<compile_context>
chip_gen: v7x
topology: tpu7x:2x2x1
jax: 0.10.0
libtpu: 0.0.40
codegen_flags: <defaults>
</compile_context>

<pallas_src>
import functools

import jax
import jax.numpy as jnp
import numpy as np
from jax import lax
from jax.experimental import pallas as pl
from jax.experimental.pallas import tpu as pltpu

EPS = 1e-5          # nn.InstanceNorm3d default
NEG_SLOPE = 0.01    # nn.LeakyReLU(negative_slope=0.01)


# ---------------------------------------------------------------------------
# DoubleConv: one Pallas kernel per batch element (grid over N)
# ---------------------------------------------------------------------------
def _double_conv_kernel(x_ref, w1_ref, w2_ref, mask_ref, o_ref, r1_ref, r2_ref,
                        *, shifts, inv_count):
    cin = x_ref.shape[0]
    cmid = w1_ref.shape[0]
    mask = mask_ref[...]                       # (1, P) f32; 1.0 on interior voxels

    def norm_lrelu(acc):
        # InstanceNorm3d (biased var, one pass) + LeakyReLU(0.01); stats in f32,
        # restricted to the DHW interior; halo re-zeroed for the next conv.
        m = acc * mask
        mean = jnp.sum(m, axis=1, keepdims=True) * inv_count
        ex2 = jnp.sum(m * m, axis=1, keepdims=True) * inv_count
        var = ex2 - mean * mean
        y = (acc - mean) * lax.rsqrt(var + EPS)
        y = jnp.maximum(y, NEG_SLOPE * y)      # LeakyReLU as a single max (VALU)
        return y * mask

    def im2col(src_f32, n_ch, dst_ref):
        # Pack the 27 tap-shifted copies of the flat volume into (27*C, P) bf16.
        # Shifts are lane rotations (XLU) - no strided slice / relayout copies.
        for k, s in enumerate(shifts):
            rolled = src_f32 if s == 0 else pltpu.roll(src_f32, shift=s, axis=1)
            dst_ref[k * n_ch:(k + 1) * n_ch, :] = rolled.astype(dst_ref.dtype)

    # ---- conv1: single deep matmul, K = 27*Cin (bias dropped: cancelled by IN) --
    x = x_ref[...].astype(jnp.float32)                     # (Cin, P)
    im2col(x, cin, r1_ref)
    acc1 = jnp.dot(w1_ref[...], r1_ref[...],               # (Cmid,27Cin)@(27Cin,P)
                   preferred_element_type=jnp.float32)
    h1 = norm_lrelu(acc1)                                  # (Cmid, P) f32, zero halo

    # ---- conv2: same structure, K = 27*Cmid ------------------------------------
    im2col(h1, cmid, r2_ref)
    acc2 = jnp.dot(w2_ref[...], r2_ref[...],
                   preferred_element_type=jnp.float32)
    o_ref[...] = norm_lrelu(acc2).astype(o_ref.dtype)      # lane-dense bf16 store


def double_conv_ncdhw(x, w1, w2):
    """(Conv3d k3 p1 -> InstanceNorm3d -> LeakyReLU) x 2.  NCDHW in / NCDHW out.

    Conv biases are omitted on purpose: a per-channel constant is exactly removed
    by the InstanceNorm mean subtraction (no affine), so they are dead math.
    """
    N, Cin, D, H, W = x.shape
    Cmid = w1.shape[0]
    Cout = w2.shape[0]

    A = (H + 2) * (W + 2)
    B = W + 2
    p_real = (D + 2) * A
    p_pad = ((p_real + 127) // 128) * 128        # lane-dense flat spatial axis

    # channels-first, zero-padded, flattened; bf16 matmul operand (halves DMA)
    xp = jnp.pad(x, ((0, 0), (0, 0), (1, 1), (1, 1), (1, 1))).reshape(N, Cin, p_real)
    xp = jnp.pad(xp, ((0, 0), (0, 0), (0, p_pad - p_real))).astype(jnp.bfloat16)

    # (Co, Ci, 3,3,3) -> (Co, 27*Ci); column = tap*Ci + ci with tap = kd*9+kh*3+kw
    w1s = jnp.transpose(w1, (0, 2, 3, 4, 1)).reshape(Cmid, 27 * Cin).astype(jnp.bfloat16)
    w2s = jnp.transpose(w2, (0, 2, 3, 4, 1)).reshape(Cout, 27 * Cmid).astype(jnp.bfloat16)

    # interior (valid output) mask over the padded flat axis
    m = np.zeros((D + 2, H + 2, W + 2), np.float32)
    m[1:D + 1, 1:H + 1, 1:W + 1] = 1.0
    mask = np.zeros((1, p_pad), np.float32)
    mask[0, :p_real] = m.reshape(-1)
    mask = jnp.asarray(mask)

    # tap (kd,kh,kw) reads flat offset (kd-1)*A + (kh-1)*B + (kw-1) relative to the
    # (interior) output voxel; realized as a lane roll by the negated offset.
    # Interior voxels never wrap, so the circular roll is exact where it matters;
    # the halo is garbage but masked out by norm_lrelu.
    shifts = tuple(
        (-((kd - 1) * A + (kh - 1) * B + (kw - 1))) % p_pad
        for kd in range(3) for kh in range(3) for kw in range(3))

    kernel = functools.partial(_double_conv_kernel, shifts=shifts,
                               inv_count=1.0 / float(D * H * W))

    y = pl.pallas_call(
        kernel,
        out_shape=jax.ShapeDtypeStruct((N, Cout, p_pad), jnp.bfloat16),
        grid_spec=pltpu.PrefetchScalarGridSpec(
            num_scalar_prefetch=0,
            grid=(N,),
            in_specs=[
                pl.BlockSpec((None, Cin, p_pad), lambda n: (n, 0, 0)),
                pl.BlockSpec((Cmid, 27 * Cin), lambda n: (0, 0)),
                pl.BlockSpec((Cout, 27 * Cmid), lambda n: (0, 0)),
                pl.BlockSpec((1, p_pad), lambda n: (0, 0)),
            ],
            out_specs=pl.BlockSpec((None, Cout, p_pad), lambda n: (n, 0, 0)),
            scratch_shapes=[
                pltpu.VMEM((27 * Cin, p_pad), jnp.bfloat16),   # conv1 im2col
                pltpu.VMEM((27 * Cmid, p_pad), jnp.bfloat16),  # conv2 im2col
            ],
        ),
        compiler_params=pltpu.CompilerParams(
            dimension_semantics=("parallel",),
            vmem_limit_bytes=64 * 1024 * 1024),
    )(xp, w1s, w2s, mask)

    # un-flatten, drop the halo, cast back to f32 (layout plumbing; the cast fuses
    # with the slice so the kernel's bf16 write-back stays half-width end to end)
    y = y[:, :, :p_real].reshape(N, Cout, D + 2, H + 2, W + 2)
    return y[:, :, 1:D + 1, 1:H + 1, 1:W + 1].astype(jnp.float32)


# ---------------------------------------------------------------------------
# ConvTranspose3d(kernel_size=2, stride=2): one matmul + a glue reshuffle
# ---------------------------------------------------------------------------
def _upconv_kernel(x_ref, w_ref, b_ref, o_ref):
    o_ref[...] = (jnp.dot(x_ref[...], w_ref[...],
                          preferred_element_type=jnp.float32) + b_ref[...])


def conv_transpose3d_k2s2(x, w, b):
    """PyTorch ConvTranspose3d(k=2, s=2).  x: NCDHW, w: (Cin, Cout, 2, 2, 2)."""
    N, C, D, H, W = x.shape
    Cout = w.shape[1]
    rows = N * D * H * W

    xf = jnp.transpose(x, (0, 2, 3, 4, 1)).reshape(rows, C).astype(jnp.float32)
    wf = jnp.transpose(w, (0, 2, 3, 4, 1)).reshape(C, 8 * Cout).astype(jnp.float32)
    bf = jnp.tile(b, 8).reshape(1, 8 * Cout).astype(jnp.float32)

    z = pl.pallas_call(
        _upconv_kernel,
        out_shape=jax.ShapeDtypeStruct((rows, 8 * Cout), jnp.float32),
        grid_spec=pltpu.PrefetchScalarGridSpec(
            num_scalar_prefetch=0,
            grid=(1,),
            in_specs=[
                pl.BlockSpec((rows, C), lambda i: (0, 0)),
                pl.BlockSpec((C, 8 * Cout), lambda i: (0, 0)),
                pl.BlockSpec((1, 8 * Cout), lambda i: (0, 0)),
            ],
            out_specs=pl.BlockSpec((rows, 8 * Cout), lambda i: (0, 0)),
        ),
    )(xf, wf, bf)

    # scatter each row's 2x2x2 block to the upsampled grid (stride==kernel => no overlap)
    z = z.reshape(N, D, H, W, 2, 2, 2, Cout)
    z = jnp.transpose(z, (0, 1, 4, 2, 5, 3, 6, 7)).reshape(N, 2 * D, 2 * H, 2 * W, Cout)
    return jnp.transpose(z, (0, 4, 1, 2, 3))                 # NCDHW


# ---------------------------------------------------------------------------
# Up.forward
# ---------------------------------------------------------------------------
@jax.jit
def up_forward(x1, x2, w_up, b_up, w1, b1, w2, b2):
    del b1, b2  # exactly cancelled by InstanceNorm mean subtraction (no affine)
    x1u = conv_transpose3d_k2s2(x1, w_up, b_up)
    # faithful reproduction of the module's F.pad call: pads W by diffY, H by diffZ
    diff_z = x2.shape[2] - x1u.shape[2]
    diff_y = x2.shape[3] - x1u.shape[3]
    x1u = jnp.pad(x1u, ((0, 0), (0, 0), (0, 0),
                        (diff_z // 2, diff_z - diff_z // 2),
                        (diff_y // 2, diff_y - diff_y // 2)))
    x = jnp.concatenate([x2, x1u], axis=1)
    return double_conv_ncdhw(x, w1, w2)


# ---------------------------------------------------------------------------
# Pure-JAX reference of the same math (bf16 conv operands, f32 stats) for checking
# ---------------------------------------------------------------------------
def _reference_up(x1, x2, w_up, b_up, w1, b1, w2, b2):
    # ConvTranspose3d(k=2,s=2) == input-dilated conv with spatially flipped,
    # channel-transposed kernel and padding k-1 = 1.
    w_t = jnp.transpose(jnp.flip(w_up, axis=(2, 3, 4)), (1, 0, 2, 3, 4))
    y = lax.conv_general_dilated(
        x1, w_t, window_strides=(1, 1, 1), padding=[(1, 1)] * 3,
        lhs_dilation=(2, 2, 2),
        dimension_numbers=('NCDHW', 'OIDHW', 'NCDHW'))
    y = y + b_up[None, :, None, None, None]

    diff_z = x2.shape[2] - y.shape[2]
    diff_y = x2.shape[3] - y.shape[3]
    y = jnp.pad(y, ((0, 0), (0, 0), (0, 0),
                    (diff_z // 2, diff_z - diff_z // 2),
                    (diff_y // 2, diff_y - diff_y // 2)))
    x = jnp.concatenate([x2, y], axis=1)

    def block(x, w, b):
        z = lax.conv_general_dilated(
            x.astype(jnp.bfloat16), w.astype(jnp.bfloat16),
            window_strides=(1, 1, 1), padding=[(1, 1)] * 3,
            dimension_numbers=('NCDHW', 'OIDHW', 'NCDHW'),
            preferred_element_type=jnp.float32)
        z = z + b[None, :, None, None, None]       # kept here to prove cancellation
        mean = z.mean(axis=(2, 3, 4), keepdims=True)
        var = ((z - mean) ** 2).mean(axis=(2, 3, 4), keepdims=True)
        z = (z - mean) * lax.rsqrt(var + EPS)
        return jnp.where(z > 0, z, NEG_SLOPE * z)

    return block(block(x, w1, b1), w2, b2)


if __name__ == "__main__":
    N = 2
    in_channels, out_channels = 16, 16
    D1 = H1 = W1 = 4
    Cup = in_channels // 2

    key = jax.random.PRNGKey(0)
    ks = jax.random.split(key, 8)
    x1 = jax.random.normal(ks[0], (N, in_channels, D1, H1, W1), jnp.float32)
    x2 = jax.random.normal(ks[1], (N, Cup, 2 * D1, 2 * H1, 2 * W1), jnp.float32)
    # ConvTranspose3d weight layout: (Cin, Cout, 2, 2, 2); Conv3d: (Cout, Cin, 3, 3, 3)
    w_up = jax.random.normal(ks[2], (in_channels, Cup, 2, 2, 2), jnp.float32) * 0.1
    b_up = jax.random.normal(ks[3], (Cup,), jnp.float32) * 0.1
    w1 = jax.random.normal(ks[4], (out_channels, in_channels, 3, 3, 3), jnp.float32) * 0.1
    b1 = jax.random.normal(ks[5], (out_channels,), jnp.float32) * 0.1
    w2 = jax.random.normal(ks[6], (out_channels, out_channels, 3, 3, 3), jnp.float32) * 0.1
    b2 = jax.random.normal(ks[7], (out_channels,), jnp.float32) * 0.1

    out = up_forward(x1, x2, w_up, b_up, w1, b1, w2, b2)
    out = jax.block_until_ready(out)

    ref = _reference_up(x1, x2, w_up, b_up, w1, b1, w2, b2)
    np.testing.assert_allclose(np.asarray(out), np.asarray(ref), rtol=2e-2, atol=2e-2)
    assert out.shape == (N, out_channels, 2 * D1, 2 * H1, 2 * W1)

    print("KERNEL_OK")
</pallas_src>

<mosaic_0001>
module attributes {stable_mosaic.version = 11 : i64} {
  func.func @_upconv_kernel(%arg0: i32, %arg1: memref<128x16xf32, #tpu.memory_space<vmem>>, %arg2: memref<16x64xf32, #tpu.memory_space<vmem>>, %arg3: memref<1x64xf32, #tpu.memory_space<vmem>>, %arg4: memref<128x64xf32, #tpu.memory_space<vmem>>) attributes {dimension_semantics = [#tpu.dimension_semantics<arbitrary>], iteration_bounds = array<i64: 1>, scalar_prefetch = 0 : i64, scratch_operands = 0 : i64, tpu.core_type = #tpu.core_type<tc>, window_params = [{pipeline_mode = #tpu.pipeline_mode<synchronous>, transform_indices = @transform_0, window_bounds = array<i64: 128, 16>}, {pipeline_mode = #tpu.pipeline_mode<synchronous>, transform_indices = @transform_1, window_bounds = array<i64: 16, 64>}, {pipeline_mode = #tpu.pipeline_mode<synchronous>, transform_indices = @transform_2, window_bounds = array<i64: 1, 64>}, {pipeline_mode = #tpu.pipeline_mode<synchronous>, transform_indices = @transform_3, window_bounds = array<i64: 128, 64>}]} {
    %c0 = arith.constant 0 : index
    %c0_0 = arith.constant 0 : index
    %0 = vector.load %arg1[%c0, %c0_0] : memref<128x16xf32, #tpu.memory_space<vmem>>, vector<128x16xf32>
    %c0_1 = arith.constant 0 : index
    %c0_2 = arith.constant 0 : index
    %1 = vector.load %arg2[%c0_1, %c0_2] : memref<16x64xf32, #tpu.memory_space<vmem>>, vector<16x64xf32>
    %cst = arith.constant dense<0.000000e+00> : vector<128x64xf32>
    %2 = tpu.matmul %0, %1, %cst {dimension_numbers = #tpu.dot_dimension_numbers<[1], [0], [0], [1], [0, 0, 1, 1], [], []>} : vector<128x16xf32>, vector<16x64xf32>, vector<128x64xf32> -> vector<128x64xf32>
    %c0_3 = arith.constant 0 : index
    %c0_4 = arith.constant 0 : index
    %3 = vector.load %arg3[%c0_3, %c0_4] : memref<1x64xf32, #tpu.memory_space<vmem>>, vector<1x64xf32>
    %4 = vector.broadcast %3 : vector<1x64xf32> to vector<128x64xf32>
    %5 = arith.addf %2, %4 : vector<128x64xf32>
    %c0_5 = arith.constant 0 : index
    %c0_6 = arith.constant 0 : index
    %6 = vector.load %arg4[%c0_5, %c0_6] : memref<128x64xf32, #tpu.memory_space<vmem>>, vector<128x64xf32>
    tpu.vector_store %arg4[%c0_5, %c0_6], %5 {strides = array<i32>} : memref<128x64xf32, #tpu.memory_space<vmem>>, vector<128x64xf32>,
    return
  }
  func.func @transform_0(%arg0: i32) -> (i32, i32) {
    %c0_i32 = arith.constant 0 : i32
    %c0_i32_0 = arith.constant 0 : i32
    %c0_i32_1 = arith.constant 0 : i32
    return %c0_i32, %c0_i32_0 : i32, i32
  }
  func.func @transform_1(%arg0: i32) -> (i32, i32) {
    %c0_i32 = arith.constant 0 : i32
    %c0_i32_0 = arith.constant 0 : i32
    %c0_i32_1 = arith.constant 0 : i32
    return %c0_i32, %c0_i32_0 : i32, i32
  }
  func.func @transform_2(%arg0: i32) -> (i32, i32) {
    %c0_i32 = arith.constant 0 : i32
    %c0_i32_0 = arith.constant 0 : i32
    %c0_i32_1 = arith.constant 0 : i32
    return %c0_i32, %c0_i32_0 : i32, i32
  }
  func.func @transform_3(%arg0: i32) -> (i32, i32) {
    %c0_i32 = arith.constant 0 : i32
    %c0_i32_0 = arith.constant 0 : i32
    %c0_i32_1 = arith.constant 0 : i32
    return %c0_i32, %c0_i32_0 : i32, i32
  }
}

module attributes {stable_mosaic.version = 11 : i64} {
  func.func @_double_conv_kernel(%arg0: i32, %arg1: memref<1x16x1024xbf16, #tpu.memory_space<vmem>>, %arg2: memref<16x432xbf16, #tpu.memory_space<vmem>>, %arg3: memref<16x432xbf16, #tpu.memory_space<vmem>>, %arg4: memref<1x1024xf32, #tpu.memory_space<vmem>>, %arg5: memref<1x16x1024xbf16, #tpu.memory_space<vmem>>, %arg6: memref<432x1024xbf16, #tpu.memory_space<vmem>>, %arg7: memref<432x1024xbf16, #tpu.memory_space<vmem>>) attributes {dimension_semantics = [#tpu.dimension_semantics<parallel>], iteration_bounds = array<i64: 2>, scalar_prefetch = 0 : i64, scratch_operands = 2 : i64, tpu.core_type = #tpu.core_type<tc>, window_params = [{transform_indices = @transform_0, window_bounds = array<i64: 1, 16, 1024>}, {pipeline_mode = #tpu.pipeline_mode<synchronous>, transform_indices = @transform_1, window_bounds = array<i64: 16, 432>}, {pipeline_mode = #tpu.pipeline_mode<synchronous>, transform_indices = @transform_2, window_bounds = array<i64: 16, 432>}, {pipeline_mode = #tpu.pipeline_mode<synchronous>, transform_indices = @transform_3, window_bounds = array<i64: 1, 1024>}, {transform_indices = @transform_4, window_bounds = array<i64: 1, 16, 1024>}]} {
    %c0 = arith.constant 0 : index
    %c0_0 = arith.constant 0 : index
    %0 = vector.load %arg4[%c0, %c0_0] : memref<1x1024xf32, #tpu.memory_space<vmem>>, vector<1x1024xf32>
    %c0_1 = arith.constant 0 : index
    %c0_2 = arith.constant 0 : index
    %c0_3 = arith.constant 0 : index
    %1 = vector.load %arg1[%c0_1, %c0_2, %c0_3] : memref<1x16x1024xbf16, #tpu.memory_space<vmem>>, vector<1x16x1024xbf16>
    %2 = vector.shape_cast %1 : vector<1x16x1024xbf16> to vector<16x1024xbf16>
    %3 = arith.extf %2 : vector<16x1024xbf16> to vector<16x1024xf32>
    %c111_i32 = arith.constant 111 : i32
    %4 = tpu.dynamic_rotate %3 by %c111_i32 dim 1 : vector<16x1024xf32>, i32 -> vector<16x1024xf32>
    %5 = arith.truncf %4 : vector<16x1024xf32> to vector<16x1024xbf16>
    %c0_4 = arith.constant 0 : index
    %c0_5 = arith.constant 0 : index
    %6 = vector.load %arg6[%c0_4, %c0_5] : memref<432x1024xbf16, #tpu.memory_space<vmem>>, vector<16x1024xbf16>
    tpu.vector_store %arg6[%c0_4, %c0_5], %5 {strides = array<i32>} : memref<432x1024xbf16, #tpu.memory_space<vmem>>, vector<16x1024xbf16>,
    %c110_i32 = arith.constant 110 : i32
    %7 = tpu.dynamic_rotate %3 by %c110_i32 dim 1 : vector<16x1024xf32>, i32 -> vector<16x1024xf32>
    %8 = arith.truncf %7 : vector<16x1024xf32> to vector<16x1024xbf16>
    %c16 = arith.constant 16 : index
    %c0_6 = arith.constant 0 : index
    %9 = vector.load %arg6[%c16, %c0_6] : memref<432x1024xbf16, #tpu.memory_space<vmem>>, vector<16x1024xbf16>
    tpu.vector_store %arg6[%c16, %c0_6], %8 {strides = array<i32>} : memref<432x1024xbf16, #tpu.memory_space<vmem>>, vector<16x1024xbf16>,
    %c109_i32 = arith.constant 109 : i32
    %10 = tpu.dynamic_rotate %3 by %c109_i32 dim 1 : vector<16x1024xf32>, i32 -> vector<16x1024xf32>
    %11 = arith.truncf %10 : vector<16x1024xf32> to vector<16x1024xbf16>
    %c32 = arith.constant 32 : index
    %c0_7 = arith.constant 0 : index
    %12 = vector.load %arg6[%c32, %c0_7] : memref<432x1024xbf16, #tpu.memory_space<vmem>>, vector<16x1024xbf16>
    tpu.vector_store %arg6[%c32, %c0_7], %11 {strides = array<i32>} : memref<432x1024xbf16, #tpu.memory_space<vmem>>, vector<16x1024xbf16>,
    %c101_i32 = arith.constant 101 : i32
    %13 = tpu.dynamic_rotate %3 by %c101_i32 dim 1 : vector<16x1024xf32>, i32 -> vector<16x1024xf32>
    %14 = arith.truncf %13 : vector<16x1024xf32> to vector<16x1024xbf16>
    %c48 = arith.constant 48 : index
    %c0_8 = arith.constant 0 : index
    %15 = vector.load %arg6[%c48, %c0_8] : memref<432x1024xbf16, #tpu.memory_space<vmem>>, vector<16x1024xbf16>
    tpu.vector_store %arg6[%c48, %c0_8], %14 {strides = array<i32>} : memref<432x1024xbf16, #tpu.memory_space<vmem>>, vector<16x1024xbf16>,
    %c100_i32 = arith.constant 100 : i32
    %16 = tpu.dynamic_rotate %3 by %c100_i32 dim 1 : vector<16x1024xf32>, i32 -> vector<16x1024xf32>
    %17 = arith.truncf %16 : vector<16x1024xf32> to vector<16x1024xbf16>
    %c64 = arith.constant 64 : index
    %c0_9 = arith.constant 0 : index
    %18 = vector.load %arg6[%c64, %c0_9] : memref<432x1024xbf16, #tpu.memory_space<vmem>>, vector<16x1024xbf16>
    tpu.vector_store %arg6[%c64, %c0_9], %17 {strides = array<i32>} : memref<432x1024xbf16, #tpu.memory_space<vmem>>, vector<16x1024xbf16>,
    %c99_i32 = arith.constant 99 : i32
    %19 = tpu.dynamic_rotate %3 by %c99_i32 dim 1 : vector<16x1024xf32>, i32 -> vector<16x1024xf32>
    %20 = arith.truncf %19 : vector<16x1024xf32> to vector<16x1024xbf16>
    %c80 = arith.constant 80 : index
    %c0_10 = arith.constant 0 : index
    %21 = vector.load %arg6[%c80, %c0_10] : memref<432x1024xbf16, #tpu.memory_space<vmem>>, vector<16x1024xbf16>
    tpu.vector_store %arg6[%c80, %c0_10], %20 {strides = array<i32>} : memref<432x1024xbf16, #tpu.memory_space<vmem>>, vector<16x1024xbf16>,
    %c91_i32 = arith.constant 91 : i32
    %22 = tpu.dynamic_rotate %3 by %c91_i32 dim 1 : vector<16x1024xf32>, i32 -> vector<16x1024xf32>
    %23 = arith.truncf %22 : vector<16x1024xf32> to vector<16x1024xbf16>
    %c96 = arith.constant 96 : index
    %c0_11 = arith.constant 0 : index
    %24 = vector.load %arg6[%c96, %c0_11] : memref<432x1024xbf16, #tpu.memory_space<vmem>>, vector<16x1024xbf16>
    tpu.vector_store %arg6[%c96, %c0_11], %23 {strides = array<i32>} : memref<432x1024xbf16, #tpu.memory_space<vmem>>, vector<16x1024xbf16>,
    %c90_i32 = arith.constant 90 : i32
    %25 = tpu.dynamic_rotate %3 by %c90_i32 dim 1 : vector<16x1024xf32>, i32 -> vector<16x1024xf32>
    %26 = arith.truncf %25 : vector<16x1024xf32> to vector<16x1024xbf16>
    %c112 = arith.constant 112 : index
    %c0_12 = arith.constant 0 : index
    %27 = vector.load %arg6[%c112, %c0_12] : memref<432x1024xbf16, #tpu.memory_space<vmem>>, vector<16x1024xbf16>
    tpu.vector_store %arg6[%c112, %c0_12], %26 {strides = array<i32>} : memref<432x1024xbf16, #tpu.memory_space<vmem>>, vector<16x1024xbf16>,
    %c89_i32 = arith.constant 89 : i32
    %28 = tpu.dynamic_rotate %3 by %c89_i32 dim 1 : vector<16x1024xf32>, i32 -> vector<16x1024xf32>
    %29 = arith.truncf %28 : vector<16x1024xf32> to vector<16x1024xbf16>
    %c128 = arith.constant 128 : index
    %c0_13 = arith.constant 0 : index
    %30 = vector.load %arg6[%c128, %c0_13] : memref<432x1024xbf16, #tpu.memory_space<vmem>>, vector<16x1024xbf16>
    tpu.vector_store %arg6[%c128, %c0_13], %29 {strides = array<i32>} : memref<432x1024xbf16, #tpu.memory_space<vmem>>, vector<16x1024xbf16>,
    %c11_i32 = arith.constant 11 : i32
    %31 = tpu.dynamic_rotate %3 by %c11_i32 dim 1 : vector<16x1024xf32>, i32 -> vector<16x1024xf32>
    %32 = arith.truncf %31 : vector<16x1024xf32> to vector<16x1024xbf16>
    %c144 = arith.constant 144 : index
    %c0_14 = arith.constant 0 : index
    %33 = vector.load %arg6[%c144, %c0_14] : memref<432x1024xbf16, #tpu.memory_space<vmem>>, vector<16x1024xbf16>
    tpu.vector_store %arg6[%c144, %c0_14], %32 {strides = array<i32>} : memref<432x1024xbf16, #tpu.memory_space<vmem>>, vector<16x1024xbf16>,
    %c10_i32 = arith.constant 10 : i32
    %34 = tpu.dynamic_rotate %3 by %c10_i32 dim 1 : vector<16x1024xf32>, i32 -> vector<16x1024xf32>
    %35 = arith.truncf %34 : vector<16x1024xf32> to vector<16x1024xbf16>
    %c160 = arith.constant 160 : index
    %c0_15 = arith.constant 0 : index
    %36 = vector.load %arg6[%c160, %c0_15] : memref<432x1024xbf16, #tpu.memory_space<vmem>>, vector<16x1024xbf16>
    tpu.vector_store %arg6[%c160, %c0_15], %35 {strides = array<i32>} : memref<432x1024xbf16, #tpu.memory_space<vmem>>, vector<16x1024xbf16>,
    %c9_i32 = arith.constant 9 : i32
    %37 = tpu.dynamic_rotate %3 by %c9_i32 dim 1 : vector<16x1024xf32>, i32 -> vector<16x1024xf32>
    %38 = arith.truncf %37 : vector<16x1024xf32> to vector<16x1024xbf16>
    %c176 = arith.constant 176 : index
    %c0_16 = arith.constant 0 : index
    %39 = vector.load %arg6[%c176, %c0_16] : memref<432x1024xbf16, #tpu.memory_space<vmem>>, vector<16x1024xbf16>
    tpu.vector_store %arg6[%c176, %c0_16], %38 {strides = array<i32>} : memref<432x1024xbf16, #tpu.memory_space<vmem>>, vector<16x1024xbf16>,
    %c1_i32 = arith.constant 1 : i32
    %40 = tpu.dynamic_rotate %3 by %c1_i32 dim 1 : vector<16x1024xf32>, i32 -> vector<16x1024xf32>
    %41 = arith.truncf %40 : vector<16x1024xf32> to vector<16x1024xbf16>
    %c192 = arith.constant 192 : index
    %c0_17 = arith.constant 0 : index
    %42 = vector.load %arg6[%c192, %c0_17] : memref<432x1024xbf16, #tpu.memory_space<vmem>>, vector<16x1024xbf16>
    tpu.vector_store %arg6[%c192, %c0_17], %41 {strides = array<i32>} : memref<432x1024xbf16, #tpu.memory_space<vmem>>, vector<16x1024xbf16>,
    %43 = arith.truncf %3 : vector<16x1024xf32> to vector<16x1024xbf16>
    %c208 = arith.constant 208 : index
    %c0_18 = arith.constant 0 : index
    %44 = vector.load %arg6[%c208, %c0_18] : memref<432x1024xbf16, #tpu.memory_space<vmem>>, vector<16x1024xbf16>
    tpu.vector_store %arg6[%c208, %c0_18], %43 {strides = array<i32>} : memref<432x1024xbf16, #tpu.memory_space<vmem>>, vector<16x1024xbf16>,
    %c1023_i32 = arith.constant 1023 : i32
    %45 = tpu.dynamic_rotate %3 by %c1023_i32 dim 1 : vector<16x1024xf32>, i32 -> vector<16x1024xf32>
    %46 = arith.truncf %45 : vector<16x1024xf32> to vector<16x1024xbf16>
    %c224 = arith.constant 224 : index
    %c0_19 = arith.constant 0 : index
    %47 = vector.load %arg6[%c224, %c0_19] : memref<432x1024xbf16, #tpu.memory_space<vmem>>, vector<16x1024xbf16>
    tpu.vector_store %arg6[%c224, %c0_19], %46 {strides = array<i32>} : memref<432x1024xbf16, #tpu.memory_space<vmem>>, vector<16x1024xbf16>,
    %c1015_i32 = arith.constant 1015 : i32
    %48 = tpu.dynamic_rotate %3 by %c1015_i32 dim 1 : vector<16x1024xf32>, i32 -> vector<16x1024xf32>
    %49 = arith.truncf %48 : vector<16x1024xf32> to vector<16x1024xbf16>
    %c240 = arith.constant 240 : index
    %c0_20 = arith.constant 0 : index
    %50 = vector.load %arg6[%c240, %c0_20] : memref<432x1024xbf16, #tpu.memory_space<vmem>>, vector<16x1024xbf16>
    tpu.vector_store %arg6[%c240, %c0_20], %49 {strides = array<i32>} : memref<432x1024xbf16, #tpu.memory_space<vmem>>, vector<16x1024xbf16>,
    %c1014_i32 = arith.constant 1014 : i32
    %51 = tpu.dynamic_rotate %3 by %c1014_i32 dim 1 : vector<16x1024xf32>, i32 -> vector<16x1024xf32>
    %52 = arith.truncf %51 : vector<16x1024xf32> to vector<16x1024xbf16>
    %c256 = arith.constant 256 : index
    %c0_21 = arith.constant 0 : index
    %53 = vector.load %arg6[%c256, %c0_21] : memref<432x1024xbf16, #tpu.memory_space<vmem>>, vector<16x1024xbf16>
    tpu.vector_store %arg6[%c256, %c0_21], %52 {strides = array<i32>} : memref<432x1024xbf16, #tpu.memory_space<vmem>>, vector<16x1024xbf16>,
    %c1013_i32 = arith.constant 1013 : i32
    %54 = tpu.dynamic_rotate %3 by %c1013_i32 dim 1 : vector<16x1024xf32>, i32 -> vector<16x1024xf32>
    %55 = arith.truncf %54 : vector<16x1024xf32> to vector<16x1024xbf16>
    %c272 = arith.constant 272 : index
    %c0_22 = arith.constant 0 : index
    %56 = vector.load %arg6[%c272, %c0_22] : memref<432x1024xbf16, #tpu.memory_space<vmem>>, vector<16x1024xbf16>
    tpu.vector_store %arg6[%c272, %c0_22], %55 {strides = array<i32>} : memref<432x1024xbf16, #tpu.memory_space<vmem>>, vector<16x1024xbf16>,
    %c935_i32 = arith.constant 935 : i32
    %57 = tpu.dynamic_rotate %3 by %c935_i32 dim 1 : vector<16x1024xf32>, i32 -> vector<16x1024xf32>
    %58 = arith.truncf %57 : vector<16x1024xf32> to vector<16x1024xbf16>
    %c288 = arith.constant 288 : index
    %c0_23 = arith.constant 0 : index
    %59 = vector.load %arg6[%c288, %c0_23] : memref<432x1024xbf16, #tpu.memory_space<vmem>>, vector<16x1024xbf16>
    tpu.vector_store %arg6[%c288, %c0_23], %58 {strides = array<i32>} : memref<432x1024xbf16, #tpu.memory_space<vmem>>, vector<16x1024xbf16>,
    %c934_i32 = arith.constant 934 : i32
    %60 = tpu.dynamic_rotate %3 by %c934_i32 dim 1 : vector<16x1024xf32>, i32 -> vector<16x1024xf32>
    %61 = arith.truncf %60 : vector<16x1024xf32> to vector<16x1024xbf16>
    %c304 = arith.constant 304 : index
    %c0_24 = arith.constant 0 : index
    %62 = vector.load %arg6[%c304, %c0_24] : memref<432x1024xbf16, #tpu.memory_space<vmem>>, vector<16x1024xbf16>
    tpu.vector_store %arg6[%c304, %c0_24], %61 {strides = array<i32>} : memref<432x1024xbf16, #tpu.memory_space<vmem>>, vector<16x1024xbf16>,
    %c933_i32 = arith.constant 933 : i32
    %63 = tpu.dynamic_rotate %3 by %c933_i32 dim 1 : vector<16x1024xf32>, i32 -> vector<16x1024xf32>
    %64 = arith.truncf %63 : vector<16x1024xf32> to vector<16x1024xbf16>
    %c320 = arith.constant 320 : index
    %c0_25 = arith.constant 0 : index
    %65 = vector.load %arg6[%c320, %c0_25] : memref<432x1024xbf16, #tpu.memory_space<vmem>>, vector<16x1024xbf16>
    tpu.vector_store %arg6[%c320, %c0_25], %64 {strides = array<i32>} : memref<432x1024xbf16, #tpu.memory_space<vmem>>, vector<16x1024xbf16>,
    %c925_i32 = arith.constant 925 : i32
    %66 = tpu.dynamic_rotate %3 by %c925_i32 dim 1 : vector<16x1024xf32>, i32 -> vector<16x1024xf32>
    %67 = arith.truncf %66 : vector<16x1024xf32> to vector<16x1024xbf16>
    %c336 = arith.constant 336 : index
    %c0_26 = arith.constant 0 : index
    %68 = vector.load %arg6[%c336, %c0_26] : memref<432x1024xbf16, #tpu.memory_space<vmem>>, vector<16x1024xbf16>
    tpu.vector_store %arg6[%c336, %c0_26], %67 {strides = array<i32>} : memref<432x1024xbf16, #tpu.memory_space<vmem>>, vector<16x1024xbf16>,
    %c924_i32 = arith.constant 924 : i32
    %69 = tpu.dynamic_rotate %3 by %c924_i32 dim 1 : vector<16x1024xf32>, i32 -> vector<16x1024xf32>
    %70 = arith.truncf %69 : vector<16x1024xf32> to vector<16x1024xbf16>
    %c352 = arith.constant 352 : index
    %c0_27 = arith.constant 0 : index
    %71 = vector.load %arg6[%c352, %c0_27] : memref<432x1024xbf16, #tpu.memory_space<vmem>>, vector<16x1024xbf16>
    tpu.vector_store %arg6[%c352, %c0_27], %70 {strides = array<i32>} : memref<432x1024xbf16, #tpu.memory_space<vmem>>, vector<16x1024xbf16>,
    %c923_i32 = arith.constant 923 : i32
    %72 = tpu.dynamic_rotate %3 by %c923_i32 dim 1 : vector<16x1024xf32>, i32 -> vector<16x1024xf32>
    %73 = arith.truncf %72 : vector<16x1024xf32> to vector<16x1024xbf16>
    %c368 = arith.constant 368 : index
    %c0_28 = arith.constant 0 : index
    %74 = vector.load %arg6[%c368, %c0_28] : memref<432x1024xbf16, #tpu.memory_space<vmem>>, vector<16x1024xbf16>
    tpu.vector_store %arg6[%c368, %c0_28], %73 {strides = array<i32>} : memref<432x1024xbf16, #tpu.memory_space<vmem>>, vector<16x1024xbf16>,
    %c915_i32 = arith.constant 915 : i32
    %75 = tpu.dynamic_rotate %3 by %c915_i32 dim 1 : vector<16x1024xf32>, i32 -> vector<16x1024xf32>
    %76 = arith.truncf %75 : vector<16x1024xf32> to vector<16x1024xbf16>
    %c384 = arith.constant 384 : index
    %c0_29 = arith.constant 0 : index
    %77 = vector.load %arg6[%c384, %c0_29] : memref<432x1024xbf16, #tpu.memory_space<vmem>>, vector<16x1024xbf16>
    tpu.vector_store %arg6[%c384, %c0_29], %76 {strides = array<i32>} : memref<432x1024xbf16, #tpu.memory_space<vmem>>, vector<16x1024xbf16>,
    %c914_i32 = arith.constant 914 : i32
    %78 = tpu.dynamic_rotate %3 by %c914_i32 dim 1 : vector<16x1024xf32>, i32 -> vector<16x1024xf32>
    %79 = arith.truncf %78 : vector<16x1024xf32> to vector<16x1024xbf16>
    %c400 = arith.constant 400 : index
    %c0_30 = arith.constant 0 : index
    %80 = vector.load %arg6[%c400, %c0_30] : memref<432x1024xbf16, #tpu.memory_space<vmem>>, vector<16x1024xbf16>
    tpu.vector_store %arg6[%c400, %c0_30], %79 {strides = array<i32>} : memref<432x1024xbf16, #tpu.memory_space<vmem>>, vector<16x1024xbf16>,
    %c913_i32 = arith.constant 913 : i32
    %81 = tpu.dynamic_rotate %3 by %c913_i32 dim 1 : vector<16x1024xf32>, i32 -> vector<16x1024xf32>
    %82 = arith.truncf %81 : vector<16x1024xf32> to vector<16x1024xbf16>
    %c416 = arith.constant 416 : index
    %c0_31 = arith.constant 0 : index
    %83 = vector.load %arg6[%c416, %c0_31] : memref<432x1024xbf16, #tpu.memory_space<vmem>>, vector<16x1024xbf16>
    tpu.vector_store %arg6[%c416, %c0_31], %82 {strides = array<i32>} : memref<432x1024xbf16, #tpu.memory_space<vmem>>, vector<16x1024xbf16>,
    %c0_32 = arith.constant 0 : index
    %c0_33 = arith.constant 0 : index
    %84 = vector.load %arg2[%c0_32, %c0_33] : memref<16x432xbf16, #tpu.memory_space<vmem>>, vector<16x432xbf16>
    %c0_34 = arith.constant 0 : index
    %c0_35 = arith.constant 0 : index
    %85 = vector.load %arg6[%c0_34, %c0_35] : memref<432x1024xbf16, #tpu.memory_space<vmem>>, vector<432x1024xbf16>
    %cst = arith.constant dense<0.000000e+00> : vector<16x1024xf32>
    %86 = tpu.matmul %84, %85, %cst {dimension_numbers = #tpu.dot_dimension_numbers<[1], [0], [0], [1], [0, 0, 1, 1], [], []>} : vector<16x432xbf16>, vector<432x1024xbf16>, vector<16x1024xf32> -> vector<16x1024xf32>
    %87 = vector.broadcast %0 : vector<1x1024xf32> to vector<16x1024xf32>
    %88 = arith.mulf %86, %87 : vector<16x1024xf32>
    %cst_36 = arith.constant dense<0.000000e+00> : vector<16xf32>
    %89 = vector.multi_reduction <add>, %88, %cst_36 [1] : vector<16x1024xf32> to vector<16xf32>
    %90 = vector.shape_cast %89 : vector<16xf32> to vector<16x1xf32>
    %cst_37 = arith.constant 0.001953125 : f32
    %91 = vector.broadcast %cst_37 : f32 to vector<16x1xf32>
    %92 = arith.mulf %90, %91 : vector<16x1xf32>
    %93 = arith.mulf %88, %88 : vector<16x1024xf32>
    %cst_38 = arith.constant dense<0.000000e+00> : vector<16xf32>
    %94 = vector.multi_reduction <add>, %93, %cst_38 [1] : vector<16x1024xf32> to vector<16xf32>
    %95 = vector.shape_cast %94 : vector<16xf32> to vector<16x1xf32>
    %cst_39 = arith.constant 0.001953125 : f32
    %96 = vector.broadcast %cst_39 : f32 to vector<16x1xf32>
    %97 = arith.mulf %95, %96 : vector<16x1xf32>
    %98 = arith.mulf %92, %92 : vector<16x1xf32>
    %99 = arith.subf %97, %98 : vector<16x1xf32>
    %100 = vector.broadcast %92 : vector<16x1xf32> to vector<16x1024xf32>
    %101 = arith.subf %86, %100 : vector<16x1024xf32>
    %cst_40 = arith.constant 9.99999974E-6 : f32
    %102 = vector.broadcast %cst_40 : f32 to vector<16x1xf32>
    %103 = arith.addf %99, %102 : vector<16x1xf32>
    %104 = math.rsqrt %103 : vector<16x1xf32>
    %105 = vector.broadcast %104 : vector<16x1xf32> to vector<16x1024xf32>
    %106 = arith.mulf %101, %105 : vector<16x1024xf32>
    %cst_41 = arith.constant 0.00999999977 : f32
    %107 = vector.broadcast %cst_41 : f32 to vector<16x1024xf32>
    %108 = arith.mulf %107, %106 : vector<16x1024xf32>
    %109 = arith.maximumf %106, %108 : vector<16x1024xf32>
    %110 = vector.broadcast %0 : vector<1x1024xf32> to vector<16x1024xf32>
    %111 = arith.mulf %109, %110 : vector<16x1024xf32>
    %c111_i32_42 = arith.constant 111 : i32
    %112 = tpu.dynamic_rotate %111 by %c111_i32_42 dim 1 : vector<16x1024xf32>, i32 -> vector<16x1024xf32>
    %113 = arith.truncf %112 : vector<16x1024xf32> to vector<16x1024xbf16>
    %c0_43 = arith.constant 0 : index
    %c0_44 = arith.constant 0 : index
    %114 = vector.load %arg7[%c0_43, %c0_44] : memref<432x1024xbf16, #tpu.memory_space<vmem>>, vector<16x1024xbf16>
    tpu.vector_store %arg7[%c0_43, %c0_44], %113 {strides = array<i32>} : memref<432x1024xbf16, #tpu.memory_space<vmem>>, vector<16x1024xbf16>,
    %c110_i32_45 = arith.constant 110 : i32
    %115 = tpu.dynamic_rotate %111 by %c110_i32_45 dim 1 : vector<16x1024xf32>, i32 -> vector<16x1024xf32>
    %116 = arith.truncf %115 : vector<16x1024xf32> to vector<16x1024xbf16>
    %c16_46 = arith.constant 16 : index
    %c0_47 = arith.constant 0 : index
    %117 = vector.load %arg7[%c16_46, %c0_47] : memref<432x1024xbf16, #tpu.memory_space<vmem>>, vector<16x1024xbf16>
    tpu.vector_store %arg7[%c16_46, %c0_47], %116 {strides = array<i32>} : memref<432x1024xbf16, #tpu.memory_space<vmem>>, vector<16x1024xbf16>,
    %c109_i32_48 = arith.constant 109 : i32
    %118 = tpu.dynamic_rotate %111 by %c109_i32_48 dim 1 : vector<16x1024xf32>, i32 -> vector<16x1024xf32>
    %119 = arith.truncf %118 : vector<16x1024xf32> to vector<16x1024xbf16>
    %c32_49 = arith.constant 32 : index
    %c0_50 = arith.constant 0 : index
    %120 = vector.load %arg7[%c32_49, %c0_50] : memref<432x1024xbf16, #tpu.memory_space<vmem>>, vector<16x1024xbf16>
    tpu.vector_store %arg7[%c32_49, %c0_50], %119 {strides = array<i32>} : memref<432x1024xbf16, #tpu.memory_space<vmem>>, vector<16x1024xbf16>,
    %c101_i32_51 = arith.constant 101 : i32
    %121 = tpu.dynamic_rotate %111 by %c101_i32_51 dim 1 : vector<16x1024xf32>, i32 -> vector<16x1024xf32>
    %122 = arith.truncf %121 : vector<16x1024xf32> to vector<16x1024xbf16>
    %c48_52 = arith.constant 48 : index
    %c0_53 = arith.constant 0 : index
    %123 = vector.load %arg7[%c48_52, %c0_53] : memref<432x1024xbf16, #tpu.memory_space<vmem>>, vector<16x1024xbf16>
    tpu.vector_store %arg7[%c48_52, %c0_53], %122 {strides = array<i32>} : memref<432x1024xbf16, #tpu.memory_space<vmem>>, vector<16x1024xbf16>,
    %c100_i32_54 = arith.constant 100 : i32
    %124 = tpu.dynamic_rotate %111 by %c100_i32_54 dim 1 : vector<16x1024xf32>, i32 -> vector<16x1024xf32>
    %125 = arith.truncf %124 : vector<16x1024xf32> to vector<16x1024xbf16>
    %c64_55 = arith.constant 64 : index
    %c0_56 = arith.constant 0 : index
    %126 = vector.load %arg7[%c64_55, %c0_56] : memref<432x1024xbf16, #tpu.memory_space<vmem>>, vector<16x1024xbf16>
    tpu.vector_store %arg7[%c64_55, %c0_56], %125 {strides = array<i32>} : memref<432x1024xbf16, #tpu.memory_space<vmem>>, vector<16x1024xbf16>,
    %c99_i32_57 = arith.constant 99 : i32
    %127 = tpu.dynamic_rotate %111 by %c99_i32_57 dim 1 : vector<16x1024xf32>, i32 -> vector<16x1024xf32>
    %128 = arith.truncf %127 : vector<16x1024xf32> to vector<16x1024xbf16>
    %c80_58 = arith.constant 80 : index
    %c0_59 = arith.constant 0 : index
    %129 = vector.load %arg7[%c80_58, %c0_59] : memref<432x1024xbf16, #tpu.memory_space<vmem>>, vector<16x1024xbf16>
    tpu.vector_store %arg7[%c80_58, %c0_59], %128 {strides = array<i32>} : memref<432x1024xbf16, #tpu.memory_space<vmem>>, vector<16x1024xbf16>,
    %c91_i32_60 = arith.constant 91 : i32
    %130 = tpu.dynamic_rotate %111 by %c91_i32_60 dim 1 : vector<16x1024xf32>, i32 -> vector<16x1024xf32>
    %131 = arith.truncf %130 : vector<16x1024xf32> to vector<16x1024xbf16>
    %c96_61 = arith.constant 96 : index
    %c0_62 = arith.constant 0 : index
    %132 = vector.load %arg7[%c96_61, %c0_62] : memref<432x1024xbf16, #tpu.memory_space<vmem>>, vector<16x1024xbf16>
    tpu.vector_store %arg7[%c96_61, %c0_62], %131 {strides = array<i32>} : memref<432x1024xbf16, #tpu.memory_space<vmem>>, vector<16x1024xbf16>,
    %c90_i32_63 = arith.constant 90 : i32
    %133 = tpu.dynamic_rotate %111 by %c90_i32_63 dim 1 : vector<16x1024xf32>, i32 -> vector<16x1024xf32>
    %134 = arith.truncf %133 : vector<16x1024xf32> to vector<16x1024xbf16>
    %c112_64 = arith.constant 112 : index
    %c0_65 = arith.constant 0 : index
    %135 = vector.load %arg7[%c112_64, %c0_65] : memref<432x1024xbf16, #tpu.memory_space<vmem>>, vector<16x1024xbf16>
    tpu.vector_store %arg7[%c112_64, %c0_65], %134 {strides = array<i32>} : memref<432x1024xbf16, #tpu.memory_space<vmem>>, vector<16x1024xbf16>,
    %c89_i32_66 = arith.constant 89 : i32
    %136 = tpu.dynamic_rotate %111 by %c89_i32_66 dim 1 : vector<16x1024xf32>, i32 -> vector<16x1024xf32>
    %137 = arith.truncf %136 : vector<16x1024xf32> to vector<16x1024xbf16>
    %c128_67 = arith.constant 128 : index
    %c0_68 = arith.constant 0 : index
    %138 = vector.load %arg7[%c128_67, %c0_68] : memref<432x1024xbf16, #tpu.memory_space<vmem>>, vector<16x1024xbf16>
    tpu.vector_store %arg7[%c128_67, %c0_68], %137 {strides = array<i32>} : memref<432x1024xbf16, #tpu.memory_space<vmem>>, vector<16x1024xbf16>,
    %c11_i32_69 = arith.constant 11 : i32
    %139 = tpu.dynamic_rotate %111 by %c11_i32_69 dim 1 : vector<16x1024xf32>, i32 -> vector<16x1024xf32>
    %140 = arith.truncf %139 : vector<16x1024xf32> to vector<16x1024xbf16>
    %c144_70 = arith.constant 144 : index
    %c0_71 = arith.constant 0 : index
    %141 = vector.load %arg7[%c144_70, %c0_71] : memref<432x1024xbf16, #tpu.memory_space<vmem>>, vector<16x1024xbf16>
    tpu.vector_store %arg7[%c144_70, %c0_71], %140 {strides = array<i32>} : memref<432x1024xbf16, #tpu.memory_space<vmem>>, vector<16x1024xbf16>,
    %c10_i32_72 = arith.constant 10 : i32
    %142 = tpu.dynamic_rotate %111 by %c10_i32_72 dim 1 : vector<16x1024xf32>, i32 -> vector<16x1024xf32>
    %143 = arith.truncf %142 : vector<16x1024xf32> to vector<16x1024xbf16>
    %c160_73 = arith.constant 160 : index
    %c0_74 = arith.constant 0 : index
    %144 = vector.load %arg7[%c160_73, %c0_74] : memref<432x1024xbf16, #tpu.memory_space<vmem>>, vector<16x1024xbf16>
    tpu.vector_store %arg7[%c160_73, %c0_74], %143 {strides = array<i32>} : memref<432x1024xbf16, #tpu.memory_space<vmem>>, vector<16x1024xbf16>,
    %c9_i32_75 = arith.constant 9 : i32
    %145 = tpu.dynamic_rotate %111 by %c9_i32_75 dim 1 : vector<16x1024xf32>, i32 -> vector<16x1024xf32>
    %146 = arith.truncf %145 : vector<16x1024xf32> to vector<16x1024xbf16>
    %c176_76 = arith.constant 176 : index
    %c0_77 = arith.constant 0 : index
    %147 = vector.load %arg7[%c176_76, %c0_77] : memref<432x1024xbf16, #tpu.memory_space<vmem>>, vector<16x1024xbf16>
    tpu.vector_store %arg7[%c176_76, %c0_77], %146 {strides = array<i32>} : memref<432x1024xbf16, #tpu.memory_space<vmem>>, vector<16x1024xbf16>,
    %c1_i32_78 = arith.constant 1 : i32
    %148 = tpu.dynamic_rotate %111 by %c1_i32_78 dim 1 : vector<16x1024xf32>, i32 -> vector<16x1024xf32>
    %149 = arith.truncf %148 : vector<16x1024xf32> to vector<16x1024xbf16>
    %c192_79 = arith.constant 192 : index
    %c0_80 = arith.constant 0 : index
    %150 = vector.load %arg7[%c192_79, %c0_80] : memref<432x1024xbf16, #tpu.memory_space<vmem>>, vector<16x1024xbf16>
    tpu.vector_store %arg7[%c192_79, %c0_80], %149 {strides = array<i32>} : memref<432x1024xbf16, #tpu.memory_space<vmem>>, vector<16x1024xbf16>,
    %151 = arith.truncf %111 : vector<16x1024xf32> to vector<16x1024xbf16>
    %c208_81 = arith.constant 208 : index
    %c0_82 = arith.constant 0 : index
    %152 = vector.load %arg7[%c208_81, %c0_82] : memref<432x1024xbf16, #tpu.memory_space<vmem>>, vector<16x1024xbf16>
    tpu.vector_store %arg7[%c208_81, %c0_82], %151 {strides = array<i32>} : memref<432x1024xbf16, #tpu.memory_space<vmem>>, vector<16x1024xbf16>,
    %c1023_i32_83 = arith.constant 1023 : i32
    %153 = tpu.dynamic_rotate %111 by %c1023_i32_83 dim 1 : vector<16x1024xf32>, i32 -> vector<16x1024xf32>
    %154 = arith.truncf %153 : vector<16x1024xf32> to vector<16x1024xbf16>
    %c224_84 = arith.constant 224 : index
    %c0_85 = arith.constant 0 : index
    %155 = vector.load %arg7[%c224_84, %c0_85] : memref<432x1024xbf16, #tpu.memory_space<vmem>>, vector<16x1024xbf16>
    tpu.vector_store %arg7[%c224_84, %c0_85], %154 {strides = array<i32>} : memref<432x1024xbf16, #tpu.memory_space<vmem>>, vector<16x1024xbf16>,
    %c1015_i32_86 = arith.constant 1015 : i32
    %156 = tpu.dynamic_rotate %111 by %c1015_i32_86 dim 1 : vector<16x1024xf32>, i32 -> vector<16x1024xf32>
    %157 = arith.truncf %156 : vector<16x1024xf32> to vector<16x1024xbf16>
    %c240_87 = arith.constant 240 : index
    %c0_88 = arith.constant 0 : index
    %158 = vector.load %arg7[%c240_87, %c0_88] : memref<432x1024xbf16, #tpu.memory_space<vmem>>, vector<16x1024xbf16>
    tpu.vector_store %arg7[%c240_87, %c0_88], %157 {strides = array<i32>} : memref<432x1024xbf16, #tpu.memory_space<vmem>>, vector<16x1024xbf16>,
    %c1014_i32_89 = arith.constant 1014 : i32
    %159 = tpu.dynamic_rotate %111 by %c1014_i32_89 dim 1 : vector<16x1024xf32>, i32 -> vector<16x1024xf32>
    %160 = arith.truncf %159 : vector<16x1024xf32> to vector<16x1024xbf16>
    %c256_90 = arith.constant 256 : index
    %c0_91 = arith.constant 0 : index
    %161 = vector.load %arg7[%c256_90, %c0_91] : memref<432x1024xbf16, #tpu.memory_space<vmem>>, vector<16x1024xbf16>
    tpu.vector_store %arg7[%c256_90, %c0_91], %160 {strides = array<i32>} : memref<432x1024xbf16, #tpu.memory_space<vmem>>, vector<16x1024xbf16>,
    %c1013_i32_92 = arith.constant 1013 : i32
    %162 = tpu.dynamic_rotate %111 by %c1013_i32_92 dim 1 : vector<16x1024xf32>, i32 -> vector<16x1024xf32>
    %163 = arith.truncf %162 : vector<16x1024xf32> to vector<16x1024xbf16>
    %c272_93 = arith.constant 272 : index
    %c0_94 = arith.constant 0 : index
    %164 = vector.load %arg7[%c272_93, %c0_94] : memref<432x1024xbf16, #tpu.memory_space<vmem>>, vector<16x1024xbf16>
    tpu.vector_store %arg7[%c272_93, %c0_94], %163 {strides = array<i32>} : memref<432x1024xbf16, #tpu.memory_space<vmem>>, vector<16x1024xbf16>,
    %c935_i32_95 = arith.constant 935 : i32
    %165 = tpu.dynamic_rotate %111 by %c935_i32_95 dim 1 : vector<16x1024xf32>, i32 -> vector<16x1024xf32>
    %166 = arith.truncf %165 : vector<16x1024xf32> to vector<16x1024xbf16>
    %c288_96 = arith.constant 288 : index
    %c0_97 = arith.constant 0 : index
    %167 = vector.load %arg7[%c288_96, %c0_97] : memref<432x1024xbf16, #tpu.memory_space<vmem>>, vector<16x1024xbf16>
    tpu.vector_store %arg7[%c288_96, %c0_97], %166 {strides = array<i32>} : memref<432x1024xbf16, #tpu.memory_space<vmem>>, vector<16x1024xbf16>,
    %c934_i32_98 = arith.constant 934 : i32
    %168 = tpu.dynamic_rotate %111 by %c934_i32_98 dim 1 : vector<16x1024xf32>, i32 -> vector<16x1024xf32>
    %169 = arith.truncf %168 : vector<16x1024xf32> to vector<16x1024xbf16>
    %c304_99 = arith.constant 304 : index
    %c0_100 = arith.constant 0 : index
    %170 = vector.load %arg7[%c304_99, %c0_100] : memref<432x1024xbf16, #tpu.memory_space<vmem>>, vector<16x1024xbf16>
    tpu.vector_store %arg7[%c304_99, %c0_100], %169 {strides = array<i32>} : memref<432x1024xbf16, #tpu.memory_space<vmem>>, vector<16x1024xbf16>,
    %c933_i32_101 = arith.constant 933 : i32
    %171 = tpu.dynamic_rotate %111 by %c933_i32_101 dim 1 : vector<16x1024xf32>, i32 -> vector<16x1024xf32>
    %172 = arith.truncf %171 : vector<16x1024xf32> to vector<16x1024xbf16>
    %c320_102 = arith.constant 320 : index
    %c0_103 = arith.constant 0 : index
    %173 = vector.load %arg7[%c320_102, %c0_103] : memref<432x1024xbf16, #tpu.memory_space<vmem>>, vector<16x1024xbf16>
    tpu.vector_store %arg7[%c320_102, %c0_103], %172 {strides = array<i32>} : memref<432x1024xbf16, #tpu.memory_space<vmem>>, vector<16x1024xbf16>,
    %c925_i32_104 = arith.constant 925 : i32
    %174 = tpu.dynamic_rotate %111 by %c925_i32_104 dim 1 : vector<16x1024xf32>, i32 -> vector<16x1024xf32>
    %175 = arith.truncf %174 : vector<16x1024xf32> to vector<16x1024xbf16>
    %c336_105 = arith.constant 336 : index
    %c0_106 = arith.constant 0 : index
    %176 = vector.load %arg7[%c336_105, %c0_106] : memref<432x1024xbf16, #tpu.memory_space<vmem>>, vector<16x1024xbf16>
    tpu.vector_store %arg7[%c336_105, %c0_106], %175 {strides = array<i32>} : memref<432x1024xbf16, #tpu.memory_space<vmem>>, vector<16x1024xbf16>,
    %c924_i32_107 = arith.constant 924 : i32
    %177 = tpu.dynamic_rotate %111 by %c924_i32_107 dim 1 : vector<16x1024xf32>, i32 -> vector<16x1024xf32>
    %178 = arith.truncf %177 : vector<16x1024xf32> to vector<16x1024xbf16>
    %c352_108 = arith.constant 352 : index
    %c0_109 = arith.constant 0 : index
    %179 = vector.load %arg7[%c352_108, %c0_109] : memref<432x1024xbf16, #tpu.memory_space<vmem>>, vector<16x1024xbf16>
    tpu.vector_store %arg7[%c352_108, %c0_109], %178 {strides = array<i32>} : memref<432x1024xbf16, #tpu.memory_space<vmem>>, vector<16x1024xbf16>,
    %c923_i32_110 = arith.constant 923 : i32
    %180 = tpu.dynamic_rotate %111 by %c923_i32_110 dim 1 : vector<16x1024xf32>, i32 -> vector<16x1024xf32>
    %181 = arith.truncf %180 : vector<16x1024xf32> to vector<16x1024xbf16>
    %c368_111 = arith.constant 368 : index
    %c0_112 = arith.constant 0 : index
    %182 = vector.load %arg7[%c368_111, %c0_112] : memref<432x1024xbf16, #tpu.memory_space<vmem>>, vector<16x1024xbf16>
    tpu.vector_store %arg7[%c368_111, %c0_112], %181 {strides = array<i32>} : memref<432x1024xbf16, #tpu.memory_space<vmem>>, vector<16x1024xbf16>,
    %c915_i32_113 = arith.constant 915 : i32
    %183 = tpu.dynamic_rotate %111 by %c915_i32_113 dim 1 : vector<16x1024xf32>, i32 -> vector<16x1024xf32>
    %184 = arith.truncf %183 : vector<16x1024xf32> to vector<16x1024xbf16>
    %c384_114 = arith.constant 384 : index
    %c0_115 = arith.constant 0 : index
    %185 = vector.load %arg7[%c384_114, %c0_115] : memref<432x1024xbf16, #tpu.memory_space<vmem>>, vector<16x1024xbf16>
    tpu.vector_store %arg7[%c384_114, %c0_115], %184 {strides = array<i32>} : memref<432x1024xbf16, #tpu.memory_space<vmem>>, vector<16x1024xbf16>,
    %c914_i32_116 = arith.constant 914 : i32
    %186 = tpu.dynamic_rotate %111 by %c914_i32_116 dim 1 : vector<16x1024xf32>, i32 -> vector<16x1024xf32>
    %187 = arith.truncf %186 : vector<16x1024xf32> to vector<16x1024xbf16>
    %c400_117 = arith.constant 400 : index
    %c0_118 = arith.constant 0 : index
    %188 = vector.load %arg7[%c400_117, %c0_118] : memref<432x1024xbf16, #tpu.memory_space<vmem>>, vector<16x1024xbf16>
    tpu.vector_store %arg7[%c400_117, %c0_118], %187 {strides = array<i32>} : memref<432x1024xbf16, #tpu.memory_space<vmem>>, vector<16x1024xbf16>,
    %c913_i32_119 = arith.constant 913 : i32
    %189 = tpu.dynamic_rotate %111 by %c913_i32_119 dim 1 : vector<16x1024xf32>, i32 -> vector<16x1024xf32>
    %190 = arith.truncf %189 : vector<16x1024xf32> to vector<16x1024xbf16>
    %c416_120 = arith.constant 416 : index
    %c0_121 = arith.constant 0 : index
    %191 = vector.load %arg7[%c416_120, %c0_121] : memref<432x1024xbf16, #tpu.memory_space<vmem>>, vector<16x1024xbf16>
    tpu.vector_store %arg7[%c416_120, %c0_121], %190 {strides = array<i32>} : memref<432x1024xbf16, #tpu.memory_space<vmem>>, vector<16x1024xbf16>,
    %c0_122 = arith.constant 0 : index
    %c0_123 = arith.constant 0 : index
    %192 = vector.load %arg3[%c0_122, %c0_123] : memref<16x432xbf16, #tpu.memory_space<vmem>>, vector<16x432xbf16>
    %c0_124 = arith.constant 0 : index
    %c0_125 = arith.constant 0 : index
    %193 = vector.load %arg7[%c0_124, %c0_125] : memref<432x1024xbf16, #tpu.memory_space<vmem>>, vector<432x1024xbf16>
    %cst_126 = arith.constant dense<0.000000e+00> : vector<16x1024xf32>
    %194 = tpu.matmul %192, %193, %cst_126 {dimension_numbers = #tpu.dot_dimension_numbers<[1], [0], [0], [1], [0, 0, 1, 1], [], []>} : vector<16x432xbf16>, vector<432x1024xbf16>, vector<16x1024xf32> -> vector<16x1024xf32>
    %195 = vector.broadcast %0 : vector<1x1024xf32> to vector<16x1024xf32>
    %196 = arith.mulf %194, %195 : vector<16x1024xf32>
    %cst_127 = arith.constant dense<0.000000e+00> : vector<16xf32>
    %197 = vector.multi_reduction <add>, %196, %cst_127 [1] : vector<16x1024xf32> to vector<16xf32>
    %198 = vector.shape_cast %197 : vector<16xf32> to vector<16x1xf32>
    %cst_128 = arith.constant 0.001953125 : f32
    %199 = vector.broadcast %cst_128 : f32 to vector<16x1xf32>
    %200 = arith.mulf %198, %199 : vector<16x1xf32>
    %201 = arith.mulf %196, %196 : vector<16x1024xf32>
    %cst_129 = arith.constant dense<0.000000e+00> : vector<16xf32>
    %202 = vector.multi_reduction <add>, %201, %cst_129 [1] : vector<16x1024xf32> to vector<16xf32>
    %203 = vector.shape_cast %202 : vector<16xf32> to vector<16x1xf32>
    %cst_130 = arith.constant 0.001953125 : f32
    %204 = vector.broadcast %cst_130 : f32 to vector<16x1xf32>
    %205 = arith.mulf %203, %204 : vector<16x1xf32>
    %206 = arith.mulf %200, %200 : vector<16x1xf32>
    %207 = arith.subf %205, %206 : vector<16x1xf32>
    %208 = vector.broadcast %200 : vector<16x1xf32> to vector<16x1024xf32>
    %209 = arith.subf %194, %208 : vector<16x1024xf32>
    %cst_131 = arith.constant 9.99999974E-6 : f32
    %210 = vector.broadcast %cst_131 : f32 to vector<16x1xf32>
    %211 = arith.addf %207, %210 : vector<16x1xf32>
    %212 = math.rsqrt %211 : vector<16x1xf32>
    %213 = vector.broadcast %212 : vector<16x1xf32> to vector<16x1024xf32>
    %214 = arith.mulf %209, %213 : vector<16x1024xf32>
    %cst_132 = arith.constant 0.00999999977 : f32
    %215 = vector.broadcast %cst_132 : f32 to vector<16x1024xf32>
    %216 = arith.mulf %215, %214 : vector<16x1024xf32>
    %217 = arith.maximumf %214, %216 : vector<16x1024xf32>
    %218 = vector.broadcast %0 : vector<1x1024xf32> to vector<16x1024xf32>
    %219 = arith.mulf %217, %218 : vector<16x1024xf32>
    %220 = arith.truncf %219 : vector<16x1024xf32> to vector<16x1024xbf16>
    %c0_133 = arith.constant 0 : index
    %c0_134 = arith.constant 0 : index
    %c0_135 = arith.constant 0 : index
    %221 = vector.load %arg5[%c0_133, %c0_134, %c0_135] : memref<1x16x1024xbf16, #tpu.memory_space<vmem>>, vector<1x16x1024xbf16>
    %222 = vector.shape_cast %221 : vector<1x16x1024xbf16> to vector<16x1024xbf16>
    %223 = vector.shape_cast %220 : vector<16x1024xbf16> to vector<1x16x1024xbf16>
    tpu.vector_store %arg5[%c0_133, %c0_134, %c0_135], %223 {strides = array<i32>} : memref<1x16x1024xbf16, #tpu.memory_space<vmem>>, vector<1x16x1024xbf16>,
    return
  }
  func.func @transform_0(%arg0: i32) -> (i32, i32, i32) {
    %c0_i32 = arith.constant 0 : i32
    %c0_i32_0 = arith.constant 0 : i32
    %c0_i32_1 = arith.constant 0 : i32
    return %arg0, %c0_i32, %c0_i32_0 : i32, i32, i32
  }
  func.func @transform_1(%arg0: i32) -> (i32, i32) {
    %c0_i32 = arith.constant 0 : i32
    %c0_i32_0 = arith.constant 0 : i32
    %c0_i32_1 = arith.constant 0 : i32
    return %c0_i32, %c0_i32_0 : i32, i32
  }
  func.func @transform_2(%arg0: i32) -> (i32, i32) {
    %c0_i32 = arith.constant 0 : i32
    %c0_i32_0 = arith.constant 0 : i32
    %c0_i32_1 = arith.constant 0 : i32
    return %c0_i32, %c0_i32_0 : i32, i32
  }
  func.func @transform_3(%arg0: i32) -> (i32, i32) {
    %c0_i32 = arith.constant 0 : i32
    %c0_i32_0 = arith.constant 0 : i32
    %c0_i32_1 = arith.constant 0 : i32
    return %c0_i32, %c0_i32_0 : i32, i32
  }
  func.func @transform_4(%arg0: i32) -> (i32, i32, i32) {
    %c0_i32 = arith.constant 0 : i32
    %c0_i32_0 = arith.constant 0 : i32
    %c0_i32_1 = arith.constant 0 : i32
    return %arg0, %c0_i32, %c0_i32_0 : i32, i32, i32
  }
}

</mosaic_0001>

<llo_original>
// kernel: tile.9
$region0: #{tile.9}
  %s0 = inlined_call_operand.vmem [shape: f32[8,8], index: 0, kind: input, shape index: {}]
  %s1 = inlined_call_operand.vmem [shape: f32[1,64], index: 1, kind: output, shape index: {}]
  $region1: #{tile.9} parent=0
    #allocation0 [shape = 'u8[4096]{0}', space=vmem, size = 0x1000, scoped, tag = 'scoped mem for output reshape']
    %v2 = vld [vmem:[%s0] sm:$0x1]
    %vm3 = vcmask 64512
    %4 = vst.msk [vmem:[#allocation0] sm:$0x1] %vm3, %v2
    %s5 = scalar_lea.vmem %s0, 7
    %v6 = vld [vmem:[%s5] sm:$0x1]
    %7 = vrot.lane.b32.xlu0 %v6, 56
    %v8 = vpop.permute.xlu0 %7
    %vm9 = vcmask 523712
    %10 = vst.msk [vmem:[#allocation0] sm:$0x1] %vm9, %v8
    %s11 = scalar_lea.vmem %s0, 6
    %v12 = vld [vmem:[%s11] sm:$0x1]
    %13 = vrot.lane.b32.xlu0 %v12, 48
    %v14 = vpop.permute.xlu0 %13
    %vm15 = vcmask 458112
    %16 = vst.msk [vmem:[#allocation0] sm:$0x1] %vm15, %v14
    %s17 = scalar_lea.vmem %s0, 5
    %v18 = vld [vmem:[%s17] sm:$0x1]
    %19 = vrot.lane.b32.xlu0 %v18, 40
    %v20 = vpop.permute.xlu0 %19
    %vm21 = vcmask 392512
    %22 = vst.msk [vmem:[#allocation0] sm:$0x1] %vm21, %v20
    %s23 = scalar_lea.vmem %s0, 4
    %v24 = vld [vmem:[%s23] sm:$0x1]
    %25 = vrot.lane.b32.xlu0 %v24, 32
    %v26 = vpop.permute.xlu0 %25
    %vm27 = vcmask 326912
    %28 = vst.msk [vmem:[#allocation0] sm:$0x1] %vm27, %v26
    %s29 = scalar_lea.vmem %s0, 3
    %v30 = vld [vmem:[%s29] sm:$0x1]
    %31 = vrot.lane.b32.xlu0 %v30, 24
    %v32 = vpop.permute.xlu0 %31
    %vm33 = vcmask 261312
    %34 = vst.msk [vmem:[#allocation0] sm:$0x1] %vm33, %v32
    %s35 = scalar_lea.vmem %s0, 2
    %v36 = vld [vmem:[%s35] sm:$0x1]
    %37 = vrot.lane.b32.xlu0 %v36, 16
    %v38 = vpop.permute.xlu0 %37
    %vm39 = vcmask 195712
    %40 = vst.msk [vmem:[#allocation0] sm:$0x1] %vm39, %v38
    %s41 = scalar_lea.vmem %s0, 1
    %v42 = vld [vmem:[%s41] sm:$0x1]
    %43 = vrot.lane.b32.xlu0 %v42, 8
    %v44 = vpop.permute.xlu0 %43
    %vm45 = vcmask 130112
    %46 = vst.msk [vmem:[#allocation0] sm:$0x1] %vm45, %v44
    %s48 = sshllo.u32 0, 1
    %v50 = vld [vmem:[#allocation0] sm:%s48]
    %s51 = sshllo.u32 0, 1
    %52 = vst [vmem:[%s1] sm:%s51] %v50

// kernel: tile.8
$region0: #{tile.8}
  #allocation0 [shape = 's32[1]{0}', space=sflag, size = 0x4, scoped, tag = 'scoped memory for tile.8']
  %s0 = inlined_call_operand.vmem [shape: f32[8], index: 0, kind: input, shape index: {}]
  %s1 = inlined_call_operand.vmem [shape: f32[8,8], index: 1, kind: output, shape index: {}]
  // Predicated region
  $region2: #{tile.8} parent=0 // pred_check
    _
  $region3: #{tile.8} parent=0 // pred_check_branch
    %3 = sbr.rel (0) target = $region5
  $region4: #{tile.8} parent=0 // pred_region
    _
  $region5: #{tile.8} parent=0 // pred_fallthru
    _
  %v4 = vld [vmem:[%s0] ss:$0 sm:$0xff]
  %5 = vst [vmem:[%s1] sm:$0xff] %v4

// kernel: up_forward.2
$region0: #{up_forward.2}
  #allocation0 [shape = 'u32[]', space=smem, size = 0x4, offset = 0x4, fixed_abs, tag = 'smem constant byte address 0x4 - core index']
  #allocation1 [shape = 'u32[144,128]{1,0:T(1,128)}', space=vmem, size = 0x12000, scoped, tag = 'internal scratch']
  %s0 = inlined_call_operand.vmem [shape: f32[128,16], index: 0, kind: input, shape index: {}]
  %s1 = inlined_call_operand.vmem [shape: f32[16,64], index: 1, kind: input, shape index: {}]
  %s2 = inlined_call_operand.vmem [shape: f32[1,64], index: 2, kind: input, shape index: {}]
  %s3 = inlined_call_operand.vmem [shape: f32[128,64], index: 3, kind: output, shape index: {}]
  %s4 = sld [smem:[#allocation0]]
  $region22: #{up_forward.2} parent=0
    _
  %s6 = ssub.s32 1, %s4
  %s7 = scalar_select 0, %s6, %s4
  // Predicated region
  $region2: #{up_forward.2} parent=0 // pred_check
    _
  $region3: #{up_forward.2} parent=0 // pred_check_branch
    %9 = sbr.rel (0) target = $region5
  $region4: #{up_forward.2} parent=0 // pred_region
    _
  $region5: #{up_forward.2} parent=0 // pred_fallthru
    _
  // Predicated region
  $region6: #{up_forward.2} parent=0 // pred_check
    _
  $region7: #{up_forward.2} parent=0 // pred_check_branch
    %11 = sbr.rel (0) target = $region9
  $region8: #{up_forward.2} parent=0 // pred_region
    _
  $region9: #{up_forward.2} parent=0 // pred_fallthru
    _
  // Predicated region
  $region10: #{up_forward.2} parent=0 // pred_check
    _
  $region11: #{up_forward.2} parent=0 // pred_check_branch
    %13 = sbr.rel (0) target = $region13
  $region12: #{up_forward.2} parent=0 // pred_region
    _
  $region13: #{up_forward.2} parent=0 // pred_fallthru
    _
  %v14 = vld [vmem:[%s0] sm:$0xff]
  %v15 = vld [vmem:[%s0 + $0x8] sm:$0xff]
  %v16 = vld [vmem:[%s0 + $0x10] sm:$0xff]
  %v17 = vld [vmem:[%s0 + $0x18] sm:$0xff]
  %v18 = vld [vmem:[%s0 + $0x20] sm:$0xff]
  %v19 = vld [vmem:[%s0 + $0x28] sm:$0xff]
  %v20 = vld [vmem:[%s0 + $0x30] sm:$0xff]
  %v21 = vld [vmem:[%s0 + $0x38] sm:$0xff]
  %v22 = vld [vmem:[%s0 + $0x40] sm:$0xff]
  %v23 = vld [vmem:[%s0 + $0x48] sm:$0xff]
  %v24 = vld [vmem:[%s0 + $0x50] sm:$0xff]
  %v25 = vld [vmem:[%s0 + $0x58] sm:$0xff]
  %v26 = vld [vmem:[%s0 + $0x60] sm:$0xff]
  %v27 = vld [vmem:[%s0 + $0x68] sm:$0xff]
  %v28 = vld [vmem:[%s0 + $0x70] sm:$0xff]
  %v29 = vld [vmem:[%s0 + $0x78] sm:$0xff]
  %v30 = vld [vmem:[%s1] sm:$0xff]
  %v31 = vld [vmem:[%s1 + $0x8] sm:$0xff]
  %v32 = vld [vmem:[%s2] sm:$0x1]
  %v34 = vlaneseq
  %v35 = vshrl.u32 %v34, 7
  %v36 = vsub.s32 0, %v35
  %v37 = vrot.slane %v32, %v36
  %vm39 = vcmask 130048
  %v41 = vsel %vm39, %v14, 0
  %v44 = vsel %vm39, %v15, 0
  %v47 = vsel %vm39, %v16, 0
  %v50 = vsel %vm39, %v17, 0
  %v53 = vsel %vm39, %v18, 0
  %v56 = vsel %vm39, %v19, 0
  %v59 = vsel %vm39, %v20, 0
  %v62 = vsel %vm39, %v21, 0
  %v65 = vsel %vm39, %v22, 0
  %v68 = vsel %vm39, %v23, 0
  %v71 = vsel %vm39, %v24, 0
  %v74 = vsel %vm39, %v25, 0
  %v77 = vsel %vm39, %v26, 0
  %v80 = vsel %vm39, %v27, 0
  %v83 = vsel %vm39, %v28, 0
  %v86 = vsel %vm39, %v29, 0
  %88 = vmatprep.subr.mxu0 0.0
  %89 = vmatpush1.msra.mxu0 %v30
  %90 = vmatprep.subr.mxu0 0.0
  %91 = vmatpush1.msra.mxu0 %v31
  %92 = vmatprep.subr.mxu0 0.0
  %93 = vmatpush1.msra.mxu0 0.0
  %94 = vmatprep.subr.mxu0 0.0
  %95 = vmatpush1.msra.mxu0 0.0
  %96 = vmatprep.subr.mxu0 0.0
  %97 = vmatpush1.msra.mxu0 0.0
  %98 = vmatprep.subr.mxu0 0.0
  %99 = vmatpush1.msra.mxu0 0.0
  %100 = vmatprep.subr.mxu0 0.0
  %101 = vmatpush1.msra.mxu0 0.0
  %102 = vmatprep.subr.mxu0 0.0
  %103 = vmatpush1.msra.mxu0 0.0
  %104 = vmatprep.subr.mxu0 0.0
  %105 = vmatpush1.msra.mxu0 0.0
  %106 = vmatprep.subr.mxu0 0.0
  %107 = vmatpush1.msra.mxu0 0.0
  %108 = vmatprep.subr.mxu0 0.0
  %109 = vmatpush1.msra.mxu0 0.0
  %110 = vmatprep.subr.mxu0 0.0
  %111 = vmatpush1.msra.mxu0 0.0
  %112 = vmatprep.subr.mxu0 0.0
  %113 = vmatpush1.msra.mxu0 0.0
  %114 = vmatprep.subr.mxu0 0.0
  %115 = vmatpush1.msra.mxu0 0.0
  %116 = vmatprep.subr.mxu0 0.0
  %117 = vmatpush1.msra.mxu0 0.0
  %118 = vmatprep.subr.mxu0 0.0
  %119 = vmatpush1.msra.mxu0 0.0
  %120 = vmatprep.subr.mxu0 0.0
  %121 = vmatpush1.msra.mxu0 0.0
  %122 = vmatprep.subr.mxu0 0.0
  %123 = vmatpush1.msra.mxu0 0.0
  %124 = vmatprep.subr.mxu0 0.0
  %125 = vmatpush1.msra.mxu0 0.0
  %126 = vmatprep.subr.mxu0 0.0
  %127 = vmatpush1.msra.mxu0 0.0
  %128 = vmatprep.subr.mxu0 0.0
  %129 = vmatpush1.msra.mxu0 0.0
  %130 = vmatprep.subr.mxu0 0.0
  %131 = vmatpush1.msra.mxu0 0.0
  %132 = vmatprep.subr.mxu0 0.0
  %133 = vmatpush1.msra.mxu0 0.0
  %134 = vmatprep.subr.mxu0 0.0
  %135 = vmatpush1.msra.mxu0 0.0
  %136 = vmatprep.subr.mxu0 0.0
  %137 = vmatpush1.msra.mxu0 0.0
  %138 = vmatprep.subr.mxu0 0.0
  %139 = vmatpush1.msra.mxu0 0.0
  %140 = vmatprep.subr.mxu0 0.0
  %141 = vmatpush1.msra.mxu0 0.0
  %142 = vmatprep.subr.mxu0 0.0
  %143 = vmatpush1.msra.mxu0 0.0
  %144 = vmatprep.subr.mxu0 0.0
  %145 = vmatpush1.msra.mxu0 0.0
  %146 = vmatprep.subr.mxu0 0.0
  %147 = vmatpush1.msra.mxu0 0.0
  %148 = vmatprep.subr.mxu0 0.0
  %149 = vmatpush1.msra.mxu0 0.0
  %150 = vmatprep.subr.mxu0 0.0
  %151 = vmatpush1.msra.mxu0 0.0
  %152 = vmatprep.mubr.f32.mxu0 0.0
  %153 = vmatmul.mubr.f32.gmra.mrb[0].mxu0 %v41
  %v154 = vpop.f32.mrb[0].mxu0
  %v155 = vadd.f32 %v37, %v154
  %v156 = vpop.f32.mrb[0].mxu0
  %157 = vmatprep.mubr.f32.mxu0 0.0
  %158 = vmatmul.mubr.f32.gmra.mrb[0].mxu0 %v44
  %v159 = vpop.f32.mrb[0].mxu0
  %v160 = vadd.f32 %v37, %v159
  %v161 = vpop.f32.mrb[0].mxu0
  %162 = vmatprep.mubr.f32.mxu0 0.0
  %163 = vmatmul.mubr.f32.gmra.mrb[0].mxu0 %v47
  %v164 = vpop.f32.mrb[0].mxu0
  %v165 = vadd.f32 %v37, %v164
  %v166 = vpop.f32.mrb[0].mxu0
  %167 = vmatprep.mubr.f32.mxu0 0.0
  %168 = vmatmul.mubr.f32.gmra.mrb[0].mxu0 %v50
  %v169 = vpop.f32.mrb[0].mxu0
  %v170 = vadd.f32 %v37, %v169
  %v171 = vpop.f32.mrb[0].mxu0
  %172 = vmatprep.mubr.f32.mxu0 0.0
  %173 = vmatmul.mubr.f32.gmra.mrb[0].mxu0 %v53
  %v174 = vpop.f32.mrb[0].mxu0
  %v175 = vadd.f32 %v37, %v174
  %v176 = vpop.f32.mrb[0].mxu0
  %177 = vmatprep.mubr.f32.mxu0 0.0
  %178 = vmatmul.mubr.f32.gmra.mrb[0].mxu0 %v56
  %v179 = vpop.f32.mrb[0].mxu0
  %v180 = vadd.f32 %v37, %v179
  %v181 = vpop.f32.mrb[0].mxu0
  %182 = vmatprep.mubr.f32.mxu0 0.0
  %183 = vmatmul.mubr.f32.gmra.mrb[0].mxu0 %v59
  %v184 = vpop.f32.mrb[0].mxu0
  %v185 = vadd.f32 %v37, %v184
  %v186 = vpop.f32.mrb[0].mxu0
  %187 = vmatprep.mubr.f32.mxu0 0.0
  %188 = vmatmul.mubr.f32.gmra.mrb[0].mxu0 %v62
  %v189 = vpop.f32.mrb[0].mxu0
  %v190 = vadd.f32 %v37, %v189
  %v191 = vpop.f32.mrb[0].mxu0
  %192 = vmatprep.mubr.f32.mxu0 0.0
  %193 = vmatmul.mubr.f32.gmra.mrb[0].mxu0 %v65
  %v194 = vpop.f32.mrb[0].mxu0
  %v195 = vadd.f32 %v37, %v194
  %v196 = vpop.f32.mrb[0].mxu0
  %197 = vmatprep.mubr.f32.mxu0 0.0
  %198 = vmatmul.mubr.f32.gmra.mrb[0].mxu0 %v68
  %v199 = vpop.f32.mrb[0].mxu0
  %v200 = vadd.f32 %v37, %v199
  %v201 = vpop.f32.mrb[0].mxu0
  %202 = vmatprep.mubr.f32.mxu0 0.0
  %203 = vmatmul.mubr.f32.gmra.mrb[0].mxu0 %v71
  %v204 = vpop.f32.mrb[0].mxu0
  %v205 = vadd.f32 %v37, %v204
  %v206 = vpop.f32.mrb[0].mxu0
  %207 = vmatprep.mubr.f32.mxu0 0.0
  %208 = vmatmul.mubr.f32.gmra.mrb[0].mxu0 %v74
  %v209 = vpop.f32.mrb[0].mxu0
  %v210 = vadd.f32 %v37, %v209
  %v211 = vpop.f32.mrb[0].mxu0
  %212 = vmatprep.mubr.f32.mxu0 0.0
  %213 = vmatmul.mubr.f32.gmra.mrb[0].mxu0 %v77
  %v214 = vpop.f32.mrb[0].mxu0
  %v215 = vadd.f32 %v37, %v214
  %v216 = vpop.f32.mrb[0].mxu0
  %217 = vmatprep.mubr.f32.mxu0 0.0
  %218 = vmatmul.mubr.f32.gmra.mrb[0].mxu0 %v80
  %v219 = vpop.f32.mrb[0].mxu0
  %v220 = vadd.f32 %v37, %v219
  %v221 = vpop.f32.mrb[0].mxu0
  %222 = vmatprep.mubr.f32.mxu0 0.0
  %223 = vmatmul.mubr.f32.gmra.mrb[0].mxu0 %v83
  %v224 = vpop.f32.mrb[0].mxu0
  %v225 = vadd.f32 %v37, %v224
  %v226 = vpop.f32.mrb[0].mxu0
  %227 = vmatprep.mubr.f32.mxu0 0.0
  %228 = vmatmul.mubr.f32.gmra.mrb[0].mxu0 %v86
  %v229 = vpop.f32.mrb[0].mxu0
  %v230 = vadd.f32 %v37, %v229
  %v231 = vpop.f32.mrb[0].mxu0
  %232 = vdwg.mxu0
  %vm233 = vcmask 523264
  %234 = vst.msk [vmem:[%s3] sm:$0xff] %vm233, %v155
  %235 = vst.msk [vmem:[%s3 + $0x8] sm:$0xff] %vm233, %v160
  %236 = vst.msk [vmem:[%s3 + $0x10] sm:$0xff] %vm233, %v165
  %237 = vst.msk [vmem:[%s3 + $0x18] sm:$0xff] %vm233, %v170
  %238 = vst.msk [vmem:[%s3 + $0x20] sm:$0xff] %vm233, %v175
  %239 = vst.msk [vmem:[%s3 + $0x28] sm:$0xff] %vm233, %v180
  %240 = vst.msk [vmem:[%s3 + $0x30] sm:$0xff] %vm233, %v185
  %241 = vst.msk [vmem:[%s3 + $0x38] sm:$0xff] %vm233, %v190
  %242 = vst.msk [vmem:[%s3 + $0x40] sm:$0xff] %vm233, %v195
  %243 = vst.msk [vmem:[%s3 + $0x48] sm:$0xff] %vm233, %v200
  %244 = vst.msk [vmem:[%s3 + $0x50] sm:$0xff] %vm233, %v205
  %245 = vst.msk [vmem:[%s3 + $0x58] sm:$0xff] %vm233, %v210
  %246 = vst.msk [vmem:[%s3 + $0x60] sm:$0xff] %vm233, %v215
  %247 = vst.msk [vmem:[%s3 + $0x68] sm:$0xff] %vm233, %v220
  %248 = vst.msk [vmem:[%s3 + $0x70] sm:$0xff] %vm233, %v225
  %249 = vst.msk [vmem:[%s3 + $0x78] sm:$0xff] %vm233, %v230
  // Predicated region
  $region14: #{up_forward.2} parent=0 // pred_check
    _
  $region15: #{up_forward.2} parent=0 // pred_check_branch
    %251 = sbr.rel (0) target = $region17
  $region16: #{up_forward.2} parent=0 // pred_region
    _
  $region17: #{up_forward.2} parent=0 // pred_fallthru
    _
  // Predicated region
  $region18: #{up_forward.2} parent=0 // pred_check
    _
  $region19: #{up_forward.2} parent=0 // pred_check_branch
    %253 = sbr.rel (0) target = $region21
  $region20: #{up_forward.2} parent=0 // pred_region
    _
  $region21: #{up_forward.2} parent=0 // pred_fallthru
    _

// kernel: up_forward.3
$region0: #{up_forward.3}
  #allocation0 [shape = 'u32[]', space=smem, size = 0x4, offset = 0x4, fixed_abs, tag = 'smem constant byte address 0x4 - core index']
  #allocation1 [shape = 'u32[144,128]{1,0:T(1,128)}', space=vmem, size = 0x12000, scoped, tag = 'internal scratch']
  #allocation2 [shape = 'bf16[432,1024]{1,0:T(16,128)(2,1)}', space=vmem, size = 0xd8000, scoped, tag = 'scratch operand']
  #allocation3 [shape = 'bf16[432,1024]{1,0:T(16,128)(2,1)}', space=vmem, size = 0xd8000, scoped, tag = 'scratch operand']
  %s0 = inlined_call_operand.hbm [shape: bf16[2,16,1024], index: 0, kind: input, shape index: {}]
  %s1 = inlined_call_operand.hbm [shape: bf16[16,432], index: 1, kind: input, shape index: {}]
  %s2 = inlined_call_operand.hbm [shape: bf16[16,432], index: 2, kind: input, shape index: {}]
  %s3 = inlined_call_operand.hbm [shape: f32[1,1024], index: 3, kind: input, shape index: {}]
  %s4 = inlined_call_operand.hbm [shape: bf16[2,16,1024], index: 4, kind: output, shape index: {}]
  %s5 = sld [smem:[#allocation0]]
  $region65: #{up_forward.3} parent=0
    _
  %s7 = ssub.s32 1, %s5
  %s8 = scalar_select 0, %s7, %s5
  $region1: #{up_forward.3} parent=0
    #allocation4 [shape = 'u8[65536]{0}', space=vmem, size = 0x10000, scoped, tag = 'input window, operand 0']
    #allocation5 [shape = 's32[2]{0}', space=sflag, size = 0x8, scoped, tag = 'scoped memory for up_forward.3']
    #allocation6 [shape = 's32[2]{0}', space=sflag, size = 0x8, scoped, tag = 'scoped memory for up_forward.3']
    #allocation7 [shape = 'u8[16384]{0}', space=vmem, size = 0x4000, scoped, tag = 'input window, operand 1, single buffered']
    #allocation8 [shape = 's32[1]{0}', space=sflag, size = 0x4, scoped, tag = 'scoped memory for up_forward.3']
    #allocation9 [shape = 'u8[16384]{0}', space=vmem, size = 0x4000, scoped, tag = 'input window, operand 2, single buffered']
    #allocation10 [shape = 'u8[4096]{0}', space=vmem, size = 0x1000, scoped, tag = 'input window, operand 3, single buffered']
    #allocation11 [shape = 's32[1]{0}', space=sflag, size = 0x4, scoped, tag = 'scoped memory for up_forward.3']
    #allocation12 [shape = 'u8[65536]{0}', space=vmem, size = 0x10000, scoped, tag = 'output window, operand 0']
    %9 = vsyncpa [#allocation5], 0
    %s10 = scalar_lea.sflag [#allocation5], 1
    %11 = vsyncpa %s10, 0
    %12 = vsyncpa [#allocation8], 0
    %13 = vsyncpa [#allocation11], 0
    %14 = vsyncpa [#allocation6], 0
    %s15 = scalar_lea.sflag [#allocation6], 1
    %16 = vsyncpa %s15, 0
    loop: start=0, step=1, limit=4
    $region2: #{up_forward.3} parent=1 // loop_pre_header
      _
    $region3: #{up_forward.3} parent=1 // loop_header
      %s18 = sphi 0, %s22
      %p19 = scmp.ge.s32.totalorder %s18, 4
      %s28 = sphi 0, %s30
      %s31 = sphi 0, %s28
      %s32 = sphi 0, %s31
      %s48 = sphi 0, %s32
      %s52 = sphi 0, %s52
      %s54 = sphi 0, %s52
      %s55 = sphi 0, %s54
      %s69 = sphi 0, %s55
      %s73 = sphi 0, %s73
      %s75 = sphi 0, %s73
      %s76 = sphi 0, %s75
      %s90 = sphi 0, %s76
      %s94 = sphi 0, %s94
      %s96 = sphi 0, %s94
      %s97 = sphi 0, %s96
      %s111 = sphi 0, %s97
      %s117 = sphi 0, %s119
      %s120 = sphi 0, %s117
      %s121 = sphi 0, %s120
      %s137 = sphi 0, %s121
    $region4: #{up_forward.3} parent=1 // loop_header_branch
      %21 = sbr.rel (%p19) target = $region8
    $region5: #{up_forward.3} parent=1 // loop_body
      %s23 = ssub.s32 %s18, 1
      %s24 = ssub.s32 %s18, 2
      %s25 = sadd.s32 %s18, 1
      %s26 = ssub.s32 %s18, %s25
      %p27 = scmp.eq.s32.totalorder %s26, 0
      %s29 = sadd.s32 %s28, 1
      %s30 = scalar_select %p27, %s28, %s29
      %p33 = pneg %p27
      %p34 = scmp.eq.s32.totalorder %s18, 1
      %p35 = por %p33, %p34
      %p36 = scmp.ne.s32.totalorder %s28, %s31
      %p37 = scmp.eq.s32.totalorder %s18, 0
      %p38 = por %p36, %p37
      %p39 = scmp.ne.s32.totalorder %s28, %s31
      %p40 = scmp.eq.s32.totalorder %s23, 1
      %p41 = por %p39, %p40
      %p42 = scmp.ne.s32.totalorder %s31, %s32
      %p43 = scmp.eq.s32.totalorder %s23, 0
      %p44 = por %p42, %p43
      %p45 = scmp.ne.s32.totalorder %s31, %s32
      %p46 = scmp.eq.s32.totalorder %s24, 1
      %p47 = por %p45, %p46
      %p49 = scmp.ne.s32.totalorder %s32, %s48
      %p50 = scmp.eq.s32.totalorder %s24, 0
      %p51 = por %p49, %p50
      %s53 = sadd.s32 %s52, 1
      %p56 = scmp.eq.s32.totalorder %s18, 1
      %p57 = scmp.ne.s32.totalorder %s52, %s54
      %p58 = scmp.eq.s32.totalorder %s18, 0
      %p59 = por %p57, %p58
      %p60 = scmp.ne.s32.totalorder %s52, %s54
      %p61 = scmp.eq.s32.totalorder %s23, 1
      %p62 = por %p60, %p61
      %p63 = scmp.ne.s32.totalorder %s54, %s55
      %p64 = scmp.eq.s32.totalorder %s23, 0
      %p65 = por %p63, %p64
      %p66 = scmp.ne.s32.totalorder %s54, %s55
      %p67 = scmp.eq.s32.totalorder %s24, 1
      %p68 = por %p66, %p67
      %p70 = scmp.ne.s32.totalorder %s55, %s69
      %p71 = scmp.eq.s32.totalorder %s24, 0
      %p72 = por %p70, %p71
      %s74 = sadd.s32 %s73, 1
      %p77 = scmp.eq.s32.totalorder %s18, 1
      %p78 = scmp.ne.s32.totalorder %s73, %s75
      %p79 = scmp.eq.s32.totalorder %s18, 0
      %p80 = por %p78, %p79
      %p81 = scmp.ne.s32.totalorder %s73, %s75
      %p82 = scmp.eq.s32.totalorder %s23, 1
      %p83 = por %p81, %p82
      %p84 = scmp.ne.s32.totalorder %s75, %s76
      %p85 = scmp.eq.s32.totalorder %s23, 0
      %p86 = por %p84, %p85
      %p87 = scmp.ne.s32.totalorder %s75, %s76
      %p88 = scmp.eq.s32.totalorder %s24, 1
      %p89 = por %p87, %p88
      %p91 = scmp.ne.s32.totalorder %s76, %s90
      %p92 = scmp.eq.s32.totalorder %s24, 0
      %p93 = por %p91, %p92
      %s95 = sadd.s32 %s94, 1
      %p98 = scmp.eq.s32.totalorder %s18, 1
      %p99 = scmp.ne.s32.totalorder %s94, %s96
      %p100 = scmp.eq.s32.totalorder %s18, 0
      %p101 = por %p99, %p100
      %p102 = scmp.ne.s32.totalorder %s94, %s96
      %p103 = scmp.eq.s32.totalorder %s23, 1
      %p104 = por %p102, %p103
      %p105 = scmp.ne.s32.totalorder %s96, %s97
      %p106 = scmp.eq.s32.totalorder %s23, 0
      %p107 = por %p105, %p106
      %p108 = scmp.ne.s32.totalorder %s96, %s97
      %p109 = scmp.eq.s32.totalorder %s24, 1
      %p110 = por %p108, %p109
      %p112 = scmp.ne.s32.totalorder %s97, %s111
      %p113 = scmp.eq.s32.totalorder %s24, 0
      %p114 = por %p112, %p113
      %s115 = ssub.s32 %s18, %s25
      %p116 = scmp.eq.s32.totalorder %s115, 0
      %s118 = sadd.s32 %s117, 1
      %s119 = scalar_select %p116, %s117, %s118
      %p122 = pneg %p116
      %p123 = scmp.eq.s32.totalorder %s18, 1
      %p124 = por %p122, %p123
      %p125 = scmp.ne.s32.totalorder %s117, %s120
      %p126 = scmp.eq.s32.totalorder %s18, 0
      %p127 = por %p125, %p126
      %p128 = scmp.ne.s32.totalorder %s117, %s120
      %p129 = scmp.eq.s32.totalorder %s23, 1
      %p130 = por %p128, %p129
      %p131 = scmp.ne.s32.totalorder %s120, %s121
      %p132 = scmp.eq.s32.totalorder %s23, 0
      %p133 = por %p131, %p132
      %p134 = scmp.ne.s32.totalorder %s120, %s121
      %p135 = scmp.eq.s32.totalorder %s24, 1
      %p136 = por %p134, %p135
      %p138 = scmp.ne.s32.totalorder %s121, %s137
      %p139 = scmp.eq.s32.totalorder %s24, 0
      %p140 = por %p138, %p139
      %p141 = scmp.le.s32.totalorder 1, %s18
      %p142 = scmp.lt.s32.totalorder %s18, 3
      %p143 = pnand %p141, %p142
      %p144 = pneg %p143
      // Predicated region
      $region9: #{up_forward.3} parent=5 // pred_check
        _
      $region10: #{up_forward.3} parent=5 // pred_check_branch
        %146 = sbr.rel (%p143) target = $region12
      $region11: #{up_forward.3} parent=5 // pred_region
        %s147 = ssub.s32 %s18, 1
        // Predicated region
        $region13: #{up_forward.3} parent=11 // pred_check
          %p148 = pneg %p65
        $region14: #{up_forward.3} parent=11 // pred_check_branch
          %150 = sbr.rel (%p148) target = $region16
        $region15: #{up_forward.3} parent=11 // pred_region
          %s152 = ssub.s32 512, 512
          %153 = vsyncadd [#allocation8], %s152
          %s154 = sshll.u32 [#allocation7], 4
          %s155 = int_to_ptr.vmem [resolvable:$true] %s154
          %160 = dma.hbm_to_vmem [thread:$0]  %s1, 512, %s155, [#allocation8], 256, 256, 16
        $region16: #{up_forward.3} parent=11 // pred_fallthru
          _
        // Predicated region
        $region17: #{up_forward.3} parent=11 // pred_check
          %p161 = pneg %p86
        $region18: #{up_forward.3} parent=11 // pred_check_branch
          %163 = sbr.rel (%p161) target = $region20
        $region19: #{up_forward.3} parent=11 // pred_region
          %s165 = ssub.s32 512, 512
          %166 = vsyncadd [#allocation8], %s165
          %s167 = sshll.u32 [#allocation9], 4
          %s168 = int_to_ptr.vmem [resolvable:$true] %s167
          %173 = dma.hbm_to_vmem [thread:$0]  %s2, 512, %s168, [#allocation8], 256, 256, 16
        $region20: #{up_forward.3} parent=11 // pred_fallthru
          _
        // Predicated region
        $region21: #{up_forward.3} parent=11 // pred_check
          %p174 = pneg %p107
        $region22: #{up_forward.3} parent=11 // pred_check_branch
          %176 = sbr.rel (%p174) target = $region24
        $region23: #{up_forward.3} parent=11 // pred_region
          %s178 = ssub.s32 128, 128
          %179 = vsyncadd [#allocation11], %s178
          %s181 = sshll.u32 [#allocation10], 4
          %s182 = int_to_ptr.vmem [resolvable:$true] %s181
          %184 = dma.hbm_to_vmem [thread:$0]  %s3, 128, %s182, [#allocation11]
        $region24: #{up_forward.3} parent=11 // pred_fallthru
          _
      $region12: #{up_forward.3} parent=5 // pred_fallthru
        _
      %p185 = scmp.lt.s32.totalorder %s18, 2
      // Predicated region
      $region25: #{up_forward.3} parent=5 // pred_check
        %p186 = pneg %p185
      $region26: #{up_forward.3} parent=5 // pred_check_branch
        %188 = sbr.rel (%p186) target = $region28
      $region27: #{up_forward.3} parent=5 // pred_region
        // Predicated region
        $region29: #{up_forward.3} parent=27 // pred_check
          %p189 = pneg %p38
        $region30: #{up_forward.3} parent=27 // pred_check_branch
          %191 = sbr.rel (%p189) target = $region32
        $region31: #{up_forward.3} parent=27 // pred_region
          %s192 = sand.u32 %s28, 1
          %s193 = scalar_lea.sflag [#allocation5], %s192
          %s194 = sand.u32 %s28, 1
          %s195 = smul.addr %s194, 64
          %s196 = scalar_lea.vmem [#allocation4], %s195
          %s198 = ssub.s32 1024, 1024
          %199 = vsyncadd %s193, %s198
          %s200 = smul.addr %s18, 16
          %s201 = smul.addr %s200, 64
          %s202 = scalar_lea.hbm %s0, %s201
          %s203 = sshll.u32 %s196, 4
          %s204 = int_to_ptr.vmem [resolvable:$true] %s203
          %209 = dma.hbm_to_vmem [thread:$0]  %s202, 1024, %s204, %s193, 512, 512, 32
        $region32: #{up_forward.3} parent=27 // pred_fallthru
          _
      $region28: #{up_forward.3} parent=5 // pred_fallthru
        _
      %p210 = scmp.le.s32.totalorder 1, %s18
      %p211 = scmp.lt.s32.totalorder %s18, 3
      %p212 = pnand %p210, %p211
      %p213 = pneg %p212
      // Predicated region
      $region33: #{up_forward.3} parent=5 // pred_check
        _
      $region34: #{up_forward.3} parent=5 // pred_check_branch
        %215 = sbr.rel (%p212) target = $region36
      $region35: #{up_forward.3} parent=5 // pred_region
        %s216 = ssub.s32 %s18, 1
        %s217 = sand.u32 %s31, 1
        %s218 = scalar_lea.sflag [#allocation5], %s217
        %s219 = sand.u32 %s31, 1
        %s220 = smul.addr %s219, 64
        %s221 = scalar_lea.vmem [#allocation4], %s220
        // Predicated region
        $region37: #{up_forward.3} parent=35 // pred_check
          %p222 = pneg %p44
        $region38: #{up_forward.3} parent=35 // pred_check_branch
          %224 = sbr.rel (%p222) target = $region40
        $region39: #{up_forward.3} parent=35 // pred_region
          %225 = dma.done %s218, 1024
        $region40: #{up_forward.3} parent=35 // pred_fallthru
          _
        // Predicated region
        $region41: #{up_forward.3} parent=35 // pred_check
          %p226 = pneg %p65
        $region42: #{up_forward.3} parent=35 // pred_check_branch
          %228 = sbr.rel (%p226) target = $region44
        $region43: #{up_forward.3} parent=35 // pred_region
          %229 = dma.done [#allocation8], 512
        $region44: #{up_forward.3} parent=35 // pred_fallthru
          _
        // Predicated region
        $region45: #{up_forward.3} parent=35 // pred_check
          %p230 = pneg %p86
        $region46: #{up_forward.3} parent=35 // pred_check_branch
          %232 = sbr.rel (%p230) target = $region48
        $region47: #{up_forward.3} parent=35 // pred_region
          %233 = dma.done [#allocation8], 512
        $region48: #{up_forward.3} parent=35 // pred_fallthru
          _
        // Predicated region
        $region49: #{up_forward.3} parent=35 // pred_check
          %p234 = pneg %p107
        $region50: #{up_forward.3} parent=35 // pred_check_branch
          %236 = sbr.rel (%p234) target = $region52
        $region51: #{up_forward.3} parent=35 // pred_region
          %237 = dma.done [#allocation11], 128
        $region52: #{up_forward.3} parent=35 // pred_fallthru
          _
        %s238 = sand.u32 %s31, 1
        %s239 = scalar_lea.sflag [#allocation5], %s238
        %s240 = sand.u32 %s31, 1
        %s241 = smul.addr %s240, 64
        %s242 = scalar_lea.vmem [#allocation4], %s241
        %p243 = pneg %p44
        %p244 = pneg %p41
        %p245 = pneg %p65
        %p246 = pneg %p62
        %p247 = pneg %p86
        %p248 = pneg %p83
        %p249 = pneg %p107
        %p250 = pneg %p104
        %p251 = pneg %p133
        %p252 = pneg %p130
        %s253 = sand.u32 %s120, 1
        %s254 = scalar_lea.sflag [#allocation6], %s253
        %s255 = sand.u32 %s120, 1
        %s256 = smul.addr %s255, 64
        %s257 = scalar_lea.vmem [#allocation12], %s256
        %v259 = vld [vmem:[#allocation10] sm:$0xff]
        %v260 = vld [vmem:[%s221] sm:$0xff]
        %v261 = vld [vmem:[%s221 + $0x8] sm:$0xff]
        %v262 = vld [vmem:[%s221 + $0x10] sm:$0xff]
        %v263 = vld [vmem:[%s221 + $0x18] sm:$0xff]
        %v264 = vld [vmem:[%s221 + $0x20] sm:$0xff]
        %v265 = vld [vmem:[%s221 + $0x28] sm:$0xff]
        %v266 = vld [vmem:[%s221 + $0x30] sm:$0xff]
        %v267 = vld [vmem:[%s221 + $0x38] sm:$0xff]
        %v268 = vunpack.c.l.bf16 %v260
        %v269 = vunpack.c.h.bf16 %v260
        %v270 = vunpack.c.l.bf16 %v261
        %v271 = vunpack.c.h.bf16 %v261
        %v272 = vunpack.c.l.bf16 %v262
        %v273 = vunpack.c.h.bf16 %v262
        %v274 = vunpack.c.l.bf16 %v263
        %v275 = vunpack.c.h.bf16 %v263
        %v276 = vunpack.c.l.bf16 %v264
        %v277 = vunpack.c.h.bf16 %v264
        %v278 = vunpack.c.l.bf16 %v265
        %v279 = vunpack.c.h.bf16 %v265
        %v280 = vunpack.c.l.bf16 %v266
        %v281 = vunpack.c.h.bf16 %v266
        %v282 = vunpack.c.l.bf16 %v267
        %v283 = vunpack.c.h.bf16 %v267
        %284 = vrot.lane.b32.xlu0 %v268, 111
        %v285 = vpop.permute.xlu0 %284
        %286 = vrot.lane.b32.xlu0 %v276, 111
        %v287 = vpop.permute.xlu0 %286
        %288 = vrot.lane.b32.xlu0 %v269, 111
        %v289 = vpop.permute.xlu0 %288
        %290 = vrot.lane.b32.xlu0 %v277, 111
        %v291 = vpop.permute.xlu0 %290
        %292 = vrot.lane.b32.xlu0 %v270, 111
        %v293 = vpop.permute.xlu0 %292
        %294 = vrot.lane.b32.xlu0 %v278, 111
        %v295 = vpop.permute.xlu0 %294
        %296 = vrot.lane.b32.xlu0 %v271, 111
        %v297 = vpop.permute.xlu0 %296
        %298 = vrot.lane.b32.xlu0 %v279, 111
        %v299 = vpop.permute.xlu0 %298
        %300 = vrot.lane.b32.xlu0 %v272, 111
        %v301 = vpop.permute.xlu0 %300
        %302 = vrot.lane.b32.xlu0 %v280, 111
        %v303 = vpop.permute.xlu0 %302
        %304 = vrot.lane.b32.xlu0 %v273, 111
        %v305 = vpop.permute.xlu0 %304
        %306 = vrot.lane.b32.xlu0 %v281, 111
        %v307 = vpop.permute.xlu0 %306
        %308 = vrot.lane.b32.xlu0 %v274, 111
        %v309 = vpop.permute.xlu0 %308
        %310 = vrot.lane.b32.xlu0 %v282, 111
        %v311 = vpop.permute.xlu0 %310
        %312 = vrot.lane.b32.xlu0 %v275, 111
        %v313 = vpop.permute.xlu0 %312
        %314 = vrot.lane.b32.xlu0 %v283, 111
        %v315 = vpop.permute.xlu0 %314
        %v316 = vlaneseq
        %v317 = vand.u32 %v316, 127
        %vm318 = vcmp.lt.s32.totalorder %v317, 111
        %v319 = vsel %vm318, %v309, %v313
        %v320 = vsel %vm318, %v311, %v315
        %v321 = vsel %vm318, %v305, %v309
        %v322 = vsel %vm318, %v307, %v311
        %v323 = vsel %vm318, %v301, %v305
        %v324 = vsel %vm318, %v303, %v307
        %v325 = vsel %vm318, %v297, %v301
        %v326 = vsel %vm318, %v299, %v303
        %v327 = vsel %vm318, %v293, %v297
        %v328 = vsel %vm318, %v295, %v299
        %v329 = vsel %vm318, %v289, %v293
        %v330 = vsel %vm318, %v291, %v295
        %v331 = vsel %vm318, %v285, %v289
        %v332 = vsel %vm318, %v287, %v291
        %v333 = vsel %vm318, %v313, %v285
        %v334 = vsel %vm318, %v315, %v287
        %v335 = vpack.c.bf16 %v334, %v333
        %v336 = vpack.c.bf16 %v332, %v331
        %v337 = vpack.c.bf16 %v330, %v329
        %v338 = vpack.c.bf16 %v328, %v327
        %v339 = vpack.c.bf16 %v326, %v325
        %v340 = vpack.c.bf16 %v324, %v323
        %v341 = vpack.c.bf16 %v322, %v321
        %v342 = vpack.c.bf16 %v320, %v319
        %343 = vst [vmem:[#allocation2] sm:$0xff] %v335
        %344 = vst [vmem:[#allocation2 + $0x8] sm:$0xff] %v336
        %345 = vst [vmem:[#allocation2 + $0x10] sm:$0xff] %v337
        %346 = vst [vmem:[#allocation2 + $0x18] sm:$0xff] %v338
        %347 = vst [vmem:[#allocation2 + $0x20] sm:$0xff] %v339
        %348 = vst [vmem:[#allocation2 + $0x28] sm:$0xff] %v340
        %349 = vst [vmem:[#allocation2 + $0x30] sm:$0xff] %v341
        %350 = vst [vmem:[#allocation2 + $0x38] sm:$0xff] %v342
        %351 = vrot.lane.b32.xlu0 %v268, 110
        %v352 = vpop.permute.xlu0 %351
        %353 = vrot.lane.b32.xlu0 %v276, 110
        %v354 = vpop.permute.xlu0 %353
        %355 = vrot.lane.b32.xlu0 %v269, 110
        %v356 = vpop.permute.xlu0 %355
        %357 = vrot.lane.b32.xlu0 %v277, 110
        %v358 = vpop.permute.xlu0 %357
        %359 = vrot.lane.b32.xlu0 %v270, 110
        %v360 = vpop.permute.xlu0 %359
        %361 = vrot.lane.b32.xlu0 %v278, 110
        %v362 = vpop.permute.xlu0 %361
        %363 = vrot.lane.b32.xlu0 %v271, 110
        %v364 = vpop.permute.xlu0 %363
        %365 = vrot.lane.b32.xlu0 %v279, 110
        %v366 = vpop.permute.xlu0 %365
        %367 = vrot.lane.b32.xlu0 %v272, 110
        %v368 = vpop.permute.xlu0 %367
        %369 = vrot.lane.b32.xlu0 %v280, 110
        %v370 = vpop.permute.xlu0 %369
        %371 = vrot.lane.b32.xlu0 %v273, 110
        %v372 = vpop.permute.xlu0 %371
        %373 = vrot.lane.b32.xlu0 %v281, 110
        %v374 = vpop.permute.xlu0 %373
        %375 = vrot.lane.b32.xlu0 %v274, 110
        %v376 = vpop.permute.xlu0 %375
        %377 = vrot.lane.b32.xlu0 %v282, 110
        %v378 = vpop.permute.xlu0 %377
        %379 = vrot.lane.b32.xlu0 %v275, 110
        %v380 = vpop.permute.xlu0 %379
        %381 = vrot.lane.b32.xlu0 %v283, 110
        %v382 = vpop.permute.xlu0 %381
        %vm383 = vcmp.lt.s32.totalorder %v317, 110
        %v384 = vsel %vm383, %v376, %v380
        %v385 = vsel %vm383, %v378, %v382
        %v386 = vsel %vm383, %v372, %v376
        %v387 = vsel %vm383, %v374, %v378
        %v388 = vsel %vm383, %v368, %v372
        %v389 = vsel %vm383, %v370, %v374
        %v390 = vsel %vm383, %v364, %v368
        %v391 = vsel %vm383, %v366, %v370
        %v392 = vsel %vm383, %v360, %v364
        %v393 = vsel %vm383, %v362, %v366
        %v394 = vsel %vm383, %v356, %v360
        %v395 = vsel %vm383, %v358, %v362
        %v396 = vsel %vm383, %v352, %v356
        %v397 = vsel %vm383, %v354, %v358
        %v398 = vsel %vm383, %v380, %v352
        %v399 = vsel %vm383, %v382, %v354
        %v400 = vpack.c.bf16 %v399, %v398
        %v401 = vpack.c.bf16 %v397, %v396
        %v402 = vpack.c.bf16 %v395, %v394
        %v403 = vpack.c.bf16 %v393, %v392
        %v404 = vpack.c.bf16 %v391, %v390
        %v405 = vpack.c.bf16 %v389, %v388
        %v406 = vpack.c.bf16 %v387, %v386
        %v407 = vpack.c.bf16 %v385, %v384
        %408 = vst [vmem:[#allocation2 + $0x40] sm:$0xff] %v400
        %409 = vst [vmem:[#allocation2 + $0x48] sm:$0xff] %v401
        %410 = vst [vmem:[#allocation2 + $0x50] sm:$0xff] %v402
        %411 = vst [vmem:[#allocation2 + $0x58] sm:$0xff] %v403
        %412 = vst [vmem:[#allocation2 + $0x60] sm:$0xff] %v404
        %413 = vst [vmem:[#allocation2 + $0x68] sm:$0xff] %v405
        %414 = vst [vmem:[#allocation2 + $0x70] sm:$0xff] %v406
        %415 = vst [vmem:[#allocation2 + $0x78] sm:$0xff] %v407
        %416 = vrot.lane.b32.xlu0 %v268, 109
        %v417 = vpop.permute.xlu0 %416
        %418 = vrot.lane.b32.xlu0 %v276, 109
        %v419 = vpop.permute.xlu0 %418
        %420 = vrot.lane.b32.xlu0 %v269, 109
        %v421 = vpop.permute.xlu0 %420
        %422 = vrot.lane.b32.xlu0 %v277, 109
        %v423 = vpop.permute.xlu0 %422
        %424 = vrot.lane.b32.xlu0 %v270, 109
        %v425 = vpop.permute.xlu0 %424
        %426 = vrot.lane.b32.xlu0 %v278, 109
        %v427 = vpop.permute.xlu0 %426
        %428 = vrot.lane.b32.xlu0 %v271, 109
        %v429 = vpop.permute.xlu0 %428
        %430 = vrot.lane.b32.xlu0 %v279, 109
        %v431 = vpop.permute.xlu0 %430
        %432 = vrot.lane.b32.xlu0 %v272, 109
        %v433 = vpop.permute.xlu0 %432
        %434 = vrot.lane.b32.xlu0 %v280, 109
        %v435 = vpop.permute.xlu0 %434
        %436 = vrot.lane.b32.xlu0 %v273, 109
        %v437 = vpop.permute.xlu0 %436
        %438 = vrot.lane.b32.xlu0 %v281, 109
        %v439 = vpop.permute.xlu0 %438
        %440 = vrot.lane.b32.xlu0 %v274, 109
        %v441 = vpop.permute.xlu0 %440
        %442 = vrot.lane.b32.xlu0 %v282, 109
        %v443 = vpop.permute.xlu0 %442
        %444 = vrot.lane.b32.xlu0 %v275, 109
        %v445 = vpop.permute.xlu0 %444
        %446 = vrot.lane.b32.xlu0 %v283, 109
        %v447 = vpop.permute.xlu0 %446
        %vm448 = vcmp.lt.s32.totalorder %v317, 109
        %v449 = vsel %vm448, %v441, %v445
        %v450 = vsel %vm448, %v443, %v447
        %v451 = vsel %vm448, %v437, %v441
        %v452 = vsel %vm448, %v439, %v443
        %v453 = vsel %vm448, %v433, %v437
        %v454 = vsel %vm448, %v435, %v439
        %v455 = vsel %vm448, %v429, %v433
        %v456 = vsel %vm448, %v431, %v435
        %v457 = vsel %vm448, %v425, %v429
        %v458 = vsel %vm448, %v427, %v431
        %v459 = vsel %vm448, %v421, %v425
        %v460 = vsel %vm448, %v423, %v427
        %v461 = vsel %vm448, %v417, %v421
        %v462 = vsel %vm448, %v419, %v423
        %v463 = vsel %vm448, %v445, %v417
        %v464 = vsel %vm448, %v447, %v419
        %v465 = vpack.c.bf16 %v464, %v463
        %v466 = vpack.c.bf16 %v462, %v461
        %v467 = vpack.c.bf16 %v460, %v459
        %v468 = vpack.c.bf16 %v458, %v457
        %v469 = vpack.c.bf16 %v456, %v455
        %v470 = vpack.c.bf16 %v454, %v453
        %v471 = vpack.c.bf16 %v452, %v451
        %v472 = vpack.c.bf16 %v450, %v449
        %473 = vst [vmem:[#allocation2 + $0x80] sm:$0xff] %v465
        %474 = vst [vmem:[#allocation2 + $0x88] sm:$0xff] %v466
        %475 = vst [vmem:[#allocation2 + $0x90] sm:$0xff] %v467
        %476 = vst [vmem:[#allocation2 + $0x98] sm:$0xff] %v468
        %477 = vst [vmem:[#allocation2 + $0xa0] sm:$0xff] %v469
        %478 = vst [vmem:[#allocation2 + $0xa8] sm:$0xff] %v470
        %479 = vst [vmem:[#allocation2 + $0xb0] sm:$0xff] %v471
        %480 = vst [vmem:[#allocation2 + $0xb8] sm:$0xff] %v472
        %481 = vrot.lane.b32.xlu0 %v268, 101
        %v482 = vpop.permute.xlu0 %481
        %483 = vrot.lane.b32.xlu0 %v276, 101
        %v484 = vpop.permute.xlu0 %483
        %485 = vrot.lane.b32.xlu0 %v269, 101
        %v486 = vpop.permute.xlu0 %485
        %487 = vrot.lane.b32.xlu0 %v277, 101
        %v488 = vpop.permute.xlu0 %487
        %489 = vrot.lane.b32.xlu0 %v270, 101
        %v490 = vpop.permute.xlu0 %489
        %491 = vrot.lane.b32.xlu0 %v278, 101
        %v492 = vpop.permute.xlu0 %491
        %493 = vrot.lane.b32.xlu0 %v271, 101
        %v494 = vpop.permute.xlu0 %493
        %495 = vrot.lane.b32.xlu0 %v279, 101
        %v496 = vpop.permute.xlu0 %495
        %497 = vrot.lane.b32.xlu0 %v272, 101
        %v498 = vpop.permute.xlu0 %497
        %499 = vrot.lane.b32.xlu0 %v280, 101
        %v500 = vpop.permute.xlu0 %499
        %501 = vrot.lane.b32.xlu0 %v273, 101
        %v502 = vpop.permute.xlu0 %501
        %503 = vrot.lane.b32.xlu0 %v281, 101
        %v504 = vpop.permute.xlu0 %503
        %505 = vrot.lane.b32.xlu0 %v274, 101
        %v506 = vpop.permute.xlu0 %505
        %507 = vrot.lane.b32.xlu0 %v282, 101
        %v508 = vpop.permute.xlu0 %507
        %509 = vrot.lane.b32.xlu0 %v275, 101
        %v510 = vpop.permute.xlu0 %509
        %511 = vrot.lane.b32.xlu0 %v283, 101
        %v512 = vpop.permute.xlu0 %511
        %vm513 = vcmp.lt.s32.totalorder %v317, 101
        %v514 = vsel %vm513, %v506, %v510
        %v515 = vsel %vm513, %v508, %v512
        %v516 = vsel %vm513, %v502, %v506
        %v517 = vsel %vm513, %v504, %v508
        %v518 = vsel %vm513, %v498, %v502
        %v519 = vsel %vm513, %v500, %v504
        %v520 = vsel %vm513, %v494, %v498
        %v521 = vsel %vm513, %v496, %v500
        %v522 = vsel %vm513, %v490, %v494
        %v523 = vsel %vm513, %v492, %v496
        %v524 = vsel %vm513, %v486, %v490
        %v525 = vsel %vm513, %v488, %v492
        %v526 = vsel %vm513, %v482, %v486
        %v527 = vsel %vm513, %v484, %v488
        %v528 = vsel %vm513, %v510, %v482
        %v529 = vsel %vm513, %v512, %v484
        %v530 = vpack.c.bf16 %v529, %v528
        %v531 = vpack.c.bf16 %v527, %v526
        %v532 = vpack.c.bf16 %v525, %v524
        %v533 = vpack.c.bf16 %v523, %v522
        %v534 = vpack.c.bf16 %v521, %v520
        %v535 = vpack.c.bf16 %v519, %v518
        %v536 = vpack.c.bf16 %v517, %v516
        %v537 = vpack.c.bf16 %v515, %v514
        %538 = vst [vmem:[#allocation2 + $0xc0] sm:$0xff] %v530
        %539 = vst [vmem:[#allocation2 + $0xc8] sm:$0xff] %v531
        %540 = vst [vmem:[#allocation2 + $0xd0] sm:$0xff] %v532
        %541 = vst [vmem:[#allocation2 + $0xd8] sm:$0xff] %v533
        %542 = vst [vmem:[#allocation2 + $0xe0] sm:$0xff] %v534
        %543 = vst [vmem:[#allocation2 + $0xe8] sm:$0xff] %v535
        %544 = vst [vmem:[#allocation2 + $0xf0] sm:$0xff] %v536
        %545 = vst [vmem:[#allocation2 + $0xf8] sm:$0xff] %v537
        %546 = vrot.lane.b32.xlu0 %v268, 100
        %v547 = vpop.permute.xlu0 %546
        %548 = vrot.lane.b32.xlu0 %v276, 100
        %v549 = vpop.permute.xlu0 %548
        %550 = vrot.lane.b32.xlu0 %v269, 100
        %v551 = vpop.permute.xlu0 %550
        %552 = vrot.lane.b32.xlu0 %v277, 100
        %v553 = vpop.permute.xlu0 %552
        %554 = vrot.lane.b32.xlu0 %v270, 100
        %v555 = vpop.permute.xlu0 %554
        %556 = vrot.lane.b32.xlu0 %v278, 100
        %v557 = vpop.permute.xlu0 %556
        %558 = vrot.lane.b32.xlu0 %v271, 100
        %v559 = vpop.permute.xlu0 %558
        %560 = vrot.lane.b32.xlu0 %v279, 100
        %v561 = vpop.permute.xlu0 %560
        %562 = vrot.lane.b32.xlu0 %v272, 100
        %v563 = vpop.permute.xlu0 %562
        %564 = vrot.lane.b32.xlu0 %v280, 100
        %v565 = vpop.permute.xlu0 %564
        %566 = vrot.lane.b32.xlu0 %v273, 100
        %v567 = vpop.permute.xlu0 %566
        %568 = vrot.lane.b32.xlu0 %v281, 100
        %v569 = vpop.permute.xlu0 %568
        %570 = vrot.lane.b32.xlu0 %v274, 100
        %v571 = vpop.permute.xlu0 %570
        %572 = vrot.lane.b32.xlu0 %v282, 100
        %v573 = vpop.permute.xlu0 %572
        %574 = vrot.lane.b32.xlu0 %v275, 100
        %v575 = vpop.permute.xlu0 %574
        %576 = vrot.lane.b32.xlu0 %v283, 100
        %v577 = vpop.permute.xlu0 %576
        %vm578 = vcmp.lt.s32.totalorder %v317, 100
        %v579 = vsel %vm578, %v571, %v575
        %v580 = vsel %vm578, %v573, %v577
        %v581 = vsel %vm578, %v567, %v571
        %v582 = vsel %vm578, %v569, %v573
        %v583 = vsel %vm578, %v563, %v567
        %v584 = vsel %vm578, %v565, %v569
        %v585 = vsel %vm578, %v559, %v563
        %v586 = vsel %vm578, %v561, %v565
        %v587 = vsel %vm578, %v555, %v559
        %v588 = vsel %vm578, %v557, %v561
        %v589 = vsel %vm578, %v551, %v555
        %v590 = vsel %vm578, %v553, %v557
        %v591 = vsel %vm578, %v547, %v551
        %v592 = vsel %vm578, %v549, %v553
        %v593 = vsel %vm578, %v575, %v547
        %v594 = vsel %vm578, %v577, %v549
        %v595 = vpack.c.bf16 %v594, %v593
        %v596 = vpack.c.bf16 %v592, %v591
        %v597 = vpack.c.bf16 %v590, %v589
        %v598 = vpack.c.bf16 %v588, %v587
        %v599 = vpack.c.bf16 %v586, %v585
        %v600 = vpack.c.bf16 %v584, %v583
        %v601 = vpack.c.bf16 %v582, %v581
        %v602 = vpack.c.bf16 %v580, %v579
        %603 = vst [vmem:[#allocation2 + $0x100] sm:$0xff] %v595
        %604 = vst [vmem:[#allocation2 + $0x108] sm:$0xff] %v596
        %605 = vst [vmem:[#allocation2 + $0x110] sm:$0xff] %v597
        %606 = vst [vmem:[#allocation2 + $0x118] sm:$0xff] %v598
        %607 = vst [vmem:[#allocation2 + $0x120] sm:$0xff] %v599
        %608 = vst [vmem:[#allocation2 + $0x128] sm:$0xff] %v600
        %609 = vst [vmem:[#allocation2 + $0x130] sm:$0xff] %v601
        %610 = vst [vmem:[#allocation2 + $0x138] sm:$0xff] %v602
        %611 = vrot.lane.b32.xlu0 %v268, 99
        %v612 = vpop.permute.xlu0 %611
        %613 = vrot.lane.b32.xlu0 %v276, 99
        %v614 = vpop.permute.xlu0 %613
        %615 = vrot.lane.b32.xlu0 %v269, 99
        %v616 = vpop.permute.xlu0 %615
        %617 = vrot.lane.b32.xlu0 %v277, 99
        %v618 = vpop.permute.xlu0 %617
        %619 = vrot.lane.b32.xlu0 %v270, 99
        %v620 = vpop.permute.xlu0 %619
        %621 = vrot.lane.b32.xlu0 %v278, 99
        %v622 = vpop.permute.xlu0 %621
        %623 = vrot.lane.b32.xlu0 %v271, 99
        %v624 = vpop.permute.xlu0 %623
        %625 = vrot.lane.b32.xlu0 %v279, 99
        %v626 = vpop.permute.xlu0 %625
        %627 = vrot.lane.b32.xlu0 %v272, 99
        %v628 = vpop.permute.xlu0 %627
        %629 = vrot.lane.b32.xlu0 %v280, 99
        %v630 = vpop.permute.xlu0 %629
        %631 = vrot.lane.b32.xlu0 %v273, 99
        %v632 = vpop.permute.xlu0 %631
        %633 = vrot.lane.b32.xlu0 %v281, 99
        %v634 = vpop.permute.xlu0 %633
        %635 = vrot.lane.b32.xlu0 %v274, 99
        %v636 = vpop.permute.xlu0 %635
        %637 = vrot.lane.b32.xlu0 %v282, 99
        %v638 = vpop.permute.xlu0 %637
        %639 = vrot.lane.b32.xlu0 %v275, 99
        %v640 = vpop.permute.xlu0 %639
        %641 = vrot.lane.b32.xlu0 %v283, 99
        %v642 = vpop.permute.xlu0 %641
        %vm643 = vcmp.lt.s32.totalorder %v317, 99
        %v644 = vsel %vm643, %v636, %v640
        %v645 = vsel %vm643, %v638, %v642
        %v646 = vsel %vm643, %v632, %v636
        %v647 = vsel %vm643, %v634, %v638
        %v648 = vsel %vm643, %v628, %v632
        %v649 = vsel %vm643, %v630, %v634
        %v650 = vsel %vm643, %v624, %v628
        %v651 = vsel %vm643, %v626, %v630
        %v652 = vsel %vm643, %v620, %v624
        %v653 = vsel %vm643, %v622, %v626
        %v654 = vsel %vm643, %v616, %v620
        %v655 = vsel %vm643, %v618, %v622
        %v656 = vsel %vm643, %v612, %v616
        %v657 = vsel %vm643, %v614, %v618
        %v658 = vsel %vm643, %v640, %v612
        %v659 = vsel %vm643, %v642, %v614
        %v660 = vpack.c.bf16 %v659, %v658
        %v661 = vpack.c.bf16 %v657, %v656
        %v662 = vpack.c.bf16 %v655, %v654
        %v663 = vpack.c.bf16 %v653, %v652
        %v664 = vpack.c.bf16 %v651, %v650
        %v665 = vpack.c.bf16 %v649, %v648
        %v666 = vpack.c.bf16 %v647, %v646
        %v667 = vpack.c.bf16 %v645, %v644
        %668 = vst [vmem:[#allocation2 + $0x140] sm:$0xff] %v660
        %669 = vst [vmem:[#allocation2 + $0x148] sm:$0xff] %v661
        %670 = vst [vmem:[#allocation2 + $0x150] sm:$0xff] %v662
        %671 = vst [vmem:[#allocation2 + $0x158] sm:$0xff] %v663
        %672 = vst [vmem:[#allocation2 + $0x160] sm:$0xff] %v664
        %673 = vst [vmem:[#allocation2 + $0x168] sm:$0xff] %v665
        %674 = vst [vmem:[#allocation2 + $0x170] sm:$0xff] %v666
        %675 = vst [vmem:[#allocation2 + $0x178] sm:$0xff] %v667
        %676 = vrot.lane.b32.xlu0 %v268, 91
        %v677 = vpop.permute.xlu0 %676
        %678 = vrot.lane.b32.xlu0 %v276, 91
        %v679 = vpop.permute.xlu0 %678
        %680 = vrot.lane.b32.xlu0 %v269, 91
        %v681 = vpop.permute.xlu0 %680
        %682 = vrot.lane.b32.xlu0 %v277, 91
        %v683 = vpop.permute.xlu0 %682
        %684 = vrot.lane.b32.xlu0 %v270, 91
        %v685 = vpop.permute.xlu0 %684
        %686 = vrot.lane.b32.xlu0 %v278, 91
        %v687 = vpop.permute.xlu0 %686
        %688 = vrot.lane.b32.xlu0 %v271, 91
        %v689 = vpop.permute.xlu0 %688
        %690 = vrot.lane.b32.xlu0 %v279, 91
        %v691 = vpop.permute.xlu0 %690
        %692 = vrot.lane.b32.xlu0 %v272, 91
        %v693 = vpop.permute.xlu0 %692
        %694 = vrot.lane.b32.xlu0 %v280, 91
        %v695 = vpop.permute.xlu0 %694
        %696 = vrot.lane.b32.xlu0 %v273, 91
        %v697 = vpop.permute.xlu0 %696
        %698 = vrot.lane.b32.xlu0 %v281, 91
        %v699 = vpop.permute.xlu0 %698
        %700 = vrot.lane.b32.xlu0 %v274, 91
        %v701 = vpop.permute.xlu0 %700
        %702 = vrot.lane.b32.xlu0 %v282, 91
        %v703 = vpop.permute.xlu0 %702
        %704 = vrot.lane.b32.xlu0 %v275, 91
        %v705 = vpop.permute.xlu0 %704
        %706 = vrot.lane.b32.xlu0 %v283, 91
        %v707 = vpop.permute.xlu0 %706
        %vm708 = vcmp.lt.s32.totalorder %v317, 91
        %v709 = vsel %vm708, %v701, %v705
        %v710 = vsel %vm708, %v703, %v707
        %v711 = vsel %vm708, %v697, %v701
        %v712 = vsel %vm708, %v699, %v703
        %v713 = vsel %vm708, %v693, %v697
        %v714 = vsel %vm708, %v695, %v699
        %v715 = vsel %vm708, %v689, %v693
        %v716 = vsel %vm708, %v691, %v695
        %v717 = vsel %vm708, %v685, %v689
        %v718 = vsel %vm708, %v687, %v691
        %v719 = vsel %vm708, %v681, %v685
        %v720 = vsel %vm708, %v683, %v687
        %v721 = vsel %vm708, %v677, %v681
        %v722 = vsel %vm708, %v679, %v683
        %v723 = vsel %vm708, %v705, %v677
        %v724 = vsel %vm708, %v707, %v679
        %v725 = vpack.c.bf16 %v724, %v723
        %v726 = vpack.c.bf16 %v722, %v721
        %v727 = vpack.c.bf16 %v720, %v719
        %v728 = vpack.c.bf16 %v718, %v717
        %v729 = vpack.c.bf16 %v716, %v715
        %v730 = vpack.c.bf16 %v714, %v713
        %v731 = vpack.c.bf16 %v712, %v711
        %v732 = vpack.c.bf16 %v710, %v709
        %733 = vst [vmem:[#allocation2 + $0x180] sm:$0xff] %v725
        %734 = vst [vmem:[#allocation2 + $0x188] sm:$0xff] %v726
        %735 = vst [vmem:[#allocation2 + $0x190] sm:$0xff] %v727
        %736 = vst [vmem:[#allocation2 + $0x198] sm:$0xff] %v728
        %737 = vst [vmem:[#allocation2 + $0x1a0] sm:$0xff] %v729
        %738 = vst [vmem:[#allocation2 + $0x1a8] sm:$0xff] %v730
        %739 = vst [vmem:[#allocation2 + $0x1b0] sm:$0xff] %v731
        %740 = vst [vmem:[#allocation2 + $0x1b8] sm:$0xff] %v732
        %741 = vrot.lane.b32.xlu0 %v268, 90
        %v742 = vpop.permute.xlu0 %741
        %743 = vrot.lane.b32.xlu0 %v276, 90
        %v744 = vpop.permute.xlu0 %743
        %745 = vrot.lane.b32.xlu0 %v269, 90
        %v746 = vpop.permute.xlu0 %745
        %747 = vrot.lane.b32.xlu0 %v277, 90
        %v748 = vpop.permute.xlu0 %747
        %749 = vrot.lane.b32.xlu0 %v270, 90
        %v750 = vpop.permute.xlu0 %749
        %751 = vrot.lane.b32.xlu0 %v278, 90
        %v752 = vpop.permute.xlu0 %751
        %753 = vrot.lane.b32.xlu0 %v271, 90
        %v754 = vpop.permute.xlu0 %753
        %755 = vrot.lane.b32.xlu0 %v279, 90
        %v756 = vpop.permute.xlu0 %755
        %757 = vrot.lane.b32.xlu0 %v272, 90
        %v758 = vpop.permute.xlu0 %757
        %759 = vrot.lane.b32.xlu0 %v280, 90
        %v760 = vpop.permute.xlu0 %759
        %761 = vrot.lane.b32.xlu0 %v273, 90
        %v762 = vpop.permute.xlu0 %761
        %763 = vrot.lane.b32.xlu0 %v281, 90
        %v764 = vpop.permute.xlu0 %763
        %765 = vrot.lane.b32.xlu0 %v274, 90
        %v766 = vpop.permute.xlu0 %765
        %767 = vrot.lane.b32.xlu0 %v282, 90
        %v768 = vpop.permute.xlu0 %767
        %769 = vrot.lane.b32.xlu0 %v275, 90
        %v770 = vpop.permute.xlu0 %769
        %771 = vrot.lane.b32.xlu0 %v283, 90
        %v772 = vpop.permute.xlu0 %771
        %vm773 = vcmp.lt.s32.totalorder %v317, 90
        %v774 = vsel %vm773, %v766, %v770
        %v775 = vsel %vm773, %v768, %v772
        %v776 = vsel %vm773, %v762, %v766
        %v777 = vsel %vm773, %v764, %v768
        %v778 = vsel %vm773, %v758, %v762
        %v779 = vsel %vm773, %v760, %v764
        %v780 = vsel %vm773, %v754, %v758
        %v781 = vsel %vm773, %v756, %v760
        %v782 = vsel %vm773, %v750, %v754
        %v783 = vsel %vm773, %v752, %v756
        %v784 = vsel %vm773, %v746, %v750
        %v785 = vsel %vm773, %v748, %v752
        %v786 = vsel %vm773, %v742, %v746
        %v787 = vsel %vm773, %v744, %v748
        %v788 = vsel %vm773, %v770, %v742
        %v789 = vsel %vm773, %v772, %v744
        %v790 = vpack.c.bf16 %v789, %v788
        %v791 = vpack.c.bf16 %v787, %v786
        %v792 = vpack.c.bf16 %v785, %v784
        %v793 = vpack.c.bf16 %v783, %v782
        %v794 = vpack.c.bf16 %v781, %v780
        %v795 = vpack.c.bf16 %v779, %v778
        %v796 = vpack.c.bf16 %v777, %v776
        %v797 = vpack.c.bf16 %v775, %v774
        %798 = vst [vmem:[#allocation2 + $0x1c0] sm:$0xff] %v790
        %799 = vst [vmem:[#allocation2 + $0x1c8] sm:$0xff] %v791
        %800 = vst [vmem:[#allocation2 + $0x1d0] sm:$0xff] %v792
        %801 = vst [vmem:[#allocation2 + $0x1d8] sm:$0xff] %v793
        %802 = vst [vmem:[#allocation2 + $0x1e0] sm:$0xff] %v794
        %803 = vst [vmem:[#allocation2 + $0x1e8] sm:$0xff] %v795
        %804 = vst [vmem:[#allocation2 + $0x1f0] sm:$0xff] %v796
        %805 = vst [vmem:[#allocation2 + $0x1f8] sm:$0xff] %v797
        %806 = vrot.lane.b32.xlu0 %v268, 89
        %v807 = vpop.permute.xlu0 %806
        %808 = vrot.lane.b32.xlu0 %v276, 89
        %v809 = vpop.permute.xlu0 %808
        %810 = vrot.lane.b32.xlu0 %v269, 89
        %v811 = vpop.permute.xlu0 %810
        %812 = vrot.lane.b32.xlu0 %v277, 89
        %v813 = vpop.permute.xlu0 %812
        %814 = vrot.lane.b32.xlu0 %v270, 89
        %v815 = vpop.permute.xlu0 %814
        %816 = vrot.lane.b32.xlu0 %v278, 89
        %v817 = vpop.permute.xlu0 %816
        %818 = vrot.lane.b32.xlu0 %v271, 89
        %v819 = vpop.permute.xlu0 %818
        %820 = vrot.lane.b32.xlu0 %v279, 89
        %v821 = vpop.permute.xlu0 %820
        %822 = vrot.lane.b32.xlu0 %v272, 89
        %v823 = vpop.permute.xlu0 %822
        %824 = vrot.lane.b32.xlu0 %v280, 89
        %v825 = vpop.permute.xlu0 %824
        %826 = vrot.lane.b32.xlu0 %v273, 89
        %v827 = vpop.permute.xlu0 %826
        %828 = vrot.lane.b32.xlu0 %v281, 89
        %v829 = vpop.permute.xlu0 %828
        %830 = vrot.lane.b32.xlu0 %v274, 89
        %v831 = vpop.permute.xlu0 %830
        %832 = vrot.lane.b32.xlu0 %v282, 89
        %v833 = vpop.permute.xlu0 %832
        %834 = vrot.lane.b32.xlu0 %v275, 89
        %v835 = vpop.permute.xlu0 %834
        %836 = vrot.lane.b32.xlu0 %v283, 89
        %v837 = vpop.permute.xlu0 %836
        %vm838 = vcmp.lt.s32.totalorder %v317, 89
        %v839 = vsel %vm838, %v831, %v835
        %v840 = vsel %vm838, %v833, %v837
        %v841 = vsel %vm838, %v827, %v831
        %v842 = vsel %vm838, %v829, %v833
        %v843 = vsel %vm838, %v823, %v827
        %v844 = vsel %vm838, %v825, %v829
        %v845 = vsel %vm838, %v819, %v823
        %v846 = vsel %vm838, %v821, %v825
        %v847 = vsel %vm838, %v815, %v819
        %v848 = vsel %vm838, %v817, %v821
        %v849 = vsel %vm838, %v811, %v815
        %v850 = vsel %vm838, %v813, %v817
        %v851 = vsel %vm838, %v807, %v811
        %v852 = vsel %vm838, %v809, %v813
        %v853 = vsel %vm838, %v835, %v807
        %v854 = vsel %vm838, %v837, %v809
        %v855 = vpack.c.bf16 %v854, %v853
        %v856 = vpack.c.bf16 %v852, %v851
        %v857 = vpack.c.bf16 %v850, %v849
        %v858 = vpack.c.bf16 %v848, %v847
        %v859 = vpack.c.bf16 %v846, %v845
        %v860 = vpack.c.bf16 %v844, %v843
        %v861 = vpack.c.bf16 %v842, %v841
        %v862 = vpack.c.bf16 %v840, %v839
        %863 = vst [vmem:[#allocation2 + $0x200] sm:$0xff] %v855
        %864 = vst [vmem:[#allocation2 + $0x208] sm:$0xff] %v856
        %865 = vst [vmem:[#allocation2 + $0x210] sm:$0xff] %v857
        %866 = vst [vmem:[#allocation2 + $0x218] sm:$0xff] %v858
        %867 = vst [vmem:[#allocation2 + $0x220] sm:$0xff] %v859
        %868 = vst [vmem:[#allocation2 + $0x228] sm:$0xff] %v860
        %869 = vst [vmem:[#allocation2 + $0x230] sm:$0xff] %v861
        %870 = vst [vmem:[#allocation2 + $0x238] sm:$0xff] %v862
        %871 = vrot.lane.b32.xlu0 %v268, 11
        %v872 = vpop.permute.xlu0 %871
        %873 = vrot.lane.b32.xlu0 %v276, 11
        %v874 = vpop.permute.xlu0 %873
        %875 = vrot.lane.b32.xlu0 %v269, 11
        %v876 = vpop.permute.xlu0 %875
        %877 = vrot.lane.b32.xlu0 %v277, 11
        %v878 = vpop.permute.xlu0 %877
        %879 = vrot.lane.b32.xlu0 %v270, 11
        %v880 = vpop.permute.xlu0 %879
        %881 = vrot.lane.b32.xlu0 %v278, 11
        %v882 = vpop.permute.xlu0 %881
        %883 = vrot.lane.b32.xlu0 %v271, 11
        %v884 = vpop.permute.xlu0 %883
        %885 = vrot.lane.b32.xlu0 %v279, 11
        %v886 = vpop.permute.xlu0 %885
        %887 = vrot.lane.b32.xlu0 %v272, 11
        %v888 = vpop.permute.xlu0 %887
        %889 = vrot.lane.b32.xlu0 %v280, 11
        %v890 = vpop.permute.xlu0 %889
        %891 = vrot.lane.b32.xlu0 %v273, 11
        %v892 = vpop.permute.xlu0 %891
        %893 = vrot.lane.b32.xlu0 %v281, 11
        %v894 = vpop.permute.xlu0 %893
        %895 = vrot.lane.b32.xlu0 %v274, 11
        %v896 = vpop.permute.xlu0 %895
        %897 = vrot.lane.b32.xlu0 %v282, 11
        %v898 = vpop.permute.xlu0 %897
        %899 = vrot.lane.b32.xlu0 %v275, 11
        %v900 = vpop.permute.xlu0 %899
        %901 = vrot.lane.b32.xlu0 %v283, 11
        %v902 = vpop.permute.xlu0 %901
        %vm903 = vcmp.lt.s32.totalorder %v317, 11
        %v904 = vsel %vm903, %v896, %v900
        %v905 = vsel %vm903, %v898, %v902
        %v906 = vsel %vm903, %v892, %v896
        %v907 = vsel %vm903, %v894, %v898
        %v908 = vsel %vm903, %v888, %v892
        %v909 = vsel %vm903, %v890, %v894
        %v910 = vsel %vm903, %v884, %v888
        %v911 = vsel %vm903, %v886, %v890
        %v912 = vsel %vm903, %v880, %v884
        %v913 = vsel %vm903, %v882, %v886
        %v914 = vsel %vm903, %v876, %v880
        %v915 = vsel %vm903, %v878, %v882
        %v916 = vsel %vm903, %v872, %v876
        %v917 = vsel %vm903, %v874, %v878
        %v918 = vsel %vm903, %v900, %v872
        %v919 = vsel %vm903, %v902, %v874
        %v920 = vpack.c.bf16 %v919, %v918
        %v921 = vpack.c.bf16 %v917, %v916
        %v922 = vpack.c.bf16 %v915, %v914
        %v923 = vpack.c.bf16 %v913, %v912
        %v924 = vpack.c.bf16 %v911, %v910
        %v925 = vpack.c.bf16 %v909, %v908
        %v926 = vpack.c.bf16 %v907, %v906
        %v927 = vpack.c.bf16 %v905, %v904
        %928 = vst [vmem:[#allocation2 + $0x240] sm:$0xff] %v920
        %929 = vst [vmem:[#allocation2 + $0x248] sm:$0xff] %v921
        %930 = vst [vmem:[#allocation2 + $0x250] sm:$0xff] %v922
        %931 = vst [vmem:[#allocation2 + $0x258] sm:$0xff] %v923
        %932 = vst [vmem:[#allocation2 + $0x260] sm:$0xff] %v924
        %933 = vst [vmem:[#allocation2 + $0x268] sm:$0xff] %v925
        %934 = vst [vmem:[#allocation2 + $0x270] sm:$0xff] %v926
        %935 = vst [vmem:[#allocation2 + $0x278] sm:$0xff] %v927
        %936 = vrot.lane.b32.xlu0 %v268, 10
        %v937 = vpop.permute.xlu0 %936
        %938 = vrot.lane.b32.xlu0 %v276, 10
        %v939 = vpop.permute.xlu0 %938
        %940 = vrot.lane.b32.xlu0 %v269, 10
        %v941 = vpop.permute.xlu0 %940
        %942 = vrot.lane.b32.xlu0 %v277, 10
        %v943 = vpop.permute.xlu0 %942
        %944 = vrot.lane.b32.xlu0 %v270, 10
        %v945 = vpop.permute.xlu0 %944
        %946 = vrot.lane.b32.xlu0 %v278, 10
        %v947 = vpop.permute.xlu0 %946
        %948 = vrot.lane.b32.xlu0 %v271, 10
        %v949 = vpop.permute.xlu0 %948
        %950 = vrot.lane.b32.xlu0 %v279, 10
        %v951 = vpop.permute.xlu0 %950
        %952 = vrot.lane.b32.xlu0 %v272, 10
        %v953 = vpop.permute.xlu0 %952
        %954 = vrot.lane.b32.xlu0 %v280, 10
        %v955 = vpop.permute.xlu0 %954
        %956 = vrot.lane.b32.xlu0 %v273, 10
        %v957 = vpop.permute.xlu0 %956
        %958 = vrot.lane.b32.xlu0 %v281, 10
        %v959 = vpop.permute.xlu0 %958
        %960 = vrot.lane.b32.xlu0 %v274, 10
        %v961 = vpop.permute.xlu0 %960
        %962 = vrot.lane.b32.xlu0 %v282, 10
        %v963 = vpop.permute.xlu0 %962
        %964 = vrot.lane.b32.xlu0 %v275, 10
        %v965 = vpop.permute.xlu0 %964
        %966 = vrot.lane.b32.xlu0 %v283, 10
        %v967 = vpop.permute.xlu0 %966
        %vm968 = vcmp.lt.s32.totalorder %v317, 10
        %v969 = vsel %vm968, %v961, %v965
        %v970 = vsel %vm968, %v963, %v967
        %v971 = vsel %vm968, %v957, %v961
        %v972 = vsel %vm968, %v959, %v963
        %v973 = vsel %vm968, %v953, %v957
        %v974 = vsel %vm968, %v955, %v959
        %v975 = vsel %vm968, %v949, %v953
        %v976 = vsel %vm968, %v951, %v955
        %v977 = vsel %vm968, %v945, %v949
        %v978 = vsel %vm968, %v947, %v951
        %v979 = vsel %vm968, %v941, %v945
        %v980 = vsel %vm968, %v943, %v947
        %v981 = vsel %vm968, %v937, %v941
        %v982 = vsel %vm968, %v939, %v943
        %v983 = vsel %vm968, %v965, %v937
        %v984 = vsel %vm968, %v967, %v939
        %v985 = vpack.c.bf16 %v984, %v983
        %v986 = vpack.c.bf16 %v982, %v981
        %v987 = vpack.c.bf16 %v980, %v979
        %v988 = vpack.c.bf16 %v978, %v977
        %v989 = vpack.c.bf16 %v976, %v975
        %v990 = vpack.c.bf16 %v974, %v973
        %v991 = vpack.c.bf16 %v972, %v971
        %v992 = vpack.c.bf16 %v970, %v969
        %993 = vst [vmem:[#allocation2 + $0x280] sm:$0xff] %v985
        %994 = vst [vmem:[#allocation2 + $0x288] sm:$0xff] %v986
        %995 = vst [vmem:[#allocation2 + $0x290] sm:$0xff] %v987
        %996 = vst [vmem:[#allocation2 + $0x298] sm:$0xff] %v988
        %997 = vst [vmem:[#allocation2 + $0x2a0] sm:$0xff] %v989
        %998 = vst [vmem:[#allocation2 + $0x2a8] sm:$0xff] %v990
        %999 = vst [vmem:[#allocation2 + $0x2b0] sm:$0xff] %v991
        %1000 = vst [vmem:[#allocation2 + $0x2b8] sm:$0xff] %v992
        %1001 = vrot.lane.b32.xlu0 %v268, 9
        %v1002 = vpop.permute.xlu0 %1001
        %1003 = vrot.lane.b32.xlu0 %v276, 9
        %v1004 = vpop.permute.xlu0 %1003
        %1005 = vrot.lane.b32.xlu0 %v269, 9
        %v1006 = vpop.permute.xlu0 %1005
        %1007 = vrot.lane.b32.xlu0 %v277, 9
        %v1008 = vpop.permute.xlu0 %1007
        %1009 = vrot.lane.b32.xlu0 %v270, 9
        %v1010 = vpop.permute.xlu0 %1009
        %1011 = vrot.lane.b32.xlu0 %v278, 9
        %v1012 = vpop.permute.xlu0 %1011
        %1013 = vrot.lane.b32.xlu0 %v271, 9
        %v1014 = vpop.permute.xlu0 %1013
        %1015 = vrot.lane.b32.xlu0 %v279, 9
        %v1016 = vpop.permute.xlu0 %1015
        %1017 = vrot.lane.b32.xlu0 %v272, 9
        %v1018 = vpop.permute.xlu0 %1017
        %1019 = vrot.lane.b32.xlu0 %v280, 9
        %v1020 = vpop.permute.xlu0 %1019
        %1021 = vrot.lane.b32.xlu0 %v273, 9
        %v1022 = vpop.permute.xlu0 %1021
        %1023 = vrot.lane.b32.xlu0 %v281, 9
        %v1024 = vpop.permute.xlu0 %1023
        %1025 = vrot.lane.b32.xlu0 %v274, 9
        %v1026 = vpop.permute.xlu0 %1025
        %1027 = vrot.lane.b32.xlu0 %v282, 9
        %v1028 = vpop.permute.xlu0 %1027
        %1029 = vrot.lane.b32.xlu0 %v275, 9
        %v1030 = vpop.permute.xlu0 %1029
        %1031 = vrot.lane.b32.xlu0 %v283, 9
        %v1032 = vpop.permute.xlu0 %1031
        %vm1033 = vcmp.lt.s32.totalorder %v317, 9
        %v1034 = vsel %vm1033, %v1026, %v1030
        %v1035 = vsel %vm1033, %v1028, %v1032
        %v1036 = vsel %vm1033, %v1022, %v1026
        %v1037 = vsel %vm1033, %v1024, %v1028
        %v1038 = vsel %vm1033, %v1018, %v1022
        %v1039 = vsel %vm1033, %v1020, %v1024
        %v1040 = vsel %vm1033, %v1014, %v1018
        %v1041 = vsel %vm1033, %v1016, %v1020
        %v1042 = vsel %vm1033, %v1010, %v1014
        %v1043 = vsel %vm1033, %v1012, %v1016
        %v1044 = vsel %vm1033, %v1006, %v1010
        %v1045 = vsel %vm1033, %v1008, %v1012
        %v1046 = vsel %vm1033, %v1002, %v1006
        %v1047 = vsel %vm1033, %v1004, %v1008
        %v1048 = vsel %vm1033, %v1030, %v1002
        %v1049 = vsel %vm1033, %v1032, %v1004
        %v1050 = vpack.c.bf16 %v1049, %v1048
        %v1051 = vpack.c.bf16 %v1047, %v1046
        %v1052 = vpack.c.bf16 %v1045, %v1044
        %v1053 = vpack.c.bf16 %v1043, %v1042
        %v1054 = vpack.c.bf16 %v1041, %v1040
        %v1055 = vpack.c.bf16 %v1039, %v1038
        %v1056 = vpack.c.bf16 %v1037, %v1036
        %v1057 = vpack.c.bf16 %v1035, %v1034
        %1058 = vst [vmem:[#allocation2 + $0x2c0] sm:$0xff] %v1050
        %1059 = vst [vmem:[#allocation2 + $0x2c8] sm:$0xff] %v1051
        %1060 = vst [vmem:[#allocation2 + $0x2d0] sm:$0xff] %v1052
        %1061 = vst [vmem:[#allocation2 + $0x2d8] sm:$0xff] %v1053
        %1062 = vst [vmem:[#allocation2 + $0x2e0] sm:$0xff] %v1054
        %1063 = vst [vmem:[#allocation2 + $0x2e8] sm:$0xff] %v1055
        %1064 = vst [vmem:[#allocation2 + $0x2f0] sm:$0xff] %v1056
        %1065 = vst [vmem:[#allocation2 + $0x2f8] sm:$0xff] %v1057
        %1066 = vrot.lane.b32.xlu0 %v268, 1
        %v1067 = vpop.permute.xlu0 %1066
        %1068 = vrot.lane.b32.xlu0 %v276, 1
        %v1069 = vpop.permute.xlu0 %1068
        %1070 = vrot.lane.b32.xlu0 %v269, 1
        %v1071 = vpop.permute.xlu0 %1070
        %1072 = vrot.lane.b32.xlu0 %v277, 1
        %v1073 = vpop.permute.xlu0 %1072
        %1074 = vrot.lane.b32.xlu0 %v270, 1
        %v1075 = vpop.permute.xlu0 %1074
        %1076 = vrot.lane.b32.xlu0 %v278, 1
        %v1077 = vpop.permute.xlu0 %1076
        %1078 = vrot.lane.b32.xlu0 %v271, 1
        %v1079 = vpop.permute.xlu0 %1078
        %1080 = vrot.lane.b32.xlu0 %v279, 1
        %v1081 = vpop.permute.xlu0 %1080
        %1082 = vrot.lane.b32.xlu0 %v272, 1
        %v1083 = vpop.permute.xlu0 %1082
        %1084 = vrot.lane.b32.xlu0 %v280, 1
        %v1085 = vpop.permute.xlu0 %1084
        %1086 = vrot.lane.b32.xlu0 %v273, 1
        %v1087 = vpop.permute.xlu0 %1086
        %1088 = vrot.lane.b32.xlu0 %v281, 1
        %v1089 = vpop.permute.xlu0 %1088
        %1090 = vrot.lane.b32.xlu0 %v274, 1
        %v1091 = vpop.permute.xlu0 %1090
        %1092 = vrot.lane.b32.xlu0 %v282, 1
        %v1093 = vpop.permute.xlu0 %1092
        %1094 = vrot.lane.b32.xlu0 %v275, 1
        %v1095 = vpop.permute.xlu0 %1094
        %1096 = vrot.lane.b32.xlu0 %v283, 1
        %v1097 = vpop.permute.xlu0 %1096
        %vm1098 = vcmp.lt.s32.totalorder %v317, 1
        %v1099 = vsel %vm1098, %v1091, %v1095
        %v1100 = vsel %vm1098, %v1093, %v1097
        %v1101 = vsel %vm1098, %v1087, %v1091
        %v1102 = vsel %vm1098, %v1089, %v1093
        %v1103 = vsel %vm1098, %v1083, %v1087
        %v1104 = vsel %vm1098, %v1085, %v1089
        %v1105 = vsel %vm1098, %v1079, %v1083
        %v1106 = vsel %vm1098, %v1081, %v1085
        %v1107 = vsel %vm1098, %v1075, %v1079
        %v1108 = vsel %vm1098, %v1077, %v1081
        %v1109 = vsel %vm1098, %v1071, %v1075
        %v1110 = vsel %vm1098, %v1073, %v1077
        %v1111 = vsel %vm1098, %v1067, %v1071
        %v1112 = vsel %vm1098, %v1069, %v1073
        %v1113 = vsel %vm1098, %v1095, %v1067
        %v1114 = vsel %vm1098, %v1097, %v1069
        %v1115 = vpack.c.bf16 %v1114, %v1113
        %v1116 = vpack.c.bf16 %v1112, %v1111
        %v1117 = vpack.c.bf16 %v1110, %v1109
        %v1118 = vpack.c.bf16 %v1108, %v1107
        %v1119 = vpack.c.bf16 %v1106, %v1105
        %v1120 = vpack.c.bf16 %v1104, %v1103
        %v1121 = vpack.c.bf16 %v1102, %v1101
        %v1122 = vpack.c.bf16 %v1100, %v1099
        %1123 = vst [vmem:[#allocation2 + $0x300] sm:$0xff] %v1115
        %1124 = vst [vmem:[#allocation2 + $0x308] sm:$0xff] %v1116
        %1125 = vst [vmem:[#allocation2 + $0x310] sm:$0xff] %v1117
        %1126 = vst [vmem:[#allocation2 + $0x318] sm:$0xff] %v1118
        %1127 = vst [vmem:[#allocation2 + $0x320] sm:$0xff] %v1119
        %1128 = vst [vmem:[#allocation2 + $0x328] sm:$0xff] %v1120
        %1129 = vst [vmem:[#allocation2 + $0x330] sm:$0xff] %v1121
        %1130 = vst [vmem:[#allocation2 + $0x338] sm:$0xff] %v1122
        %v1139 = vunpack.c.l.b16 %v260
        %v1140 = vunpack.c.h.b16 %v260
        %v1141 = vunpack.c.l.b16 %v261
        %v1142 = vunpack.c.h.b16 %v261
        %v1143 = vunpack.c.l.b16 %v262
        %v1144 = vunpack.c.h.b16 %v262
        %v1145 = vunpack.c.l.b16 %v263
        %v1146 = vunpack.c.h.b16 %v263
        %v1147 = vunpack.c.l.b16 %v264
        %v1148 = vunpack.c.h.b16 %v264
        %v1149 = vunpack.c.l.b16 %v265
        %v1150 = vunpack.c.h.b16 %v265
        %v1151 = vunpack.c.l.b16 %v266
        %v1152 = vunpack.c.h.b16 %v266
        %v1153 = vunpack.c.l.b16 %v267
        %v1154 = vunpack.c.h.b16 %v267
        %v1155 = vpack.c.b16 %v1147, %v1139
        %v1156 = vpack.c.b16 %v1148, %v1140
        %v1157 = vpack.c.b16 %v1149, %v1141
        %v1158 = vpack.c.b16 %v1150, %v1142
        %v1159 = vpack.c.b16 %v1151, %v1143
        %v1160 = vpack.c.b16 %v1152, %v1144
        %v1161 = vpack.c.b16 %v1153, %v1145
        %v1162 = vpack.c.b16 %v1154, %v1146
        %1171 = vst [vmem:[#allocation2 + $0x340] sm:$0xff] %v1155
        %1172 = vst [vmem:[#allocation2 + $0x348] sm:$0xff] %v1156
        %1173 = vst [vmem:[#allocation2 + $0x350] sm:$0xff] %v1157
        %1174 = vst [vmem:[#allocation2 + $0x358] sm:$0xff] %v1158
        %1175 = vst [vmem:[#allocation2 + $0x360] sm:$0xff] %v1159
        %1176 = vst [vmem:[#allocation2 + $0x368] sm:$0xff] %v1160
        %1177 = vst [vmem:[#allocation2 + $0x370] sm:$0xff] %v1161
        %1178 = vst [vmem:[#allocation2 + $0x378] sm:$0xff] %v1162
        %1179 = vrot.lane.b32.xlu0 %v268, 127
        %v1180 = vpop.permute.xlu0 %1179
        %1181 = vrot.lane.b32.xlu0 %v276, 127
        %v1182 = vpop.permute.xlu0 %1181
        %1183 = vrot.lane.b32.xlu0 %v269, 127
        %v1184 = vpop.permute.xlu0 %1183
        %1185 = vrot.lane.b32.xlu0 %v277, 127
        %v1186 = vpop.permute.xlu0 %1185
        %1187 = vrot.lane.b32.xlu0 %v270, 127
        %v1188 = vpop.permute.xlu0 %1187
        %1189 = vrot.lane.b32.xlu0 %v278, 127
        %v1190 = vpop.permute.xlu0 %1189
        %1191 = vrot.lane.b32.xlu0 %v271, 127
        %v1192 = vpop.permute.xlu0 %1191
        %1193 = vrot.lane.b32.xlu0 %v279, 127
        %v1194 = vpop.permute.xlu0 %1193
        %1195 = vrot.lane.b32.xlu0 %v272, 127
        %v1196 = vpop.permute.xlu0 %1195
        %1197 = vrot.lane.b32.xlu0 %v280, 127
        %v1198 = vpop.permute.xlu0 %1197
        %1199 = vrot.lane.b32.xlu0 %v273, 127
        %v1200 = vpop.permute.xlu0 %1199
        %1201 = vrot.lane.b32.xlu0 %v281, 127
        %v1202 = vpop.permute.xlu0 %1201
        %1203 = vrot.lane.b32.xlu0 %v274, 127
        %v1204 = vpop.permute.xlu0 %1203
        %1205 = vrot.lane.b32.xlu0 %v282, 127
        %v1206 = vpop.permute.xlu0 %1205
        %1207 = vrot.lane.b32.xlu0 %v275, 127
        %v1208 = vpop.permute.xlu0 %1207
        %1209 = vrot.lane.b32.xlu0 %v283, 127
        %v1210 = vpop.permute.xlu0 %1209
        %vm1211 = vcmp.lt.s32.totalorder %v317, 127
        %v1212 = vsel %vm1211, %v1204, %v1208
        %v1213 = vsel %vm1211, %v1206, %v1210
        %v1214 = vsel %vm1211, %v1200, %v1204
        %v1215 = vsel %vm1211, %v1202, %v1206
        %v1216 = vsel %vm1211, %v1196, %v1200
        %v1217 = vsel %vm1211, %v1198, %v1202
        %v1218 = vsel %vm1211, %v1192, %v1196
        %v1219 = vsel %vm1211, %v1194, %v1198
        %v1220 = vsel %vm1211, %v1188, %v1192
        %v1221 = vsel %vm1211, %v1190, %v1194
        %v1222 = vsel %vm1211, %v1184, %v1188
        %v1223 = vsel %vm1211, %v1186, %v1190
        %v1224 = vsel %vm1211, %v1180, %v1184
        %v1225 = vsel %vm1211, %v1182, %v1186
        %v1226 = vsel %vm1211, %v1208, %v1180
        %v1227 = vsel %vm1211, %v1210, %v1182
        %v1228 = vpack.c.bf16 %v1225, %v1224
        %v1229 = vpack.c.bf16 %v1223, %v1222
        %v1230 = vpack.c.bf16 %v1221, %v1220
        %v1231 = vpack.c.bf16 %v1219, %v1218
        %v1232 = vpack.c.bf16 %v1217, %v1216
        %v1233 = vpack.c.bf16 %v1215, %v1214
        %v1234 = vpack.c.bf16 %v1213, %v1212
        %v1235 = vpack.c.bf16 %v1227, %v1226
        %1236 = vst [vmem:[#allocation2 + $0x380] sm:$0xff] %v1228
        %1237 = vst [vmem:[#allocation2 + $0x388] sm:$0xff] %v1229
        %1238 = vst [vmem:[#allocation2 + $0x390] sm:$0xff] %v1230
        %1239 = vst [vmem:[#allocation2 + $0x398] sm:$0xff] %v1231
        %1240 = vst [vmem:[#allocation2 + $0x3a0] sm:$0xff] %v1232
        %1241 = vst [vmem:[#allocation2 + $0x3a8] sm:$0xff] %v1233
        %1242 = vst [vmem:[#allocation2 + $0x3b0] sm:$0xff] %v1234
        %1243 = vst [vmem:[#allocation2 + $0x3b8] sm:$0xff] %v1235
        %1244 = vrot.lane.b32.xlu0 %v268, 119
        %v1245 = vpop.permute.xlu0 %1244
        %1246 = vrot.lane.b32.xlu0 %v276, 119
        %v1247 = vpop.permute.xlu0 %1246
        %1248 = vrot.lane.b32.xlu0 %v269, 119
        %v1249 = vpop.permute.xlu0 %1248
        %1250 = vrot.lane.b32.xlu0 %v277, 119
        %v1251 = vpop.permute.xlu0 %1250
        %1252 = vrot.lane.b32.xlu0 %v270, 119
        %v1253 = vpop.permute.xlu0 %1252
        %1254 = vrot.lane.b32.xlu0 %v278, 119
        %v1255 = vpop.permute.xlu0 %1254
        %1256 = vrot.lane.b32.xlu0 %v271, 119
        %v1257 = vpop.permute.xlu0 %1256
        %1258 = vrot.lane.b32.xlu0 %v279, 119
        %v1259 = vpop.permute.xlu0 %1258
        %1260 = vrot.lane.b32.xlu0 %v272, 119
        %v1261 = vpop.permute.xlu0 %1260
        %1262 = vrot.lane.b32.xlu0 %v280, 119
        %v1263 = vpop.permute.xlu0 %1262
        %1264 = vrot.lane.b32.xlu0 %v273, 119
        %v1265 = vpop.permute.xlu0 %1264
        %1266 = vrot.lane.b32.xlu0 %v281, 119
        %v1267 = vpop.permute.xlu0 %1266
        %1268 = vrot.lane.b32.xlu0 %v274, 119
        %v1269 = vpop.permute.xlu0 %1268
        %1270 = vrot.lane.b32.xlu0 %v282, 119
        %v1271 = vpop.permute.xlu0 %1270
        %1272 = vrot.lane.b32.xlu0 %v275, 119
        %v1273 = vpop.permute.xlu0 %1272
        %1274 = vrot.lane.b32.xlu0 %v283, 119
        %v1275 = vpop.permute.xlu0 %1274
        %vm1276 = vcmp.lt.s32.totalorder %v317, 119
        %v1277 = vsel %vm1276, %v1269, %v1273
        %v1278 = vsel %vm1276, %v1271, %v1275
        %v1279 = vsel %vm1276, %v1265, %v1269
        %v1280 = vsel %vm1276, %v1267, %v1271
        %v1281 = vsel %vm1276, %v1261, %v1265
        %v1282 = vsel %vm1276, %v1263, %v1267
        %v1283 = vsel %vm1276, %v1257, %v1261
        %v1284 = vsel %vm1276, %v1259, %v1263
        %v1285 = vsel %vm1276, %v1253, %v1257
        %v1286 = vsel %vm1276, %v1255, %v1259
        %v1287 = vsel %vm1276, %v1249, %v1253
        %v1288 = vsel %vm1276, %v1251, %v1255
        %v1289 = vsel %vm1276, %v1245, %v1249
        %v1290 = vsel %vm1276, %v1247, %v1251
        %v1291 = vsel %vm1276, %v1273, %v1245
        %v1292 = vsel %vm1276, %v1275, %v1247
        %v1293 = vpack.c.bf16 %v1290, %v1289
        %v1294 = vpack.c.bf16 %v1288, %v1287
        %v1295 = vpack.c.bf16 %v1286, %v1285
        %v1296 = vpack.c.bf16 %v1284, %v1283
        %v1297 = vpack.c.bf16 %v1282, %v1281
        %v1298 = vpack.c.bf16 %v1280, %v1279
        %v1299 = vpack.c.bf16 %v1278, %v1277
        %v1300 = vpack.c.bf16 %v1292, %v1291
        %1301 = vst [vmem:[#allocation2 + $0x3c0] sm:$0xff] %v1293
        %1302 = vst [vmem:[#allocation2 + $0x3c8] sm:$0xff] %v1294
        %1303 = vst [vmem:[#allocation2 + $0x3d0] sm:$0xff] %v1295
        %1304 = vst [vmem:[#allocation2 + $0x3d8] sm:$0xff] %v1296
        %1305 = vst [vmem:[#allocation2 + $0x3e0] sm:$0xff] %v1297
        %1306 = vst [vmem:[#allocation2 + $0x3e8] sm:$0xff] %v1298
        %1307 = vst [vmem:[#allocation2 + $0x3f0] sm:$0xff] %v1299
        %1308 = vst [vmem:[#allocation2 + $0x3f8] sm:$0xff] %v1300
        %1309 = vrot.lane.b32.xlu0 %v268, 118
        %v1310 = vpop.permute.xlu0 %1309
        %1311 = vrot.lane.b32.xlu0 %v276, 118
        %v1312 = vpop.permute.xlu0 %1311
        %1313 = vrot.lane.b32.xlu0 %v269, 118
        %v1314 = vpop.permute.xlu0 %1313
        %1315 = vrot.lane.b32.xlu0 %v277, 118
        %v1316 = vpop.permute.xlu0 %1315
        %1317 = vrot.lane.b32.xlu0 %v270, 118
        %v1318 = vpop.permute.xlu0 %1317
        %1319 = vrot.lane.b32.xlu0 %v278, 118
        %v1320 = vpop.permute.xlu0 %1319
        %1321 = vrot.lane.b32.xlu0 %v271, 118
        %v1322 = vpop.permute.xlu0 %1321
        %1323 = vrot.lane.b32.xlu0 %v279, 118
        %v1324 = vpop.permute.xlu0 %1323
        %1325 = vrot.lane.b32.xlu0 %v272, 118
        %v1326 = vpop.permute.xlu0 %1325
        %1327 = vrot.lane.b32.xlu0 %v280, 118
        %v1328 = vpop.permute.xlu0 %1327
        %1329 = vrot.lane.b32.xlu0 %v273, 118
        %v1330 = vpop.permute.xlu0 %1329
        %1331 = vrot.lane.b32.xlu0 %v281, 118
        %v1332 = vpop.permute.xlu0 %1331
        %1333 = vrot.lane.b32.xlu0 %v274, 118
        %v1334 = vpop.permute.xlu0 %1333
        %1335 = vrot.lane.b32.xlu0 %v282, 118
        %v1336 = vpop.permute.xlu0 %1335
        %1337 = vrot.lane.b32.xlu0 %v275, 118
        %v1338 = vpop.permute.xlu0 %1337
        %1339 = vrot.lane.b32.xlu0 %v283, 118
        %v1340 = vpop.permute.xlu0 %1339
        %vm1341 = vcmp.lt.s32.totalorder %v317, 118
        %v1342 = vsel %vm1341, %v1334, %v1338
        %v1343 = vsel %vm1341, %v1336, %v1340
        %v1344 = vsel %vm1341, %v1330, %v1334
        %v1345 = vsel %vm1341, %v1332, %v1336
        %v1346 = vsel %vm1341, %v1326, %v1330
        %v1347 = vsel %vm1341, %v1328, %v1332
        %v1348 = vsel %vm1341, %v1322, %v1326
        %v1349 = vsel %vm1341, %v1324, %v1328
        %v1350 = vsel %vm1341, %v1318, %v1322
        %v1351 = vsel %vm1341, %v1320, %v1324
        %v1352 = vsel %vm1341, %v1314, %v1318
        %v1353 = vsel %vm1341, %v1316, %v1320
        %v1354 = vsel %vm1341, %v1310, %v1314
        %v1355 = vsel %vm1341, %v1312, %v1316
        %v1356 = vsel %vm1341, %v1338, %v1310
        %v1357 = vsel %vm1341, %v1340, %v1312
        %v1358 = vpack.c.bf16 %v1355, %v1354
        %v1359 = vpack.c.bf16 %v1353, %v1352
        %v1360 = vpack.c.bf16 %v1351, %v1350
        %v1361 = vpack.c.bf16 %v1349, %v1348
        %v1362 = vpack.c.bf16 %v1347, %v1346
        %v1363 = vpack.c.bf16 %v1345, %v1344
        %v1364 = vpack.c.bf16 %v1343, %v1342
        %v1365 = vpack.c.bf16 %v1357, %v1356
        %1366 = vst [vmem:[#allocation2 + $0x400] sm:$0xff] %v1358
        %1367 = vst [vmem:[#allocation2 + $0x408] sm:$0xff] %v1359
        %1368 = vst [vmem:[#allocation2 + $0x410] sm:$0xff] %v1360
        %1369 = vst [vmem:[#allocation2 + $0x418] sm:$0xff] %v1361
        %1370 = vst [vmem:[#allocation2 + $0x420] sm:$0xff] %v1362
        %1371 = vst [vmem:[#allocation2 + $0x428] sm:$0xff] %v1363
        %1372 = vst [vmem:[#allocation2 + $0x430] sm:$0xff] %v1364
        %1373 = vst [vmem:[#allocation2 + $0x438] sm:$0xff] %v1365
        %1374 = vrot.lane.b32.xlu0 %v268, 117
        %v1375 = vpop.permute.xlu0 %1374
        %1376 = vrot.lane.b32.xlu0 %v276, 117
        %v1377 = vpop.permute.xlu0 %1376
        %1378 = vrot.lane.b32.xlu0 %v269, 117
        %v1379 = vpop.permute.xlu0 %1378
        %1380 = vrot.lane.b32.xlu0 %v277, 117
        %v1381 = vpop.permute.xlu0 %1380
        %1382 = vrot.lane.b32.xlu0 %v270, 117
        %v1383 = vpop.permute.xlu0 %1382
        %1384 = vrot.lane.b32.xlu0 %v278, 117
        %v1385 = vpop.permute.xlu0 %1384
        %1386 = vrot.lane.b32.xlu0 %v271, 117
        %v1387 = vpop.permute.xlu0 %1386
        %1388 = vrot.lane.b32.xlu0 %v279, 117
        %v1389 = vpop.permute.xlu0 %1388
        %1390 = vrot.lane.b32.xlu0 %v272, 117
        %v1391 = vpop.permute.xlu0 %1390
        %1392 = vrot.lane.b32.xlu0 %v280, 117
        %v1393 = vpop.permute.xlu0 %1392
        %1394 = vrot.lane.b32.xlu0 %v273, 117
        %v1395 = vpop.permute.xlu0 %1394
        %1396 = vrot.lane.b32.xlu0 %v281, 117
        %v1397 = vpop.permute.xlu0 %1396
        %1398 = vrot.lane.b32.xlu0 %v274, 117
        %v1399 = vpop.permute.xlu0 %1398
        %1400 = vrot.lane.b32.xlu0 %v282, 117
        %v1401 = vpop.permute.xlu0 %1400
        %1402 = vrot.lane.b32.xlu0 %v275, 117
        %v1403 = vpop.permute.xlu0 %1402
        %1404 = vrot.lane.b32.xlu0 %v283, 117
        %v1405 = vpop.permute.xlu0 %1404
        %vm1406 = vcmp.lt.s32.totalorder %v317, 117
        %v1407 = vsel %vm1406, %v1399, %v1403
        %v1408 = vsel %vm1406, %v1401, %v1405
        %v1409 = vsel %vm1406, %v1395, %v1399
        %v1410 = vsel %vm1406, %v1397, %v1401
        %v1411 = vsel %vm1406, %v1391, %v1395
        %v1412 = vsel %vm1406, %v1393, %v1397
        %v1413 = vsel %vm1406, %v1387, %v1391
        %v1414 = vsel %vm1406, %v1389, %v1393
        %v1415 = vsel %vm1406, %v1383, %v1387
        %v1416 = vsel %vm1406, %v1385, %v1389
        %v1417 = vsel %vm1406, %v1379, %v1383
        %v1418 = vsel %vm1406, %v1381, %v1385
        %v1419 = vsel %vm1406, %v1375, %v1379
        %v1420 = vsel %vm1406, %v1377, %v1381
        %v1421 = vsel %vm1406, %v1403, %v1375
        %v1422 = vsel %vm1406, %v1405, %v1377
        %v1423 = vpack.c.bf16 %v1420, %v1419
        %v1424 = vpack.c.bf16 %v1418, %v1417
        %v1425 = vpack.c.bf16 %v1416, %v1415
        %v1426 = vpack.c.bf16 %v1414, %v1413
        %v1427 = vpack.c.bf16 %v1412, %v1411
        %v1428 = vpack.c.bf16 %v1410, %v1409
        %v1429 = vpack.c.bf16 %v1408, %v1407
        %v1430 = vpack.c.bf16 %v1422, %v1421
        %1431 = vst [vmem:[#allocation2 + $0x440] sm:$0xff] %v1423
        %1432 = vst [vmem:[#allocation2 + $0x448] sm:$0xff] %v1424
        %1433 = vst [vmem:[#allocation2 + $0x450] sm:$0xff] %v1425
        %1434 = vst [vmem:[#allocation2 + $0x458] sm:$0xff] %v1426
        %1435 = vst [vmem:[#allocation2 + $0x460] sm:$0xff] %v1427
        %1436 = vst [vmem:[#allocation2 + $0x468] sm:$0xff] %v1428
        %1437 = vst [vmem:[#allocation2 + $0x470] sm:$0xff] %v1429
        %1438 = vst [vmem:[#allocation2 + $0x478] sm:$0xff] %v1430
        %1439 = vrot.lane.b32.xlu0 %v268, 39
        %v1440 = vpop.permute.xlu0 %1439
        %1441 = vrot.lane.b32.xlu0 %v276, 39
        %v1442 = vpop.permute.xlu0 %1441
        %1443 = vrot.lane.b32.xlu0 %v269, 39
        %v1444 = vpop.permute.xlu0 %1443
        %1445 = vrot.lane.b32.xlu0 %v277, 39
        %v1446 = vpop.permute.xlu0 %1445
        %1447 = vrot.lane.b32.xlu0 %v270, 39
        %v1448 = vpop.permute.xlu0 %1447
        %1449 = vrot.lane.b32.xlu0 %v278, 39
        %v1450 = vpop.permute.xlu0 %1449
        %1451 = vrot.lane.b32.xlu0 %v271, 39
        %v1452 = vpop.permute.xlu0 %1451
        %1453 = vrot.lane.b32.xlu0 %v279, 39
        %v1454 = vpop.permute.xlu0 %1453
        %1455 = vrot.lane.b32.xlu0 %v272, 39
        %v1456 = vpop.permute.xlu0 %1455
        %1457 = vrot.lane.b32.xlu0 %v280, 39
        %v1458 = vpop.permute.xlu0 %1457
        %1459 = vrot.lane.b32.xlu0 %v273, 39
        %v1460 = vpop.permute.xlu0 %1459
        %1461 = vrot.lane.b32.xlu0 %v281, 39
        %v1462 = vpop.permute.xlu0 %1461
        %1463 = vrot.lane.b32.xlu0 %v274, 39
        %v1464 = vpop.permute.xlu0 %1463
        %1465 = vrot.lane.b32.xlu0 %v282, 39
        %v1466 = vpop.permute.xlu0 %1465
        %1467 = vrot.lane.b32.xlu0 %v275, 39
        %v1468 = vpop.permute.xlu0 %1467
        %1469 = vrot.lane.b32.xlu0 %v283, 39
        %v1470 = vpop.permute.xlu0 %1469
        %vm1471 = vcmp.lt.s32.totalorder %v317, 39
        %v1472 = vsel %vm1471, %v1464, %v1468
        %v1473 = vsel %vm1471, %v1466, %v1470
        %v1474 = vsel %vm1471, %v1460, %v1464
        %v1475 = vsel %vm1471, %v1462, %v1466
        %v1476 = vsel %vm1471, %v1456, %v1460
        %v1477 = vsel %vm1471, %v1458, %v1462
        %v1478 = vsel %vm1471, %v1452, %v1456
        %v1479 = vsel %vm1471, %v1454, %v1458
        %v1480 = vsel %vm1471, %v1448, %v1452
        %v1481 = vsel %vm1471, %v1450, %v1454
        %v1482 = vsel %vm1471, %v1444, %v1448
        %v1483 = vsel %vm1471, %v1446, %v1450
        %v1484 = vsel %vm1471, %v1440, %v1444
        %v1485 = vsel %vm1471, %v1442, %v1446
        %v1486 = vsel %vm1471, %v1468, %v1440
        %v1487 = vsel %vm1471, %v1470, %v1442
        %v1488 = vpack.c.bf16 %v1485, %v1484
        %v1489 = vpack.c.bf16 %v1483, %v1482
        %v1490 = vpack.c.bf16 %v1481, %v1480
        %v1491 = vpack.c.bf16 %v1479, %v1478
        %v1492 = vpack.c.bf16 %v1477, %v1476
        %v1493 = vpack.c.bf16 %v1475, %v1474
        %v1494 = vpack.c.bf16 %v1473, %v1472
        %v1495 = vpack.c.bf16 %v1487, %v1486
        %1496 = vst [vmem:[#allocation2 + $0x480] sm:$0xff] %v1488
        %1497 = vst [vmem:[#allocation2 + $0x488] sm:$0xff] %v1489
        %1498 = vst [vmem:[#allocation2 + $0x490] sm:$0xff] %v1490
        %1499 = vst [vmem:[#allocation2 + $0x498] sm:$0xff] %v1491
        %1500 = vst [vmem:[#allocation2 + $0x4a0] sm:$0xff] %v1492
        %1501 = vst [vmem:[#allocation2 + $0x4a8] sm:$0xff] %v1493
        %1502 = vst [vmem:[#allocation2 + $0x4b0] sm:$0xff] %v1494
        %1503 = vst [vmem:[#allocation2 + $0x4b8] sm:$0xff] %v1495
        %1504 = vrot.lane.b32.xlu0 %v268, 38
        %v1505 = vpop.permute.xlu0 %1504
        %1506 = vrot.lane.b32.xlu0 %v276, 38
        %v1507 = vpop.permute.xlu0 %1506
        %1508 = vrot.lane.b32.xlu0 %v269, 38
        %v1509 = vpop.permute.xlu0 %1508
        %1510 = vrot.lane.b32.xlu0 %v277, 38
        %v1511 = vpop.permute.xlu0 %1510
        %1512 = vrot.lane.b32.xlu0 %v270, 38
        %v1513 = vpop.permute.xlu0 %1512
        %1514 = vrot.lane.b32.xlu0 %v278, 38
        %v1515 = vpop.permute.xlu0 %1514
        %1516 = vrot.lane.b32.xlu0 %v271, 38
        %v1517 = vpop.permute.xlu0 %1516
        %1518 = vrot.lane.b32.xlu0 %v279, 38
        %v1519 = vpop.permute.xlu0 %1518
        %1520 = vrot.lane.b32.xlu0 %v272, 38
        %v1521 = vpop.permute.xlu0 %1520
        %1522 = vrot.lane.b32.xlu0 %v280, 38
        %v1523 = vpop.permute.xlu0 %1522
        %1524 = vrot.lane.b32.xlu0 %v273, 38
        %v1525 = vpop.permute.xlu0 %1524
        %1526 = vrot.lane.b32.xlu0 %v281, 38
        %v1527 = vpop.permute.xlu0 %1526
        %1528 = vrot.lane.b32.xlu0 %v274, 38
        %v1529 = vpop.permute.xlu0 %1528
        %1530 = vrot.lane.b32.xlu0 %v282, 38
        %v1531 = vpop.permute.xlu0 %1530
        %1532 = vrot.lane.b32.xlu0 %v275, 38
        %v1533 = vpop.permute.xlu0 %1532
        %1534 = vrot.lane.b32.xlu0 %v283, 38
        %v1535 = vpop.permute.xlu0 %1534
        %vm1536 = vcmp.lt.s32.totalorder %v317, 38
        %v1537 = vsel %vm1536, %v1529, %v1533
        %v1538 = vsel %vm1536, %v1531, %v1535
        %v1539 = vsel %vm1536, %v1525, %v1529
        %v1540 = vsel %vm1536, %v1527, %v1531
        %v1541 = vsel %vm1536, %v1521, %v1525
        %v1542 = vsel %vm1536, %v1523, %v1527
        %v1543 = vsel %vm1536, %v1517, %v1521
        %v1544 = vsel %vm1536, %v1519, %v1523
        %v1545 = vsel %vm1536, %v1513, %v1517
        %v1546 = vsel %vm1536, %v1515, %v1519
        %v1547 = vsel %vm1536, %v1509, %v1513
        %v1548 = vsel %vm1536, %v1511, %v1515
        %v1549 = vsel %vm1536, %v1505, %v1509
        %v1550 = vsel %vm1536, %v1507, %v1511
        %v1551 = vsel %vm1536, %v1533, %v1505
        %v1552 = vsel %vm1536, %v1535, %v1507
        %v1553 = vpack.c.bf16 %v1550, %v1549
        %v1554 = vpack.c.bf16 %v1548, %v1547
        %v1555 = vpack.c.bf16 %v1546, %v1545
        %v1556 = vpack.c.bf16 %v1544, %v1543
        %v1557 = vpack.c.bf16 %v1542, %v1541
        %v1558 = vpack.c.bf16 %v1540, %v1539
        %v1559 = vpack.c.bf16 %v1538, %v1537
        %v1560 = vpack.c.bf16 %v1552, %v1551
        %1561 = vst [vmem:[#allocation2 + $0x4c0] sm:$0xff] %v1553
        %1562 = vst [vmem:[#allocation2 + $0x4c8] sm:$0xff] %v1554
        %1563 = vst [vmem:[#allocation2 + $0x4d0] sm:$0xff] %v1555
        %1564 = vst [vmem:[#allocation2 + $0x4d8] sm:$0xff] %v1556
        %1565 = vst [vmem:[#allocation2 + $0x4e0] sm:$0xff] %v1557
        %1566 = vst [vmem:[#allocation2 + $0x4e8] sm:$0xff] %v1558
        %1567 = vst [vmem:[#allocation2 + $0x4f0] sm:$0xff] %v1559
        %1568 = vst [vmem:[#allocation2 + $0x4f8] sm:$0xff] %v1560
        %1569 = vrot.lane.b32.xlu0 %v268, 37
        %v1570 = vpop.permute.xlu0 %1569
        %1571 = vrot.lane.b32.xlu0 %v276, 37
        %v1572 = vpop.permute.xlu0 %1571
        %1573 = vrot.lane.b32.xlu0 %v269, 37
        %v1574 = vpop.permute.xlu0 %1573
        %1575 = vrot.lane.b32.xlu0 %v277, 37
        %v1576 = vpop.permute.xlu0 %1575
        %1577 = vrot.lane.b32.xlu0 %v270, 37
        %v1578 = vpop.permute.xlu0 %1577
        %1579 = vrot.lane.b32.xlu0 %v278, 37
        %v1580 = vpop.permute.xlu0 %1579
        %1581 = vrot.lane.b32.xlu0 %v271, 37
        %v1582 = vpop.permute.xlu0 %1581
        %1583 = vrot.lane.b32.xlu0 %v279, 37
        %v1584 = vpop.permute.xlu0 %1583
        %1585 = vrot.lane.b32.xlu0 %v272, 37
        %v1586 = vpop.permute.xlu0 %1585
        %1587 = vrot.lane.b32.xlu0 %v280, 37
        %v1588 = vpop.permute.xlu0 %1587
        %1589 = vrot.lane.b32.xlu0 %v273, 37
        %v1590 = vpop.permute.xlu0 %1589
        %1591 = vrot.lane.b32.xlu0 %v281, 37
        %v1592 = vpop.permute.xlu0 %1591
        %1593 = vrot.lane.b32.xlu0 %v274, 37
        %v1594 = vpop.permute.xlu0 %1593
        %1595 = vrot.lane.b32.xlu0 %v282, 37
        %v1596 = vpop.permute.xlu0 %1595
        %1597 = vrot.lane.b32.xlu0 %v275, 37
        %v1598 = vpop.permute.xlu0 %1597
        %1599 = vrot.lane.b32.xlu0 %v283, 37
        %v1600 = vpop.permute.xlu0 %1599
        %vm1601 = vcmp.lt.s32.totalorder %v317, 37
        %v1602 = vsel %vm1601, %v1594, %v1598
        %v1603 = vsel %vm1601, %v1596, %v1600
        %v1604 = vsel %vm1601, %v1590, %v1594
        %v1605 = vsel %vm1601, %v1592, %v1596
        %v1606 = vsel %vm1601, %v1586, %v1590
        %v1607 = vsel %vm1601, %v1588, %v1592
        %v1608 = vsel %vm1601, %v1582, %v1586
        %v1609 = vsel %vm1601, %v1584, %v1588
        %v1610 = vsel %vm1601, %v1578, %v1582
        %v1611 = vsel %vm1601, %v1580, %v1584
        %v1612 = vsel %vm1601, %v1574, %v1578
        %v1613 = vsel %vm1601, %v1576, %v1580
        %v1614 = vsel %vm1601, %v1570, %v1574
        %v1615 = vsel %vm1601, %v1572, %v1576
        %v1616 = vsel %vm1601, %v1598, %v1570
        %v1617 = vsel %vm1601, %v1600, %v1572
        %v1618 = vpack.c.bf16 %v1615, %v1614
        %v1619 = vpack.c.bf16 %v1613, %v1612
        %v1620 = vpack.c.bf16 %v1611, %v1610
        %v1621 = vpack.c.bf16 %v1609, %v1608
        %v1622 = vpack.c.bf16 %v1607, %v1606
        %v1623 = vpack.c.bf16 %v1605, %v1604
        %v1624 = vpack.c.bf16 %v1603, %v1602
        %v1625 = vpack.c.bf16 %v1617, %v1616
        %1626 = vst [vmem:[#allocation2 + $0x500] sm:$0xff] %v1618
        %1627 = vst [vmem:[#allocation2 + $0x508] sm:$0xff] %v1619
        %1628 = vst [vmem:[#allocation2 + $0x510] sm:$0xff] %v1620
        %1629 = vst [vmem:[#allocation2 + $0x518] sm:$0xff] %v1621
        %1630 = vst [vmem:[#allocation2 + $0x520] sm:$0xff] %v1622
        %1631 = vst [vmem:[#allocation2 + $0x528] sm:$0xff] %v1623
        %1632 = vst [vmem:[#allocation2 + $0x530] sm:$0xff] %v1624
        %1633 = vst [vmem:[#allocation2 + $0x538] sm:$0xff] %v1625
        %1634 = vrot.lane.b32.xlu0 %v268, 29
        %v1635 = vpop.permute.xlu0 %1634
        %1636 = vrot.lane.b32.xlu0 %v276, 29
        %v1637 = vpop.permute.xlu0 %1636
        %1638 = vrot.lane.b32.xlu0 %v269, 29
        %v1639 = vpop.permute.xlu0 %1638
        %1640 = vrot.lane.b32.xlu0 %v277, 29
        %v1641 = vpop.permute.xlu0 %1640
        %1642 = vrot.lane.b32.xlu0 %v270, 29
        %v1643 = vpop.permute.xlu0 %1642
        %1644 = vrot.lane.b32.xlu0 %v278, 29
        %v1645 = vpop.permute.xlu0 %1644
        %1646 = vrot.lane.b32.xlu0 %v271, 29
        %v1647 = vpop.permute.xlu0 %1646
        %1648 = vrot.lane.b32.xlu0 %v279, 29
        %v1649 = vpop.permute.xlu0 %1648
        %1650 = vrot.lane.b32.xlu0 %v272, 29
        %v1651 = vpop.permute.xlu0 %1650
        %1652 = vrot.lane.b32.xlu0 %v280, 29
        %v1653 = vpop.permute.xlu0 %1652
        %1654 = vrot.lane.b32.xlu0 %v273, 29
        %v1655 = vpop.permute.xlu0 %1654
        %1656 = vrot.lane.b32.xlu0 %v281, 29
        %v1657 = vpop.permute.xlu0 %1656
        %1658 = vrot.lane.b32.xlu0 %v274, 29
        %v1659 = vpop.permute.xlu0 %1658
        %1660 = vrot.lane.b32.xlu0 %v282, 29
        %v1661 = vpop.permute.xlu0 %1660
        %1662 = vrot.lane.b32.xlu0 %v275, 29
        %v1663 = vpop.permute.xlu0 %1662
        %1664 = vrot.lane.b32.xlu0 %v283, 29
        %v1665 = vpop.permute.xlu0 %1664
        %vm1666 = vcmp.lt.s32.totalorder %v317, 29
        %v1667 = vsel %vm1666, %v1659, %v1663
        %v1668 = vsel %vm1666, %v1661, %v1665
        %v1669 = vsel %vm1666, %v1655, %v1659
        %v1670 = vsel %vm1666, %v1657, %v1661
        %v1671 = vsel %vm1666, %v1651, %v1655
        %v1672 = vsel %vm1666, %v1653, %v1657
        %v1673 = vsel %vm1666, %v1647, %v1651
        %v1674 = vsel %vm1666, %v1649, %v1653
        %v1675 = vsel %vm1666, %v1643, %v1647
        %v1676 = vsel %vm1666, %v1645, %v1649
        %v1677 = vsel %vm1666, %v1639, %v1643
        %v1678 = vsel %vm1666, %v1641, %v1645
        %v1679 = vsel %vm1666, %v1635, %v1639
        %v1680 = vsel %vm1666, %v1637, %v1641
        %v1681 = vsel %vm1666, %v1663, %v1635
        %v1682 = vsel %vm1666, %v1665, %v1637
        %v1683 = vpack.c.bf16 %v1680, %v1679
        %v1684 = vpack.c.bf16 %v1678, %v1677
        %v1685 = vpack.c.bf16 %v1676, %v1675
        %v1686 = vpack.c.bf16 %v1674, %v1673
        %v1687 = vpack.c.bf16 %v1672, %v1671
        %v1688 = vpack.c.bf16 %v1670, %v1669
        %v1689 = vpack.c.bf16 %v1668, %v1667
        %v1690 = vpack.c.bf16 %v1682, %v1681
        %1691 = vst [vmem:[#allocation2 + $0x540] sm:$0xff] %v1683
        %1692 = vst [vmem:[#allocation2 + $0x548] sm:$0xff] %v1684
        %1693 = vst [vmem:[#allocation2 + $0x550] sm:$0xff] %v1685
        %1694 = vst [vmem:[#allocation2 + $0x558] sm:$0xff] %v1686
        %1695 = vst [vmem:[#allocation2 + $0x560] sm:$0xff] %v1687
        %1696 = vst [vmem:[#allocation2 + $0x568] sm:$0xff] %v1688
        %1697 = vst [vmem:[#allocation2 + $0x570] sm:$0xff] %v1689
        %1698 = vst [vmem:[#allocation2 + $0x578] sm:$0xff] %v1690
        %1699 = vrot.lane.b32.xlu0 %v268, 28
        %v1700 = vpop.permute.xlu0 %1699
        %1701 = vrot.lane.b32.xlu0 %v276, 28
        %v1702 = vpop.permute.xlu0 %1701
        %1703 = vrot.lane.b32.xlu0 %v269, 28
        %v1704 = vpop.permute.xlu0 %1703
        %1705 = vrot.lane.b32.xlu0 %v277, 28
        %v1706 = vpop.permute.xlu0 %1705
        %1707 = vrot.lane.b32.xlu0 %v270, 28
        %v1708 = vpop.permute.xlu0 %1707
        %1709 = vrot.lane.b32.xlu0 %v278, 28
        %v1710 = vpop.permute.xlu0 %1709
        %1711 = vrot.lane.b32.xlu0 %v271, 28
        %v1712 = vpop.permute.xlu0 %1711
        %1713 = vrot.lane.b32.xlu0 %v279, 28
        %v1714 = vpop.permute.xlu0 %1713
        %1715 = vrot.lane.b32.xlu0 %v272, 28
        %v1716 = vpop.permute.xlu0 %1715
        %1717 = vrot.lane.b32.xlu0 %v280, 28
        %v1718 = vpop.permute.xlu0 %1717
        %1719 = vrot.lane.b32.xlu0 %v273, 28
        %v1720 = vpop.permute.xlu0 %1719
        %1721 = vrot.lane.b32.xlu0 %v281, 28
        %v1722 = vpop.permute.xlu0 %1721
        %1723 = vrot.lane.b32.xlu0 %v274, 28
        %v1724 = vpop.permute.xlu0 %1723
        %1725 = vrot.lane.b32.xlu0 %v282, 28
        %v1726 = vpop.permute.xlu0 %1725
        %1727 = vrot.lane.b32.xlu0 %v275, 28
        %v1728 = vpop.permute.xlu0 %1727
        %1729 = vrot.lane.b32.xlu0 %v283, 28
        %v1730 = vpop.permute.xlu0 %1729
        %vm1731 = vcmp.lt.s32.totalorder %v317, 28
        %v1732 = vsel %vm1731, %v1724, %v1728
        %v1733 = vsel %vm1731, %v1726, %v1730
        %v1734 = vsel %vm1731, %v1720, %v1724
        %v1735 = vsel %vm1731, %v1722, %v1726
        %v1736 = vsel %vm1731, %v1716, %v1720
        %v1737 = vsel %vm1731, %v1718, %v1722
        %v1738 = vsel %vm1731, %v1712, %v1716
        %v1739 = vsel %vm1731, %v1714, %v1718
        %v1740 = vsel %vm1731, %v1708, %v1712
        %v1741 = vsel %vm1731, %v1710, %v1714
        %v1742 = vsel %vm1731, %v1704, %v1708
        %v1743 = vsel %vm1731, %v1706, %v1710
        %v1744 = vsel %vm1731, %v1700, %v1704
        %v1745 = vsel %vm1731, %v1702, %v1706
        %v1746 = vsel %vm1731, %v1728, %v1700
        %v1747 = vsel %vm1731, %v1730, %v1702
        %v1748 = vpack.c.bf16 %v1745, %v1744
        %v1749 = vpack.c.bf16 %v1743, %v1742
        %v1750 = vpack.c.bf16 %v1741, %v1740
        %v1751 = vpack.c.bf16 %v1739, %v1738
        %v1752 = vpack.c.bf16 %v1737, %v1736
        %v1753 = vpack.c.bf16 %v1735, %v1734
        %v1754 = vpack.c.bf16 %v1733, %v1732
        %v1755 = vpack.c.bf16 %v1747, %v1746
        %1756 = vst [vmem:[#allocation2 + $0x580] sm:$0xff] %v1748
        %1757 = vst [vmem:[#allocation2 + $0x588] sm:$0xff] %v1749
        %1758 = vst [vmem:[#allocation2 + $0x590] sm:$0xff] %v1750
        %1759 = vst [vmem:[#allocation2 + $0x598] sm:$0xff] %v1751
        %1760 = vst [vmem:[#allocation2 + $0x5a0] sm:$0xff] %v1752
        %1761 = vst [vmem:[#allocation2 + $0x5a8] sm:$0xff] %v1753
        %1762 = vst [vmem:[#allocation2 + $0x5b0] sm:$0xff] %v1754
        %1763 = vst [vmem:[#allocation2 + $0x5b8] sm:$0xff] %v1755
        %1764 = vrot.lane.b32.xlu0 %v268, 27
        %v1765 = vpop.permute.xlu0 %1764
        %1766 = vrot.lane.b32.xlu0 %v276, 27
        %v1767 = vpop.permute.xlu0 %1766
        %1768 = vrot.lane.b32.xlu0 %v269, 27
        %v1769 = vpop.permute.xlu0 %1768
        %1770 = vrot.lane.b32.xlu0 %v277, 27
        %v1771 = vpop.permute.xlu0 %1770
        %1772 = vrot.lane.b32.xlu0 %v270, 27
        %v1773 = vpop.permute.xlu0 %1772
        %1774 = vrot.lane.b32.xlu0 %v278, 27
        %v1775 = vpop.permute.xlu0 %1774
        %1776 = vrot.lane.b32.xlu0 %v271, 27
        %v1777 = vpop.permute.xlu0 %1776
        %1778 = vrot.lane.b32.xlu0 %v279, 27
        %v1779 = vpop.permute.xlu0 %1778
        %1780 = vrot.lane.b32.xlu0 %v272, 27
        %v1781 = vpop.permute.xlu0 %1780
        %1782 = vrot.lane.b32.xlu0 %v280, 27
        %v1783 = vpop.permute.xlu0 %1782
        %1784 = vrot.lane.b32.xlu0 %v273, 27
        %v1785 = vpop.permute.xlu0 %1784
        %1786 = vrot.lane.b32.xlu0 %v281, 27
        %v1787 = vpop.permute.xlu0 %1786
        %1788 = vrot.lane.b32.xlu0 %v274, 27
        %v1789 = vpop.permute.xlu0 %1788
        %1790 = vrot.lane.b32.xlu0 %v282, 27
        %v1791 = vpop.permute.xlu0 %1790
        %1792 = vrot.lane.b32.xlu0 %v275, 27
        %v1793 = vpop.permute.xlu0 %1792
        %1794 = vrot.lane.b32.xlu0 %v283, 27
        %v1795 = vpop.permute.xlu0 %1794
        %vm1796 = vcmp.lt.s32.totalorder %v317, 27
        %v1797 = vsel %vm1796, %v1789, %v1793
        %v1798 = vsel %vm1796, %v1791, %v1795
        %v1799 = vsel %vm1796, %v1785, %v1789
        %v1800 = vsel %vm1796, %v1787, %v1791
        %v1801 = vsel %vm1796, %v1781, %v1785
        %v1802 = vsel %vm1796, %v1783, %v1787
        %v1803 = vsel %vm1796, %v1777, %v1781
        %v1804 = vsel %vm1796, %v1779, %v1783
        %v1805 = vsel %vm1796, %v1773, %v1777
        %v1806 = vsel %vm1796, %v1775, %v1779
        %v1807 = vsel %vm1796, %v1769, %v1773
        %v1808 = vsel %vm1796, %v1771, %v1775
        %v1809 = vsel %vm1796, %v1765, %v1769
        %v1810 = vsel %vm1796, %v1767, %v1771
        %v1811 = vsel %vm1796, %v1793, %v1765
        %v1812 = vsel %vm1796, %v1795, %v1767
        %v1813 = vpack.c.bf16 %v1810, %v1809
        %v1814 = vpack.c.bf16 %v1808, %v1807
        %v1815 = vpack.c.bf16 %v1806, %v1805
        %v1816 = vpack.c.bf16 %v1804, %v1803
        %v1817 = vpack.c.bf16 %v1802, %v1801
        %v1818 = vpack.c.bf16 %v1800, %v1799
        %v1819 = vpack.c.bf16 %v1798, %v1797
        %v1820 = vpack.c.bf16 %v1812, %v1811
        %1821 = vst [vmem:[#allocation2 + $0x5c0] sm:$0xff] %v1813
        %1822 = vst [vmem:[#allocation2 + $0x5c8] sm:$0xff] %v1814
        %1823 = vst [vmem:[#allocation2 + $0x5d0] sm:$0xff] %v1815
        %1824 = vst [vmem:[#allocation2 + $0x5d8] sm:$0xff] %v1816
        %1825 = vst [vmem:[#allocation2 + $0x5e0] sm:$0xff] %v1817
        %1826 = vst [vmem:[#allocation2 + $0x5e8] sm:$0xff] %v1818
        %1827 = vst [vmem:[#allocation2 + $0x5f0] sm:$0xff] %v1819
        %1828 = vst [vmem:[#allocation2 + $0x5f8] sm:$0xff] %v1820
        %1829 = vrot.lane.b32.xlu0 %v268, 19
        %v1830 = vpop.permute.xlu0 %1829
        %1831 = vrot.lane.b32.xlu0 %v276, 19
        %v1832 = vpop.permute.xlu0 %1831
        %1833 = vrot.lane.b32.xlu0 %v269, 19
        %v1834 = vpop.permute.xlu0 %1833
        %1835 = vrot.lane.b32.xlu0 %v277, 19
        %v1836 = vpop.permute.xlu0 %1835
        %1837 = vrot.lane.b32.xlu0 %v270, 19
        %v1838 = vpop.permute.xlu0 %1837
        %1839 = vrot.lane.b32.xlu0 %v278, 19
        %v1840 = vpop.permute.xlu0 %1839
        %1841 = vrot.lane.b32.xlu0 %v271, 19
        %v1842 = vpop.permute.xlu0 %1841
        %1843 = vrot.lane.b32.xlu0 %v279, 19
        %v1844 = vpop.permute.xlu0 %1843
        %1845 = vrot.lane.b32.xlu0 %v272, 19
        %v1846 = vpop.permute.xlu0 %1845
        %1847 = vrot.lane.b32.xlu0 %v280, 19
        %v1848 = vpop.permute.xlu0 %1847
        %1849 = vrot.lane.b32.xlu0 %v273, 19
        %v1850 = vpop.permute.xlu0 %1849
        %1851 = vrot.lane.b32.xlu0 %v281, 19
        %v1852 = vpop.permute.xlu0 %1851
        %1853 = vrot.lane.b32.xlu0 %v274, 19
        %v1854 = vpop.permute.xlu0 %1853
        %1855 = vrot.lane.b32.xlu0 %v282, 19
        %v1856 = vpop.permute.xlu0 %1855
        %1857 = vrot.lane.b32.xlu0 %v275, 19
        %v1858 = vpop.permute.xlu0 %1857
        %1859 = vrot.lane.b32.xlu0 %v283, 19
        %v1860 = vpop.permute.xlu0 %1859
        %vm1861 = vcmp.lt.s32.totalorder %v317, 19
        %v1862 = vsel %vm1861, %v1854, %v1858
        %v1863 = vsel %vm1861, %v1856, %v1860
        %v1864 = vsel %vm1861, %v1850, %v1854
        %v1865 = vsel %vm1861, %v1852, %v1856
        %v1866 = vsel %vm1861, %v1846, %v1850
        %v1867 = vsel %vm1861, %v1848, %v1852
        %v1868 = vsel %vm1861, %v1842, %v1846
        %v1869 = vsel %vm1861, %v1844, %v1848
        %v1870 = vsel %vm1861, %v1838, %v1842
        %v1871 = vsel %vm1861, %v1840, %v1844
        %v1872 = vsel %vm1861, %v1834, %v1838
        %v1873 = vsel %vm1861, %v1836, %v1840
        %v1874 = vsel %vm1861, %v1830, %v1834
        %v1875 = vsel %vm1861, %v1832, %v1836
        %v1876 = vsel %vm1861, %v1858, %v1830
        %v1877 = vsel %vm1861, %v1860, %v1832
        %v1878 = vpack.c.bf16 %v1875, %v1874
        %v1879 = vpack.c.bf16 %v1873, %v1872
        %v1880 = vpack.c.bf16 %v1871, %v1870
        %v1881 = vpack.c.bf16 %v1869, %v1868
        %v1882 = vpack.c.bf16 %v1867, %v1866
        %v1883 = vpack.c.bf16 %v1865, %v1864
        %v1884 = vpack.c.bf16 %v1863, %v1862
        %v1885 = vpack.c.bf16 %v1877, %v1876
        %1886 = vst [vmem:[#allocation2 + $0x600] sm:$0xff] %v1878
        %1887 = vst [vmem:[#allocation2 + $0x608] sm:$0xff] %v1879
        %1888 = vst [vmem:[#allocation2 + $0x610] sm:$0xff] %v1880
        %1889 = vst [vmem:[#allocation2 + $0x618] sm:$0xff] %v1881
        %1890 = vst [vmem:[#allocation2 + $0x620] sm:$0xff] %v1882
        %1891 = vst [vmem:[#allocation2 + $0x628] sm:$0xff] %v1883
        %1892 = vst [vmem:[#allocation2 + $0x630] sm:$0xff] %v1884
        %1893 = vst [vmem:[#allocation2 + $0x638] sm:$0xff] %v1885
        %1894 = vrot.lane.b32.xlu0 %v268, 18
        %v1895 = vpop.permute.xlu0 %1894
        %1896 = vrot.lane.b32.xlu0 %v276, 18
        %v1897 = vpop.permute.xlu0 %1896
        %1898 = vrot.lane.b32.xlu0 %v269, 18
        %v1899 = vpop.permute.xlu0 %1898
        %1900 = vrot.lane.b32.xlu0 %v277, 18
        %v1901 = vpop.permute.xlu0 %1900
        %1902 = vrot.lane.b32.xlu0 %v270, 18
        %v1903 = vpop.permute.xlu0 %1902
        %1904 = vrot.lane.b32.xlu0 %v278, 18
        %v1905 = vpop.permute.xlu0 %1904
        %1906 = vrot.lane.b32.xlu0 %v271, 18
        %v1907 = vpop.permute.xlu0 %1906
        %1908 = vrot.lane.b32.xlu0 %v279, 18
        %v1909 = vpop.permute.xlu0 %1908
        %1910 = vrot.lane.b32.xlu0 %v272, 18
        %v1911 = vpop.permute.xlu0 %1910
        %1912 = vrot.lane.b32.xlu0 %v280, 18
        %v1913 = vpop.permute.xlu0 %1912
        %1914 = vrot.lane.b32.xlu0 %v273, 18
        %v1915 = vpop.permute.xlu0 %1914
        %1916 = vrot.lane.b32.xlu0 %v281, 18
        %v1917 = vpop.permute.xlu0 %1916
        %1918 = vrot.lane.b32.xlu0 %v274, 18
        %v1919 = vpop.permute.xlu0 %1918
        %1920 = vrot.lane.b32.xlu0 %v282, 18
        %v1921 = vpop.permute.xlu0 %1920
        %1922 = vrot.lane.b32.xlu0 %v275, 18
        %v1923 = vpop.permute.xlu0 %1922
        %1924 = vrot.lane.b32.xlu0 %v283, 18
        %v1925 = vpop.permute.xlu0 %1924
        %vm1926 = vcmp.lt.s32.totalorder %v317, 18
        %v1927 = vsel %vm1926, %v1919, %v1923
        %v1928 = vsel %vm1926, %v1921, %v1925
        %v1929 = vsel %vm1926, %v1915, %v1919
        %v1930 = vsel %vm1926, %v1917, %v1921
        %v1931 = vsel %vm1926, %v1911, %v1915
        %v1932 = vsel %vm1926, %v1913, %v1917
        %v1933 = vsel %vm1926, %v1907, %v1911
        %v1934 = vsel %vm1926, %v1909, %v1913
        %v1935 = vsel %vm1926, %v1903, %v1907
        %v1936 = vsel %vm1926, %v1905, %v1909
        %v1937 = vsel %vm1926, %v1899, %v1903
        %v1938 = vsel %vm1926, %v1901, %v1905
        %v1939 = vsel %vm1926, %v1895, %v1899
        %v1940 = vsel %vm1926, %v1897, %v1901
        %v1941 = vsel %vm1926, %v1923, %v1895
        %v1942 = vsel %vm1926, %v1925, %v1897
        %v1943 = vpack.c.bf16 %v1940, %v1939
        %v1944 = vpack.c.bf16 %v1938, %v1937
        %v1945 = vpack.c.bf16 %v1936, %v1935
        %v1946 = vpack.c.bf16 %v1934, %v1933
        %v1947 = vpack.c.bf16 %v1932, %v1931
        %v1948 = vpack.c.bf16 %v1930, %v1929
        %v1949 = vpack.c.bf16 %v1928, %v1927
        %v1950 = vpack.c.bf16 %v1942, %v1941
        %1951 = vst [vmem:[#allocation2 + $0x640] sm:$0xff] %v1943
        %1952 = vst [vmem:[#allocation2 + $0x648] sm:$0xff] %v1944
        %1953 = vst [vmem:[#allocation2 + $0x650] sm:$0xff] %v1945
        %1954 = vst [vmem:[#allocation2 + $0x658] sm:$0xff] %v1946
        %1955 = vst [vmem:[#allocation2 + $0x660] sm:$0xff] %v1947
        %1956 = vst [vmem:[#allocation2 + $0x668] sm:$0xff] %v1948
        %1957 = vst [vmem:[#allocation2 + $0x670] sm:$0xff] %v1949
        %1958 = vst [vmem:[#allocation2 + $0x678] sm:$0xff] %v1950
        %1959 = vrot.lane.b32.xlu0 %v268, 17
        %v1960 = vpop.permute.xlu0 %1959
        %1961 = vrot.lane.b32.xlu0 %v276, 17
        %v1962 = vpop.permute.xlu0 %1961
        %1963 = vrot.lane.b32.xlu0 %v269, 17
        %v1964 = vpop.permute.xlu0 %1963
        %1965 = vrot.lane.b32.xlu0 %v277, 17
        %v1966 = vpop.permute.xlu0 %1965
        %1967 = vrot.lane.b32.xlu0 %v270, 17
        %v1968 = vpop.permute.xlu0 %1967
        %1969 = vrot.lane.b32.xlu0 %v278, 17
        %v1970 = vpop.permute.xlu0 %1969
        %1971 = vrot.lane.b32.xlu0 %v271, 17
        %v1972 = vpop.permute.xlu0 %1971
        %1973 = vrot.lane.b32.xlu0 %v279, 17
        %v1974 = vpop.permute.xlu0 %1973
        %1975 = vrot.lane.b32.xlu0 %v272, 17
        %v1976 = vpop.permute.xlu0 %1975
        %1977 = vrot.lane.b32.xlu0 %v280, 17
        %v1978 = vpop.permute.xlu0 %1977
        %1979 = vrot.lane.b32.xlu0 %v273, 17
        %v1980 = vpop.permute.xlu0 %1979
        %1981 = vrot.lane.b32.xlu0 %v281, 17
        %v1982 = vpop.permute.xlu0 %1981
        %1983 = vrot.lane.b32.xlu0 %v274, 17
        %v1984 = vpop.permute.xlu0 %1983
        %1985 = vrot.lane.b32.xlu0 %v282, 17
        %v1986 = vpop.permute.xlu0 %1985
        %1987 = vrot.lane.b32.xlu0 %v275, 17
        %v1988 = vpop.permute.xlu0 %1987
        %1989 = vrot.lane.b32.xlu0 %v283, 17
        %v1990 = vpop.permute.xlu0 %1989
        %vm1991 = vcmp.lt.s32.totalorder %v317, 17
        %v1992 = vsel %vm1991, %v1984, %v1988
        %v1993 = vsel %vm1991, %v1986, %v1990
        %v1994 = vsel %vm1991, %v1980, %v1984
        %v1995 = vsel %vm1991, %v1982, %v1986
        %v1996 = vsel %vm1991, %v1976, %v1980
        %v1997 = vsel %vm1991, %v1978, %v1982
        %v1998 = vsel %vm1991, %v1972, %v1976
        %v1999 = vsel %vm1991, %v1974, %v1978
        %v2000 = vsel %vm1991, %v1968, %v1972
        %v2001 = vsel %vm1991, %v1970, %v1974
        %v2002 = vsel %vm1991, %v1964, %v1968
        %v2003 = vsel %vm1991, %v1966, %v1970
        %v2004 = vsel %vm1991, %v1960, %v1964
        %v2005 = vsel %vm1991, %v1962, %v1966
        %v2006 = vsel %vm1991, %v1988, %v1960
        %v2007 = vsel %vm1991, %v1990, %v1962
        %v2008 = vpack.c.bf16 %v2005, %v2004
        %v2009 = vpack.c.bf16 %v2003, %v2002
        %v2010 = vpack.c.bf16 %v2001, %v2000
        %v2011 = vpack.c.bf16 %v1999, %v1998
        %v2012 = vpack.c.bf16 %v1997, %v1996
        %v2013 = vpack.c.bf16 %v1995, %v1994
        %v2014 = vpack.c.bf16 %v1993, %v1992
        %v2015 = vpack.c.bf16 %v2007, %v2006
        %2016 = vst [vmem:[#allocation2 + $0x680] sm:$0xff] %v2008
        %2017 = vst [vmem:[#allocation2 + $0x688] sm:$0xff] %v2009
        %2018 = vst [vmem:[#allocation2 + $0x690] sm:$0xff] %v2010
        %2019 = vst [vmem:[#allocation2 + $0x698] sm:$0xff] %v2011
        %2020 = vst [vmem:[#allocation2 + $0x6a0] sm:$0xff] %v2012
        %2021 = vst [vmem:[#allocation2 + $0x6a8] sm:$0xff] %v2013
        %2022 = vst [vmem:[#allocation2 + $0x6b0] sm:$0xff] %v2014
        %2023 = vst [vmem:[#allocation2 + $0x6b8] sm:$0xff] %v2015
        %v2024 = vld [vmem:[#allocation7] sm:$0xff]
        %v2025 = vld [vmem:[#allocation7 + $0x8] sm:$0xff]
        %v2026 = vld [vmem:[#allocation7 + $0x10] sm:$0xff]
        %v2027 = vld [vmem:[#allocation7 + $0x18] sm:$0xff]
        %v2028 = vld [vmem:[#allocation2] sm:$0xff]
        %v2029 = vld [vmem:[#allocation2 + $0x8] sm:$0xff]
        %v2030 = vld [vmem:[#allocation2 + $0x10] sm:$0xff]
        %v2031 = vld [vmem:[#allocation2 + $0x18] sm:$0xff]
        %v2032 = vld [vmem:[#allocation2 + $0x20] sm:$0xff]
        %v2033 = vld [vmem:[#allocation2 + $0x28] sm:$0xff]
        %v2034 = vld [vmem:[#allocation2 + $0x30] sm:$0xff]
        %v2035 = vld [vmem:[#allocation2 + $0x38] sm:$0xff]
        %v2036 = vld [vmem:[#allocation2 + $0x40] sm:$0xff]
        %v2037 = vld [vmem:[#allocation2 + $0x48] sm:$0xff]
        %v2038 = vld [vmem:[#allocation2 + $0x50] sm:$0xff]
        %v2039 = vld [vmem:[#allocation2 + $0x58] sm:$0xff]
        %v2040 = vld [vmem:[#allocation2 + $0x60] sm:$0xff]
        %v2041 = vld [vmem:[#allocation2 + $0x68] sm:$0xff]
        %v2042 = vld [vmem:[#allocation2 + $0x70] sm:$0xff]
        %v2043 = vld [vmem:[#allocation2 + $0x78] sm:$0xff]
        %v2044 = vld [vmem:[#allocation2 + $0x80] sm:$0xff]
        %v2045 = vld [vmem:[#allocation2 + $0x88] sm:$0xff]
        %v2046 = vld [vmem:[#allocation2 + $0x90] sm:$0xff]
        %v2047 = vld [vmem:[#allocation2 + $0x98] sm:$0xff]
        %v2048 = vld [vmem:[#allocation2 + $0xa0] sm:$0xff]
        %v2049 = vld [vmem:[#allocation2 + $0xa8] sm:$0xff]
        %v2050 = vld [vmem:[#allocation2 + $0xb0] sm:$0xff]
        %v2051 = vld [vmem:[#allocation2 + $0xb8] sm:$0xff]
        %v2052 = vld [vmem:[#allocation2 + $0xc0] sm:$0xff]
        %v2053 = vld [vmem:[#allocation2 + $0xc8] sm:$0xff]
        %v2054 = vld [vmem:[#allocation2 + $0xd0] sm:$0xff]
        %v2055 = vld [vmem:[#allocation2 + $0xd8] sm:$0xff]
        %v2056 = vld [vmem:[#allocation2 + $0xe0] sm:$0xff]
        %v2057 = vld [vmem:[#allocation2 + $0xe8] sm:$0xff]
        %v2058 = vld [vmem:[#allocation2 + $0xf0] sm:$0xff]
        %v2059 = vld [vmem:[#allocation2 + $0xf8] sm:$0xff]
        %v2060 = vld [vmem:[#allocation2 + $0x100] sm:$0xff]
        %v2061 = vld [vmem:[#allocation2 + $0x108] sm:$0xff]
        %v2062 = vld [vmem:[#allocation2 + $0x110] sm:$0xff]
        %v2063 = vld [vmem:[#allocation2 + $0x118] sm:$0xff]
        %v2064 = vld [vmem:[#allocation2 + $0x120] sm:$0xff]
        %v2065 = vld [vmem:[#allocation2 + $0x128] sm:$0xff]
        %v2066 = vld [vmem:[#allocation2 + $0x130] sm:$0xff]
        %v2067 = vld [vmem:[#allocation2 + $0x138] sm:$0xff]
        %v2068 = vld [vmem:[#allocation2 + $0x140] sm:$0xff]
        %v2069 = vld [vmem:[#allocation2 + $0x148] sm:$0xff]
        %v2070 = vld [vmem:[#allocation2 + $0x150] sm:$0xff]
        %v2071 = vld [vmem:[#allocation2 + $0x158] sm:$0xff]
        %v2072 = vld [vmem:[#allocation2 + $0x160] sm:$0xff]
        %v2073 = vld [vmem:[#allocation2 + $0x168] sm:$0xff]
        %v2074 = vld [vmem:[#allocation2 + $0x170] sm:$0xff]
        %v2075 = vld [vmem:[#allocation2 + $0x178] sm:$0xff]
        %v2076 = vld [vmem:[#allocation2 + $0x180] sm:$0xff]
        %v2077 = vld [vmem:[#allocation2 + $0x188] sm:$0xff]
        %v2078 = vld [vmem:[#allocation2 + $0x190] sm:$0xff]
        %v2079 = vld [vmem:[#allocation2 + $0x198] sm:$0xff]
        %v2080 = vld [vmem:[#allocation2 + $0x1a0] sm:$0xff]
        %v2081 = vld [vmem:[#allocation2 + $0x1a8] sm:$0xff]
        %v2082 = vld [vmem:[#allocation2 + $0x1b0] sm:$0xff]
        %v2083 = vld [vmem:[#allocation2 + $0x1b8] sm:$0xff]
        %v2084 = vld [vmem:[#allocation2 + $0x1c0] sm:$0xff]
        %v2085 = vld [vmem:[#allocation2 + $0x1c8] sm:$0xff]
        %v2086 = vld [vmem:[#allocation2 + $0x1d0] sm:$0xff]
        %v2087 = vld [vmem:[#allocation2 + $0x1d8] sm:$0xff]
        %v2088 = vld [vmem:[#allocation2 + $0x1e0] sm:$0xff]
        %v2089 = vld [vmem:[#allocation2 + $0x1e8] sm:$0xff]
        %v2090 = vld [vmem:[#allocation2 + $0x1f0] sm:$0xff]
        %v2091 = vld [vmem:[#allocation2 + $0x1f8] sm:$0xff]
        %v2092 = vld [vmem:[#allocation2 + $0x200] sm:$0xff]
        %v2093 = vld [vmem:[#allocation2 + $0x208] sm:$0xff]
        %v2094 = vld [vmem:[#allocation2 + $0x210] sm:$0xff]
        %v2095 = vld [vmem:[#allocation2 + $0x218] sm:$0xff]
        %v2096 = vld [vmem:[#allocation2 + $0x220] sm:$0xff]
        %v2097 = vld [vmem:[#allocation2 + $0x228] sm:$0xff]
        %v2098 = vld [vmem:[#allocation2 + $0x230] sm:$0xff]
        %v2099 = vld [vmem:[#allocation2 + $0x238] sm:$0xff]
        %v2100 = vld [vmem:[#allocation2 + $0x240] sm:$0xff]
        %v2101 = vld [vmem:[#allocation2 + $0x248] sm:$0xff]
        %v2102 = vld [vmem:[#allocation2 + $0x250] sm:$0xff]
        %v2103 = vld [vmem:[#allocation2 + $0x258] sm:$0xff]
        %v2104 = vld [vmem:[#allocation2 + $0x260] sm:$0xff]
        %v2105 = vld [vmem:[#allocation2 + $0x268] sm:$0xff]
        %v2106 = vld [vmem:[#allocation2 + $0x270] sm:$0xff]
        %v2107 = vld [vmem:[#allocation2 + $0x278] sm:$0xff]
        %v2108 = vld [vmem:[#allocation2 + $0x280] sm:$0xff]
        %v2109 = vld [vmem:[#allocation2 + $0x288] sm:$0xff]
        %v2110 = vld [vmem:[#allocation2 + $0x290] sm:$0xff]
        %v2111 = vld [vmem:[#allocation2 + $0x298] sm:$0xff]
        %v2112 = vld [vmem:[#allocation2 + $0x2a0] sm:$0xff]
        %v2113 = vld [vmem:[#allocation2 + $0x2a8] sm:$0xff]
        %v2114 = vld [vmem:[#allocation2 + $0x2b0] sm:$0xff]
        %v2115 = vld [vmem:[#allocation2 + $0x2b8] sm:$0xff]
        %v2116 = vld [vmem:[#allocation2 + $0x2c0] sm:$0xff]
        %v2117 = vld [vmem:[#allocation2 + $0x2c8] sm:$0xff]
        %v2118 = vld [vmem:[#allocation2 + $0x2d0] sm:$0xff]
        %v2119 = vld [vmem:[#allocation2 + $0x2d8] sm:$0xff]
        %v2120 = vld [vmem:[#allocation2 + $0x2e0] sm:$0xff]
        %v2121 = vld [vmem:[#allocation2 + $0x2e8] sm:$0xff]
        %v2122 = vld [vmem:[#allocation2 + $0x2f0] sm:$0xff]
        %v2123 = vld [vmem:[#allocation2 + $0x2f8] sm:$0xff]
        %v2124 = vld [vmem:[#allocation2 + $0x300] sm:$0xff]
        %v2125 = vld [vmem:[#allocation2 + $0x308] sm:$0xff]
        %v2126 = vld [vmem:[#allocation2 + $0x310] sm:$0xff]
        %v2127 = vld [vmem:[#allocation2 + $0x318] sm:$0xff]
        %v2128 = vld [vmem:[#allocation2 + $0x320] sm:$0xff]
        %v2129 = vld [vmem:[#allocation2 + $0x328] sm:$0xff]
        %v2130 = vld [vmem:[#allocation2 + $0x330] sm:$0xff]
        %v2131 = vld [vmem:[#allocation2 + $0x338] sm:$0xff]
        %v2132 = vld [vmem:[#allocation2 + $0x340] sm:$0xff]
        %v2133 = vld [vmem:[#allocation2 + $0x348] sm:$0xff]
        %v2134 = vld [vmem:[#allocation2 + $0x350] sm:$0xff]
        %v2135 = vld [vmem:[#allocation2 + $0x358] sm:$0xff]
        %v2136 = vld [vmem:[#allocation2 + $0x360] sm:$0xff]
        %v2137 = vld [vmem:[#allocation2 + $0x368] sm:$0xff]
        %v2138 = vld [vmem:[#allocation2 + $0x370] sm:$0xff]
        %v2139 = vld [vmem:[#allocation2 + $0x378] sm:$0xff]
        %v2140 = vld [vmem:[#allocation2 + $0x380] sm:$0xff]
        %v2141 = vld [vmem:[#allocation2 + $0x388] sm:$0xff]
        %v2142 = vld [vmem:[#allocation2 + $0x390] sm:$0xff]
        %v2143 = vld [vmem:[#allocation2 + $0x398] sm:$0xff]
        %v2144 = vld [vmem:[#allocation2 + $0x3a0] sm:$0xff]
        %v2145 = vld [vmem:[#allocation2 + $0x3a8] sm:$0xff]
        %v2146 = vld [vmem:[#allocation2 + $0x3b0] sm:$0xff]
        %v2147 = vld [vmem:[#allocation2 + $0x3b8] sm:$0xff]
        %v2148 = vld [vmem:[#allocation2 + $0x3c0] sm:$0xff]
        %v2149 = vld [vmem:[#allocation2 + $0x3c8] sm:$0xff]
        %v2150 = vld [vmem:[#allocation2 + $0x3d0] sm:$0xff]
        %v2151 = vld [vmem:[#allocation2 + $0x3d8] sm:$0xff]
        %v2152 = vld [vmem:[#allocation2 + $0x3e0] sm:$0xff]
        %v2153 = vld [vmem:[#allocation2 + $0x3e8] sm:$0xff]
        %v2154 = vld [vmem:[#allocation2 + $0x3f0] sm:$0xff]
        %v2155 = vld [vmem:[#allocation2 + $0x3f8] sm:$0xff]
        %v2156 = vld [vmem:[#allocation2 + $0x400] sm:$0xff]
        %v2157 = vld [vmem:[#allocation2 + $0x408] sm:$0xff]
        %v2158 = vld [vmem:[#allocation2 + $0x410] sm:$0xff]
        %v2159 = vld [vmem:[#allocation2 + $0x418] sm:$0xff]
        %v2160 = vld [vmem:[#allocation2 + $0x420] sm:$0xff]
        %v2161 = vld [vmem:[#allocation2 + $0x428] sm:$0xff]
        %v2162 = vld [vmem:[#allocation2 + $0x430] sm:$0xff]
        %v2163 = vld [vmem:[#allocation2 + $0x438] sm:$0xff]
        %v2164 = vld [vmem:[#allocation2 + $0x440] sm:$0xff]
        %v2165 = vld [vmem:[#allocation2 + $0x448] sm:$0xff]
        %v2166 = vld [vmem:[#allocation2 + $0x450] sm:$0xff]
        %v2167 = vld [vmem:[#allocation2 + $0x458] sm:$0xff]
        %v2168 = vld [vmem:[#allocation2 + $0x460] sm:$0xff]
        %v2169 = vld [vmem:[#allocation2 + $0x468] sm:$0xff]
        %v2170 = vld [vmem:[#allocation2 + $0x470] sm:$0xff]
        %v2171 = vld [vmem:[#allocation2 + $0x478] sm:$0xff]
        %v2172 = vld [vmem:[#allocation2 + $0x480] sm:$0xff]
        %v2173 = vld [vmem:[#allocation2 + $0x488] sm:$0xff]
        %v2174 = vld [vmem:[#allocation2 + $0x490] sm:$0xff]
        %v2175 = vld [vmem:[#allocation2 + $0x498] sm:$0xff]
        %v2176 = vld [vmem:[#allocation2 + $0x4a0] sm:$0xff]
        %v2177 = vld [vmem:[#allocation2 + $0x4a8] sm:$0xff]
        %v2178 = vld [vmem:[#allocation2 + $0x4b0] sm:$0xff]
        %v2179 = vld [vmem:[#allocation2 + $0x4b8] sm:$0xff]
        %v2180 = vld [vmem:[#allocation2 + $0x4c0] sm:$0xff]
        %v2181 = vld [vmem:[#allocation2 + $0x4c8] sm:$0xff]
        %v2182 = vld [vmem:[#allocation2 + $0x4d0] sm:$0xff]
        %v2183 = vld [vmem:[#allocation2 + $0x4d8] sm:$0xff]
        %v2184 = vld [vmem:[#allocation2 + $0x4e0] sm:$0xff]
        %v2185 = vld [vmem:[#allocation2 + $0x4e8] sm:$0xff]
        %v2186 = vld [vmem:[#allocation2 + $0x4f0] sm:$0xff]
        %v2187 = vld [vmem:[#allocation2 + $0x4f8] sm:$0xff]
        %v2188 = vld [vmem:[#allocation2 + $0x500] sm:$0xff]
        %v2189 = vld [vmem:[#allocation2 + $0x508] sm:$0xff]
        %v2190 = vld [vmem:[#allocation2 + $0x510] sm:$0xff]
        %v2191 = vld [vmem:[#allocation2 + $0x518] sm:$0xff]
        %v2192 = vld [vmem:[#allocation2 + $0x520] sm:$0xff]
        %v2193 = vld [vmem:[#allocation2 + $0x528] sm:$0xff]
        %v2194 = vld [vmem:[#allocation2 + $0x530] sm:$0xff]
        %v2195 = vld [vmem:[#allocation2 + $0x538] sm:$0xff]
        %v2196 = vld [vmem:[#allocation2 + $0x540] sm:$0xff]
        %v2197 = vld [vmem:[#allocation2 + $0x548] sm:$0xff]
        %v2198 = vld [vmem:[#allocation2 + $0x550] sm:$0xff]
        %v2199 = vld [vmem:[#allocation2 + $0x558] sm:$0xff]
        %v2200 = vld [vmem:[#allocation2 + $0x560] sm:$0xff]
        %v2201 = vld [vmem:[#allocation2 + $0x568] sm:$0xff]
        %v2202 = vld [vmem:[#allocation2 + $0x570] sm:$0xff]
        %v2203 = vld [vmem:[#allocation2 + $0x578] sm:$0xff]
        %v2204 = vld [vmem:[#allocation2 + $0x580] sm:$0xff]
        %v2205 = vld [vmem:[#allocation2 + $0x588] sm:$0xff]
        %v2206 = vld [vmem:[#allocation2 + $0x590] sm:$0xff]
        %v2207 = vld [vmem:[#allocation2 + $0x598] sm:$0xff]
        %v2208 = vld [vmem:[#allocation2 + $0x5a0] sm:$0xff]
        %v2209 = vld [vmem:[#allocation2 + $0x5a8] sm:$0xff]
        %v2210 = vld [vmem:[#allocation2 + $0x5b0] sm:$0xff]
        %v2211 = vld [vmem:[#allocation2 + $0x5b8] sm:$0xff]
        %v2212 = vld [vmem:[#allocation2 + $0x5c0] sm:$0xff]
        %v2213 = vld [vmem:[#allocation2 + $0x5c8] sm:$0xff]
        %v2214 = vld [vmem:[#allocation2 + $0x5d0] sm:$0xff]
        %v2215 = vld [vmem:[#allocation2 + $0x5d8] sm:$0xff]
        %v2216 = vld [vmem:[#allocation2 + $0x5e0] sm:$0xff]
        %v2217 = vld [vmem:[#allocation2 + $0x5e8] sm:$0xff]
        %v2218 = vld [vmem:[#allocation2 + $0x5f0] sm:$0xff]
        %v2219 = vld [vmem:[#allocation2 + $0x5f8] sm:$0xff]
        %v2220 = vld [vmem:[#allocation2 + $0x600] sm:$0xff]
        %v2221 = vld [vmem:[#allocation2 + $0x608] sm:$0xff]
        %v2222 = vld [vmem:[#allocation2 + $0x610] sm:$0xff]
        %v2223 = vld [vmem:[#allocation2 + $0x618] sm:$0xff]
        %v2224 = vld [vmem:[#allocation2 + $0x620] sm:$0xff]
        %v2225 = vld [vmem:[#allocation2 + $0x628] sm:$0xff]
        %v2226 = vld [vmem:[#allocation2 + $0x630] sm:$0xff]
        %v2227 = vld [vmem:[#allocation2 + $0x638] sm:$0xff]
        %v2228 = vld [vmem:[#allocation2 + $0x640] sm:$0xff]
        %v2229 = vld [vmem:[#allocation2 + $0x648] sm:$0xff]
        %v2230 = vld [vmem:[#allocation2 + $0x650] sm:$0xff]
        %v2231 = vld [vmem:[#allocation2 + $0x658] sm:$0xff]
        %v2232 = vld [vmem:[#allocation2 + $0x660] sm:$0xff]
        %v2233 = vld [vmem:[#allocation2 + $0x668] sm:$0xff]
        %v2234 = vld [vmem:[#allocation2 + $0x670] sm:$0xff]
        %v2235 = vld [vmem:[#allocation2 + $0x678] sm:$0xff]
        %v2236 = vld [vmem:[#allocation2 + $0x680] sm:$0xff]
        %v2237 = vld [vmem:[#allocation2 + $0x688] sm:$0xff]
        %v2238 = vld [vmem:[#allocation2 + $0x690] sm:$0xff]
        %v2239 = vld [vmem:[#allocation2 + $0x698] sm:$0xff]
        %v2240 = vld [vmem:[#allocation2 + $0x6a0] sm:$0xff]
        %v2241 = vld [vmem:[#allocation2 + $0x6a8] sm:$0xff]
        %v2242 = vld [vmem:[#allocation2 + $0x6b0] sm:$0xff]
        %v2243 = vld [vmem:[#allocation2 + $0x6b8] sm:$0xff]
        %v2248 = vunpack.c.l.b16 %v2024
        %v2249 = vunpack.c.h.b16 %v2024
        %v2250 = vunpack.c.l.b16 %v2025
        %v2251 = vunpack.c.h.b16 %v2025
        %v2252 = vunpack.c.l.b16 %v2026
        %v2253 = vunpack.c.h.b16 %v2026
        %v2254 = vunpack.c.l.b16 %v2027
        %v2255 = vunpack.c.h.b16 %v2027
        %v2256 = vpack.c.b16 %v2252, %v2248
        %v2257 = vpack.c.b16 %v2253, %v2249
        %v2258 = vpack.c.b16 %v2254, %v2250
        %v2259 = vpack.c.b16 %v2255, %v2251
        %vm2263 = vcmask 392192
        %v2265 = vsel %vm2263, %v2259, 0
        %2267 = vmatprep.subr.bf16.mxu0 %v2029
        %2268 = vmatpush1.bf16.msra.mxu0 %v2028
        %2269 = vmatprep.subr.bf16.mxu0 %v2037
        %2270 = vmatpush1.bf16.msra.mxu0 %v2036
        %2271 = vmatprep.subr.bf16.mxu0 %v2045
        %2272 = vmatpush1.bf16.msra.mxu0 %v2044
        %2273 = vmatprep.subr.bf16.mxu0 %v2053
        %2274 = vmatpush1.bf16.msra.mxu0 %v2052
        %2275 = vmatprep.subr.bf16.mxu0 %v2061
        %2276 = vmatpush1.bf16.msra.mxu0 %v2060
        %2277 = vmatprep.subr.bf16.mxu0 %v2069
        %2278 = vmatpush1.bf16.msra.mxu0 %v2068
        %2279 = vmatprep.subr.bf16.mxu0 %v2077
        %2280 = vmatpush1.bf16.msra.mxu0 %v2076
        %2281 = vmatprep.subr.bf16.mxu0 %v2085
        %2282 = vmatpush1.bf16.msra.mxu0 %v2084
        %2283 = vmatprep.subr.bf16.mxu0 %v2093
        %2284 = vmatpush1.bf16.msra.mxu0 %v2092
        %2285 = vmatprep.subr.bf16.mxu0 %v2101
        %2286 = vmatpush1.bf16.msra.mxu0 %v2100
        %2287 = vmatprep.subr.bf16.mxu0 %v2109
        %2288 = vmatpush1.bf16.msra.mxu0 %v2108
        %2289 = vmatprep.subr.bf16.mxu0 %v2117
        %2290 = vmatpush1.bf16.msra.mxu0 %v2116
        %2291 = vmatprep.subr.bf16.mxu0 %v2125
        %2292 = vmatpush1.bf16.msra.mxu0 %v2124
        %2293 = vmatprep.subr.bf16.mxu0 %v2133
        %2294 = vmatpush1.bf16.msra.mxu0 %v2132
        %2295 = vmatprep.subr.bf16.mxu0 %v2141
        %2296 = vmatpush1.bf16.msra.mxu0 %v2140
        %2297 = vmatprep.subr.bf16.mxu0 %v2149
        %2298 = vmatpush1.bf16.msra.mxu0 %v2148
        %2299 = vmatprep.mubr.bf16.mxu0 %v2257
        %2300 = vmatmul.mubr.bf16.gmra.mrb[0].mxu0 %v2256
        %v2301 = vpop.f32.mrb[0].mxu0
        %v2302 = vadd.f32 0.0, %v2301
        %v2303 = vpop.f32.mrb[0].mxu0
        %v2304 = vadd.f32 0.0, %v2303
        %v2305 = vpop.f32.mrb[0].mxu0
        %v2306 = vadd.f32 0.0, %v2305
        %v2307 = vpop.f32.mrb[0].mxu0
        %v2308 = vadd.f32 0.0, %v2307
        %2309 = vdwg.mxu0
        %2310 = vmatprep.subr.bf16.mxu0 %v2157
        %2311 = vmatpush1.bf16.msra.mxu0 %v2156
        %2312 = vmatprep.subr.bf16.mxu0 %v2165
        %2313 = vmatpush1.bf16.msra.mxu0 %v2164
        %2314 = vmatprep.subr.bf16.mxu0 %v2173
        %2315 = vmatpush1.bf16.msra.mxu0 %v2172
        %2316 = vmatprep.subr.bf16.mxu0 %v2181
        %2317 = vmatpush1.bf16.msra.mxu0 %v2180
        %2318 = vmatprep.subr.bf16.mxu0 %v2189
        %2319 = vmatpush1.bf16.msra.mxu0 %v2188
        %2320 = vmatprep.subr.bf16.mxu0 %v2197
        %2321 = vmatpush1.bf16.msra.mxu0 %v2196
        %2322 = vmatprep.subr.bf16.mxu0 %v2205
        %2323 = vmatpush1.bf16.msra.mxu0 %v2204
        %2324 = vmatprep.subr.bf16.mxu0 %v2213
        %2325 = vmatpush1.bf16.msra.mxu0 %v2212
        %2326 = vmatprep.subr.bf16.mxu0 %v2221
        %2327 = vmatpush1.bf16.msra.mxu0 %v2220
        %2328 = vmatprep.subr.bf16.mxu0 %v2229
        %2329 = vmatpush1.bf16.msra.mxu0 %v2228
        %2330 = vmatprep.subr.bf16.mxu0 %v2237
        %2331 = vmatpush1.bf16.msra.mxu0 %v2236
        %2332 = vmatprep.subr.bf16.mxu0 0
        %2333 = vmatpush1.bf16.msra.mxu0 0
        %2334 = vmatprep.subr.bf16.mxu0 0
        %2335 = vmatpush1.bf16.msra.mxu0 0
        %2336 = vmatprep.subr.bf16.mxu0 0
        %2337 = vmatpush1.bf16.msra.mxu0 0
        %2338 = vmatprep.subr.bf16.mxu0 0
        %2339 = vmatpush1.bf16.msra.mxu0 0
        %2340 = vmatprep.subr.bf16.mxu0 0
        %2341 = vmatpush1.bf16.msra.mxu0 0
        %2342 = vmatprep.mubr.bf16.mxu0 %v2265
        %2343 = vmatmul.mubr.bf16.gmra.mrb[0].mxu0 %v2258
        %v2344 = vpop.f32.mrb[0].mxu0
        %v2345 = vadd.f32 %v2302, %v2344
        %v2346 = vpop.f32.mrb[0].mxu0
        %v2347 = vadd.f32 %v2304, %v2346
        %v2348 = vpop.f32.mrb[0].mxu0
        %v2349 = vadd.f32 %v2306, %v2348
        %v2350 = vpop.f32.mrb[0].mxu0
        %v2351 = vadd.f32 %v2308, %v2350
        %2352 = vdwg.mxu0
        %2353 = vmatprep.subr.bf16.mxu0 %v2031
        %2354 = vmatpush1.bf16.msra.mxu0 %v2030
        %2355 = vmatprep.subr.bf16.mxu0 %v2039
        %2356 = vmatpush1.bf16.msra.mxu0 %v2038
        %2357 = vmatprep.subr.bf16.mxu0 %v2047
        %2358 = vmatpush1.bf16.msra.mxu0 %v2046
        %2359 = vmatprep.subr.bf16.mxu0 %v2055
        %2360 = vmatpush1.bf16.msra.mxu0 %v2054
        %2361 = vmatprep.subr.bf16.mxu0 %v2063
        %2362 = vmatpush1.bf16.msra.mxu0 %v2062
        %2363 = vmatprep.subr.bf16.mxu0 %v2071
        %2364 = vmatpush1.bf16.msra.mxu0 %v2070
        %2365 = vmatprep.subr.bf16.mxu0 %v2079
        %2366 = vmatpush1.bf16.msra.mxu0 %v2078
        %2367 = vmatprep.subr.bf16.mxu0 %v2087
        %2368 = vmatpush1.bf16.msra.mxu0 %v2086
        %2369 = vmatprep.subr.bf16.mxu0 %v2095
        %2370 = vmatpush1.bf16.msra.mxu0 %v2094
        %2371 = vmatprep.subr.bf16.mxu0 %v2103
        %2372 = vmatpush1.bf16.msra.mxu0 %v2102
        %2373 = vmatprep.subr.bf16.mxu0 %v2111
        %2374 = vmatpush1.bf16.msra.mxu0 %v2110
        %2375 = vmatprep.subr.bf16.mxu0 %v2119
        %2376 = vmatpush1.bf16.msra.mxu0 %v2118
        %2377 = vmatprep.subr.bf16.mxu0 %v2127
        %2378 = vmatpush1.bf16.msra.mxu0 %v2126
        %2379 = vmatprep.subr.bf16.mxu0 %v2135
        %2380 = vmatpush1.bf16.msra.mxu0 %v2134
        %2381 = vmatprep.subr.bf16.mxu0 %v2143
        %2382 = vmatpush1.bf16.msra.mxu0 %v2142
        %2383 = vmatprep.subr.bf16.mxu0 %v2151
        %2384 = vmatpush1.bf16.msra.mxu0 %v2150
        %2385 = vmatprep.mubr.bf16.mxu0 %v2257
        %2386 = vmatmul.mubr.bf16.gmra.mrb[0].mxu0 %v2256
        %v2387 = vpop.f32.mrb[0].mxu0
        %v2388 = vadd.f32 0.0, %v2387
        %v2389 = vpop.f32.mrb[0].mxu0
        %v2390 = vadd.f32 0.0, %v2389
        %v2391 = vpop.f32.mrb[0].mxu0
        %v2392 = vadd.f32 0.0, %v2391
        %v2393 = vpop.f32.mrb[0].mxu0
        %v2394 = vadd.f32 0.0, %v2393
        %2395 = vdwg.mxu0
        %2396 = vmatprep.subr.bf16.mxu0 %v2159
        %2397 = vmatpush1.bf16.msra.mxu0 %v2158
        %2398 = vmatprep.subr.bf16.mxu0 %v2167
        %2399 = vmatpush1.bf16.msra.mxu0 %v2166
        %2400 = vmatprep.subr.bf16.mxu0 %v2175
        %2401 = vmatpush1.bf16.msra.mxu0 %v2174
        %2402 = vmatprep.subr.bf16.mxu0 %v2183
        %2403 = vmatpush1.bf16.msra.mxu0 %v2182
        %2404 = vmatprep.subr.bf16.mxu0 %v2191
        %2405 = vmatpush1.bf16.msra.mxu0 %v2190
        %2406 = vmatprep.subr.bf16.mxu0 %v2199
        %2407 = vmatpush1.bf16.msra.mxu0 %v2198
        %2408 = vmatprep.subr.bf16.mxu0 %v2207
        %2409 = vmatpush1.bf16.msra.mxu0 %v2206
        %2410 = vmatprep.subr.bf16.mxu0 %v2215
        %2411 = vmatpush1.bf16.msra.mxu0 %v2214
        %2412 = vmatprep.subr.bf16.mxu0 %v2223
        %2413 = vmatpush1.bf16.msra.mxu0 %v2222
        %2414 = vmatprep.subr.bf16.mxu0 %v2231
        %2415 = vmatpush1.bf16.msra.mxu0 %v2230
        %2416 = vmatprep.subr.bf16.mxu0 %v2239
        %2417 = vmatpush1.bf16.msra.mxu0 %v2238
        %2418 = vmatprep.subr.bf16.mxu0 0
        %2419 = vmatpush1.bf16.msra.mxu0 0
        %2420 = vmatprep.subr.bf16.mxu0 0
        %2421 = vmatpush1.bf16.msra.mxu0 0
        %2422 = vmatprep.subr.bf16.mxu0 0
        %2423 = vmatpush1.bf16.msra.mxu0 0
        %2424 = vmatprep.subr.bf16.mxu0 0
        %2425 = vmatpush1.bf16.msra.mxu0 0
        %2426 = vmatprep.subr.bf16.mxu0 0
        %2427 = vmatpush1.bf16.msra.mxu0 0
        %2428 = vmatprep.mubr.bf16.mxu0 %v2265
        %2429 = vmatmul.mubr.bf16.gmra.mrb[0].mxu0 %v2258
        %v2430 = vpop.f32.mrb[0].mxu0
        %v2431 = vadd.f32 %v2388, %v2430
        %v2432 = vpop.f32.mrb[0].mxu0
        %v2433 = vadd.f32 %v2390, %v2432
        %v2434 = vpop.f32.mrb[0].mxu0
        %v2435 = vadd.f32 %v2392, %v2434
        %v2436 = vpop.f32.mrb[0].mxu0
        %v2437 = vadd.f32 %v2394, %v2436
        %2438 = vdwg.mxu0
        %2439 = vmatprep.subr.bf16.mxu0 %v2033
        %2440 = vmatpush1.bf16.msra.mxu0 %v2032
        %2441 = vmatprep.subr.bf16.mxu0 %v2041
        %2442 = vmatpush1.bf16.msra.mxu0 %v2040
        %2443 = vmatprep.subr.bf16.mxu0 %v2049
        %2444 = vmatpush1.bf16.msra.mxu0 %v2048
        %2445 = vmatprep.subr.bf16.mxu0 %v2057
        %2446 = vmatpush1.bf16.msra.mxu0 %v2056
        %2447 = vmatprep.subr.bf16.mxu0 %v2065
        %2448 = vmatpush1.bf16.msra.mxu0 %v2064
        %2449 = vmatprep.subr.bf16.mxu0 %v2073
        %2450 = vmatpush1.bf16.msra.mxu0 %v2072
        %2451 = vmatprep.subr.bf16.mxu0 %v2081
        %2452 = vmatpush1.bf16.msra.mxu0 %v2080
        %2453 = vmatprep.subr.bf16.mxu0 %v2089
        %2454 = vmatpush1.bf16.msra.mxu0 %v2088
        %2455 = vmatprep.subr.bf16.mxu0 %v2097
        %2456 = vmatpush1.bf16.msra.mxu0 %v2096
        %2457 = vmatprep.subr.bf16.mxu0 %v2105
        %2458 = vmatpush1.bf16.msra.mxu0 %v2104
        %2459 = vmatprep.subr.bf16.mxu0 %v2113
        %2460 = vmatpush1.bf16.msra.mxu0 %v2112
        %2461 = vmatprep.subr.bf16.mxu0 %v2121
        %2462 = vmatpush1.bf16.msra.mxu0 %v2120
        %2463 = vmatprep.subr.bf16.mxu0 %v2129
        %2464 = vmatpush1.bf16.msra.mxu0 %v2128
        %2465 = vmatprep.subr.bf16.mxu0 %v2137
        %2466 = vmatpush1.bf16.msra.mxu0 %v2136
        %2467 = vmatprep.subr.bf16.mxu0 %v2145
        %2468 = vmatpush1.bf16.msra.mxu0 %v2144
        %2469 = vmatprep.subr.bf16.mxu0 %v2153
        %2470 = vmatpush1.bf16.msra.mxu0 %v2152
        %2471 = vmatprep.mubr.bf16.mxu0 %v2257
        %2472 = vmatmul.mubr.bf16.gmra.mrb[0].mxu0 %v2256
        %v2473 = vpop.f32.mrb[0].mxu0
        %v2474 = vadd.f32 0.0, %v2473
        %v2475 = vpop.f32.mrb[0].mxu0
        %v2476 = vadd.f32 0.0, %v2475
        %v2477 = vpop.f32.mrb[0].mxu0
        %v2478 = vadd.f32 0.0, %v2477
        %v2479 = vpop.f32.mrb[0].mxu0
        %v2480 = vadd.f32 0.0, %v2479
        %2481 = vdwg.mxu0
        %2482 = vmatprep.subr.bf16.mxu0 %v2161
        %2483 = vmatpush1.bf16.msra.mxu0 %v2160
        %2484 = vmatprep.subr.bf16.mxu0 %v2169
        %2485 = vmatpush1.bf16.msra.mxu0 %v2168
        %2486 = vmatprep.subr.bf16.mxu0 %v2177
        %2487 = vmatpush1.bf16.msra.mxu0 %v2176
        %2488 = vmatprep.subr.bf16.mxu0 %v2185
        %2489 = vmatpush1.bf16.msra.mxu0 %v2184
        %2490 = vmatprep.subr.bf16.mxu0 %v2193
        %2491 = vmatpush1.bf16.msra.mxu0 %v2192
        %2492 = vmatprep.subr.bf16.mxu0 %v2201
        %2493 = vmatpush1.bf16.msra.mxu0 %v2200
        %2494 = vmatprep.subr.bf16.mxu0 %v2209
        %2495 = vmatpush1.bf16.msra.mxu0 %v2208
        %2496 = vmatprep.subr.bf16.mxu0 %v2217
        %2497 = vmatpush1.bf16.msra.mxu0 %v2216
        %2498 = vmatprep.subr.bf16.mxu0 %v2225
        %2499 = vmatpush1.bf16.msra.mxu0 %v2224
        %2500 = vmatprep.subr.bf16.mxu0 %v2233
        %2501 = vmatpush1.bf16.msra.mxu0 %v2232
        %2502 = vmatprep.subr.bf16.mxu0 %v2241
        %2503 = vmatpush1.bf16.msra.mxu0 %v2240
        %2504 = vmatprep.subr.bf16.mxu0 0
        %2505 = vmatpush1.bf16.msra.mxu0 0
        %2506 = vmatprep.subr.bf16.mxu0 0
        %2507 = vmatpush1.bf16.msra.mxu0 0
        %2508 = vmatprep.subr.bf16.mxu0 0
        %2509 = vmatpush1.bf16.msra.mxu0 0
        %2510 = vmatprep.subr.bf16.mxu0 0
        %2511 = vmatpush1.bf16.msra.mxu0 0
        %2512 = vmatprep.subr.bf16.mxu0 0
        %2513 = vmatpush1.bf16.msra.mxu0 0
        %2514 = vmatprep.mubr.bf16.mxu0 %v2265
        %2515 = vmatmul.mubr.bf16.gmra.mrb[0].mxu0 %v2258
        %v2516 = vpop.f32.mrb[0].mxu0
        %v2517 = vadd.f32 %v2474, %v2516
        %v2518 = vpop.f32.mrb[0].mxu0
        %v2519 = vadd.f32 %v2476, %v2518
        %v2520 = vpop.f32.mrb[0].mxu0
        %v2521 = vadd.f32 %v2478, %v2520
        %v2522 = vpop.f32.mrb[0].mxu0
        %v2523 = vadd.f32 %v2480, %v2522
        %2524 = vdwg.mxu0
        %2525 = vmatprep.subr.bf16.mxu0 %v2035
        %2526 = vmatpush1.bf16.msra.mxu0 %v2034
        %2527 = vmatprep.subr.bf16.mxu0 %v2043
        %2528 = vmatpush1.bf16.msra.mxu0 %v2042
        %2529 = vmatprep.subr.bf16.mxu0 %v2051
        %2530 = vmatpush1.bf16.msra.mxu0 %v2050
        %2531 = vmatprep.subr.bf16.mxu0 %v2059
        %2532 = vmatpush1.bf16.msra.mxu0 %v2058
        %2533 = vmatprep.subr.bf16.mxu0 %v2067
        %2534 = vmatpush1.bf16.msra.mxu0 %v2066
        %2535 = vmatprep.subr.bf16.mxu0 %v2075
        %2536 = vmatpush1.bf16.msra.mxu0 %v2074
        %2537 = vmatprep.subr.bf16.mxu0 %v2083
        %2538 = vmatpush1.bf16.msra.mxu0 %v2082
        %2539 = vmatprep.subr.bf16.mxu0 %v2091
        %2540 = vmatpush1.bf16.msra.mxu0 %v2090
        %2541 = vmatprep.subr.bf16.mxu0 %v2099
        %2542 = vmatpush1.bf16.msra.mxu0 %v2098
        %2543 = vmatprep.subr.bf16.mxu0 %v2107
        %2544 = vmatpush1.bf16.msra.mxu0 %v2106
        %2545 = vmatprep.subr.bf16.mxu0 %v2115
        %2546 = vmatpush1.bf16.msra.mxu0 %v2114
        %2547 = vmatprep.subr.bf16.mxu0 %v2123
        %2548 = vmatpush1.bf16.msra.mxu0 %v2122
        %2549 = vmatprep.subr.bf16.mxu0 %v2131
        %2550 = vmatpush1.bf16.msra.mxu0 %v2130
        %2551 = vmatprep.subr.bf16.mxu0 %v2139
        %2552 = vmatpush1.bf16.msra.mxu0 %v2138
        %2553 = vmatprep.subr.bf16.mxu0 %v2147
        %2554 = vmatpush1.bf16.msra.mxu0 %v2146
        %2555 = vmatprep.subr.bf16.mxu0 %v2155
        %2556 = vmatpush1.bf16.msra.mxu0 %v2154
        %2557 = vmatprep.mubr.bf16.mxu0 %v2257
        %2558 = vmatmul.mubr.bf16.gmra.mrb[0].mxu0 %v2256
        %v2559 = vpop.f32.mrb[0].mxu0
        %v2560 = vadd.f32 0.0, %v2559
        %v2561 = vpop.f32.mrb[0].mxu0
        %v2562 = vadd.f32 0.0, %v2561
        %v2563 = vpop.f32.mrb[0].mxu0
        %v2564 = vadd.f32 0.0, %v2563
        %v2565 = vpop.f32.mrb[0].mxu0
        %v2566 = vadd.f32 0.0, %v2565
        %2567 = vdwg.mxu0
        %2568 = vmatprep.subr.bf16.mxu0 %v2163
        %2569 = vmatpush1.bf16.msra.mxu0 %v2162
        %2570 = vmatprep.subr.bf16.mxu0 %v2171
        %2571 = vmatpush1.bf16.msra.mxu0 %v2170
        %2572 = vmatprep.subr.bf16.mxu0 %v2179
        %2573 = vmatpush1.bf16.msra.mxu0 %v2178
        %2574 = vmatprep.subr.bf16.mxu0 %v2187
        %2575 = vmatpush1.bf16.msra.mxu0 %v2186
        %2576 = vmatprep.subr.bf16.mxu0 %v2195
        %2577 = vmatpush1.bf16.msra.mxu0 %v2194
        %2578 = vmatprep.subr.bf16.mxu0 %v2203
        %2579 = vmatpush1.bf16.msra.mxu0 %v2202
        %2580 = vmatprep.subr.bf16.mxu0 %v2211
        %2581 = vmatpush1.bf16.msra.mxu0 %v2210
        %2582 = vmatprep.subr.bf16.mxu0 %v2219
        %2583 = vmatpush1.bf16.msra.mxu0 %v2218
        %2584 = vmatprep.subr.bf16.mxu0 %v2227
        %2585 = vmatpush1.bf16.msra.mxu0 %v2226
        %2586 = vmatprep.subr.bf16.mxu0 %v2235
        %2587 = vmatpush1.bf16.msra.mxu0 %v2234
        %2588 = vmatprep.subr.bf16.mxu0 %v2243
        %2589 = vmatpush1.bf16.msra.mxu0 %v2242
        %2590 = vmatprep.subr.bf16.mxu0 0
        %2591 = vmatpush1.bf16.msra.mxu0 0
        %2592 = vmatprep.subr.bf16.mxu0 0
        %2593 = vmatpush1.bf16.msra.mxu0 0
        %2594 = vmatprep.subr.bf16.mxu0 0
        %2595 = vmatpush1.bf16.msra.mxu0 0
        %2596 = vmatprep.subr.bf16.mxu0 0
        %2597 = vmatpush1.bf16.msra.mxu0 0
        %2598 = vmatprep.subr.bf16.mxu0 0
        %2599 = vmatpush1.bf16.msra.mxu0 0
        %2600 = vmatprep.mubr.bf16.mxu0 %v2265
        %2601 = vmatmul.mubr.bf16.gmra.mrb[0].mxu0 %v2258
        %v2602 = vpop.f32.mrb[0].mxu0
        %v2603 = vadd.f32 %v2560, %v2602
        %v2604 = vpop.f32.mrb[0].mxu0
        %v2605 = vadd.f32 %v2562, %v2604
        %v2606 = vpop.f32.mrb[0].mxu0
        %v2607 = vadd.f32 %v2564, %v2606
        %v2608 = vpop.f32.mrb[0].mxu0
        %v2609 = vadd.f32 %v2566, %v2608
        %2610 = vdwg.mxu0
        %v2612 = vlaneseq
        %v2613 = vshrl.u32 %v2612, 7
        %v2614 = vsub.s32 0, %v2613
        %v2615 = vrot.slane %v259, %v2614
        %v2616 = vlaneseq
        %v2617 = vshrl.u32 %v2616, 7
        %v2618 = vsub.s32 1, %v2617
        %v2619 = vrot.slane %v259, %v2618
        %v2620 = vlaneseq
        %v2621 = vshrl.u32 %v2620, 7
        %v2622 = vsub.s32 2, %v2621
        %v2623 = vrot.slane %v259, %v2622
        %v2624 = vlaneseq
        %v2625 = vshrl.u32 %v2624, 7
        %v2626 = vsub.s32 3, %v2625
        %v2627 = vrot.slane %v259, %v2626
        %v2628 = vlaneseq
        %v2629 = vshrl.u32 %v2628, 7
        %v2630 = vsub.s32 4, %v2629
        %v2631 = vrot.slane %v259, %v2630
        %v2632 = vlaneseq
        %v2633 = vshrl.u32 %v2632, 7
        %v2634 = vsub.s32 5, %v2633
        %v2635 = vrot.slane %v259, %v2634
        %v2636 = vlaneseq
        %v2637 = vshrl.u32 %v2636, 7
        %v2638 = vsub.s32 6, %v2637
        %v2639 = vrot.slane %v259, %v2638
        %v2640 = vlaneseq
        %v2641 = vshrl.u32 %v2640, 7
        %v2642 = vsub.s32 7, %v2641
        %v2643 = vrot.slane %v259, %v2642
        %v2652 = vmul.f32 %v2345, %v2615
        %v2653 = vmul.f32 %v2347, %v2619
        %v2654 = vmul.f32 %v2431, %v2623
        %v2655 = vmul.f32 %v2433, %v2627
        %v2656 = vmul.f32 %v2517, %v2631
        %v2657 = vmul.f32 %v2519, %v2635
        %v2658 = vmul.f32 %v2603, %v2639
        %v2659 = vmul.f32 %v2605, %v2643
        %v2660 = vmul.f32 %v2349, %v2615
        %v2661 = vmul.f32 %v2351, %v2619
        %v2662 = vmul.f32 %v2435, %v2623
        %v2663 = vmul.f32 %v2437, %v2627
        %v2664 = vmul.f32 %v2521, %v2631
        %v2665 = vmul.f32 %v2523, %v2635
        %v2666 = vmul.f32 %v2607, %v2639
        %v2667 = vmul.f32 %v2609, %v2643
        %v2668 = vadd.f32 %v2652, %v2653
        %v2669 = vadd.f32 %v2668, %v2654
        %v2670 = vadd.f32 %v2669, %v2655
        %v2671 = vadd.f32 %v2670, %v2656
        %v2672 = vadd.f32 %v2671, %v2657
        %v2673 = vadd.f32 %v2672, %v2658
        %v2674 = vadd.f32 %v2673, %v2659
        %2675 = vadd.xlane.f32.xlu0 %v2674
        %v2676 = vpop.xlane.xlu0 %2675
        %v2677 = vadd.f32 %v2660, %v2661
        %v2678 = vadd.f32 %v2677, %v2662
        %v2679 = vadd.f32 %v2678, %v2663
        %v2680 = vadd.f32 %v2679, %v2664
        %v2681 = vadd.f32 %v2680, %v2665
        %v2682 = vadd.f32 %v2681, %v2666
        %v2683 = vadd.f32 %v2682, %v2667
        %2684 = vadd.xlane.f32.xlu0 %v2683
        %v2685 = vpop.xlane.xlu0 %2684
        %v2686 = vmul.f32 %v2676, 0.001953125
        %v2687 = vmul.f32 %v2685, 0.001953125
        %v2688 = vmul.f32 %v2652, %v2652
        %v2689 = vmul.f32 %v2653, %v2653
        %v2690 = vmul.f32 %v2654, %v2654
        %v2691 = vmul.f32 %v2655, %v2655
        %v2692 = vmul.f32 %v2656, %v2656
        %v2693 = vmul.f32 %v2657, %v2657
        %v2694 = vmul.f32 %v2658, %v2658
        %v2695 = vmul.f32 %v2659, %v2659
        %v2696 = vmul.f32 %v2660, %v2660
        %v2697 = vmul.f32 %v2661, %v2661
        %v2698 = vmul.f32 %v2662, %v2662
        %v2699 = vmul.f32 %v2663, %v2663
        %v2700 = vmul.f32 %v2664, %v2664
        %v2701 = vmul.f32 %v2665, %v2665
        %v2702 = vmul.f32 %v2666, %v2666
        %v2703 = vmul.f32 %v2667, %v2667
        %v2704 = vadd.f32 %v2688, %v2689
        %v2705 = vadd.f32 %v2704, %v2690
        %v2706 = vadd.f32 %v2705, %v2691
        %v2707 = vadd.f32 %v2706, %v2692
        %v2708 = vadd.f32 %v2707, %v2693
        %v2709 = vadd.f32 %v2708, %v2694
        %v2710 = vadd.f32 %v2709, %v2695
        %2711 = vadd.xlane.f32.xlu0 %v2710
        %v2712 = vpop.xlane.xlu0 %2711
        %v2713 = vadd.f32 %v2696, %v2697
        %v2714 = vadd.f32 %v2713, %v2698
        %v2715 = vadd.f32 %v2714, %v2699
        %v2716 = vadd.f32 %v2715, %v2700
        %v2717 = vadd.f32 %v2716, %v2701
        %v2718 = vadd.f32 %v2717, %v2702
        %v2719 = vadd.f32 %v2718, %v2703
        %2720 = vadd.xlane.f32.xlu0 %v2719
        %v2721 = vpop.xlane.xlu0 %2720
        %v2722 = vmul.f32 %v2712, 0.001953125
        %v2723 = vmul.f32 %v2721, 0.001953125
        %v2724 = vmul.f32 %v2686, %v2686
        %v2725 = vmul.f32 %v2687, %v2687
        %v2726 = vsub.f32 %v2722, %v2724
        %v2727 = vsub.f32 %v2723, %v2725
        %v2728 = vsub.f32 %v2345, %v2686
        %v2729 = vsub.f32 %v2347, %v2686
        %v2730 = vsub.f32 %v2431, %v2686
        %v2731 = vsub.f32 %v2433, %v2686
        %v2732 = vsub.f32 %v2517, %v2686
        %v2733 = vsub.f32 %v2519, %v2686
        %v2734 = vsub.f32 %v2603, %v2686
        %v2735 = vsub.f32 %v2605, %v2686
        %v2736 = vsub.f32 %v2349, %v2687
        %v2737 = vsub.f32 %v2351, %v2687
        %v2738 = vsub.f32 %v2435, %v2687
        %v2739 = vsub.f32 %v2437, %v2687
        %v2740 = vsub.f32 %v2521, %v2687
        %v2741 = vsub.f32 %v2523, %v2687
        %v2742 = vsub.f32 %v2607, %v2687
        %v2743 = vsub.f32 %v2609, %v2687
        %v2744 = vadd.f32 %v2726, 1e-05
        %v2745 = vadd.f32 %v2727, 1e-05
        %v2746 = vrsqrt.pop %v2744
        %v2747 = vrsqrt.pop %v2745
        %v2748 = vmul.f32 %v2728, %v2746
        %v2749 = vmul.f32 %v2729, %v2746
        %v2750 = vmul.f32 %v2730, %v2746
        %v2751 = vmul.f32 %v2731, %v2746
        %v2752 = vmul.f32 %v2732, %v2746
        %v2753 = vmul.f32 %v2733, %v2746
        %v2754 = vmul.f32 %v2734, %v2746
        %v2755 = vmul.f32 %v2735, %v2746
        %v2756 = vmul.f32 %v2736, %v2747
        %v2757 = vmul.f32 %v2737, %v2747
        %v2758 = vmul.f32 %v2738, %v2747
        %v2759 = vmul.f32 %v2739, %v2747
        %v2760 = vmul.f32 %v2740, %v2747
        %v2761 = vmul.f32 %v2741, %v2747
        %v2762 = vmul.f32 %v2742, %v2747
        %v2763 = vmul.f32 %v2743, %v2747
        %v2764 = vmul.f32 %v2748, 0.01
        %v2765 = vmul.f32 %v2749, 0.01
        %v2766 = vmul.f32 %v2750, 0.01
        %v2767 = vmul.f32 %v2751, 0.01
        %v2768 = vmul.f32 %v2752, 0.01
        %v2769 = vmul.f32 %v2753, 0.01
        %v2770 = vmul.f32 %v2754, 0.01
        %v2771 = vmul.f32 %v2755, 0.01
        %v2772 = vmul.f32 %v2756, 0.01
        %v2773 = vmul.f32 %v2757, 0.01
        %v2774 = vmul.f32 %v2758, 0.01
        %v2775 = vmul.f32 %v2759, 0.01
        %v2776 = vmul.f32 %v2760, 0.01
        %v2777 = vmul.f32 %v2761, 0.01
        %v2778 = vmul.f32 %v2762, 0.01
        %v2779 = vmul.f32 %v2763, 0.01
        %v2780 = vmax.f32 %v2748, %v2764
        %v2781 = vmax.f32 %v2749, %v2765
        %v2782 = vmax.f32 %v2750, %v2766
        %v2783 = vmax.f32 %v2751, %v2767
        %v2784 = vmax.f32 %v2752, %v2768
        %v2785 = vmax.f32 %v2753, %v2769
        %v2786 = vmax.f32 %v2754, %v2770
        %v2787 = vmax.f32 %v2755, %v2771
        %v2788 = vmax.f32 %v2756, %v2772
        %v2789 = vmax.f32 %v2757, %v2773
        %v2790 = vmax.f32 %v2758, %v2774
        %v2791 = vmax.f32 %v2759, %v2775
        %v2792 = vmax.f32 %v2760, %v2776
        %v2793 = vmax.f32 %v2761, %v2777
        %v2794 = vmax.f32 %v2762, %v2778
        %v2795 = vmax.f32 %v2763, %v2779
        %v2796 = vmul.f32 %v2780, %v2615
        %v2797 = vmul.f32 %v2781, %v2619
        %v2798 = vmul.f32 %v2782, %v2623
        %v2799 = vmul.f32 %v2783, %v2627
        %v2800 = vmul.f32 %v2784, %v2631
        %v2801 = vmul.f32 %v2785, %v2635
        %v2802 = vmul.f32 %v2786, %v2639
        %v2803 = vmul.f32 %v2787, %v2643
        %v2804 = vmul.f32 %v2788, %v2615
        %v2805 = vmul.f32 %v2789, %v2619
        %v2806 = vmul.f32 %v2790, %v2623
        %v2807 = vmul.f32 %v2791, %v2627
        %v2808 = vmul.f32 %v2792, %v2631
        %v2809 = vmul.f32 %v2793, %v2635
        %v2810 = vmul.f32 %v2794, %v2639
        %v2811 = vmul.f32 %v2795, %v2643
        %2812 = vrot.lane.b32.xlu0 %v2796, 111
        %v2813 = vpop.permute.xlu0 %2812
        %2814 = vrot.lane.b32.xlu0 %v2804, 111
        %v2815 = vpop.permute.xlu0 %2814
        %2816 = vrot.lane.b32.xlu0 %v2797, 111
        %v2817 = vpop.permute.xlu0 %2816
        %2818 = vrot.lane.b32.xlu0 %v2805, 111
        %v2819 = vpop.permute.xlu0 %2818
        %2820 = vrot.lane.b32.xlu0 %v2798, 111
        %v2821 = vpop.permute.xlu0 %2820
        %2822 = vrot.lane.b32.xlu0 %v2806, 111
        %v2823 = vpop.permute.xlu0 %2822
        %2824 = vrot.lane.b32.xlu0 %v2799, 111
        %v2825 = vpop.permute.xlu0 %2824
        %2826 = vrot.lane.b32.xlu0 %v2807, 111
        %v2827 = vpop.permute.xlu0 %2826
        %2828 = vrot.lane.b32.xlu0 %v2800, 111
        %v2829 = vpop.permute.xlu0 %2828
        %2830 = vrot.lane.b32.xlu0 %v2808, 111
        %v2831 = vpop.permute.xlu0 %2830
        %2832 = vrot.lane.b32.xlu0 %v2801, 111
        %v2833 = vpop.permute.xlu0 %2832
        %2834 = vrot.lane.b32.xlu0 %v2809, 111
        %v2835 = vpop.permute.xlu0 %2834
        %2836 = vrot.lane.b32.xlu0 %v2802, 111
        %v2837 = vpop.permute.xlu0 %2836
        %2838 = vrot.lane.b32.xlu0 %v2810, 111
        %v2839 = vpop.permute.xlu0 %2838
        %2840 = vrot.lane.b32.xlu0 %v2803, 111
        %v2841 = vpop.permute.xlu0 %2840
        %2842 = vrot.lane.b32.xlu0 %v2811, 111
        %v2843 = vpop.permute.xlu0 %2842
        %v2844 = vsel %vm318, %v2837, %v2841
        %v2845 = vsel %vm318, %v2839, %v2843
        %v2846 = vsel %vm318, %v2833, %v2837
        %v2847 = vsel %vm318, %v2835, %v2839
        %v2848 = vsel %vm318, %v2829, %v2833
        %v2849 = vsel %vm318, %v2831, %v2835
        %v2850 = vsel %vm318, %v2825, %v2829
        %v2851 = vsel %vm318, %v2827, %v2831
        %v2852 = vsel %vm318, %v2821, %v2825
        %v2853 = vsel %vm318, %v2823, %v2827
        %v2854 = vsel %vm318, %v2817, %v2821
        %v2855 = vsel %vm318, %v2819, %v2823
        %v2856 = vsel %vm318, %v2813, %v2817
        %v2857 = vsel %vm318, %v2815, %v2819
        %v2858 = vsel %vm318, %v2841, %v2813
        %v2859 = vsel %vm318, %v2843, %v2815
        %v2860 = vpack.c.bf16 %v2859, %v2858
        %v2861 = vpack.c.bf16 %v2857, %v2856
        %v2862 = vpack.c.bf16 %v2855, %v2854
        %v2863 = vpack.c.bf16 %v2853, %v2852
        %v2864 = vpack.c.bf16 %v2851, %v2850
        %v2865 = vpack.c.bf16 %v2849, %v2848
        %v2866 = vpack.c.bf16 %v2847, %v2846
        %v2867 = vpack.c.bf16 %v2845, %v2844
        %2868 = vst [vmem:[#allocation3] sm:$0xff] %v2860
        %2869 = vst [vmem:[#allocation3 + $0x8] sm:$0xff] %v2861
        %2870 = vst [vmem:[#allocation3 + $0x10] sm:$0xff] %v2862
        %2871 = vst [vmem:[#allocation3 + $0x18] sm:$0xff] %v2863
        %2872 = vst [vmem:[#allocation3 + $0x20] sm:$0xff] %v2864
        %2873 = vst [vmem:[#allocation3 + $0x28] sm:$0xff] %v2865
        %2874 = vst [vmem:[#allocation3 + $0x30] sm:$0xff] %v2866
        %2875 = vst [vmem:[#allocation3 + $0x38] sm:$0xff] %v2867
        %2876 = vrot.lane.b32.xlu0 %v2796, 110
        %v2877 = vpop.permute.xlu0 %2876
        %2878 = vrot.lane.b32.xlu0 %v2804, 110
        %v2879 = vpop.permute.xlu0 %2878
        %2880 = vrot.lane.b32.xlu0 %v2797, 110
        %v2881 = vpop.permute.xlu0 %2880
        %2882 = vrot.lane.b32.xlu0 %v2805, 110
        %v2883 = vpop.permute.xlu0 %2882
        %2884 = vrot.lane.b32.xlu0 %v2798, 110
        %v2885 = vpop.permute.xlu0 %2884
        %2886 = vrot.lane.b32.xlu0 %v2806, 110
        %v2887 = vpop.permute.xlu0 %2886
        %2888 = vrot.lane.b32.xlu0 %v2799, 110
        %v2889 = vpop.permute.xlu0 %2888
        %2890 = vrot.lane.b32.xlu0 %v2807, 110
        %v2891 = vpop.permute.xlu0 %2890
        %2892 = vrot.lane.b32.xlu0 %v2800, 110
        %v2893 = vpop.permute.xlu0 %2892
        %2894 = vrot.lane.b32.xlu0 %v2808, 110
        %v2895 = vpop.permute.xlu0 %2894
        %2896 = vrot.lane.b32.xlu0 %v2801, 110
        %v2897 = vpop.permute.xlu0 %2896
        %2898 = vrot.lane.b32.xlu0 %v2809, 110
        %v2899 = vpop.permute.xlu0 %2898
        %2900 = vrot.lane.b32.xlu0 %v2802, 110
        %v2901 = vpop.permute.xlu0 %2900
        %2902 = vrot.lane.b32.xlu0 %v2810, 110
        %v2903 = vpop.permute.xlu0 %2902
        %2904 = vrot.lane.b32.xlu0 %v2803, 110
        %v2905 = vpop.permute.xlu0 %2904
        %2906 = vrot.lane.b32.xlu0 %v2811, 110
        %v2907 = vpop.permute.xlu0 %2906
        %v2908 = vsel %vm383, %v2901, %v2905
        %v2909 = vsel %vm383, %v2903, %v2907
        %v2910 = vsel %vm383, %v2897, %v2901
        %v2911 = vsel %vm383, %v2899, %v2903
        %v2912 = vsel %vm383, %v2893, %v2897
        %v2913 = vsel %vm383, %v2895, %v2899
        %v2914 = vsel %vm383, %v2889, %v2893
        %v2915 = vsel %vm383, %v2891, %v2895
        %v2916 = vsel %vm383, %v2885, %v2889
        %v2917 = vsel %vm383, %v2887, %v2891
        %v2918 = vsel %vm383, %v2881, %v2885
        %v2919 = vsel %vm383, %v2883, %v2887
        %v2920 = vsel %vm383, %v2877, %v2881
        %v2921 = vsel %vm383, %v2879, %v2883
        %v2922 = vsel %vm383, %v2905, %v2877
        %v2923 = vsel %vm383, %v2907, %v2879
        %v2924 = vpack.c.bf16 %v2923, %v2922
        %v2925 = vpack.c.bf16 %v2921, %v2920
        %v2926 = vpack.c.bf16 %v2919, %v2918
        %v2927 = vpack.c.bf16 %v2917, %v2916
        %v2928 = vpack.c.bf16 %v2915, %v2914
        %v2929 = vpack.c.bf16 %v2913, %v2912
        %v2930 = vpack.c.bf16 %v2911, %v2910
        %v2931 = vpack.c.bf16 %v2909, %v2908
        %2932 = vst [vmem:[#allocation3 + $0x40] sm:$0xff] %v2924
        %2933 = vst [vmem:[#allocation3 + $0x48] sm:$0xff] %v2925
        %2934 = vst [vmem:[#allocation3 + $0x50] sm:$0xff] %v2926
        %2935 = vst [vmem:[#allocation3 + $0x58] sm:$0xff] %v2927
        %2936 = vst [vmem:[#allocation3 + $0x60] sm:$0xff] %v2928
        %2937 = vst [vmem:[#allocation3 + $0x68] sm:$0xff] %v2929
        %2938 = vst [vmem:[#allocation3 + $0x70] sm:$0xff] %v2930
        %2939 = vst [vmem:[#allocation3 + $0x78] sm:$0xff] %v2931
        %2940 = vrot.lane.b32.xlu0 %v2796, 109
        %v2941 = vpop.permute.xlu0 %2940
        %2942 = vrot.lane.b32.xlu0 %v2804, 109
        %v2943 = vpop.permute.xlu0 %2942
        %2944 = vrot.lane.b32.xlu0 %v2797, 109
        %v2945 = vpop.permute.xlu0 %2944
        %2946 = vrot.lane.b32.xlu0 %v2805, 109
        %v2947 = vpop.permute.xlu0 %2946
        %2948 = vrot.lane.b32.xlu0 %v2798, 109
        %v2949 = vpop.permute.xlu0 %2948
        %2950 = vrot.lane.b32.xlu0 %v2806, 109
        %v2951 = vpop.permute.xlu0 %2950
        %2952 = vrot.lane.b32.xlu0 %v2799, 109
        %v2953 = vpop.permute.xlu0 %2952
        %2954 = vrot.lane.b32.xlu0 %v2807, 109
        %v2955 = vpop.permute.xlu0 %2954
        %2956 = vrot.lane.b32.xlu0 %v2800, 109
        %v2957 = vpop.permute.xlu0 %2956
        %2958 = vrot.lane.b32.xlu0 %v2808, 109
        %v2959 = vpop.permute.xlu0 %2958
        %2960 = vrot.lane.b32.xlu0 %v2801, 109
        %v2961 = vpop.permute.xlu0 %2960
        %2962 = vrot.lane.b32.xlu0 %v2809, 109
        %v2963 = vpop.permute.xlu0 %2962
        %2964 = vrot.lane.b32.xlu0 %v2802, 109
        %v2965 = vpop.permute.xlu0 %2964
        %2966 = vrot.lane.b32.xlu0 %v2810, 109
        %v2967 = vpop.permute.xlu0 %2966
        %2968 = vrot.lane.b32.xlu0 %v2803, 109
        %v2969 = vpop.permute.xlu0 %2968
        %2970 = vrot.lane.b32.xlu0 %v2811, 109
        %v2971 = vpop.permute.xlu0 %2970
        %v2972 = vsel %vm448, %v2965, %v2969
        %v2973 = vsel %vm448, %v2967, %v2971
        %v2974 = vsel %vm448, %v2961, %v2965
        %v2975 = vsel %vm448, %v2963, %v2967
        %v2976 = vsel %vm448, %v2957, %v2961
        %v2977 = vsel %vm448, %v2959, %v2963
        %v2978 = vsel %vm448, %v2953, %v2957
        %v2979 = vsel %vm448, %v2955, %v2959
        %v2980 = vsel %vm448, %v2949, %v2953
        %v2981 = vsel %vm448, %v2951, %v2955
        %v2982 = vsel %vm448, %v2945, %v2949
        %v2983 = vsel %vm448, %v2947, %v2951
        %v2984 = vsel %vm448, %v2941, %v2945
        %v2985 = vsel %vm448, %v2943, %v2947
        %v2986 = vsel %vm448, %v2969, %v2941
        %v2987 = vsel %vm448, %v2971, %v2943
        %v2988 = vpack.c.bf16 %v2987, %v2986
        %v2989 = vpack.c.bf16 %v2985, %v2984
        %v2990 = vpack.c.bf16 %v2983, %v2982
        %v2991 = vpack.c.bf16 %v2981, %v2980
        %v2992 = vpack.c.bf16 %v2979, %v2978
        %v2993 = vpack.c.bf16 %v2977, %v2976
        %v2994 = vpack.c.bf16 %v2975, %v2974
        %v2995 = vpack.c.bf16 %v2973, %v2972
        %2996 = vst [vmem:[#allocation3 + $0x80] sm:$0xff] %v2988
        %2997 = vst [vmem:[#allocation3 + $0x88] sm:$0xff] %v2989
        %2998 = vst [vmem:[#allocation3 + $0x90] sm:$0xff] %v2990
        %2999 = vst [vmem:[#allocation3 + $0x98] sm:$0xff] %v2991
        %3000 = vst [vmem:[#allocation3 + $0xa0] sm:$0xff] %v2992
        %3001 = vst [vmem:[#allocation3 + $0xa8] sm:$0xff] %v2993
        %3002 = vst [vmem:[#allocation3 + $0xb0] sm:$0xff] %v2994
        %3003 = vst [vmem:[#allocation3 + $0xb8] sm:$0xff] %v2995
        %3004 = vrot.lane.b32.xlu0 %v2796, 101
        %v3005 = vpop.permute.xlu0 %3004
        %3006 = vrot.lane.b32.xlu0 %v2804, 101
        %v3007 = vpop.permute.xlu0 %3006
        %3008 = vrot.lane.b32.xlu0 %v2797, 101
        %v3009 = vpop.permute.xlu0 %3008
        %3010 = vrot.lane.b32.xlu0 %v2805, 101
        %v3011 = vpop.permute.xlu0 %3010
        %3012 = vrot.lane.b32.xlu0 %v2798, 101
        %v3013 = vpop.permute.xlu0 %3012
        %3014 = vrot.lane.b32.xlu0 %v2806, 101
        %v3015 = vpop.permute.xlu0 %3014
        %3016 = vrot.lane.b32.xlu0 %v2799, 101
        %v3017 = vpop.permute.xlu0 %3016
        %3018 = vrot.lane.b32.xlu0 %v2807, 101
        %v3019 = vpop.permute.xlu0 %3018
        %3020 = vrot.lane.b32.xlu0 %v2800, 101
        %v3021 = vpop.permute.xlu0 %3020
        %3022 = vrot.lane.b32.xlu0 %v2808, 101
        %v3023 = vpop.permute.xlu0 %3022
        %3024 = vrot.lane.b32.xlu0 %v2801, 101
        %v3025 = vpop.permute.xlu0 %3024
        %3026 = vrot.lane.b32.xlu0 %v2809, 101
        %v3027 = vpop.permute.xlu0 %3026
        %3028 = vrot.lane.b32.xlu0 %v2802, 101
        %v3029 = vpop.permute.xlu0 %3028
        %3030 = vrot.lane.b32.xlu0 %v2810, 101
        %v3031 = vpop.permute.xlu0 %3030
        %3032 = vrot.lane.b32.xlu0 %v2803, 101
        %v3033 = vpop.permute.xlu0 %3032
        %3034 = vrot.lane.b32.xlu0 %v2811, 101
        %v3035 = vpop.permute.xlu0 %3034
        %v3036 = vsel %vm513, %v3029, %v3033
        %v3037 = vsel %vm513, %v3031, %v3035
        %v3038 = vsel %vm513, %v3025, %v3029
        %v3039 = vsel %vm513, %v3027, %v3031
        %v3040 = vsel %vm513, %v3021, %v3025
        %v3041 = vsel %vm513, %v3023, %v3027
        %v3042 = vsel %vm513, %v3017, %v3021
        %v3043 = vsel %vm513, %v3019, %v3023
        %v3044 = vsel %vm513, %v3013, %v3017
        %v3045 = vsel %vm513, %v3015, %v3019
        %v3046 = vsel %vm513, %v3009, %v3013
        %v3047 = vsel %vm513, %v3011, %v3015
        %v3048 = vsel %vm513, %v3005, %v3009
        %v3049 = vsel %vm513, %v3007, %v3011
        %v3050 = vsel %vm513, %v3033, %v3005
        %v3051 = vsel %vm513, %v3035, %v3007
        %v3052 = vpack.c.bf16 %v3051, %v3050
        %v3053 = vpack.c.bf16 %v3049, %v3048
        %v3054 = vpack.c.bf16 %v3047, %v3046
        %v3055 = vpack.c.bf16 %v3045, %v3044
        %v3056 = vpack.c.bf16 %v3043, %v3042
        %v3057 = vpack.c.bf16 %v3041, %v3040
        %v3058 = vpack.c.bf16 %v3039, %v3038
        %v3059 = vpack.c.bf16 %v3037, %v3036
        %3060 = vst [vmem:[#allocation3 + $0xc0] sm:$0xff] %v3052
        %3061 = vst [vmem:[#allocation3 + $0xc8] sm:$0xff] %v3053
        %3062 = vst [vmem:[#allocation3 + $0xd0] sm:$0xff] %v3054
        %3063 = vst [vmem:[#allocation3 + $0xd8] sm:$0xff] %v3055
        %3064 = vst [vmem:[#allocation3 + $0xe0] sm:$0xff] %v3056
        %3065 = vst [vmem:[#allocation3 + $0xe8] sm:$0xff] %v3057
        %3066 = vst [vmem:[#allocation3 + $0xf0] sm:$0xff] %v3058
        %3067 = vst [vmem:[#allocation3 + $0xf8] sm:$0xff] %v3059
        %3068 = vrot.lane.b32.xlu0 %v2796, 100
        %v3069 = vpop.permute.xlu0 %3068
        %3070 = vrot.lane.b32.xlu0 %v2804, 100
        %v3071 = vpop.permute.xlu0 %3070
        %3072 = vrot.lane.b32.xlu0 %v2797, 100
        %v3073 = vpop.permute.xlu0 %3072
        %3074 = vrot.lane.b32.xlu0 %v2805, 100
        %v3075 = vpop.permute.xlu0 %3074
        %3076 = vrot.lane.b32.xlu0 %v2798, 100
        %v3077 = vpop.permute.xlu0 %3076
        %3078 = vrot.lane.b32.xlu0 %v2806, 100
        %v3079 = vpop.permute.xlu0 %3078
        %3080 = vrot.lane.b32.xlu0 %v2799, 100
        %v3081 = vpop.permute.xlu0 %3080
        %3082 = vrot.lane.b32.xlu0 %v2807, 100
        %v3083 = vpop.permute.xlu0 %3082
        %3084 = vrot.lane.b32.xlu0 %v2800, 100
        %v3085 = vpop.permute.xlu0 %3084
        %3086 = vrot.lane.b32.xlu0 %v2808, 100
        %v3087 = vpop.permute.xlu0 %3086
        %3088 = vrot.lane.b32.xlu0 %v2801, 100
        %v3089 = vpop.permute.xlu0 %3088
        %3090 = vrot.lane.b32.xlu0 %v2809, 100
        %v3091 = vpop.permute.xlu0 %3090
        %3092 = vrot.lane.b32.xlu0 %v2802, 100
        %v3093 = vpop.permute.xlu0 %3092
        %3094 = vrot.lane.b32.xlu0 %v2810, 100
        %v3095 = vpop.permute.xlu0 %3094
        %3096 = vrot.lane.b32.xlu0 %v2803, 100
        %v3097 = vpop.permute.xlu0 %3096
        %3098 = vrot.lane.b32.xlu0 %v2811, 100
        %v3099 = vpop.permute.xlu0 %3098
        %v3100 = vsel %vm578, %v3093, %v3097
        %v3101 = vsel %vm578, %v3095, %v3099
        %v3102 = vsel %vm578, %v3089, %v3093
        %v3103 = vsel %vm578, %v3091, %v3095
        %v3104 = vsel %vm578, %v3085, %v3089
        %v3105 = vsel %vm578, %v3087, %v3091
        %v3106 = vsel %vm578, %v3081, %v3085
        %v3107 = vsel %vm578, %v3083, %v3087
        %v3108 = vsel %vm578, %v3077, %v3081
        %v3109 = vsel %vm578, %v3079, %v3083
        %v3110 = vsel %vm578, %v3073, %v3077
        %v3111 = vsel %vm578, %v3075, %v3079
        %v3112 = vsel %vm578, %v3069, %v3073
        %v3113 = vsel %vm578, %v3071, %v3075
        %v3114 = vsel %vm578, %v3097, %v3069
        %v3115 = vsel %vm578, %v3099, %v3071
        %v3116 = vpack.c.bf16 %v3115, %v3114
        %v3117 = vpack.c.bf16 %v3113, %v3112
        %v3118 = vpack.c.bf16 %v3111, %v3110
        %v3119 = vpack.c.bf16 %v3109, %v3108
        %v3120 = vpack.c.bf16 %v3107, %v3106
        %v3121 = vpack.c.bf16 %v3105, %v3104
        %v3122 = vpack.c.bf16 %v3103, %v3102
        %v3123 = vpack.c.bf16 %v3101, %v3100
        %3124 = vst [vmem:[#allocation3 + $0x100] sm:$0xff] %v3116
        %3125 = vst [vmem:[#allocation3 + $0x108] sm:$0xff] %v3117
        %3126 = vst [vmem:[#allocation3 + $0x110] sm:$0xff] %v3118
        %3127 = vst [vmem:[#allocation3 + $0x118] sm:$0xff] %v3119
        %3128 = vst [vmem:[#allocation3 + $0x120] sm:$0xff] %v3120
        %3129 = vst [vmem:[#allocation3 + $0x128] sm:$0xff] %v3121
        %3130 = vst [vmem:[#allocation3 + $0x130] sm:$0xff] %v3122
        %3131 = vst [vmem:[#allocation3 + $0x138] sm:$0xff] %v3123
        %3132 = vrot.lane.b32.xlu0 %v2796, 99
        %v3133 = vpop.permute.xlu0 %3132
        %3134 = vrot.lane.b32.xlu0 %v2804, 99
        %v3135 = vpop.permute.xlu0 %3134
        %3136 = vrot.lane.b32.xlu0 %v2797, 99
        %v3137 = vpop.permute.xlu0 %3136
        %3138 = vrot.lane.b32.xlu0 %v2805, 99
        %v3139 = vpop.permute.xlu0 %3138
        %3140 = vrot.lane.b32.xlu0 %v2798, 99
        %v3141 = vpop.permute.xlu0 %3140
        %3142 = vrot.lane.b32.xlu0 %v2806, 99
        %v3143 = vpop.permute.xlu0 %3142
        %3144 = vrot.lane.b32.xlu0 %v2799, 99
        %v3145 = vpop.permute.xlu0 %3144
        %3146 = vrot.lane.b32.xlu0 %v2807, 99
        %v3147 = vpop.permute.xlu0 %3146
        %3148 = vrot.lane.b32.xlu0 %v2800, 99
        %v3149 = vpop.permute.xlu0 %3148
        %3150 = vrot.lane.b32.xlu0 %v2808, 99
        %v3151 = vpop.permute.xlu0 %3150
        %3152 = vrot.lane.b32.xlu0 %v2801, 99
        %v3153 = vpop.permute.xlu0 %3152
        %3154 = vrot.lane.b32.xlu0 %v2809, 99
        %v3155 = vpop.permute.xlu0 %3154
        %3156 = vrot.lane.b32.xlu0 %v2802, 99
        %v3157 = vpop.permute.xlu0 %3156
        %3158 = vrot.lane.b32.xlu0 %v2810, 99
        %v3159 = vpop.permute.xlu0 %3158
        %3160 = vrot.lane.b32.xlu0 %v2803, 99
        %v3161 = vpop.permute.xlu0 %3160
        %3162 = vrot.lane.b32.xlu0 %v2811, 99
        %v3163 = vpop.permute.xlu0 %3162
        %v3164 = vsel %vm643, %v3157, %v3161
        %v3165 = vsel %vm643, %v3159, %v3163
        %v3166 = vsel %vm643, %v3153, %v3157
        %v3167 = vsel %vm643, %v3155, %v3159
        %v3168 = vsel %vm643, %v3149, %v3153
        %v3169 = vsel %vm643, %v3151, %v3155
        %v3170 = vsel %vm643, %v3145, %v3149
        %v3171 = vsel %vm643, %v3147, %v3151
        %v3172 = vsel %vm643, %v3141, %v3145
        %v3173 = vsel %vm643, %v3143, %v3147
        %v3174 = vsel %vm643, %v3137, %v3141
        %v3175 = vsel %vm643, %v3139, %v3143
        %v3176 = vsel %vm643, %v3133, %v3137
        %v3177 = vsel %vm643, %v3135, %v3139
        %v3178 = vsel %vm643, %v3161, %v3133
        %v3179 = vsel %vm643, %v3163, %v3135
        %v3180 = vpack.c.bf16 %v3179, %v3178
        %v3181 = vpack.c.bf16 %v3177, %v3176
        %v3182 = vpack.c.bf16 %v3175, %v3174
        %v3183 = vpack.c.bf16 %v3173, %v3172
        %v3184 = vpack.c.bf16 %v3171, %v3170
        %v3185 = vpack.c.bf16 %v3169, %v3168
        %v3186 = vpack.c.bf16 %v3167, %v3166
        %v3187 = vpack.c.bf16 %v3165, %v3164
        %3188 = vst [vmem:[#allocation3 + $0x140] sm:$0xff] %v3180
        %3189 = vst [vmem:[#allocation3 + $0x148] sm:$0xff] %v3181
        %3190 = vst [vmem:[#allocation3 + $0x150] sm:$0xff] %v3182
        %3191 = vst [vmem:[#allocation3 + $0x158] sm:$0xff] %v3183
        %3192 = vst [vmem:[#allocation3 + $0x160] sm:$0xff] %v3184
        %3193 = vst [vmem:[#allocation3 + $0x168] sm:$0xff] %v3185
        %3194 = vst [vmem:[#allocation3 + $0x170] sm:$0xff] %v3186
        %3195 = vst [vmem:[#allocation3 + $0x178] sm:$0xff] %v3187
        %3196 = vrot.lane.b32.xlu0 %v2796, 91
        %v3197 = vpop.permute.xlu0 %3196
        %3198 = vrot.lane.b32.xlu0 %v2804, 91
        %v3199 = vpop.permute.xlu0 %3198
        %3200 = vrot.lane.b32.xlu0 %v2797, 91
        %v3201 = vpop.permute.xlu0 %3200
        %3202 = vrot.lane.b32.xlu0 %v2805, 91
        %v3203 = vpop.permute.xlu0 %3202
        %3204 = vrot.lane.b32.xlu0 %v2798, 91
        %v3205 = vpop.permute.xlu0 %3204
        %3206 = vrot.lane.b32.xlu0 %v2806, 91
        %v3207 = vpop.permute.xlu0 %3206
        %3208 = vrot.lane.b32.xlu0 %v2799, 91
        %v3209 = vpop.permute.xlu0 %3208
        %3210 = vrot.lane.b32.xlu0 %v2807, 91
        %v3211 = vpop.permute.xlu0 %3210
        %3212 = vrot.lane.b32.xlu0 %v2800, 91
        %v3213 = vpop.permute.xlu0 %3212
        %3214 = vrot.lane.b32.xlu0 %v2808, 91
        %v3215 = vpop.permute.xlu0 %3214
        %3216 = vrot.lane.b32.xlu0 %v2801, 91
        %v3217 = vpop.permute.xlu0 %3216
        %3218 = vrot.lane.b32.xlu0 %v2809, 91
        %v3219 = vpop.permute.xlu0 %3218
        %3220 = vrot.lane.b32.xlu0 %v2802, 91
        %v3221 = vpop.permute.xlu0 %3220
        %3222 = vrot.lane.b32.xlu0 %v2810, 91
        %v3223 = vpop.permute.xlu0 %3222
        %3224 = vrot.lane.b32.xlu0 %v2803, 91
        %v3225 = vpop.permute.xlu0 %3224
        %3226 = vrot.lane.b32.xlu0 %v2811, 91
        %v3227 = vpop.permute.xlu0 %3226
        %v3228 = vsel %vm708, %v3221, %v3225
        %v3229 = vsel %vm708, %v3223, %v3227
        %v3230 = vsel %vm708, %v3217, %v3221
        %v3231 = vsel %vm708, %v3219, %v3223
        %v3232 = vsel %vm708, %v3213, %v3217
        %v3233 = vsel %vm708, %v3215, %v3219
        %v3234 = vsel %vm708, %v3209, %v3213
        %v3235 = vsel %vm708, %v3211, %v3215
        %v3236 = vsel %vm708, %v3205, %v3209
        %v3237 = vsel %vm708, %v3207, %v3211
        %v3238 = vsel %vm708, %v3201, %v3205
        %v3239 = vsel %vm708, %v3203, %v3207
        %v3240 = vsel %vm708, %v3197, %v3201
        %v3241 = vsel %vm708, %v3199, %v3203
        %v3242 = vsel %vm708, %v3225, %v3197
        %v3243 = vsel %vm708, %v3227, %v3199
        %v3244 = vpack.c.bf16 %v3243, %v3242
        %v3245 = vpack.c.bf16 %v3241, %v3240
        %v3246 = vpack.c.bf16 %v3239, %v3238
        %v3247 = vpack.c.bf16 %v3237, %v3236
        %v3248 = vpack.c.bf16 %v3235, %v3234
        %v3249 = vpack.c.bf16 %v3233, %v3232
        %v3250 = vpack.c.bf16 %v3231, %v3230
        %v3251 = vpack.c.bf16 %v3229, %v3228
        %3252 = vst [vmem:[#allocation3 + $0x180] sm:$0xff] %v3244
        %3253 = vst [vmem:[#allocation3 + $0x188] sm:$0xff] %v3245
        %3254 = vst [vmem:[#allocation3 + $0x190] sm:$0xff] %v3246
        %3255 = vst [vmem:[#allocation3 + $0x198] sm:$0xff] %v3247
        %3256 = vst [vmem:[#allocation3 + $0x1a0] sm:$0xff] %v3248
        %3257 = vst [vmem:[#allocation3 + $0x1a8] sm:$0xff] %v3249
        %3258 = vst [vmem:[#allocation3 + $0x1b0] sm:$0xff] %v3250
        %3259 = vst [vmem:[#allocation3 + $0x1b8] sm:$0xff] %v3251
        %3260 = vrot.lane.b32.xlu0 %v2796, 90
        %v3261 = vpop.permute.xlu0 %3260
        %3262 = vrot.lane.b32.xlu0 %v2804, 90
        %v3263 = vpop.permute.xlu0 %3262
        %3264 = vrot.lane.b32.xlu0 %v2797, 90
        %v3265 = vpop.permute.xlu0 %3264
        %3266 = vrot.lane.b32.xlu0 %v2805, 90
        %v3267 = vpop.permute.xlu0 %3266
        %3268 = vrot.lane.b32.xlu0 %v2798, 90
        %v3269 = vpop.permute.xlu0 %3268
        %3270 = vrot.lane.b32.xlu0 %v2806, 90
        %v3271 = vpop.permute.xlu0 %3270
        %3272 = vrot.lane.b32.xlu0 %v2799, 90
        %v3273 = vpop.permute.xlu0 %3272
        %3274 = vrot.lane.b32.xlu0 %v2807, 90
        %v3275 = vpop.permute.xlu0 %3274
        %3276 = vrot.lane.b32.xlu0 %v2800, 90
        %v3277 = vpop.permute.xlu0 %3276
        %3278 = vrot.lane.b32.xlu0 %v2808, 90
        %v3279 = vpop.permute.xlu0 %3278
        %3280 = vrot.lane.b32.xlu0 %v2801, 90
        %v3281 = vpop.permute.xlu0 %3280
        %3282 = vrot.lane.b32.xlu0 %v2809, 90
        %v3283 = vpop.permute.xlu0 %3282
        %3284 = vrot.lane.b32.xlu0 %v2802, 90
        %v3285 = vpop.permute.xlu0 %3284
        %3286 = vrot.lane.b32.xlu0 %v2810, 90
        %v3287 = vpop.permute.xlu0 %3286
        %3288 = vrot.lane.b32.xlu0 %v2803, 90
        %v3289 = vpop.permute.xlu0 %3288
        %3290 = vrot.lane.b32.xlu0 %v2811, 90
        %v3291 = vpop.permute.xlu0 %3290
        %v3292 = vsel %vm773, %v3285, %v3289
        %v3293 = vsel %vm773, %v3287, %v3291
        %v3294 = vsel %vm773, %v3281, %v3285
        %v3295 = vsel %vm773, %v3283, %v3287
        %v3296 = vsel %vm773, %v3277, %v3281
        %v3297 = vsel %vm773, %v3279, %v3283
        %v3298 = vsel %vm773, %v3273, %v3277
        %v3299 = vsel %vm773, %v3275, %v3279
        %v3300 = vsel %vm773, %v3269, %v3273
        %v3301 = vsel %vm773, %v3271, %v3275
        %v3302 = vsel %vm773, %v3265, %v3269
        %v3303 = vsel %vm773, %v3267, %v3271
        %v3304 = vsel %vm773, %v3261, %v3265
        %v3305 = vsel %vm773, %v3263, %v3267
        %v3306 = vsel %vm773, %v3289, %v3261
        %v3307 = vsel %vm773, %v3291, %v3263
        %v3308 = vpack.c.bf16 %v3307, %v3306
        %v3309 = vpack.c.bf16 %v3305, %v3304
        %v3310 = vpack.c.bf16 %v3303, %v3302
        %v3311 = vpack.c.bf16 %v3301, %v3300
        %v3312 = vpack.c.bf16 %v3299, %v3298
        %v3313 = vpack.c.bf16 %v3297, %v3296
        %v3314 = vpack.c.bf16 %v3295, %v3294
        %v3315 = vpack.c.bf16 %v3293, %v3292
        %3316 = vst [vmem:[#allocation3 + $0x1c0] sm:$0xff] %v3308
        %3317 = vst [vmem:[#allocation3 + $0x1c8] sm:$0xff] %v3309
        %3318 = vst [vmem:[#allocation3 + $0x1d0] sm:$0xff] %v3310
        %3319 = vst [vmem:[#allocation3 + $0x1d8] sm:$0xff] %v3311
        %3320 = vst [vmem:[#allocation3 + $0x1e0] sm:$0xff] %v3312
        %3321 = vst [vmem:[#allocation3 + $0x1e8] sm:$0xff] %v3313
        %3322 = vst [vmem:[#allocation3 + $0x1f0] sm:$0xff] %v3314
        %3323 = vst [vmem:[#allocation3 + $0x1f8] sm:$0xff] %v3315
        %3324 = vrot.lane.b32.xlu0 %v2796, 89
        %v3325 = vpop.permute.xlu0 %3324
        %3326 = vrot.lane.b32.xlu0 %v2804, 89
        %v3327 = vpop.permute.xlu0 %3326
        %3328 = vrot.lane.b32.xlu0 %v2797, 89
        %v3329 = vpop.permute.xlu0 %3328
        %3330 = vrot.lane.b32.xlu0 %v2805, 89
        %v3331 = vpop.permute.xlu0 %3330
        %3332 = vrot.lane.b32.xlu0 %v2798, 89
        %v3333 = vpop.permute.xlu0 %3332
        %3334 = vrot.lane.b32.xlu0 %v2806, 89
        %v3335 = vpop.permute.xlu0 %3334
        %3336 = vrot.lane.b32.xlu0 %v2799, 89
        %v3337 = vpop.permute.xlu0 %3336
        %3338 = vrot.lane.b32.xlu0 %v2807, 89
        %v3339 = vpop.permute.xlu0 %3338
        %3340 = vrot.lane.b32.xlu0 %v2800, 89
        %v3341 = vpop.permute.xlu0 %3340
        %3342 = vrot.lane.b32.xlu0 %v2808, 89
        %v3343 = vpop.permute.xlu0 %3342
        %3344 = vrot.lane.b32.xlu0 %v2801, 89
        %v3345 = vpop.permute.xlu0 %3344
        %3346 = vrot.lane.b32.xlu0 %v2809, 89
        %v3347 = vpop.permute.xlu0 %3346
        %3348 = vrot.lane.b32.xlu0 %v2802, 89
        %v3349 = vpop.permute.xlu0 %3348
        %3350 = vrot.lane.b32.xlu0 %v2810, 89
        %v3351 = vpop.permute.xlu0 %3350
        %3352 = vrot.lane.b32.xlu0 %v2803, 89
        %v3353 = vpop.permute.xlu0 %3352
        %3354 = vrot.lane.b32.xlu0 %v2811, 89
        %v3355 = vpop.permute.xlu0 %3354
        %v3356 = vsel %vm838, %v3349, %v3353
        %v3357 = vsel %vm838, %v3351, %v3355
        %v3358 = vsel %vm838, %v3345, %v3349
        %v3359 = vsel %vm838, %v3347, %v3351
        %v3360 = vsel %vm838, %v3341, %v3345
        %v3361 = vsel %vm838, %v3343, %v3347
        %v3362 = vsel %vm838, %v3337, %v3341
        %v3363 = vsel %vm838, %v3339, %v3343
        %v3364 = vsel %vm838, %v3333, %v3337
        %v3365 = vsel %vm838, %v3335, %v3339
        %v3366 = vsel %vm838, %v3329, %v3333
        %v3367 = vsel %vm838, %v3331, %v3335
        %v3368 = vsel %vm838, %v3325, %v3329
        %v3369 = vsel %vm838, %v3327, %v3331
        %v3370 = vsel %vm838, %v3353, %v3325
        %v3371 = vsel %vm838, %v3355, %v3327
        %v3372 = vpack.c.bf16 %v3371, %v3370
        %v3373 = vpack.c.bf16 %v3369, %v3368
        %v3374 = vpack.c.bf16 %v3367, %v3366
        %v3375 = vpack.c.bf16 %v3365, %v3364
        %v3376 = vpack.c.bf16 %v3363, %v3362
        %v3377 = vpack.c.bf16 %v3361, %v3360
        %v3378 = vpack.c.bf16 %v3359, %v3358
        %v3379 = vpack.c.bf16 %v3357, %v3356
        %3380 = vst [vmem:[#allocation3 + $0x200] sm:$0xff] %v3372
        %3381 = vst [vmem:[#allocation3 + $0x208] sm:$0xff] %v3373
        %3382 = vst [vmem:[#allocation3 + $0x210] sm:$0xff] %v3374
        %3383 = vst [vmem:[#allocation3 + $0x218] sm:$0xff] %v3375
        %3384 = vst [vmem:[#allocation3 + $0x220] sm:$0xff] %v3376
        %3385 = vst [vmem:[#allocation3 + $0x228] sm:$0xff] %v3377
        %3386 = vst [vmem:[#allocation3 + $0x230] sm:$0xff] %v3378
        %3387 = vst [vmem:[#allocation3 + $0x238] sm:$0xff] %v3379
        %3388 = vrot.lane.b32.xlu0 %v2796, 11
        %v3389 = vpop.permute.xlu0 %3388
        %3390 = vrot.lane.b32.xlu0 %v2804, 11
        %v3391 = vpop.permute.xlu0 %3390
        %3392 = vrot.lane.b32.xlu0 %v2797, 11
        %v3393 = vpop.permute.xlu0 %3392
        %3394 = vrot.lane.b32.xlu0 %v2805, 11
        %v3395 = vpop.permute.xlu0 %3394
        %3396 = vrot.lane.b32.xlu0 %v2798, 11
        %v3397 = vpop.permute.xlu0 %3396
        %3398 = vrot.lane.b32.xlu0 %v2806, 11
        %v3399 = vpop.permute.xlu0 %3398
        %3400 = vrot.lane.b32.xlu0 %v2799, 11
        %v3401 = vpop.permute.xlu0 %3400
        %3402 = vrot.lane.b32.xlu0 %v2807, 11
        %v3403 = vpop.permute.xlu0 %3402
        %3404 = vrot.lane.b32.xlu0 %v2800, 11
        %v3405 = vpop.permute.xlu0 %3404
        %3406 = vrot.lane.b32.xlu0 %v2808, 11
        %v3407 = vpop.permute.xlu0 %3406
        %3408 = vrot.lane.b32.xlu0 %v2801, 11
        %v3409 = vpop.permute.xlu0 %3408
        %3410 = vrot.lane.b32.xlu0 %v2809, 11
        %v3411 = vpop.permute.xlu0 %3410
        %3412 = vrot.lane.b32.xlu0 %v2802, 11
        %v3413 = vpop.permute.xlu0 %3412
        %3414 = vrot.lane.b32.xlu0 %v2810, 11
        %v3415 = vpop.permute.xlu0 %3414
        %3416 = vrot.lane.b32.xlu0 %v2803, 11
        %v3417 = vpop.permute.xlu0 %3416
        %3418 = vrot.lane.b32.xlu0 %v2811, 11
        %v3419 = vpop.permute.xlu0 %3418
        %v3420 = vsel %vm903, %v3413, %v3417
        %v3421 = vsel %vm903, %v3415, %v3419
        %v3422 = vsel %vm903, %v3409, %v3413
        %v3423 = vsel %vm903, %v3411, %v3415
        %v3424 = vsel %vm903, %v3405, %v3409
        %v3425 = vsel %vm903, %v3407, %v3411
        %v3426 = vsel %vm903, %v3401, %v3405
        %v3427 = vsel %vm903, %v3403, %v3407
        %v3428 = vsel %vm903, %v3397, %v3401
        %v3429 = vsel %vm903, %v3399, %v3403
        %v3430 = vsel %vm903, %v3393, %v3397
        %v3431 = vsel %vm903, %v3395, %v3399
        %v3432 = vsel %vm903, %v3389, %v3393
        %v3433 = vsel %vm903, %v3391, %v3395
        %v3434 = vsel %vm903, %v3417, %v3389
        %v3435 = vsel %vm903, %v3419, %v3391
        %v3436 = vpack.c.bf16 %v3435, %v3434
        %v3437 = vpack.c.bf16 %v3433, %v3432
        %v3438 = vpack.c.bf16 %v3431, %v3430
        %v3439 = vpack.c.bf16 %v3429, %v3428
        %v3440 = vpack.c.bf16 %v3427, %v3426
        %v3441 = vpack.c.bf16 %v3425, %v3424
        %v3442 = vpack.c.bf16 %v3423, %v3422
        %v3443 = vpack.c.bf16 %v3421, %v3420
        %3444 = vst [vmem:[#allocation3 + $0x240] sm:$0xff] %v3436
        %3445 = vst [vmem:[#allocation3 + $0x248] sm:$0xff] %v3437
        %3446 = vst [vmem:[#allocation3 + $0x250] sm:$0xff] %v3438
        %3447 = vst [vmem:[#allocation3 + $0x258] sm:$0xff] %v3439
        %3448 = vst [vmem:[#allocation3 + $0x260] sm:$0xff] %v3440
        %3449 = vst [vmem:[#allocation3 + $0x268] sm:$0xff] %v3441
        %3450 = vst [vmem:[#allocation3 + $0x270] sm:$0xff] %v3442
        %3451 = vst [vmem:[#allocation3 + $0x278] sm:$0xff] %v3443
        %3452 = vrot.lane.b32.xlu0 %v2796, 10
        %v3453 = vpop.permute.xlu0 %3452
        %3454 = vrot.lane.b32.xlu0 %v2804, 10
        %v3455 = vpop.permute.xlu0 %3454
        %3456 = vrot.lane.b32.xlu0 %v2797, 10
        %v3457 = vpop.permute.xlu0 %3456
        %3458 = vrot.lane.b32.xlu0 %v2805, 10
        %v3459 = vpop.permute.xlu0 %3458
        %3460 = vrot.lane.b32.xlu0 %v2798, 10
        %v3461 = vpop.permute.xlu0 %3460
        %3462 = vrot.lane.b32.xlu0 %v2806, 10
        %v3463 = vpop.permute.xlu0 %3462
        %3464 = vrot.lane.b32.xlu0 %v2799, 10
        %v3465 = vpop.permute.xlu0 %3464
        %3466 = vrot.lane.b32.xlu0 %v2807, 10
        %v3467 = vpop.permute.xlu0 %3466
        %3468 = vrot.lane.b32.xlu0 %v2800, 10
        %v3469 = vpop.permute.xlu0 %3468
        %3470 = vrot.lane.b32.xlu0 %v2808, 10
        %v3471 = vpop.permute.xlu0 %3470
        %3472 = vrot.lane.b32.xlu0 %v2801, 10
        %v3473 = vpop.permute.xlu0 %3472
        %3474 = vrot.lane.b32.xlu0 %v2809, 10
        %v3475 = vpop.permute.xlu0 %3474
        %3476 = vrot.lane.b32.xlu0 %v2802, 10
        %v3477 = vpop.permute.xlu0 %3476
        %3478 = vrot.lane.b32.xlu0 %v2810, 10
        %v3479 = vpop.permute.xlu0 %3478
        %3480 = vrot.lane.b32.xlu0 %v2803, 10
        %v3481 = vpop.permute.xlu0 %3480
        %3482 = vrot.lane.b32.xlu0 %v2811, 10
        %v3483 = vpop.permute.xlu0 %3482
        %v3484 = vsel %vm968, %v3477, %v3481
        %v3485 = vsel %vm968, %v3479, %v3483
        %v3486 = vsel %vm968, %v3473, %v3477
        %v3487 = vsel %vm968, %v3475, %v3479
        %v3488 = vsel %vm968, %v3469, %v3473
        %v3489 = vsel %vm968, %v3471, %v3475
        %v3490 = vsel %vm968, %v3465, %v3469
        %v3491 = vsel %vm968, %v3467, %v3471
        %v3492 = vsel %vm968, %v3461, %v3465
        %v3493 = vsel %vm968, %v3463, %v3467
        %v3494 = vsel %vm968, %v3457, %v3461
        %v3495 = vsel %vm968, %v3459, %v3463
        %v3496 = vsel %vm968, %v3453, %v3457
        %v3497 = vsel %vm968, %v3455, %v3459
        %v3498 = vsel %vm968, %v3481, %v3453
        %v3499 = vsel %vm968, %v3483, %v3455
        %v3500 = vpack.c.bf16 %v3499, %v3498
        %v3501 = vpack.c.bf16 %v3497, %v3496
        %v3502 = vpack.c.bf16 %v3495, %v3494
        %v3503 = vpack.c.bf16 %v3493, %v3492
        %v3504 = vpack.c.bf16 %v3491, %v3490
        %v3505 = vpack.c.bf16 %v3489, %v3488
        %v3506 = vpack.c.bf16 %v3487, %v3486
        %v3507 = vpack.c.bf16 %v3485, %v3484
        %3508 = vst [vmem:[#allocation3 + $0x280] sm:$0xff] %v3500
        %3509 = vst [vmem:[#allocation3 + $0x288] sm:$0xff] %v3501
        %3510 = vst [vmem:[#allocation3 + $0x290] sm:$0xff] %v3502
        %3511 = vst [vmem:[#allocation3 + $0x298] sm:$0xff] %v3503
        %3512 = vst [vmem:[#allocation3 + $0x2a0] sm:$0xff] %v3504
        %3513 = vst [vmem:[#allocation3 + $0x2a8] sm:$0xff] %v3505
        %3514 = vst [vmem:[#allocation3 + $0x2b0] sm:$0xff] %v3506
        %3515 = vst [vmem:[#allocation3 + $0x2b8] sm:$0xff] %v3507
        %3516 = vrot.lane.b32.xlu0 %v2796, 9
        %v3517 = vpop.permute.xlu0 %3516
        %3518 = vrot.lane.b32.xlu0 %v2804, 9
        %v3519 = vpop.permute.xlu0 %3518
        %3520 = vrot.lane.b32.xlu0 %v2797, 9
        %v3521 = vpop.permute.xlu0 %3520
        %3522 = vrot.lane.b32.xlu0 %v2805, 9
        %v3523 = vpop.permute.xlu0 %3522
        %3524 = vrot.lane.b32.xlu0 %v2798, 9
        %v3525 = vpop.permute.xlu0 %3524
        %3526 = vrot.lane.b32.xlu0 %v2806, 9
        %v3527 = vpop.permute.xlu0 %3526
        %3528 = vrot.lane.b32.xlu0 %v2799, 9
        %v3529 = vpop.permute.xlu0 %3528
        %3530 = vrot.lane.b32.xlu0 %v2807, 9
        %v3531 = vpop.permute.xlu0 %3530
        %3532 = vrot.lane.b32.xlu0 %v2800, 9
        %v3533 = vpop.permute.xlu0 %3532
        %3534 = vrot.lane.b32.xlu0 %v2808, 9
        %v3535 = vpop.permute.xlu0 %3534
        %3536 = vrot.lane.b32.xlu0 %v2801, 9
        %v3537 = vpop.permute.xlu0 %3536
        %3538 = vrot.lane.b32.xlu0 %v2809, 9
        %v3539 = vpop.permute.xlu0 %3538
        %3540 = vrot.lane.b32.xlu0 %v2802, 9
        %v3541 = vpop.permute.xlu0 %3540
        %3542 = vrot.lane.b32.xlu0 %v2810, 9
        %v3543 = vpop.permute.xlu0 %3542
        %3544 = vrot.lane.b32.xlu0 %v2803, 9
        %v3545 = vpop.permute.xlu0 %3544
        %3546 = vrot.lane.b32.xlu0 %v2811, 9
        %v3547 = vpop.permute.xlu0 %3546
        %v3548 = vsel %vm1033, %v3541, %v3545
        %v3549 = vsel %vm1033, %v3543, %v3547
        %v3550 = vsel %vm1033, %v3537, %v3541
        %v3551 = vsel %vm1033, %v3539, %v3543
        %v3552 = vsel %vm1033, %v3533, %v3537
        %v3553 = vsel %vm1033, %v3535, %v3539
        %v3554 = vsel %vm1033, %v3529, %v3533
        %v3555 = vsel %vm1033, %v3531, %v3535
        %v3556 = vsel %vm1033, %v3525, %v3529
        %v3557 = vsel %vm1033, %v3527, %v3531
        %v3558 = vsel %vm1033, %v3521, %v3525
        %v3559 = vsel %vm1033, %v3523, %v3527
        %v3560 = vsel %vm1033, %v3517, %v3521
        %v3561 = vsel %vm1033, %v3519, %v3523
        %v3562 = vsel %vm1033, %v3545, %v3517
        %v3563 = vsel %vm1033, %v3547, %v3519
        %v3564 = vpack.c.bf16 %v3563, %v3562
        %v3565 = vpack.c.bf16 %v3561, %v3560
        %v3566 = vpack.c.bf16 %v3559, %v3558
        %v3567 = vpack.c.bf16 %v3557, %v3556
        %v3568 = vpack.c.bf16 %v3555, %v3554
        %v3569 = vpack.c.bf16 %v3553, %v3552
        %v3570 = vpack.c.bf16 %v3551, %v3550
        %v3571 = vpack.c.bf16 %v3549, %v3548
        %3572 = vst [vmem:[#allocation3 + $0x2c0] sm:$0xff] %v3564
        %3573 = vst [vmem:[#allocation3 + $0x2c8] sm:$0xff] %v3565
        %3574 = vst [vmem:[#allocation3 + $0x2d0] sm:$0xff] %v3566
        %3575 = vst [vmem:[#allocation3 + $0x2d8] sm:$0xff] %v3567
        %3576 = vst [vmem:[#allocation3 + $0x2e0] sm:$0xff] %v3568
        %3577 = vst [vmem:[#allocation3 + $0x2e8] sm:$0xff] %v3569
        %3578 = vst [vmem:[#allocation3 + $0x2f0] sm:$0xff] %v3570
        %3579 = vst [vmem:[#allocation3 + $0x2f8] sm:$0xff] %v3571
        %3580 = vrot.lane.b32.xlu0 %v2796, 1
        %v3581 = vpop.permute.xlu0 %3580
        %3582 = vrot.lane.b32.xlu0 %v2804, 1
        %v3583 = vpop.permute.xlu0 %3582
        %3584 = vrot.lane.b32.xlu0 %v2797, 1
        %v3585 = vpop.permute.xlu0 %3584
        %3586 = vrot.lane.b32.xlu0 %v2805, 1
        %v3587 = vpop.permute.xlu0 %3586
        %3588 = vrot.lane.b32.xlu0 %v2798, 1
        %v3589 = vpop.permute.xlu0 %3588
        %3590 = vrot.lane.b32.xlu0 %v2806, 1
        %v3591 = vpop.permute.xlu0 %3590
        %3592 = vrot.lane.b32.xlu0 %v2799, 1
        %v3593 = vpop.permute.xlu0 %3592
        %3594 = vrot.lane.b32.xlu0 %v2807, 1
        %v3595 = vpop.permute.xlu0 %3594
        %3596 = vrot.lane.b32.xlu0 %v2800, 1
        %v3597 = vpop.permute.xlu0 %3596
        %3598 = vrot.lane.b32.xlu0 %v2808, 1
        %v3599 = vpop.permute.xlu0 %3598
        %3600 = vrot.lane.b32.xlu0 %v2801, 1
        %v3601 = vpop.permute.xlu0 %3600
        %3602 = vrot.lane.b32.xlu0 %v2809, 1
        %v3603 = vpop.permute.xlu0 %3602
        %3604 = vrot.lane.b32.xlu0 %v2802, 1
        %v3605 = vpop.permute.xlu0 %3604
        %3606 = vrot.lane.b32.xlu0 %v2810, 1
        %v3607 = vpop.permute.xlu0 %3606
        %3608 = vrot.lane.b32.xlu0 %v2803, 1
        %v3609 = vpop.permute.xlu0 %3608
        %3610 = vrot.lane.b32.xlu0 %v2811, 1
        %v3611 = vpop.permute.xlu0 %3610
        %v3612 = vsel %vm1098, %v3605, %v3609
        %v3613 = vsel %vm1098, %v3607, %v3611
        %v3614 = vsel %vm1098, %v3601, %v3605
        %v3615 = vsel %vm1098, %v3603, %v3607
        %v3616 = vsel %vm1098, %v3597, %v3601
        %v3617 = vsel %vm1098, %v3599, %v3603
        %v3618 = vsel %vm1098, %v3593, %v3597
        %v3619 = vsel %vm1098, %v3595, %v3599
        %v3620 = vsel %vm1098, %v3589, %v3593
        %v3621 = vsel %vm1098, %v3591, %v3595
        %v3622 = vsel %vm1098, %v3585, %v3589
        %v3623 = vsel %vm1098, %v3587, %v3591
        %v3624 = vsel %vm1098, %v3581, %v3585
        %v3625 = vsel %vm1098, %v3583, %v3587
        %v3626 = vsel %vm1098, %v3609, %v3581
        %v3627 = vsel %vm1098, %v3611, %v3583
        %v3628 = vpack.c.bf16 %v3627, %v3626
        %v3629 = vpack.c.bf16 %v3625, %v3624
        %v3630 = vpack.c.bf16 %v3623, %v3622
        %v3631 = vpack.c.bf16 %v3621, %v3620
        %v3632 = vpack.c.bf16 %v3619, %v3618
        %v3633 = vpack.c.bf16 %v3617, %v3616
        %v3634 = vpack.c.bf16 %v3615, %v3614
        %v3635 = vpack.c.bf16 %v3613, %v3612
        %3636 = vst [vmem:[#allocation3 + $0x300] sm:$0xff] %v3628
        %3637 = vst [vmem:[#allocation3 + $0x308] sm:$0xff] %v3629
        %3638 = vst [vmem:[#allocation3 + $0x310] sm:$0xff] %v3630
        %3639 = vst [vmem:[#allocation3 + $0x318] sm:$0xff] %v3631
        %3640 = vst [vmem:[#allocation3 + $0x320] sm:$0xff] %v3632
        %3641 = vst [vmem:[#allocation3 + $0x328] sm:$0xff] %v3633
        %3642 = vst [vmem:[#allocation3 + $0x330] sm:$0xff] %v3634
        %3643 = vst [vmem:[#allocation3 + $0x338] sm:$0xff] %v3635
        %v3644 = vpack.c.bf16 %v2804, %v2796
        %v3645 = vpack.c.bf16 %v2805, %v2797
        %v3646 = vpack.c.bf16 %v2806, %v2798
        %v3647 = vpack.c.bf16 %v2807, %v2799
        %v3648 = vpack.c.bf16 %v2808, %v2800
        %v3649 = vpack.c.bf16 %v2809, %v2801
        %v3650 = vpack.c.bf16 %v2810, %v2802
        %v3651 = vpack.c.bf16 %v2811, %v2803
        %3652 = vst [vmem:[#allocation3 + $0x340] sm:$0xff] %v3644
        %3653 = vst [vmem:[#allocation3 + $0x348] sm:$0xff] %v3645
        %3654 = vst [vmem:[#allocation3 + $0x350] sm:$0xff] %v3646
        %3655 = vst [vmem:[#allocation3 + $0x358] sm:$0xff] %v3647
        %3656 = vst [vmem:[#allocation3 + $0x360] sm:$0xff] %v3648
        %3657 = vst [vmem:[#allocation3 + $0x368] sm:$0xff] %v3649
        %3658 = vst [vmem:[#allocation3 + $0x370] sm:$0xff] %v3650
        %3659 = vst [vmem:[#allocation3 + $0x378] sm:$0xff] %v3651
        %3660 = vrot.lane.b32.xlu0 %v2796, 127
        %v3661 = vpop.permute.xlu0 %3660
        %3662 = vrot.lane.b32.xlu0 %v2804, 127
        %v3663 = vpop.permute.xlu0 %3662
        %3664 = vrot.lane.b32.xlu0 %v2797, 127
        %v3665 = vpop.permute.xlu0 %3664
        %3666 = vrot.lane.b32.xlu0 %v2805, 127
        %v3667 = vpop.permute.xlu0 %3666
        %3668 = vrot.lane.b32.xlu0 %v2798, 127
        %v3669 = vpop.permute.xlu0 %3668
        %3670 = vrot.lane.b32.xlu0 %v2806, 127
        %v3671 = vpop.permute.xlu0 %3670
        %3672 = vrot.lane.b32.xlu0 %v2799, 127
        %v3673 = vpop.permute.xlu0 %3672
        %3674 = vrot.lane.b32.xlu0 %v2807, 127
        %v3675 = vpop.permute.xlu0 %3674
        %3676 = vrot.lane.b32.xlu0 %v2800, 127
        %v3677 = vpop.permute.xlu0 %3676
        %3678 = vrot.lane.b32.xlu0 %v2808, 127
        %v3679 = vpop.permute.xlu0 %3678
        %3680 = vrot.lane.b32.xlu0 %v2801, 127
        %v3681 = vpop.permute.xlu0 %3680
        %3682 = vrot.lane.b32.xlu0 %v2809, 127
        %v3683 = vpop.permute.xlu0 %3682
        %3684 = vrot.lane.b32.xlu0 %v2802, 127
        %v3685 = vpop.permute.xlu0 %3684
        %3686 = vrot.lane.b32.xlu0 %v2810, 127
        %v3687 = vpop.permute.xlu0 %3686
        %3688 = vrot.lane.b32.xlu0 %v2803, 127
        %v3689 = vpop.permute.xlu0 %3688
        %3690 = vrot.lane.b32.xlu0 %v2811, 127
        %v3691 = vpop.permute.xlu0 %3690
        %v3692 = vsel %vm1211, %v3685, %v3689
        %v3693 = vsel %vm1211, %v3687, %v3691
        %v3694 = vsel %vm1211, %v3681, %v3685
        %v3695 = vsel %vm1211, %v3683, %v3687
        %v3696 = vsel %vm1211, %v3677, %v3681
        %v3697 = vsel %vm1211, %v3679, %v3683
        %v3698 = vsel %vm1211, %v3673, %v3677
        %v3699 = vsel %vm1211, %v3675, %v3679
        %v3700 = vsel %vm1211, %v3669, %v3673
        %v3701 = vsel %vm1211, %v3671, %v3675
        %v3702 = vsel %vm1211, %v3665, %v3669
        %v3703 = vsel %vm1211, %v3667, %v3671
        %v3704 = vsel %vm1211, %v3661, %v3665
        %v3705 = vsel %vm1211, %v3663, %v3667
        %v3706 = vsel %vm1211, %v3689, %v3661
        %v3707 = vsel %vm1211, %v3691, %v3663
        %v3708 = vpack.c.bf16 %v3705, %v3704
        %v3709 = vpack.c.bf16 %v3703, %v3702
        %v3710 = vpack.c.bf16 %v3701, %v3700
        %v3711 = vpack.c.bf16 %v3699, %v3698
        %v3712 = vpack.c.bf16 %v3697, %v3696
        %v3713 = vpack.c.bf16 %v3695, %v3694
        %v3714 = vpack.c.bf16 %v3693, %v3692
        %v3715 = vpack.c.bf16 %v3707, %v3706
        %3716 = vst [vmem:[#allocation3 + $0x380] sm:$0xff] %v3708
        %3717 = vst [vmem:[#allocation3 + $0x388] sm:$0xff] %v3709
        %3718 = vst [vmem:[#allocation3 + $0x390] sm:$0xff] %v3710
        %3719 = vst [vmem:[#allocation3 + $0x398] sm:$0xff] %v3711
        %3720 = vst [vmem:[#allocation3 + $0x3a0] sm:$0xff] %v3712
        %3721 = vst [vmem:[#allocation3 + $0x3a8] sm:$0xff] %v3713
        %3722 = vst [vmem:[#allocation3 + $0x3b0] sm:$0xff] %v3714
        %3723 = vst [vmem:[#allocation3 + $0x3b8] sm:$0xff] %v3715
        %3724 = vrot.lane.b32.xlu0 %v2796, 119
        %v3725 = vpop.permute.xlu0 %3724
        %3726 = vrot.lane.b32.xlu0 %v2804, 119
        %v3727 = vpop.permute.xlu0 %3726
        %3728 = vrot.lane.b32.xlu0 %v2797, 119
        %v3729 = vpop.permute.xlu0 %3728
        %3730 = vrot.lane.b32.xlu0 %v2805, 119
        %v3731 = vpop.permute.xlu0 %3730
        %3732 = vrot.lane.b32.xlu0 %v2798, 119
        %v3733 = vpop.permute.xlu0 %3732
        %3734 = vrot.lane.b32.xlu0 %v2806, 119
        %v3735 = vpop.permute.xlu0 %3734
        %3736 = vrot.lane.b32.xlu0 %v2799, 119
        %v3737 = vpop.permute.xlu0 %3736
        %3738 = vrot.lane.b32.xlu0 %v2807, 119
        %v3739 = vpop.permute.xlu0 %3738
        %3740 = vrot.lane.b32.xlu0 %v2800, 119
        %v3741 = vpop.permute.xlu0 %3740
        %3742 = vrot.lane.b32.xlu0 %v2808, 119
        %v3743 = vpop.permute.xlu0 %3742
        %3744 = vrot.lane.b32.xlu0 %v2801, 119
        %v3745 = vpop.permute.xlu0 %3744
        %3746 = vrot.lane.b32.xlu0 %v2809, 119
        %v3747 = vpop.permute.xlu0 %3746
        %3748 = vrot.lane.b32.xlu0 %v2802, 119
        %v3749 = vpop.permute.xlu0 %3748
        %3750 = vrot.lane.b32.xlu0 %v2810, 119
        %v3751 = vpop.permute.xlu0 %3750
        %3752 = vrot.lane.b32.xlu0 %v2803, 119
        %v3753 = vpop.permute.xlu0 %3752
        %3754 = vrot.lane.b32.xlu0 %v2811, 119
        %v3755 = vpop.permute.xlu0 %3754
        %v3756 = vsel %vm1276, %v3749, %v3753
        %v3757 = vsel %vm1276, %v3751, %v3755
        %v3758 = vsel %vm1276, %v3745, %v3749
        %v3759 = vsel %vm1276, %v3747, %v3751
        %v3760 = vsel %vm1276, %v3741, %v3745
        %v3761 = vsel %vm1276, %v3743, %v3747
        %v3762 = vsel %vm1276, %v3737, %v3741
        %v3763 = vsel %vm1276, %v3739, %v3743
        %v3764 = vsel %vm1276, %v3733, %v3737
        %v3765 = vsel %vm1276, %v3735, %v3739
        %v3766 = vsel %vm1276, %v3729, %v3733
        %v3767 = vsel %vm1276, %v3731, %v3735
        %v3768 = vsel %vm1276, %v3725, %v3729
        %v3769 = vsel %vm1276, %v3727, %v3731
        %v3770 = vsel %vm1276, %v3753, %v3725
        %v3771 = vsel %vm1276, %v3755, %v3727
        %v3772 = vpack.c.bf16 %v3769, %v3768
        %v3773 = vpack.c.bf16 %v3767, %v3766
        %v3774 = vpack.c.bf16 %v3765, %v3764
        %v3775 = vpack.c.bf16 %v3763, %v3762
        %v3776 = vpack.c.bf16 %v3761, %v3760
        %v3777 = vpack.c.bf16 %v3759, %v3758
        %v3778 = vpack.c.bf16 %v3757, %v3756
        %v3779 = vpack.c.bf16 %v3771, %v3770
        %3780 = vst [vmem:[#allocation3 + $0x3c0] sm:$0xff] %v3772
        %3781 = vst [vmem:[#allocation3 + $0x3c8] sm:$0xff] %v3773
        %3782 = vst [vmem:[#allocation3 + $0x3d0] sm:$0xff] %v3774
        %3783 = vst [vmem:[#allocation3 + $0x3d8] sm:$0xff] %v3775
        %3784 = vst [vmem:[#allocation3 + $0x3e0] sm:$0xff] %v3776
        %3785 = vst [vmem:[#allocation3 + $0x3e8] sm:$0xff] %v3777
        %3786 = vst [vmem:[#allocation3 + $0x3f0] sm:$0xff] %v3778
        %3787 = vst [vmem:[#allocation3 + $0x3f8] sm:$0xff] %v3779
        %3788 = vrot.lane.b32.xlu0 %v2796, 118
        %v3789 = vpop.permute.xlu0 %3788
        %3790 = vrot.lane.b32.xlu0 %v2804, 118
        %v3791 = vpop.permute.xlu0 %3790
        %3792 = vrot.lane.b32.xlu0 %v2797, 118
        %v3793 = vpop.permute.xlu0 %3792
        %3794 = vrot.lane.b32.xlu0 %v2805, 118
        %v3795 = vpop.permute.xlu0 %3794
        %3796 = vrot.lane.b32.xlu0 %v2798, 118
        %v3797 = vpop.permute.xlu0 %3796
        %3798 = vrot.lane.b32.xlu0 %v2806, 118
        %v3799 = vpop.permute.xlu0 %3798
        %3800 = vrot.lane.b32.xlu0 %v2799, 118
        %v3801 = vpop.permute.xlu0 %3800
        %3802 = vrot.lane.b32.xlu0 %v2807, 118
        %v3803 = vpop.permute.xlu0 %3802
        %3804 = vrot.lane.b32.xlu0 %v2800, 118
        %v3805 = vpop.permute.xlu0 %3804
        %3806 = vrot.lane.b32.xlu0 %v2808, 118
        %v3807 = vpop.permute.xlu0 %3806
        %3808 = vrot.lane.b32.xlu0 %v2801, 118
        %v3809 = vpop.permute.xlu0 %3808
        %3810 = vrot.lane.b32.xlu0 %v2809, 118
        %v3811 = vpop.permute.xlu0 %3810
        %3812 = vrot.lane.b32.xlu0 %v2802, 118
        %v3813 = vpop.permute.xlu0 %3812
        %3814 = vrot.lane.b32.xlu0 %v2810, 118
        %v3815 = vpop.permute.xlu0 %3814
        %3816 = vrot.lane.b32.xlu0 %v2803, 118
        %v3817 = vpop.permute.xlu0 %3816
        %3818 = vrot.lane.b32.xlu0 %v2811, 118
        %v3819 = vpop.permute.xlu0 %3818
        %v3820 = vsel %vm1341, %v3813, %v3817
        %v3821 = vsel %vm1341, %v3815, %v3819
        %v3822 = vsel %vm1341, %v3809, %v3813
        %v3823 = vsel %vm1341, %v3811, %v3815
        %v3824 = vsel %vm1341, %v3805, %v3809
        %v3825 = vsel %vm1341, %v3807, %v3811
        %v3826 = vsel %vm1341, %v3801, %v3805
        %v3827 = vsel %vm1341, %v3803, %v3807
        %v3828 = vsel %vm1341, %v3797, %v3801
        %v3829 = vsel %vm1341, %v3799, %v3803
        %v3830 = vsel %vm1341, %v3793, %v3797
        %v3831 = vsel %vm1341, %v3795, %v3799
        %v3832 = vsel %vm1341, %v3789, %v3793
        %v3833 = vsel %vm1341, %v3791, %v3795
        %v3834 = vsel %vm1341, %v3817, %v3789
        %v3835 = vsel %vm1341, %v3819, %v3791
        %v3836 = vpack.c.bf16 %v3833, %v3832
        %v3837 = vpack.c.bf16 %v3831, %v3830
        %v3838 = vpack.c.bf16 %v3829, %v3828
        %v3839 = vpack.c.bf16 %v3827, %v3826
        %v3840 = vpack.c.bf16 %v3825, %v3824
        %v3841 = vpack.c.bf16 %v3823, %v3822
        %v3842 = vpack.c.bf16 %v3821, %v3820
        %v3843 = vpack.c.bf16 %v3835, %v3834
        %3844 = vst [vmem:[#allocation3 + $0x400] sm:$0xff] %v3836
        %3845 = vst [vmem:[#allocation3 + $0x408] sm:$0xff] %v3837
        %3846 = vst [vmem:[#allocation3 + $0x410] sm:$0xff] %v3838
        %3847 = vst [vmem:[#allocation3 + $0x418] sm:$0xff] %v3839
        %3848 = vst [vmem:[#allocation3 + $0x420] sm:$0xff] %v3840
        %3849 = vst [vmem:[#allocation3 + $0x428] sm:$0xff] %v3841
        %3850 = vst [vmem:[#allocation3 + $0x430] sm:$0xff] %v3842
        %3851 = vst [vmem:[#allocation3 + $0x438] sm:$0xff] %v3843
        %3852 = vrot.lane.b32.xlu0 %v2796, 117
        %v3853 = vpop.permute.xlu0 %3852
        %3854 = vrot.lane.b32.xlu0 %v2804, 117
        %v3855 = vpop.permute.xlu0 %3854
        %3856 = vrot.lane.b32.xlu0 %v2797, 117
        %v3857 = vpop.permute.xlu0 %3856
        %3858 = vrot.lane.b32.xlu0 %v2805, 117
        %v3859 = vpop.permute.xlu0 %3858
        %3860 = vrot.lane.b32.xlu0 %v2798, 117
        %v3861 = vpop.permute.xlu0 %3860
        %3862 = vrot.lane.b32.xlu0 %v2806, 117
        %v3863 = vpop.permute.xlu0 %3862
        %3864 = vrot.lane.b32.xlu0 %v2799, 117
        %v3865 = vpop.permute.xlu0 %3864
        %3866 = vrot.lane.b32.xlu0 %v2807, 117
        %v3867 = vpop.permute.xlu0 %3866
        %3868 = vrot.lane.b32.xlu0 %v2800, 117
        %v3869 = vpop.permute.xlu0 %3868
        %3870 = vrot.lane.b32.xlu0 %v2808, 117
        %v3871 = vpop.permute.xlu0 %3870
        %3872 = vrot.lane.b32.xlu0 %v2801, 117
        %v3873 = vpop.permute.xlu0 %3872
        %3874 = vrot.lane.b32.xlu0 %v2809, 117
        %v3875 = vpop.permute.xlu0 %3874
        %3876 = vrot.lane.b32.xlu0 %v2802, 117
        %v3877 = vpop.permute.xlu0 %3876
        %3878 = vrot.lane.b32.xlu0 %v2810, 117
        %v3879 = vpop.permute.xlu0 %3878
        %3880 = vrot.lane.b32.xlu0 %v2803, 117
        %v3881 = vpop.permute.xlu0 %3880
        %3882 = vrot.lane.b32.xlu0 %v2811, 117
        %v3883 = vpop.permute.xlu0 %3882
        %v3884 = vsel %vm1406, %v3877, %v3881
        %v3885 = vsel %vm1406, %v3879, %v3883
        %v3886 = vsel %vm1406, %v3873, %v3877
        %v3887 = vsel %vm1406, %v3875, %v3879
        %v3888 = vsel %vm1406, %v3869, %v3873
        %v3889 = vsel %vm1406, %v3871, %v3875
        %v3890 = vsel %vm1406, %v3865, %v3869
        %v3891 = vsel %vm1406, %v3867, %v3871
        %v3892 = vsel %vm1406, %v3861, %v3865
        %v3893 = vsel %vm1406, %v3863, %v3867
        %v3894 = vsel %vm1406, %v3857, %v3861
        %v3895 = vsel %vm1406, %v3859, %v3863
        %v3896 = vsel %vm1406, %v3853, %v3857
        %v3897 = vsel %vm1406, %v3855, %v3859
        %v3898 = vsel %vm1406, %v3881, %v3853
        %v3899 = vsel %vm1406, %v3883, %v3855
        %v3900 = vpack.c.bf16 %v3897, %v3896
        %v3901 = vpack.c.bf16 %v3895, %v3894
        %v3902 = vpack.c.bf16 %v3893, %v3892
        %v3903 = vpack.c.bf16 %v3891, %v3890
        %v3904 = vpack.c.bf16 %v3889, %v3888
        %v3905 = vpack.c.bf16 %v3887, %v3886
        %v3906 = vpack.c.bf16 %v3885, %v3884
        %v3907 = vpack.c.bf16 %v3899, %v3898
        %3908 = vst [vmem:[#allocation3 + $0x440] sm:$0xff] %v3900
        %3909 = vst [vmem:[#allocation3 + $0x448] sm:$0xff] %v3901
        %3910 = vst [vmem:[#allocation3 + $0x450] sm:$0xff] %v3902
        %3911 = vst [vmem:[#allocation3 + $0x458] sm:$0xff] %v3903
        %3912 = vst [vmem:[#allocation3 + $0x460] sm:$0xff] %v3904
        %3913 = vst [vmem:[#allocation3 + $0x468] sm:$0xff] %v3905
        %3914 = vst [vmem:[#allocation3 + $0x470] sm:$0xff] %v3906
        %3915 = vst [vmem:[#allocation3 + $0x478] sm:$0xff] %v3907
        %3916 = vrot.lane.b32.xlu0 %v2796, 39
        %v3917 = vpop.permute.xlu0 %3916
        %3918 = vrot.lane.b32.xlu0 %v2804, 39
        %v3919 = vpop.permute.xlu0 %3918
        %3920 = vrot.lane.b32.xlu0 %v2797, 39
        %v3921 = vpop.permute.xlu0 %3920
        %3922 = vrot.lane.b32.xlu0 %v2805, 39
        %v3923 = vpop.permute.xlu0 %3922
        %3924 = vrot.lane.b32.xlu0 %v2798, 39
        %v3925 = vpop.permute.xlu0 %3924
        %3926 = vrot.lane.b32.xlu0 %v2806, 39
        %v3927 = vpop.permute.xlu0 %3926
        %3928 = vrot.lane.b32.xlu0 %v2799, 39
        %v3929 = vpop.permute.xlu0 %3928
        %3930 = vrot.lane.b32.xlu0 %v2807, 39
        %v3931 = vpop.permute.xlu0 %3930
        %3932 = vrot.lane.b32.xlu0 %v2800, 39
        %v3933 = vpop.permute.xlu0 %3932
        %3934 = vrot.lane.b32.xlu0 %v2808, 39
        %v3935 = vpop.permute.xlu0 %3934
        %3936 = vrot.lane.b32.xlu0 %v2801, 39
        %v3937 = vpop.permute.xlu0 %3936
        %3938 = vrot.lane.b32.xlu0 %v2809, 39
        %v3939 = vpop.permute.xlu0 %3938
        %3940 = vrot.lane.b32.xlu0 %v2802, 39
        %v3941 = vpop.permute.xlu0 %3940
        %3942 = vrot.lane.b32.xlu0 %v2810, 39
        %v3943 = vpop.permute.xlu0 %3942
        %3944 = vrot.lane.b32.xlu0 %v2803, 39
        %v3945 = vpop.permute.xlu0 %3944
        %3946 = vrot.lane.b32.xlu0 %v2811, 39
        %v3947 = vpop.permute.xlu0 %3946
        %v3948 = vsel %vm1471, %v3941, %v3945
        %v3949 = vsel %vm1471, %v3943, %v3947
        %v3950 = vsel %vm1471, %v3937, %v3941
        %v3951 = vsel %vm1471, %v3939, %v3943
        %v3952 = vsel %vm1471, %v3933, %v3937
        %v3953 = vsel %vm1471, %v3935, %v3939
        %v3954 = vsel %vm1471, %v3929, %v3933
        %v3955 = vsel %vm1471, %v3931, %v3935
        %v3956 = vsel %vm1471, %v3925, %v3929
        %v3957 = vsel %vm1471, %v3927, %v3931
        %v3958 = vsel %vm1471, %v3921, %v3925
        %v3959 = vsel %vm1471, %v3923, %v3927
        %v3960 = vsel %vm1471, %v3917, %v3921
        %v3961 = vsel %vm1471, %v3919, %v3923
        %v3962 = vsel %vm1471, %v3945, %v3917
        %v3963 = vsel %vm1471, %v3947, %v3919
        %v3964 = vpack.c.bf16 %v3961, %v3960
        %v3965 = vpack.c.bf16 %v3959, %v3958
        %v3966 = vpack.c.bf16 %v3957, %v3956
        %v3967 = vpack.c.bf16 %v3955, %v3954
        %v3968 = vpack.c.bf16 %v3953, %v3952
        %v3969 = vpack.c.bf16 %v3951, %v3950
        %v3970 = vpack.c.bf16 %v3949, %v3948
        %v3971 = vpack.c.bf16 %v3963, %v3962
        %3972 = vst [vmem:[#allocation3 + $0x480] sm:$0xff] %v3964
        %3973 = vst [vmem:[#allocation3 + $0x488] sm:$0xff] %v3965
        %3974 = vst [vmem:[#allocation3 + $0x490] sm:$0xff] %v3966
        %3975 = vst [vmem:[#allocation3 + $0x498] sm:$0xff] %v3967
        %3976 = vst [vmem:[#allocation3 + $0x4a0] sm:$0xff] %v3968
        %3977 = vst [vmem:[#allocation3 + $0x4a8] sm:$0xff] %v3969
        %3978 = vst [vmem:[#allocation3 + $0x4b0] sm:$0xff] %v3970
        %3979 = vst [vmem:[#allocation3 + $0x4b8] sm:$0xff] %v3971
        %3980 = vrot.lane.b32.xlu0 %v2796, 38
        %v3981 = vpop.permute.xlu0 %3980
        %3982 = vrot.lane.b32.xlu0 %v2804, 38
        %v3983 = vpop.permute.xlu0 %3982
        %3984 = vrot.lane.b32.xlu0 %v2797, 38
        %v3985 = vpop.permute.xlu0 %3984
        %3986 = vrot.lane.b32.xlu0 %v2805, 38
        %v3987 = vpop.permute.xlu0 %3986
        %3988 = vrot.lane.b32.xlu0 %v2798, 38
        %v3989 = vpop.permute.xlu0 %3988
        %3990 = vrot.lane.b32.xlu0 %v2806, 38
        %v3991 = vpop.permute.xlu0 %3990
        %3992 = vrot.lane.b32.xlu0 %v2799, 38
        %v3993 = vpop.permute.xlu0 %3992
        %3994 = vrot.lane.b32.xlu0 %v2807, 38
        %v3995 = vpop.permute.xlu0 %3994
        %3996 = vrot.lane.b32.xlu0 %v2800, 38
        %v3997 = vpop.permute.xlu0 %3996
        %3998 = vrot.lane.b32.xlu0 %v2808, 38
        %v3999 = vpop.permute.xlu0 %3998
        %4000 = vrot.lane.b32.xlu0 %v2801, 38
        %v4001 = vpop.permute.xlu0 %4000
        %4002 = vrot.lane.b32.xlu0 %v2809, 38
        %v4003 = vpop.permute.xlu0 %4002
        %4004 = vrot.lane.b32.xlu0 %v2802, 38
        %v4005 = vpop.permute.xlu0 %4004
        %4006 = vrot.lane.b32.xlu0 %v2810, 38
        %v4007 = vpop.permute.xlu0 %4006
        %4008 = vrot.lane.b32.xlu0 %v2803, 38
        %v4009 = vpop.permute.xlu0 %4008
        %4010 = vrot.lane.b32.xlu0 %v2811, 38
        %v4011 = vpop.permute.xlu0 %4010
        %v4012 = vsel %vm1536, %v4005, %v4009
        %v4013 = vsel %vm1536, %v4007, %v4011
        %v4014 = vsel %vm1536, %v4001, %v4005
        %v4015 = vsel %vm1536, %v4003, %v4007
        %v4016 = vsel %vm1536, %v3997, %v4001
        %v4017 = vsel %vm1536, %v3999, %v4003
        %v4018 = vsel %vm1536, %v3993, %v3997
        %v4019 = vsel %vm1536, %v3995, %v3999
        %v4020 = vsel %vm1536, %v3989, %v3993
        %v4021 = vsel %vm1536, %v3991, %v3995
        %v4022 = vsel %vm1536, %v3985, %v3989
        %v4023 = vsel %vm1536, %v3987, %v3991
        %v4024 = vsel %vm1536, %v3981, %v3985
        %v4025 = vsel %vm1536, %v3983, %v3987
        %v4026 = vsel %vm1536, %v4009, %v3981
        %v4027 = vsel %vm1536, %v4011, %v3983
        %v4028 = vpack.c.bf16 %v4025, %v4024
        %v4029 = vpack.c.bf16 %v4023, %v4022
        %v4030 = vpack.c.bf16 %v4021, %v4020
        %v4031 = vpack.c.bf16 %v4019, %v4018
        %v4032 = vpack.c.bf16 %v4017, %v4016
        %v4033 = vpack.c.bf16 %v4015, %v4014
        %v4034 = vpack.c.bf16 %v4013, %v4012
        %v4035 = vpack.c.bf16 %v4027, %v4026
        %4036 = vst [vmem:[#allocation3 + $0x4c0] sm:$0xff] %v4028
        %4037 = vst [vmem:[#allocation3 + $0x4c8] sm:$0xff] %v4029
        %4038 = vst [vmem:[#allocation3 + $0x4d0] sm:$0xff] %v4030
        %4039 = vst [vmem:[#allocation3 + $0x4d8] sm:$0xff] %v4031
        %4040 = vst [vmem:[#allocation3 + $0x4e0] sm:$0xff] %v4032
        %4041 = vst [vmem:[#allocation3 + $0x4e8] sm:$0xff] %v4033
        %4042 = vst [vmem:[#allocation3 + $0x4f0] sm:$0xff] %v4034
        %4043 = vst [vmem:[#allocation3 + $0x4f8] sm:$0xff] %v4035
        %4044 = vrot.lane.b32.xlu0 %v2796, 37
        %v4045 = vpop.permute.xlu0 %4044
        %4046 = vrot.lane.b32.xlu0 %v2804, 37
        %v4047 = vpop.permute.xlu0 %4046
        %4048 = vrot.lane.b32.xlu0 %v2797, 37
        %v4049 = vpop.permute.xlu0 %4048
        %4050 = vrot.lane.b32.xlu0 %v2805, 37
        %v4051 = vpop.permute.xlu0 %4050
        %4052 = vrot.lane.b32.xlu0 %v2798, 37
        %v4053 = vpop.permute.xlu0 %4052
        %4054 = vrot.lane.b32.xlu0 %v2806, 37
        %v4055 = vpop.permute.xlu0 %4054
        %4056 = vrot.lane.b32.xlu0 %v2799, 37
        %v4057 = vpop.permute.xlu0 %4056
        %4058 = vrot.lane.b32.xlu0 %v2807, 37
        %v4059 = vpop.permute.xlu0 %4058
        %4060 = vrot.lane.b32.xlu0 %v2800, 37
        %v4061 = vpop.permute.xlu0 %4060
        %4062 = vrot.lane.b32.xlu0 %v2808, 37
        %v4063 = vpop.permute.xlu0 %4062
        %4064 = vrot.lane.b32.xlu0 %v2801, 37
        %v4065 = vpop.permute.xlu0 %4064
        %4066 = vrot.lane.b32.xlu0 %v2809, 37
        %v4067 = vpop.permute.xlu0 %4066
        %4068 = vrot.lane.b32.xlu0 %v2802, 37
        %v4069 = vpop.permute.xlu0 %4068
        %4070 = vrot.lane.b32.xlu0 %v2810, 37
        %v4071 = vpop.permute.xlu0 %4070
        %4072 = vrot.lane.b32.xlu0 %v2803, 37
        %v4073 = vpop.permute.xlu0 %4072
        %4074 = vrot.lane.b32.xlu0 %v2811, 37
        %v4075 = vpop.permute.xlu0 %4074
        %v4076 = vsel %vm1601, %v4069, %v4073
        %v4077 = vsel %vm1601, %v4071, %v4075
        %v4078 = vsel %vm1601, %v4065, %v4069
        %v4079 = vsel %vm1601, %v4067, %v4071
        %v4080 = vsel %vm1601, %v4061, %v4065
        %v4081 = vsel %vm1601, %v4063, %v4067
        %v4082 = vsel %vm1601, %v4057, %v4061
        %v4083 = vsel %vm1601, %v4059, %v4063
        %v4084 = vsel %vm1601, %v4053, %v4057
        %v4085 = vsel %vm1601, %v4055, %v4059
        %v4086 = vsel %vm1601, %v4049, %v4053
        %v4087 = vsel %vm1601, %v4051, %v4055
        %v4088 = vsel %vm1601, %v4045, %v4049
        %v4089 = vsel %vm1601, %v4047, %v4051
        %v4090 = vsel %vm1601, %v4073, %v4045
        %v4091 = vsel %vm1601, %v4075, %v4047
        %v4092 = vpack.c.bf16 %v4089, %v4088
        %v4093 = vpack.c.bf16 %v4087, %v4086
        %v4094 = vpack.c.bf16 %v4085, %v4084
        %v4095 = vpack.c.bf16 %v4083, %v4082
        %v4096 = vpack.c.bf16 %v4081, %v4080
        %v4097 = vpack.c.bf16 %v4079, %v4078
        %v4098 = vpack.c.bf16 %v4077, %v4076
        %v4099 = vpack.c.bf16 %v4091, %v4090
        %4100 = vst [vmem:[#allocation3 + $0x500] sm:$0xff] %v4092
        %4101 = vst [vmem:[#allocation3 + $0x508] sm:$0xff] %v4093
        %4102 = vst [vmem:[#allocation3 + $0x510] sm:$0xff] %v4094
        %4103 = vst [vmem:[#allocation3 + $0x518] sm:$0xff] %v4095
        %4104 = vst [vmem:[#allocation3 + $0x520] sm:$0xff] %v4096
        %4105 = vst [vmem:[#allocation3 + $0x528] sm:$0xff] %v4097
        %4106 = vst [vmem:[#allocation3 + $0x530] sm:$0xff] %v4098
        %4107 = vst [vmem:[#allocation3 + $0x538] sm:$0xff] %v4099
        %4108 = vrot.lane.b32.xlu0 %v2796, 29
        %v4109 = vpop.permute.xlu0 %4108
        %4110 = vrot.lane.b32.xlu0 %v2804, 29
        %v4111 = vpop.permute.xlu0 %4110
        %4112 = vrot.lane.b32.xlu0 %v2797, 29
        %v4113 = vpop.permute.xlu0 %4112
        %4114 = vrot.lane.b32.xlu0 %v2805, 29
        %v4115 = vpop.permute.xlu0 %4114
        %4116 = vrot.lane.b32.xlu0 %v2798, 29
        %v4117 = vpop.permute.xlu0 %4116
        %4118 = vrot.lane.b32.xlu0 %v2806, 29
        %v4119 = vpop.permute.xlu0 %4118
        %4120 = vrot.lane.b32.xlu0 %v2799, 29
        %v4121 = vpop.permute.xlu0 %4120
        %4122 = vrot.lane.b32.xlu0 %v2807, 29
        %v4123 = vpop.permute.xlu0 %4122
        %4124 = vrot.lane.b32.xlu0 %v2800, 29
        %v4125 = vpop.permute.xlu0 %4124
        %4126 = vrot.lane.b32.xlu0 %v2808, 29
        %v4127 = vpop.permute.xlu0 %4126
        %4128 = vrot.lane.b32.xlu0 %v2801, 29
        %v4129 = vpop.permute.xlu0 %4128
        %4130 = vrot.lane.b32.xlu0 %v2809, 29
        %v4131 = vpop.permute.xlu0 %4130
        %4132 = vrot.lane.b32.xlu0 %v2802, 29
        %v4133 = vpop.permute.xlu0 %4132
        %4134 = vrot.lane.b32.xlu0 %v2810, 29
        %v4135 = vpop.permute.xlu0 %4134
        %4136 = vrot.lane.b32.xlu0 %v2803, 29
        %v4137 = vpop.permute.xlu0 %4136
        %4138 = vrot.lane.b32.xlu0 %v2811, 29
        %v4139 = vpop.permute.xlu0 %4138
        %v4140 = vsel %vm1666, %v4133, %v4137
        %v4141 = vsel %vm1666, %v4135, %v4139
        %v4142 = vsel %vm1666, %v4129, %v4133
        %v4143 = vsel %vm1666, %v4131, %v4135
        %v4144 = vsel %vm1666, %v4125, %v4129
        %v4145 = vsel %vm1666, %v4127, %v4131
        %v4146 = vsel %vm1666, %v4121, %v4125
        %v4147 = vsel %vm1666, %v4123, %v4127
        %v4148 = vsel %vm1666, %v4117, %v4121
        %v4149 = vsel %vm1666, %v4119, %v4123
        %v4150 = vsel %vm1666, %v4113, %v4117
        %v4151 = vsel %vm1666, %v4115, %v4119
        %v4152 = vsel %vm1666, %v4109, %v4113
        %v4153 = vsel %vm1666, %v4111, %v4115
        %v4154 = vsel %vm1666, %v4137, %v4109
        %v4155 = vsel %vm1666, %v4139, %v4111
        %v4156 = vpack.c.bf16 %v4153, %v4152
        %v4157 = vpack.c.bf16 %v4151, %v4150
        %v4158 = vpack.c.bf16 %v4149, %v4148
        %v4159 = vpack.c.bf16 %v4147, %v4146
        %v4160 = vpack.c.bf16 %v4145, %v4144
        %v4161 = vpack.c.bf16 %v4143, %v4142
        %v4162 = vpack.c.bf16 %v4141, %v4140
        %v4163 = vpack.c.bf16 %v4155, %v4154
        %4164 = vst [vmem:[#allocation3 + $0x540] sm:$0xff] %v4156
        %4165 = vst [vmem:[#allocation3 + $0x548] sm:$0xff] %v4157
        %4166 = vst [vmem:[#allocation3 + $0x550] sm:$0xff] %v4158
        %4167 = vst [vmem:[#allocation3 + $0x558] sm:$0xff] %v4159
        %4168 = vst [vmem:[#allocation3 + $0x560] sm:$0xff] %v4160
        %4169 = vst [vmem:[#allocation3 + $0x568] sm:$0xff] %v4161
        %4170 = vst [vmem:[#allocation3 + $0x570] sm:$0xff] %v4162
        %4171 = vst [vmem:[#allocation3 + $0x578] sm:$0xff] %v4163
        %4172 = vrot.lane.b32.xlu0 %v2796, 28
        %v4173 = vpop.permute.xlu0 %4172
        %4174 = vrot.lane.b32.xlu0 %v2804, 28
        %v4175 = vpop.permute.xlu0 %4174
        %4176 = vrot.lane.b32.xlu0 %v2797, 28
        %v4177 = vpop.permute.xlu0 %4176
        %4178 = vrot.lane.b32.xlu0 %v2805, 28
        %v4179 = vpop.permute.xlu0 %4178
        %4180 = vrot.lane.b32.xlu0 %v2798, 28
        %v4181 = vpop.permute.xlu0 %4180
        %4182 = vrot.lane.b32.xlu0 %v2806, 28
        %v4183 = vpop.permute.xlu0 %4182
        %4184 = vrot.lane.b32.xlu0 %v2799, 28
        %v4185 = vpop.permute.xlu0 %4184
        %4186 = vrot.lane.b32.xlu0 %v2807, 28
        %v4187 = vpop.permute.xlu0 %4186
        %4188 = vrot.lane.b32.xlu0 %v2800, 28
        %v4189 = vpop.permute.xlu0 %4188
        %4190 = vrot.lane.b32.xlu0 %v2808, 28
        %v4191 = vpop.permute.xlu0 %4190
        %4192 = vrot.lane.b32.xlu0 %v2801, 28
        %v4193 = vpop.permute.xlu0 %4192
        %4194 = vrot.lane.b32.xlu0 %v2809, 28
        %v4195 = vpop.permute.xlu0 %4194
        %4196 = vrot.lane.b32.xlu0 %v2802, 28
        %v4197 = vpop.permute.xlu0 %4196
        %4198 = vrot.lane.b32.xlu0 %v2810, 28
        %v4199 = vpop.permute.xlu0 %4198
        %4200 = vrot.lane.b32.xlu0 %v2803, 28
        %v4201 = vpop.permute.xlu0 %4200
        %4202 = vrot.lane.b32.xlu0 %v2811, 28
        %v4203 = vpop.permute.xlu0 %4202
        %v4204 = vsel %vm1731, %v4197, %v4201
        %v4205 = vsel %vm1731, %v4199, %v4203
        %v4206 = vsel %vm1731, %v4193, %v4197
        %v4207 = vsel %vm1731, %v4195, %v4199
        %v4208 = vsel %vm1731, %v4189, %v4193
        %v4209 = vsel %vm1731, %v4191, %v4195
        %v4210 = vsel %vm1731, %v4185, %v4189
        %v4211 = vsel %vm1731, %v4187, %v4191
        %v4212 = vsel %vm1731, %v4181, %v4185
        %v4213 = vsel %vm1731, %v4183, %v4187
        %v4214 = vsel %vm1731, %v4177, %v4181
        %v4215 = vsel %vm1731, %v4179, %v4183
        %v4216 = vsel %vm1731, %v4173, %v4177
        %v4217 = vsel %vm1731, %v4175, %v4179
        %v4218 = vsel %vm1731, %v4201, %v4173
        %v4219 = vsel %vm1731, %v4203, %v4175
        %v4220 = vpack.c.bf16 %v4217, %v4216
        %v4221 = vpack.c.bf16 %v4215, %v4214
        %v4222 = vpack.c.bf16 %v4213, %v4212
        %v4223 = vpack.c.bf16 %v4211, %v4210
        %v4224 = vpack.c.bf16 %v4209, %v4208
        %v4225 = vpack.c.bf16 %v4207, %v4206
        %v4226 = vpack.c.bf16 %v4205, %v4204
        %v4227 = vpack.c.bf16 %v4219, %v4218
        %4228 = vst [vmem:[#allocation3 + $0x580] sm:$0xff] %v4220
        %4229 = vst [vmem:[#allocation3 + $0x588] sm:$0xff] %v4221
        %4230 = vst [vmem:[#allocation3 + $0x590] sm:$0xff] %v4222
        %4231 = vst [vmem:[#allocation3 + $0x598] sm:$0xff] %v4223
        %4232 = vst [vmem:[#allocation3 + $0x5a0] sm:$0xff] %v4224
        %4233 = vst [vmem:[#allocation3 + $0x5a8] sm:$0xff] %v4225
        %4234 = vst [vmem:[#allocation3 + $0x5b0] sm:$0xff] %v4226
        %4235 = vst [vmem:[#allocation3 + $0x5b8] sm:$0xff] %v4227
        %4236 = vrot.lane.b32.xlu0 %v2796, 27
        %v4237 = vpop.permute.xlu0 %4236
        %4238 = vrot.lane.b32.xlu0 %v2804, 27
        %v4239 = vpop.permute.xlu0 %4238
        %4240 = vrot.lane.b32.xlu0 %v2797, 27
        %v4241 = vpop.permute.xlu0 %4240
        %4242 = vrot.lane.b32.xlu0 %v2805, 27
        %v4243 = vpop.permute.xlu0 %4242
        %4244 = vrot.lane.b32.xlu0 %v2798, 27
        %v4245 = vpop.permute.xlu0 %4244
        %4246 = vrot.lane.b32.xlu0 %v2806, 27
        %v4247 = vpop.permute.xlu0 %4246
        %4248 = vrot.lane.b32.xlu0 %v2799, 27
        %v4249 = vpop.permute.xlu0 %4248
        %4250 = vrot.lane.b32.xlu0 %v2807, 27
        %v4251 = vpop.permute.xlu0 %4250
        %4252 = vrot.lane.b32.xlu0 %v2800, 27
        %v4253 = vpop.permute.xlu0 %4252
        %4254 = vrot.lane.b32.xlu0 %v2808, 27
        %v4255 = vpop.permute.xlu0 %4254
        %4256 = vrot.lane.b32.xlu0 %v2801, 27
        %v4257 = vpop.permute.xlu0 %4256
        %4258 = vrot.lane.b32.xlu0 %v2809, 27
        %v4259 = vpop.permute.xlu0 %4258
        %4260 = vrot.lane.b32.xlu0 %v2802, 27
        %v4261 = vpop.permute.xlu0 %4260
        %4262 = vrot.lane.b32.xlu0 %v2810, 27
        %v4263 = vpop.permute.xlu0 %4262
        %4264 = vrot.lane.b32.xlu0 %v2803, 27
        %v4265 = vpop.permute.xlu0 %4264
        %4266 = vrot.lane.b32.xlu0 %v2811, 27
        %v4267 = vpop.permute.xlu0 %4266
        %v4268 = vsel %vm1796, %v4261, %v4265
        %v4269 = vsel %vm1796, %v4263, %v4267
        %v4270 = vsel %vm1796, %v4257, %v4261
        %v4271 = vsel %vm1796, %v4259, %v4263
        %v4272 = vsel %vm1796, %v4253, %v4257
        %v4273 = vsel %vm1796, %v4255, %v4259
        %v4274 = vsel %vm1796, %v4249, %v4253
        %v4275 = vsel %vm1796, %v4251, %v4255
        %v4276 = vsel %vm1796, %v4245, %v4249
        %v4277 = vsel %vm1796, %v4247, %v4251
        %v4278 = vsel %vm1796, %v4241, %v4245
        %v4279 = vsel %vm1796, %v4243, %v4247
        %v4280 = vsel %vm1796, %v4237, %v4241
        %v4281 = vsel %vm1796, %v4239, %v4243
        %v4282 = vsel %vm1796, %v4265, %v4237
        %v4283 = vsel %vm1796, %v4267, %v4239
        %v4284 = vpack.c.bf16 %v4281, %v4280
        %v4285 = vpack.c.bf16 %v4279, %v4278
        %v4286 = vpack.c.bf16 %v4277, %v4276
        %v4287 = vpack.c.bf16 %v4275, %v4274
        %v4288 = vpack.c.bf16 %v4273, %v4272
        %v4289 = vpack.c.bf16 %v4271, %v4270
        %v4290 = vpack.c.bf16 %v4269, %v4268
        %v4291 = vpack.c.bf16 %v4283, %v4282
        %4292 = vst [vmem:[#allocation3 + $0x5c0] sm:$0xff] %v4284
        %4293 = vst [vmem:[#allocation3 + $0x5c8] sm:$0xff] %v4285
        %4294 = vst [vmem:[#allocation3 + $0x5d0] sm:$0xff] %v4286
        %4295 = vst [vmem:[#allocation3 + $0x5d8] sm:$0xff] %v4287
        %4296 = vst [vmem:[#allocation3 + $0x5e0] sm:$0xff] %v4288
        %4297 = vst [vmem:[#allocation3 + $0x5e8] sm:$0xff] %v4289
        %4298 = vst [vmem:[#allocation3 + $0x5f0] sm:$0xff] %v4290
        %4299 = vst [vmem:[#allocation3 + $0x5f8] sm:$0xff] %v4291
        %4300 = vrot.lane.b32.xlu0 %v2796, 19
        %v4301 = vpop.permute.xlu0 %4300
        %4302 = vrot.lane.b32.xlu0 %v2804, 19
        %v4303 = vpop.permute.xlu0 %4302
        %4304 = vrot.lane.b32.xlu0 %v2797, 19
        %v4305 = vpop.permute.xlu0 %4304
        %4306 = vrot.lane.b32.xlu0 %v2805, 19
        %v4307 = vpop.permute.xlu0 %4306
        %4308 = vrot.lane.b32.xlu0 %v2798, 19
        %v4309 = vpop.permute.xlu0 %4308
        %4310 = vrot.lane.b32.xlu0 %v2806, 19
        %v4311 = vpop.permute.xlu0 %4310
        %4312 = vrot.lane.b32.xlu0 %v2799, 19
        %v4313 = vpop.permute.xlu0 %4312
        %4314 = vrot.lane.b32.xlu0 %v2807, 19
        %v4315 = vpop.permute.xlu0 %4314
        %4316 = vrot.lane.b32.xlu0 %v2800, 19
        %v4317 = vpop.permute.xlu0 %4316
        %4318 = vrot.lane.b32.xlu0 %v2808, 19
        %v4319 = vpop.permute.xlu0 %4318
        %4320 = vrot.lane.b32.xlu0 %v2801, 19
        %v4321 = vpop.permute.xlu0 %4320
        %4322 = vrot.lane.b32.xlu0 %v2809, 19
        %v4323 = vpop.permute.xlu0 %4322
        %4324 = vrot.lane.b32.xlu0 %v2802, 19
        %v4325 = vpop.permute.xlu0 %4324
        %4326 = vrot.lane.b32.xlu0 %v2810, 19
        %v4327 = vpop.permute.xlu0 %4326
        %4328 = vrot.lane.b32.xlu0 %v2803, 19
        %v4329 = vpop.permute.xlu0 %4328
        %4330 = vrot.lane.b32.xlu0 %v2811, 19
        %v4331 = vpop.permute.xlu0 %4330
        %v4332 = vsel %vm1861, %v4325, %v4329
        %v4333 = vsel %vm1861, %v4327, %v4331
        %v4334 = vsel %vm1861, %v4321, %v4325
        %v4335 = vsel %vm1861, %v4323, %v4327
        %v4336 = vsel %vm1861, %v4317, %v4321
        %v4337 = vsel %vm1861, %v4319, %v4323
        %v4338 = vsel %vm1861, %v4313, %v4317
        %v4339 = vsel %vm1861, %v4315, %v4319
        %v4340 = vsel %vm1861, %v4309, %v4313
        %v4341 = vsel %vm1861, %v4311, %v4315
        %v4342 = vsel %vm1861, %v4305, %v4309
        %v4343 = vsel %vm1861, %v4307, %v4311
        %v4344 = vsel %vm1861, %v4301, %v4305
        %v4345 = vsel %vm1861, %v4303, %v4307
        %v4346 = vsel %vm1861, %v4329, %v4301
        %v4347 = vsel %vm1861, %v4331, %v4303
        %v4348 = vpack.c.bf16 %v4345, %v4344
        %v4349 = vpack.c.bf16 %v4343, %v4342
        %v4350 = vpack.c.bf16 %v4341, %v4340
        %v4351 = vpack.c.bf16 %v4339, %v4338
        %v4352 = vpack.c.bf16 %v4337, %v4336
        %v4353 = vpack.c.bf16 %v4335, %v4334
        %v4354 = vpack.c.bf16 %v4333, %v4332
        %v4355 = vpack.c.bf16 %v4347, %v4346
        %4356 = vst [vmem:[#allocation3 + $0x600] sm:$0xff] %v4348
        %4357 = vst [vmem:[#allocation3 + $0x608] sm:$0xff] %v4349
        %4358 = vst [vmem:[#allocation3 + $0x610] sm:$0xff] %v4350
        %4359 = vst [vmem:[#allocation3 + $0x618] sm:$0xff] %v4351
        %4360 = vst [vmem:[#allocation3 + $0x620] sm:$0xff] %v4352
        %4361 = vst [vmem:[#allocation3 + $0x628] sm:$0xff] %v4353
        %4362 = vst [vmem:[#allocation3 + $0x630] sm:$0xff] %v4354
        %4363 = vst [vmem:[#allocation3 + $0x638] sm:$0xff] %v4355
        %4364 = vrot.lane.b32.xlu0 %v2796, 18
        %v4365 = vpop.permute.xlu0 %4364
        %4366 = vrot.lane.b32.xlu0 %v2804, 18
        %v4367 = vpop.permute.xlu0 %4366
        %4368 = vrot.lane.b32.xlu0 %v2797, 18
        %v4369 = vpop.permute.xlu0 %4368
        %4370 = vrot.lane.b32.xlu0 %v2805, 18
        %v4371 = vpop.permute.xlu0 %4370
        %4372 = vrot.lane.b32.xlu0 %v2798, 18
        %v4373 = vpop.permute.xlu0 %4372
        %4374 = vrot.lane.b32.xlu0 %v2806, 18
        %v4375 = vpop.permute.xlu0 %4374
        %4376 = vrot.lane.b32.xlu0 %v2799, 18
        %v4377 = vpop.permute.xlu0 %4376
        %4378 = vrot.lane.b32.xlu0 %v2807, 18
        %v4379 = vpop.permute.xlu0 %4378
        %4380 = vrot.lane.b32.xlu0 %v2800, 18
        %v4381 = vpop.permute.xlu0 %4380
        %4382 = vrot.lane.b32.xlu0 %v2808, 18
        %v4383 = vpop.permute.xlu0 %4382
        %4384 = vrot.lane.b32.xlu0 %v2801, 18
        %v4385 = vpop.permute.xlu0 %4384
        %4386 = vrot.lane.b32.xlu0 %v2809, 18
        %v4387 = vpop.permute.xlu0 %4386
        %4388 = vrot.lane.b32.xlu0 %v2802, 18
        %v4389 = vpop.permute.xlu0 %4388
        %4390 = vrot.lane.b32.xlu0 %v2810, 18
        %v4391 = vpop.permute.xlu0 %4390
        %4392 = vrot.lane.b32.xlu0 %v2803, 18
        %v4393 = vpop.permute.xlu0 %4392
        %4394 = vrot.lane.b32.xlu0 %v2811, 18
        %v4395 = vpop.permute.xlu0 %4394
        %v4396 = vsel %vm1926, %v4389, %v4393
        %v4397 = vsel %vm1926, %v4391, %v4395
        %v4398 = vsel %vm1926, %v4385, %v4389
        %v4399 = vsel %vm1926, %v4387, %v4391
        %v4400 = vsel %vm1926, %v4381, %v4385
        %v4401 = vsel %vm1926, %v4383, %v4387
        %v4402 = vsel %vm1926, %v4377, %v4381
        %v4403 = vsel %vm1926, %v4379, %v4383
        %v4404 = vsel %vm1926, %v4373, %v4377
        %v4405 = vsel %vm1926, %v4375, %v4379
        %v4406 = vsel %vm1926, %v4369, %v4373
        %v4407 = vsel %vm1926, %v4371, %v4375
        %v4408 = vsel %vm1926, %v4365, %v4369
        %v4409 = vsel %vm1926, %v4367, %v4371
        %v4410 = vsel %vm1926, %v4393, %v4365
        %v4411 = vsel %vm1926, %v4395, %v4367
        %v4412 = vpack.c.bf16 %v4409, %v4408
        %v4413 = vpack.c.bf16 %v4407, %v4406
        %v4414 = vpack.c.bf16 %v4405, %v4404
        %v4415 = vpack.c.bf16 %v4403, %v4402
        %v4416 = vpack.c.bf16 %v4401, %v4400
        %v4417 = vpack.c.bf16 %v4399, %v4398
        %v4418 = vpack.c.bf16 %v4397, %v4396
        %v4419 = vpack.c.bf16 %v4411, %v4410
        %4420 = vst [vmem:[#allocation3 + $0x640] sm:$0xff] %v4412
        %4421 = vst [vmem:[#allocation3 + $0x648] sm:$0xff] %v4413
        %4422 = vst [vmem:[#allocation3 + $0x650] sm:$0xff] %v4414
        %4423 = vst [vmem:[#allocation3 + $0x658] sm:$0xff] %v4415
        %4424 = vst [vmem:[#allocation3 + $0x660] sm:$0xff] %v4416
        %4425 = vst [vmem:[#allocation3 + $0x668] sm:$0xff] %v4417
        %4426 = vst [vmem:[#allocation3 + $0x670] sm:$0xff] %v4418
        %4427 = vst [vmem:[#allocation3 + $0x678] sm:$0xff] %v4419
        %4428 = vrot.lane.b32.xlu0 %v2796, 17
        %v4429 = vpop.permute.xlu0 %4428
        %4430 = vrot.lane.b32.xlu0 %v2804, 17
        %v4431 = vpop.permute.xlu0 %4430
        %4432 = vrot.lane.b32.xlu0 %v2797, 17
        %v4433 = vpop.permute.xlu0 %4432
        %4434 = vrot.lane.b32.xlu0 %v2805, 17
        %v4435 = vpop.permute.xlu0 %4434
        %4436 = vrot.lane.b32.xlu0 %v2798, 17
        %v4437 = vpop.permute.xlu0 %4436
        %4438 = vrot.lane.b32.xlu0 %v2806, 17
        %v4439 = vpop.permute.xlu0 %4438
        %4440 = vrot.lane.b32.xlu0 %v2799, 17
        %v4441 = vpop.permute.xlu0 %4440
        %4442 = vrot.lane.b32.xlu0 %v2807, 17
        %v4443 = vpop.permute.xlu0 %4442
        %4444 = vrot.lane.b32.xlu0 %v2800, 17
        %v4445 = vpop.permute.xlu0 %4444
        %4446 = vrot.lane.b32.xlu0 %v2808, 17
        %v4447 = vpop.permute.xlu0 %4446
        %4448 = vrot.lane.b32.xlu0 %v2801, 17
        %v4449 = vpop.permute.xlu0 %4448
        %4450 = vrot.lane.b32.xlu0 %v2809, 17
        %v4451 = vpop.permute.xlu0 %4450
        %4452 = vrot.lane.b32.xlu0 %v2802, 17
        %v4453 = vpop.permute.xlu0 %4452
        %4454 = vrot.lane.b32.xlu0 %v2810, 17
        %v4455 = vpop.permute.xlu0 %4454
        %4456 = vrot.lane.b32.xlu0 %v2803, 17
        %v4457 = vpop.permute.xlu0 %4456
        %4458 = vrot.lane.b32.xlu0 %v2811, 17
        %v4459 = vpop.permute.xlu0 %4458
        %v4460 = vsel %vm1991, %v4453, %v4457
        %v4461 = vsel %vm1991, %v4455, %v4459
        %v4462 = vsel %vm1991, %v4449, %v4453
        %v4463 = vsel %vm1991, %v4451, %v4455
        %v4464 = vsel %vm1991, %v4445, %v4449
        %v4465 = vsel %vm1991, %v4447, %v4451
        %v4466 = vsel %vm1991, %v4441, %v4445
        %v4467 = vsel %vm1991, %v4443, %v4447
        %v4468 = vsel %vm1991, %v4437, %v4441
        %v4469 = vsel %vm1991, %v4439, %v4443
        %v4470 = vsel %vm1991, %v4433, %v4437
        %v4471 = vsel %vm1991, %v4435, %v4439
        %v4472 = vsel %vm1991, %v4429, %v4433
        %v4473 = vsel %vm1991, %v4431, %v4435
        %v4474 = vsel %vm1991, %v4457, %v4429
        %v4475 = vsel %vm1991, %v4459, %v4431
        %v4476 = vpack.c.bf16 %v4473, %v4472
        %v4477 = vpack.c.bf16 %v4471, %v4470
        %v4478 = vpack.c.bf16 %v4469, %v4468
        %v4479 = vpack.c.bf16 %v4467, %v4466
        %v4480 = vpack.c.bf16 %v4465, %v4464
        %v4481 = vpack.c.bf16 %v4463, %v4462
        %v4482 = vpack.c.bf16 %v4461, %v4460
        %v4483 = vpack.c.bf16 %v4475, %v4474
        %4484 = vst [vmem:[#allocation3 + $0x680] sm:$0xff] %v4476
        %4485 = vst [vmem:[#allocation3 + $0x688] sm:$0xff] %v4477
        %4486 = vst [vmem:[#allocation3 + $0x690] sm:$0xff] %v4478
        %4487 = vst [vmem:[#allocation3 + $0x698] sm:$0xff] %v4479
        %4488 = vst [vmem:[#allocation3 + $0x6a0] sm:$0xff] %v4480
        %4489 = vst [vmem:[#allocation3 + $0x6a8] sm:$0xff] %v4481
        %4490 = vst [vmem:[#allocation3 + $0x6b0] sm:$0xff] %v4482
        %4491 = vst [vmem:[#allocation3 + $0x6b8] sm:$0xff] %v4483
        %v4492 = vld [vmem:[#allocation9] sm:$0xff]
        %v4493 = vld [vmem:[#allocation9 + $0x8] sm:$0xff]
        %v4494 = vld [vmem:[#allocation9 + $0x10] sm:$0xff]
        %v4495 = vld [vmem:[#allocation9 + $0x18] sm:$0xff]
        %v4496 = vld [vmem:[#allocation3] sm:$0xff]
        %v4497 = vld [vmem:[#allocation3 + $0x8] sm:$0xff]
        %v4498 = vld [vmem:[#allocation3 + $0x10] sm:$0xff]
        %v4499 = vld [vmem:[#allocation3 + $0x18] sm:$0xff]
        %v4500 = vld [vmem:[#allocation3 + $0x20] sm:$0xff]
        %v4501 = vld [vmem:[#allocation3 + $0x28] sm:$0xff]
        %v4502 = vld [vmem:[#allocation3 + $0x30] sm:$0xff]
        %v4503 = vld [vmem:[#allocation3 + $0x38] sm:$0xff]
        %v4504 = vld [vmem:[#allocation3 + $0x40] sm:$0xff]
        %v4505 = vld [vmem:[#allocation3 + $0x48] sm:$0xff]
        %v4506 = vld [vmem:[#allocation3 + $0x50] sm:$0xff]
        %v4507 = vld [vmem:[#allocation3 + $0x58] sm:$0xff]
        %v4508 = vld [vmem:[#allocation3 + $0x60] sm:$0xff]
        %v4509 = vld [vmem:[#allocation3 + $0x68] sm:$0xff]
        %v4510 = vld [vmem:[#allocation3 + $0x70] sm:$0xff]
        %v4511 = vld [vmem:[#allocation3 + $0x78] sm:$0xff]
        %v4512 = vld [vmem:[#allocation3 + $0x80] sm:$0xff]
        %v4513 = vld [vmem:[#allocation3 + $0x88] sm:$0xff]
        %v4514 = vld [vmem:[#allocation3 + $0x90] sm:$0xff]
        %v4515 = vld [vmem:[#allocation3 + $0x98] sm:$0xff]
        %v4516 = vld [vmem:[#allocation3 + $0xa0] sm:$0xff]
        %v4517 = vld [vmem:[#allocation3 + $0xa8] sm:$0xff]
        %v4518 = vld [vmem:[#allocation3 + $0xb0] sm:$0xff]
        %v4519 = vld [vmem:[#allocation3 + $0xb8] sm:$0xff]
        %v4520 = vld [vmem:[#allocation3 + $0xc0] sm:$0xff]
        %v4521 = vld [vmem:[#allocation3 + $0xc8] sm:$0xff]
        %v4522 = vld [vmem:[#allocation3 + $0xd0] sm:$0xff]
        %v4523 = vld [vmem:[#allocation3 + $0xd8] sm:$0xff]
        %v4524 = vld [vmem:[#allocation3 + $0xe0] sm:$0xff]
        %v4525 = vld [vmem:[#allocation3 + $0xe8] sm:$0xff]
        %v4526 = vld [vmem:[#allocation3 + $0xf0] sm:$0xff]
        %v4527 = vld [vmem:[#allocation3 + $0xf8] sm:$0xff]
        %v4528 = vld [vmem:[#allocation3 + $0x100] sm:$0xff]
        %v4529 = vld [vmem:[#allocation3 + $0x108] sm:$0xff]
        %v4530 = vld [vmem:[#allocation3 + $0x110] sm:$0xff]
        %v4531 = vld [vmem:[#allocation3 + $0x118] sm:$0xff]
        %v4532 = vld [vmem:[#allocation3 + $0x120] sm:$0xff]
        %v4533 = vld [vmem:[#allocation3 + $0x128] sm:$0xff]
        %v4534 = vld [vmem:[#allocation3 + $0x130] sm:$0xff]
        %v4535 = vld [vmem:[#allocation3 + $0x138] sm:$0xff]
        %v4536 = vld [vmem:[#allocation3 + $0x140] sm:$0xff]
        %v4537 = vld [vmem:[#allocation3 + $0x148] sm:$0xff]
        %v4538 = vld [vmem:[#allocation3 + $0x150] sm:$0xff]
        %v4539 = vld [vmem:[#allocation3 + $0x158] sm:$0xff]
        %v4540 = vld [vmem:[#allocation3 + $0x160] sm:$0xff]
        %v4541 = vld [vmem:[#allocation3 + $0x168] sm:$0xff]
        %v4542 = vld [vmem:[#allocation3 + $0x170] sm:$0xff]
        %v4543 = vld [vmem:[#allocation3 + $0x178] sm:$0xff]
        %v4544 = vld [vmem:[#allocation3 + $0x180] sm:$0xff]
        %v4545 = vld [vmem:[#allocation3 + $0x188] sm:$0xff]
        %v4546 = vld [vmem:[#allocation3 + $0x190] sm:$0xff]
        %v4547 = vld [vmem:[#allocation3 + $0x198] sm:$0xff]
        %v4548 = vld [vmem:[#allocation3 + $0x1a0] sm:$0xff]
        %v4549 = vld [vmem:[#allocation3 + $0x1a8] sm:$0xff]
        %v4550 = vld [vmem:[#allocation3 + $0x1b0] sm:$0xff]
        %v4551 = vld [vmem:[#allocation3 + $0x1b8] sm:$0xff]
        %v4552 = vld [vmem:[#allocation3 + $0x1c0] sm:$0xff]
        %v4553 = vld [vmem:[#allocation3 + $0x1c8] sm:$0xff]
        %v4554 = vld [vmem:[#allocation3 + $0x1d0] sm:$0xff]
        %v4555 = vld [vmem:[#allocation3 + $0x1d8] sm:$0xff]
        %v4556 = vld [vmem:[#allocation3 + $0x1e0] sm:$0xff]
        %v4557 = vld [vmem:[#allocation3 + $0x1e8] sm:$0xff]
        %v4558 = vld [vmem:[#allocation3 + $0x1f0] sm:$0xff]
        %v4559 = vld [vmem:[#allocation3 + $0x1f8] sm:$0xff]
        %v4560 = vld [vmem:[#allocation3 + $0x200] sm:$0xff]
        %v4561 = vld [vmem:[#allocation3 + $0x208] sm:$0xff]
        %v4562 = vld [vmem:[#allocation3 + $0x210] sm:$0xff]
        %v4563 = vld [vmem:[#allocation3 + $0x218] sm:$0xff]
        %v4564 = vld [vmem:[#allocation3 + $0x220] sm:$0xff]
        %v4565 = vld [vmem:[#allocation3 + $0x228] sm:$0xff]
        %v4566 = vld [vmem:[#allocation3 + $0x230] sm:$0xff]
        %v4567 = vld [vmem:[#allocation3 + $0x238] sm:$0xff]
        %v4568 = vld [vmem:[#allocation3 + $0x240] sm:$0xff]
        %v4569 = vld [vmem:[#allocation3 + $0x248] sm:$0xff]
        %v4570 = vld [vmem:[#allocation3 + $0x250] sm:$0xff]
        %v4571 = vld [vmem:[#allocation3 + $0x258] sm:$0xff]
        %v4572 = vld [vmem:[#allocation3 + $0x260] sm:$0xff]
        %v4573 = vld [vmem:[#allocation3 + $0x268] sm:$0xff]
        %v4574 = vld [vmem:[#allocation3 + $0x270] sm:$0xff]
        %v4575 = vld [vmem:[#allocation3 + $0x278] sm:$0xff]
        %v4576 = vld [vmem:[#allocation3 + $0x280] sm:$0xff]
        %v4577 = vld [vmem:[#allocation3 + $0x288] sm:$0xff]
        %v4578 = vld [vmem:[#allocation3 + $0x290] sm:$0xff]
        %v4579 = vld [vmem:[#allocation3 + $0x298] sm:$0xff]
        %v4580 = vld [vmem:[#allocation3 + $0x2a0] sm:$0xff]
        %v4581 = vld [vmem:[#allocation3 + $0x2a8] sm:$0xff]
        %v4582 = vld [vmem:[#allocation3 + $0x2b0] sm:$0xff]
        %v4583 = vld [vmem:[#allocation3 + $0x2b8] sm:$0xff]
        %v4584 = vld [vmem:[#allocation3 + $0x2c0] sm:$0xff]
        %v4585 = vld [vmem:[#allocation3 + $0x2c8] sm:$0xff]
        %v4586 = vld [vmem:[#allocation3 + $0x2d0] sm:$0xff]
        %v4587 = vld [vmem:[#allocation3 + $0x2d8] sm:$0xff]
        %v4588 = vld [vmem:[#allocation3 + $0x2e0] sm:$0xff]
        %v4589 = vld [vmem:[#allocation3 + $0x2e8] sm:$0xff]
        %v4590 = vld [vmem:[#allocation3 + $0x2f0] sm:$0xff]
        %v4591 = vld [vmem:[#allocation3 + $0x2f8] sm:$0xff]
        %v4592 = vld [vmem:[#allocation3 + $0x300] sm:$0xff]
        %v4593 = vld [vmem:[#allocation3 + $0x308] sm:$0xff]
        %v4594 = vld [vmem:[#allocation3 + $0x310] sm:$0xff]
        %v4595 = vld [vmem:[#allocation3 + $0x318] sm:$0xff]
        %v4596 = vld [vmem:[#allocation3 + $0x320] sm:$0xff]
        %v4597 = vld [vmem:[#allocation3 + $0x328] sm:$0xff]
        %v4598 = vld [vmem:[#allocation3 + $0x330] sm:$0xff]
        %v4599 = vld [vmem:[#allocation3 + $0x338] sm:$0xff]
        %v4600 = vld [vmem:[#allocation3 + $0x340] sm:$0xff]
        %v4601 = vld [vmem:[#allocation3 + $0x348] sm:$0xff]
        %v4602 = vld [vmem:[#allocation3 + $0x350] sm:$0xff]
        %v4603 = vld [vmem:[#allocation3 + $0x358] sm:$0xff]
        %v4604 = vld [vmem:[#allocation3 + $0x360] sm:$0xff]
        %v4605 = vld [vmem:[#allocation3 + $0x368] sm:$0xff]
        %v4606 = vld [vmem:[#allocation3 + $0x370] sm:$0xff]
        %v4607 = vld [vmem:[#allocation3 + $0x378] sm:$0xff]
        %v4608 = vld [vmem:[#allocation3 + $0x380] sm:$0xff]
        %v4609 = vld [vmem:[#allocation3 + $0x388] sm:$0xff]
        %v4610 = vld [vmem:[#allocation3 + $0x390] sm:$0xff]
        %v4611 = vld [vmem:[#allocation3 + $0x398] sm:$0xff]
        %v4612 = vld [vmem:[#allocation3 + $0x3a0] sm:$0xff]
        %v4613 = vld [vmem:[#allocation3 + $0x3a8] sm:$0xff]
        %v4614 = vld [vmem:[#allocation3 + $0x3b0] sm:$0xff]
        %v4615 = vld [vmem:[#allocation3 + $0x3b8] sm:$0xff]
        %v4616 = vld [vmem:[#allocation3 + $0x3c0] sm:$0xff]
        %v4617 = vld [vmem:[#allocation3 + $0x3c8] sm:$0xff]
        %v4618 = vld [vmem:[#allocation3 + $0x3d0] sm:$0xff]
        %v4619 = vld [vmem:[#allocation3 + $0x3d8] sm:$0xff]
        %v4620 = vld [vmem:[#allocation3 + $0x3e0] sm:$0xff]
        %v4621 = vld [vmem:[#allocation3 + $0x3e8] sm:$0xff]
        %v4622 = vld [vmem:[#allocation3 + $0x3f0] sm:$0xff]
        %v4623 = vld [vmem:[#allocation3 + $0x3f8] sm:$0xff]
        %v4624 = vld [vmem:[#allocation3 + $0x400] sm:$0xff]
        %v4625 = vld [vmem:[#allocation3 + $0x408] sm:$0xff]
        %v4626 = vld [vmem:[#allocation3 + $0x410] sm:$0xff]
        %v4627 = vld [vmem:[#allocation3 + $0x418] sm:$0xff]
        %v4628 = vld [vmem:[#allocation3 + $0x420] sm:$0xff]
        %v4629 = vld [vmem:[#allocation3 + $0x428] sm:$0xff]
        %v4630 = vld [vmem:[#allocation3 + $0x430] sm:$0xff]
        %v4631 = vld [vmem:[#allocation3 + $0x438] sm:$0xff]
        %v4632 = vld [vmem:[#allocation3 + $0x440] sm:$0xff]
        %v4633 = vld [vmem:[#allocation3 + $0x448] sm:$0xff]
        %v4634 = vld [vmem:[#allocation3 + $0x450] sm:$0xff]
        %v4635 = vld [vmem:[#allocation3 + $0x458] sm:$0xff]
        %v4636 = vld [vmem:[#allocation3 + $0x460] sm:$0xff]
        %v4637 = vld [vmem:[#allocation3 + $0x468] sm:$0xff]
        %v4638 = vld [vmem:[#allocation3 + $0x470] sm:$0xff]
        %v4639 = vld [vmem:[#allocation3 + $0x478] sm:$0xff]
        %v4640 = vld [vmem:[#allocation3 + $0x480] sm:$0xff]
        %v4641 = vld [vmem:[#allocation3 + $0x488] sm:$0xff]
        %v4642 = vld [vmem:[#allocation3 + $0x490] sm:$0xff]
        %v4643 = vld [vmem:[#allocation3 + $0x498] sm:$0xff]
        %v4644 = vld [vmem:[#allocation3 + $0x4a0] sm:$0xff]
        %v4645 = vld [vmem:[#allocation3 + $0x4a8] sm:$0xff]
        %v4646 = vld [vmem:[#allocation3 + $0x4b0] sm:$0xff]
        %v4647 = vld [vmem:[#allocation3 + $0x4b8] sm:$0xff]
        %v4648 = vld [vmem:[#allocation3 + $0x4c0] sm:$0xff]
        %v4649 = vld [vmem:[#allocation3 + $0x4c8] sm:$0xff]
        %v4650 = vld [vmem:[#allocation3 + $0x4d0] sm:$0xff]
        %v4651 = vld [vmem:[#allocation3 + $0x4d8] sm:$0xff]
        %v4652 = vld [vmem:[#allocation3 + $0x4e0] sm:$0xff]
        %v4653 = vld [vmem:[#allocation3 + $0x4e8] sm:$0xff]
        %v4654 = vld [vmem:[#allocation3 + $0x4f0] sm:$0xff]
        %v4655 = vld [vmem:[#allocation3 + $0x4f8] sm:$0xff]
        %v4656 = vld [vmem:[#allocation3 + $0x500] sm:$0xff]
        %v4657 = vld [vmem:[#allocation3 + $0x508] sm:$0xff]
        %v4658 = vld [vmem:[#allocation3 + $0x510] sm:$0xff]
        %v4659 = vld [vmem:[#allocation3 + $0x518] sm:$0xff]
        %v4660 = vld [vmem:[#allocation3 + $0x520] sm:$0xff]
        %v4661 = vld [vmem:[#allocation3 + $0x528] sm:$0xff]
        %v4662 = vld [vmem:[#allocation3 + $0x530] sm:$0xff]
        %v4663 = vld [vmem:[#allocation3 + $0x538] sm:$0xff]
        %v4664 = vld [vmem:[#allocation3 + $0x540] sm:$0xff]
        %v4665 = vld [vmem:[#allocation3 + $0x548] sm:$0xff]
        %v4666 = vld [vmem:[#allocation3 + $0x550] sm:$0xff]
        %v4667 = vld [vmem:[#allocation3 + $0x558] sm:$0xff]
        %v4668 = vld [vmem:[#allocation3 + $0x560] sm:$0xff]
        %v4669 = vld [vmem:[#allocation3 + $0x568] sm:$0xff]
        %v4670 = vld [vmem:[#allocation3 + $0x570] sm:$0xff]
        %v4671 = vld [vmem:[#allocation3 + $0x578] sm:$0xff]
        %v4672 = vld [vmem:[#allocation3 + $0x580] sm:$0xff]
        %v4673 = vld [vmem:[#allocation3 + $0x588] sm:$0xff]
        %v4674 = vld [vmem:[#allocation3 + $0x590] sm:$0xff]
        %v4675 = vld [vmem:[#allocation3 + $0x598] sm:$0xff]
        %v4676 = vld [vmem:[#allocation3 + $0x5a0] sm:$0xff]
        %v4677 = vld [vmem:[#allocation3 + $0x5a8] sm:$0xff]
        %v4678 = vld [vmem:[#allocation3 + $0x5b0] sm:$0xff]
        %v4679 = vld [vmem:[#allocation3 + $0x5b8] sm:$0xff]
        %v4680 = vld [vmem:[#allocation3 + $0x5c0] sm:$0xff]
        %v4681 = vld [vmem:[#allocation3 + $0x5c8] sm:$0xff]
        %v4682 = vld [vmem:[#allocation3 + $0x5d0] sm:$0xff]
        %v4683 = vld [vmem:[#allocation3 + $0x5d8] sm:$0xff]
        %v4684 = vld [vmem:[#allocation3 + $0x5e0] sm:$0xff]
        %v4685 = vld [vmem:[#allocation3 + $0x5e8] sm:$0xff]
        %v4686 = vld [vmem:[#allocation3 + $0x5f0] sm:$0xff]
        %v4687 = vld [vmem:[#allocation3 + $0x5f8] sm:$0xff]
        %v4688 = vld [vmem:[#allocation3 + $0x600] sm:$0xff]
        %v4689 = vld [vmem:[#allocation3 + $0x608] sm:$0xff]
        %v4690 = vld [vmem:[#allocation3 + $0x610] sm:$0xff]
        %v4691 = vld [vmem:[#allocation3 + $0x618] sm:$0xff]
        %v4692 = vld [vmem:[#allocation3 + $0x620] sm:$0xff]
        %v4693 = vld [vmem:[#allocation3 + $0x628] sm:$0xff]
        %v4694 = vld [vmem:[#allocation3 + $0x630] sm:$0xff]
        %v4695 = vld [vmem:[#allocation3 + $0x638] sm:$0xff]
        %v4696 = vld [vmem:[#allocation3 + $0x640] sm:$0xff]
        %v4697 = vld [vmem:[#allocation3 + $0x648] sm:$0xff]
        %v4698 = vld [vmem:[#allocation3 + $0x650] sm:$0xff]
        %v4699 = vld [vmem:[#allocation3 + $0x658] sm:$0xff]
        %v4700 = vld [vmem:[#allocation3 + $0x660] sm:$0xff]
        %v4701 = vld [vmem:[#allocation3 + $0x668] sm:$0xff]
        %v4702 = vld [vmem:[#allocation3 + $0x670] sm:$0xff]
        %v4703 = vld [vmem:[#allocation3 + $0x678] sm:$0xff]
        %v4704 = vld [vmem:[#allocation3 + $0x680] sm:$0xff]
        %v4705 = vld [vmem:[#allocation3 + $0x688] sm:$0xff]
        %v4706 = vld [vmem:[#allocation3 + $0x690] sm:$0xff]
        %v4707 = vld [vmem:[#allocation3 + $0x698] sm:$0xff]
        %v4708 = vld [vmem:[#allocation3 + $0x6a0] sm:$0xff]
        %v4709 = vld [vmem:[#allocation3 + $0x6a8] sm:$0xff]
        %v4710 = vld [vmem:[#allocation3 + $0x6b0] sm:$0xff]
        %v4711 = vld [vmem:[#allocation3 + $0x6b8] sm:$0xff]
        %v4716 = vunpack.c.l.b16 %v4492
        %v4717 = vunpack.c.h.b16 %v4492
        %v4718 = vunpack.c.l.b16 %v4493
        %v4719 = vunpack.c.h.b16 %v4493
        %v4720 = vunpack.c.l.b16 %v4494
        %v4721 = vunpack.c.h.b16 %v4494
        %v4722 = vunpack.c.l.b16 %v4495
        %v4723 = vunpack.c.h.b16 %v4495
        %v4724 = vpack.c.b16 %v4720, %v4716
        %v4725 = vpack.c.b16 %v4721, %v4717
        %v4726 = vpack.c.b16 %v4722, %v4718
        %v4727 = vpack.c.b16 %v4723, %v4719
        %v4732 = vsel %vm2263, %v4727, 0
        %4734 = vmatprep.subr.bf16.mxu0 %v4497
        %4735 = vmatpush1.bf16.msra.mxu0 %v4496
        %4736 = vmatprep.subr.bf16.mxu0 %v4505
        %4737 = vmatpush1.bf16.msra.mxu0 %v4504
        %4738 = vmatprep.subr.bf16.mxu0 %v4513
        %4739 = vmatpush1.bf16.msra.mxu0 %v4512
        %4740 = vmatprep.subr.bf16.mxu0 %v4521
        %4741 = vmatpush1.bf16.msra.mxu0 %v4520
        %4742 = vmatprep.subr.bf16.mxu0 %v4529
        %4743 = vmatpush1.bf16.msra.mxu0 %v4528
        %4744 = vmatprep.subr.bf16.mxu0 %v4537
        %4745 = vmatpush1.bf16.msra.mxu0 %v4536
        %4746 = vmatprep.subr.bf16.mxu0 %v4545
        %4747 = vmatpush1.bf16.msra.mxu0 %v4544
        %4748 = vmatprep.subr.bf16.mxu0 %v4553
        %4749 = vmatpush1.bf16.msra.mxu0 %v4552
        %4750 = vmatprep.subr.bf16.mxu0 %v4561
        %4751 = vmatpush1.bf16.msra.mxu0 %v4560
        %4752 = vmatprep.subr.bf16.mxu0 %v4569
        %4753 = vmatpush1.bf16.msra.mxu0 %v4568
        %4754 = vmatprep.subr.bf16.mxu0 %v4577
        %4755 = vmatpush1.bf16.msra.mxu0 %v4576
        %4756 = vmatprep.subr.bf16.mxu0 %v4585
        %4757 = vmatpush1.bf16.msra.mxu0 %v4584
        %4758 = vmatprep.subr.bf16.mxu0 %v4593
        %4759 = vmatpush1.bf16.msra.mxu0 %v4592
        %4760 = vmatprep.subr.bf16.mxu0 %v4601
        %4761 = vmatpush1.bf16.msra.mxu0 %v4600
        %4762 = vmatprep.subr.bf16.mxu0 %v4609
        %4763 = vmatpush1.bf16.msra.mxu0 %v4608
        %4764 = vmatprep.subr.bf16.mxu0 %v4617
        %4765 = vmatpush1.bf16.msra.mxu0 %v4616
        %4766 = vmatprep.mubr.bf16.mxu0 %v4725
        %4767 = vmatmul.mubr.bf16.gmra.mrb[0].mxu0 %v4724
        %v4768 = vpop.f32.mrb[0].mxu0
        %v4769 = vadd.f32 0.0, %v4768
        %v4770 = vpop.f32.mrb[0].mxu0
        %v4771 = vadd.f32 0.0, %v4770
        %v4772 = vpop.f32.mrb[0].mxu0
        %v4773 = vadd.f32 0.0, %v4772
        %v4774 = vpop.f32.mrb[0].mxu0
        %v4775 = vadd.f32 0.0, %v4774
        %4776 = vdwg.mxu0
        %4777 = vmatprep.subr.bf16.mxu0 %v4625
        %4778 = vmatpush1.bf16.msra.mxu0 %v4624
        %4779 = vmatprep.subr.bf16.mxu0 %v4633
        %4780 = vmatpush1.bf16.msra.mxu0 %v4632
        %4781 = vmatprep.subr.bf16.mxu0 %v4641
        %4782 = vmatpush1.bf16.msra.mxu0 %v4640
        %4783 = vmatprep.subr.bf16.mxu0 %v4649
        %4784 = vmatpush1.bf16.msra.mxu0 %v4648
        %4785 = vmatprep.subr.bf16.mxu0 %v4657
        %4786 = vmatpush1.bf16.msra.mxu0 %v4656
        %4787 = vmatprep.subr.bf16.mxu0 %v4665
        %4788 = vmatpush1.bf16.msra.mxu0 %v4664
        %4789 = vmatprep.subr.bf16.mxu0 %v4673
        %4790 = vmatpush1.bf16.msra.mxu0 %v4672
        %4791 = vmatprep.subr.bf16.mxu0 %v4681
        %4792 = vmatpush1.bf16.msra.mxu0 %v4680
        %4793 = vmatprep.subr.bf16.mxu0 %v4689
        %4794 = vmatpush1.bf16.msra.mxu0 %v4688
        %4795 = vmatprep.subr.bf16.mxu0 %v4697
        %4796 = vmatpush1.bf16.msra.mxu0 %v4696
        %4797 = vmatprep.subr.bf16.mxu0 %v4705
        %4798 = vmatpush1.bf16.msra.mxu0 %v4704
        %4799 = vmatprep.subr.bf16.mxu0 0
        %4800 = vmatpush1.bf16.msra.mxu0 0
        %4801 = vmatprep.subr.bf16.mxu0 0
        %4802 = vmatpush1.bf16.msra.mxu0 0
        %4803 = vmatprep.subr.bf16.mxu0 0
        %4804 = vmatpush1.bf16.msra.mxu0 0
        %4805 = vmatprep.subr.bf16.mxu0 0
        %4806 = vmatpush1.bf16.msra.mxu0 0
        %4807 = vmatprep.subr.bf16.mxu0 0
        %4808 = vmatpush1.bf16.msra.mxu0 0
        %4809 = vmatprep.mubr.bf16.mxu0 %v4732
        %4810 = vmatmul.mubr.bf16.gmra.mrb[0].mxu0 %v4726
        %v4811 = vpop.f32.mrb[0].mxu0
        %v4812 = vadd.f32 %v4769, %v4811
        %v4813 = vpop.f32.mrb[0].mxu0
        %v4814 = vadd.f32 %v4771, %v4813
        %v4815 = vpop.f32.mrb[0].mxu0
        %v4816 = vadd.f32 %v4773, %v4815
        %v4817 = vpop.f32.mrb[0].mxu0
        %v4818 = vadd.f32 %v4775, %v4817
        %4819 = vdwg.mxu0
        %4820 = vmatprep.subr.bf16.mxu0 %v4499
        %4821 = vmatpush1.bf16.msra.mxu0 %v4498
        %4822 = vmatprep.subr.bf16.mxu0 %v4507
        %4823 = vmatpush1.bf16.msra.mxu0 %v4506
        %4824 = vmatprep.subr.bf16.mxu0 %v4515
        %4825 = vmatpush1.bf16.msra.mxu0 %v4514
        %4826 = vmatprep.subr.bf16.mxu0 %v4523
        %4827 = vmatpush1.bf16.msra.mxu0 %v4522
        %4828 = vmatprep.subr.bf16.mxu0 %v4531
        %4829 = vmatpush1.bf16.msra.mxu0 %v4530
        %4830 = vmatprep.subr.bf16.mxu0 %v4539
        %4831 = vmatpush1.bf16.msra.mxu0 %v4538
        %4832 = vmatprep.subr.bf16.mxu0 %v4547
        %4833 = vmatpush1.bf16.msra.mxu0 %v4546
        %4834 = vmatprep.subr.bf16.mxu0 %v4555
        %4835 = vmatpush1.bf16.msra.mxu0 %v4554
        %4836 = vmatprep.subr.bf16.mxu0 %v4563
        %4837 = vmatpush1.bf16.msra.mxu0 %v4562
        %4838 = vmatprep.subr.bf16.mxu0 %v4571
        %4839 = vmatpush1.bf16.msra.mxu0 %v4570
        %4840 = vmatprep.subr.bf16.mxu0 %v4579
        %4841 = vmatpush1.bf16.msra.mxu0 %v4578
        %4842 = vmatprep.subr.bf16.mxu0 %v4587
        %4843 = vmatpush1.bf16.msra.mxu0 %v4586
        %4844 = vmatprep.subr.bf16.mxu0 %v4595
        %4845 = vmatpush1.bf16.msra.mxu0 %v4594
        %4846 = vmatprep.subr.bf16.mxu0 %v4603
        %4847 = vmatpush1.bf16.msra.mxu0 %v4602
        %4848 = vmatprep.subr.bf16.mxu0 %v4611
        %4849 = vmatpush1.bf16.msra.mxu0 %v4610
        %4850 = vmatprep.subr.bf16.mxu0 %v4619
        %4851 = vmatpush1.bf16.msra.mxu0 %v4618
        %4852 = vmatprep.mubr.bf16.mxu0 %v4725
        %4853 = vmatmul.mubr.bf16.gmra.mrb[0].mxu0 %v4724
        %v4854 = vpop.f32.mrb[0].mxu0
        %v4855 = vadd.f32 0.0, %v4854
        %v4856 = vpop.f32.mrb[0].mxu0
        %v4857 = vadd.f32 0.0, %v4856
        %v4858 = vpop.f32.mrb[0].mxu0
        %v4859 = vadd.f32 0.0, %v4858
        %v4860 = vpop.f32.mrb[0].mxu0
        %v4861 = vadd.f32 0.0, %v4860
        %4862 = vdwg.mxu0
        %4863 = vmatprep.subr.bf16.mxu0 %v4627
        %4864 = vmatpush1.bf16.msra.mxu0 %v4626
        %4865 = vmatprep.subr.bf16.mxu0 %v4635
        %4866 = vmatpush1.bf16.msra.mxu0 %v4634
        %4867 = vmatprep.subr.bf16.mxu0 %v4643
        %4868 = vmatpush1.bf16.msra.mxu0 %v4642
        %4869 = vmatprep.subr.bf16.mxu0 %v4651
        %4870 = vmatpush1.bf16.msra.mxu0 %v4650
        %4871 = vmatprep.subr.bf16.mxu0 %v4659
        %4872 = vmatpush1.bf16.msra.mxu0 %v4658
        %4873 = vmatprep.subr.bf16.mxu0 %v4667
        %4874 = vmatpush1.bf16.msra.mxu0 %v4666
        %4875 = vmatprep.subr.bf16.mxu0 %v4675
        %4876 = vmatpush1.bf16.msra.mxu0 %v4674
        %4877 = vmatprep.subr.bf16.mxu0 %v4683
        %4878 = vmatpush1.bf16.msra.mxu0 %v4682
        %4879 = vmatprep.subr.bf16.mxu0 %v4691
        %4880 = vmatpush1.bf16.msra.mxu0 %v4690
        %4881 = vmatprep.subr.bf16.mxu0 %v4699
        %4882 = vmatpush1.bf16.msra.mxu0 %v4698
        %4883 = vmatprep.subr.bf16.mxu0 %v4707
        %4884 = vmatpush1.bf16.msra.mxu0 %v4706
        %4885 = vmatprep.subr.bf16.mxu0 0
        %4886 = vmatpush1.bf16.msra.mxu0 0
        %4887 = vmatprep.subr.bf16.mxu0 0
        %4888 = vmatpush1.bf16.msra.mxu0 0
        %4889 = vmatprep.subr.bf16.mxu0 0
        %4890 = vmatpush1.bf16.msra.mxu0 0
        %4891 = vmatprep.subr.bf16.mxu0 0
        %4892 = vmatpush1.bf16.msra.mxu0 0
        %4893 = vmatprep.subr.bf16.mxu0 0
        %4894 = vmatpush1.bf16.msra.mxu0 0
        %4895 = vmatprep.mubr.bf16.mxu0 %v4732
        %4896 = vmatmul.mubr.bf16.gmra.mrb[0].mxu0 %v4726
        %v4897 = vpop.f32.mrb[0].mxu0
        %v4898 = vadd.f32 %v4855, %v4897
        %v4899 = vpop.f32.mrb[0].mxu0
        %v4900 = vadd.f32 %v4857, %v4899
        %v4901 = vpop.f32.mrb[0].mxu0
        %v4902 = vadd.f32 %v4859, %v4901
        %v4903 = vpop.f32.mrb[0].mxu0
        %v4904 = vadd.f32 %v4861, %v4903
        %4905 = vdwg.mxu0
        %4906 = vmatprep.subr.bf16.mxu0 %v4501
        %4907 = vmatpush1.bf16.msra.mxu0 %v4500
        %4908 = vmatprep.subr.bf16.mxu0 %v4509
        %4909 = vmatpush1.bf16.msra.mxu0 %v4508
        %4910 = vmatprep.subr.bf16.mxu0 %v4517
        %4911 = vmatpush1.bf16.msra.mxu0 %v4516
        %4912 = vmatprep.subr.bf16.mxu0 %v4525
        %4913 = vmatpush1.bf16.msra.mxu0 %v4524
        %4914 = vmatprep.subr.bf16.mxu0 %v4533
        %4915 = vmatpush1.bf16.msra.mxu0 %v4532
        %4916 = vmatprep.subr.bf16.mxu0 %v4541
        %4917 = vmatpush1.bf16.msra.mxu0 %v4540
        %4918 = vmatprep.subr.bf16.mxu0 %v4549
        %4919 = vmatpush1.bf16.msra.mxu0 %v4548
        %4920 = vmatprep.subr.bf16.mxu0 %v4557
        %4921 = vmatpush1.bf16.msra.mxu0 %v4556
        %4922 = vmatprep.subr.bf16.mxu0 %v4565
        %4923 = vmatpush1.bf16.msra.mxu0 %v4564
        %4924 = vmatprep.subr.bf16.mxu0 %v4573
        %4925 = vmatpush1.bf16.msra.mxu0 %v4572
        %4926 = vmatprep.subr.bf16.mxu0 %v4581
        %4927 = vmatpush1.bf16.msra.mxu0 %v4580
        %4928 = vmatprep.subr.bf16.mxu0 %v4589
        %4929 = vmatpush1.bf16.msra.mxu0 %v4588
        %4930 = vmatprep.subr.bf16.mxu0 %v4597
        %4931 = vmatpush1.bf16.msra.mxu0 %v4596
        %4932 = vmatprep.subr.bf16.mxu0 %v4605
        %4933 = vmatpush1.bf16.msra.mxu0 %v4604
        %4934 = vmatprep.subr.bf16.mxu0 %v4613
        %4935 = vmatpush1.bf16.msra.mxu0 %v4612
        %4936 = vmatprep.subr.bf16.mxu0 %v4621
        %4937 = vmatpush1.bf16.msra.mxu0 %v4620
        %4938 = vmatprep.mubr.bf16.mxu0 %v4725
        %4939 = vmatmul.mubr.bf16.gmra.mrb[0].mxu0 %v4724
        %v4940 = vpop.f32.mrb[0].mxu0
        %v4941 = vadd.f32 0.0, %v4940
        %v4942 = vpop.f32.mrb[0].mxu0
        %v4943 = vadd.f32 0.0, %v4942
        %v4944 = vpop.f32.mrb[0].mxu0
        %v4945 = vadd.f32 0.0, %v4944
        %v4946 = vpop.f32.mrb[0].mxu0
        %v4947 = vadd.f32 0.0, %v4946
        %4948 = vdwg.mxu0
        %4949 = vmatprep.subr.bf16.mxu0 %v4629
        %4950 = vmatpush1.bf16.msra.mxu0 %v4628
        %4951 = vmatprep.subr.bf16.mxu0 %v4637
        %4952 = vmatpush1.bf16.msra.mxu0 %v4636
        %4953 = vmatprep.subr.bf16.mxu0 %v4645
        %4954 = vmatpush1.bf16.msra.mxu0 %v4644
        %4955 = vmatprep.subr.bf16.mxu0 %v4653
        %4956 = vmatpush1.bf16.msra.mxu0 %v4652
        %4957 = vmatprep.subr.bf16.mxu0 %v4661
        %4958 = vmatpush1.bf16.msra.mxu0 %v4660
        %4959 = vmatprep.subr.bf16.mxu0 %v4669
        %4960 = vmatpush1.bf16.msra.mxu0 %v4668
        %4961 = vmatprep.subr.bf16.mxu0 %v4677
        %4962 = vmatpush1.bf16.msra.mxu0 %v4676
        %4963 = vmatprep.subr.bf16.mxu0 %v4685
        %4964 = vmatpush1.bf16.msra.mxu0 %v4684
        %4965 = vmatprep.subr.bf16.mxu0 %v4693
        %4966 = vmatpush1.bf16.msra.mxu0 %v4692
        %4967 = vmatprep.subr.bf16.mxu0 %v4701
        %4968 = vmatpush1.bf16.msra.mxu0 %v4700
        %4969 = vmatprep.subr.bf16.mxu0 %v4709
        %4970 = vmatpush1.bf16.msra.mxu0 %v4708
        %4971 = vmatprep.subr.bf16.mxu0 0
        %4972 = vmatpush1.bf16.msra.mxu0 0
        %4973 = vmatprep.subr.bf16.mxu0 0
        %4974 = vmatpush1.bf16.msra.mxu0 0
        %4975 = vmatprep.subr.bf16.mxu0 0
        %4976 = vmatpush1.bf16.msra.mxu0 0
        %4977 = vmatprep.subr.bf16.mxu0 0
        %4978 = vmatpush1.bf16.msra.mxu0 0
        %4979 = vmatprep.subr.bf16.mxu0 0
        %4980 = vmatpush1.bf16.msra.mxu0 0
        %4981 = vmatprep.mubr.bf16.mxu0 %v4732
        %4982 = vmatmul.mubr.bf16.gmra.mrb[0].mxu0 %v4726
        %v4983 = vpop.f32.mrb[0].mxu0
        %v4984 = vadd.f32 %v4941, %v4983
        %v4985 = vpop.f32.mrb[0].mxu0
        %v4986 = vadd.f32 %v4943, %v4985
        %v4987 = vpop.f32.mrb[0].mxu0
        %v4988 = vadd.f32 %v4945, %v4987
        %v4989 = vpop.f32.mrb[0].mxu0
        %v4990 = vadd.f32 %v4947, %v4989
        %4991 = vdwg.mxu0
        %4992 = vmatprep.subr.bf16.mxu0 %v4503
        %4993 = vmatpush1.bf16.msra.mxu0 %v4502
        %4994 = vmatprep.subr.bf16.mxu0 %v4511
        %4995 = vmatpush1.bf16.msra.mxu0 %v4510
        %4996 = vmatprep.subr.bf16.mxu0 %v4519
        %4997 = vmatpush1.bf16.msra.mxu0 %v4518
        %4998 = vmatprep.subr.bf16.mxu0 %v4527
        %4999 = vmatpush1.bf16.msra.mxu0 %v4526
        %5000 = vmatprep.subr.bf16.mxu0 %v4535
        %5001 = vmatpush1.bf16.msra.mxu0 %v4534
        %5002 = vmatprep.subr.bf16.mxu0 %v4543
        %5003 = vmatpush1.bf16.msra.mxu0 %v4542
        %5004 = vmatprep.subr.bf16.mxu0 %v4551
        %5005 = vmatpush1.bf16.msra.mxu0 %v4550
        %5006 = vmatprep.subr.bf16.mxu0 %v4559
        %5007 = vmatpush1.bf16.msra.mxu0 %v4558
        %5008 = vmatprep.subr.bf16.mxu0 %v4567
        %5009 = vmatpush1.bf16.msra.mxu0 %v4566
        %5010 = vmatprep.subr.bf16.mxu0 %v4575
        %5011 = vmatpush1.bf16.msra.mxu0 %v4574
        %5012 = vmatprep.subr.bf16.mxu0 %v4583
        %5013 = vmatpush1.bf16.msra.mxu0 %v4582
        %5014 = vmatprep.subr.bf16.mxu0 %v4591
        %5015 = vmatpush1.bf16.msra.mxu0 %v4590
        %5016 = vmatprep.subr.bf16.mxu0 %v4599
        %5017 = vmatpush1.bf16.msra.mxu0 %v4598
        %5018 = vmatprep.subr.bf16.mxu0 %v4607
        %5019 = vmatpush1.bf16.msra.mxu0 %v4606
        %5020 = vmatprep.subr.bf16.mxu0 %v4615
        %5021 = vmatpush1.bf16.msra.mxu0 %v4614
        %5022 = vmatprep.subr.bf16.mxu0 %v4623
        %5023 = vmatpush1.bf16.msra.mxu0 %v4622
        %5024 = vmatprep.mubr.bf16.mxu0 %v4725
        %5025 = vmatmul.mubr.bf16.gmra.mrb[0].mxu0 %v4724
        %v5026 = vpop.f32.mrb[0].mxu0
        %v5027 = vadd.f32 0.0, %v5026
        %v5028 = vpop.f32.mrb[0].mxu0
        %v5029 = vadd.f32 0.0, %v5028
        %v5030 = vpop.f32.mrb[0].mxu0
        %v5031 = vadd.f32 0.0, %v5030
        %v5032 = vpop.f32.mrb[0].mxu0
        %v5033 = vadd.f32 0.0, %v5032
        %5034 = vdwg.mxu0
        %5035 = vmatprep.subr.bf16.mxu0 %v4631
        %5036 = vmatpush1.bf16.msra.mxu0 %v4630
        %5037 = vmatprep.subr.bf16.mxu0 %v4639
        %5038 = vmatpush1.bf16.msra.mxu0 %v4638
        %5039 = vmatprep.subr.bf16.mxu0 %v4647
        %5040 = vmatpush1.bf16.msra.mxu0 %v4646
        %5041 = vmatprep.subr.bf16.mxu0 %v4655
        %5042 = vmatpush1.bf16.msra.mxu0 %v4654
        %5043 = vmatprep.subr.bf16.mxu0 %v4663
        %5044 = vmatpush1.bf16.msra.mxu0 %v4662
        %5045 = vmatprep.subr.bf16.mxu0 %v4671
        %5046 = vmatpush1.bf16.msra.mxu0 %v4670
        %5047 = vmatprep.subr.bf16.mxu0 %v4679
        %5048 = vmatpush1.bf16.msra.mxu0 %v4678
        %5049 = vmatprep.subr.bf16.mxu0 %v4687
        %5050 = vmatpush1.bf16.msra.mxu0 %v4686
        %5051 = vmatprep.subr.bf16.mxu0 %v4695
        %5052 = vmatpush1.bf16.msra.mxu0 %v4694
        %5053 = vmatprep.subr.bf16.mxu0 %v4703
        %5054 = vmatpush1.bf16.msra.mxu0 %v4702
        %5055 = vmatprep.subr.bf16.mxu0 %v4711
        %5056 = vmatpush1.bf16.msra.mxu0 %v4710
        %5057 = vmatprep.subr.bf16.mxu0 0
        %5058 = vmatpush1.bf16.msra.mxu0 0
        %5059 = vmatprep.subr.bf16.mxu0 0
        %5060 = vmatpush1.bf16.msra.mxu0 0
        %5061 = vmatprep.subr.bf16.mxu0 0
        %5062 = vmatpush1.bf16.msra.mxu0 0
        %5063 = vmatprep.subr.bf16.mxu0 0
        %5064 = vmatpush1.bf16.msra.mxu0 0
        %5065 = vmatprep.subr.bf16.mxu0 0
        %5066 = vmatpush1.bf16.msra.mxu0 0
        %5067 = vmatprep.mubr.bf16.mxu0 %v4732
        %5068 = vmatmul.mubr.bf16.gmra.mrb[0].mxu0 %v4726
        %v5069 = vpop.f32.mrb[0].mxu0
        %v5070 = vadd.f32 %v5027, %v5069
        %v5071 = vpop.f32.mrb[0].mxu0
        %v5072 = vadd.f32 %v5029, %v5071
        %v5073 = vpop.f32.mrb[0].mxu0
        %v5074 = vadd.f32 %v5031, %v5073
        %v5075 = vpop.f32.mrb[0].mxu0
        %v5076 = vadd.f32 %v5033, %v5075
        %5077 = vdwg.mxu0
        %v5078 = vmul.f32 %v4812, %v2615
        %v5079 = vmul.f32 %v4814, %v2619
        %v5080 = vmul.f32 %v4898, %v2623
        %v5081 = vmul.f32 %v4900, %v2627
        %v5082 = vmul.f32 %v4984, %v2631
        %v5083 = vmul.f32 %v4986, %v2635
        %v5084 = vmul.f32 %v5070, %v2639
        %v5085 = vmul.f32 %v5072, %v2643
        %v5086 = vmul.f32 %v4816, %v2615
        %v5087 = vmul.f32 %v4818, %v2619
        %v5088 = vmul.f32 %v4902, %v2623
        %v5089 = vmul.f32 %v4904, %v2627
        %v5090 = vmul.f32 %v4988, %v2631
        %v5091 = vmul.f32 %v4990, %v2635
        %v5092 = vmul.f32 %v5074, %v2639
        %v5093 = vmul.f32 %v5076, %v2643
        %v5094 = vadd.f32 %v5078, %v5079
        %v5095 = vadd.f32 %v5094, %v5080
        %v5096 = vadd.f32 %v5095, %v5081
        %v5097 = vadd.f32 %v5096, %v5082
        %v5098 = vadd.f32 %v5097, %v5083
        %v5099 = vadd.f32 %v5098, %v5084
        %v5100 = vadd.f32 %v5099, %v5085
        %5101 = vadd.xlane.f32.xlu0 %v5100
        %v5102 = vpop.xlane.xlu0 %5101
        %v5103 = vadd.f32 %v5086, %v5087
        %v5104 = vadd.f32 %v5103, %v5088
        %v5105 = vadd.f32 %v5104, %v5089
        %v5106 = vadd.f32 %v5105, %v5090
        %v5107 = vadd.f32 %v5106, %v5091
        %v5108 = vadd.f32 %v5107, %v5092
        %v5109 = vadd.f32 %v5108, %v5093
        %5110 = vadd.xlane.f32.xlu0 %v5109
        %v5111 = vpop.xlane.xlu0 %5110
        %v5112 = vmul.f32 %v5102, 0.001953125
        %v5113 = vmul.f32 %v5111, 0.001953125
        %v5114 = vmul.f32 %v5078, %v5078
        %v5115 = vmul.f32 %v5079, %v5079
        %v5116 = vmul.f32 %v5080, %v5080
        %v5117 = vmul.f32 %v5081, %v5081
        %v5118 = vmul.f32 %v5082, %v5082
        %v5119 = vmul.f32 %v5083, %v5083
        %v5120 = vmul.f32 %v5084, %v5084
        %v5121 = vmul.f32 %v5085, %v5085
        %v5122 = vmul.f32 %v5086, %v5086
        %v5123 = vmul.f32 %v5087, %v5087
        %v5124 = vmul.f32 %v5088, %v5088
        %v5125 = vmul.f32 %v5089, %v5089
        %v5126 = vmul.f32 %v5090, %v5090
        %v5127 = vmul.f32 %v5091, %v5091
        %v5128 = vmul.f32 %v5092, %v5092
        %v5129 = vmul.f32 %v5093, %v5093
        %v5130 = vadd.f32 %v5114, %v5115
        %v5131 = vadd.f32 %v5130, %v5116
        %v5132 = vadd.f32 %v5131, %v5117
        %v5133 = vadd.f32 %v5132, %v5118
        %v5134 = vadd.f32 %v5133, %v5119
        %v5135 = vadd.f32 %v5134, %v5120
        %v5136 = vadd.f32 %v5135, %v5121
        %5137 = vadd.xlane.f32.xlu0 %v5136
        %v5138 = vpop.xlane.xlu0 %5137
        %v5139 = vadd.f32 %v5122, %v5123
        %v5140 = vadd.f32 %v5139, %v5124
        %v5141 = vadd.f32 %v5140, %v5125
        %v5142 = vadd.f32 %v5141, %v5126
        %v5143 = vadd.f32 %v5142, %v5127
        %v5144 = vadd.f32 %v5143, %v5128
        %v5145 = vadd.f32 %v5144, %v5129
        %5146 = vadd.xlane.f32.xlu0 %v5145
        %v5147 = vpop.xlane.xlu0 %5146
        %v5148 = vmul.f32 %v5138, 0.001953125
        %v5149 = vmul.f32 %v5147, 0.001953125
        %v5150 = vmul.f32 %v5112, %v5112
        %v5151 = vmul.f32 %v5113, %v5113
        %v5152 = vsub.f32 %v5148, %v5150
        %v5153 = vsub.f32 %v5149, %v5151
        %v5154 = vsub.f32 %v4812, %v5112
        %v5155 = vsub.f32 %v4814, %v5112
        %v5156 = vsub.f32 %v4898, %v5112
        %v5157 = vsub.f32 %v4900, %v5112
        %v5158 = vsub.f32 %v4984, %v5112
        %v5159 = vsub.f32 %v4986, %v5112
        %v5160 = vsub.f32 %v5070, %v5112
        %v5161 = vsub.f32 %v5072, %v5112
        %v5162 = vsub.f32 %v4816, %v5113
        %v5163 = vsub.f32 %v4818, %v5113
        %v5164 = vsub.f32 %v4902, %v5113
        %v5165 = vsub.f32 %v4904, %v5113
        %v5166 = vsub.f32 %v4988, %v5113
        %v5167 = vsub.f32 %v4990, %v5113
        %v5168 = vsub.f32 %v5074, %v5113
        %v5169 = vsub.f32 %v5076, %v5113
        %v5170 = vadd.f32 %v5152, 1e-05
        %v5171 = vadd.f32 %v5153, 1e-05
        %v5172 = vrsqrt.pop %v5170
        %v5173 = vrsqrt.pop %v5171
        %v5174 = vmul.f32 %v5154, %v5172
        %v5175 = vmul.f32 %v5155, %v5172
        %v5176 = vmul.f32 %v5156, %v5172
        %v5177 = vmul.f32 %v5157, %v5172
        %v5178 = vmul.f32 %v5158, %v5172
        %v5179 = vmul.f32 %v5159, %v5172
        %v5180 = vmul.f32 %v5160, %v5172
        %v5181 = vmul.f32 %v5161, %v5172
        %v5182 = vmul.f32 %v5162, %v5173
        %v5183 = vmul.f32 %v5163, %v5173
        %v5184 = vmul.f32 %v5164, %v5173
        %v5185 = vmul.f32 %v5165, %v5173
        %v5186 = vmul.f32 %v5166, %v5173
        %v5187 = vmul.f32 %v5167, %v5173
        %v5188 = vmul.f32 %v5168, %v5173
        %v5189 = vmul.f32 %v5169, %v5173
        %v5190 = vmul.f32 %v5174, 0.01
        %v5191 = vmul.f32 %v5175, 0.01
        %v5192 = vmul.f32 %v5176, 0.01
        %v5193 = vmul.f32 %v5177, 0.01
        %v5194 = vmul.f32 %v5178, 0.01
        %v5195 = vmul.f32 %v5179, 0.01
        %v5196 = vmul.f32 %v5180, 0.01
        %v5197 = vmul.f32 %v5181, 0.01
        %v5198 = vmul.f32 %v5182, 0.01
        %v5199 = vmul.f32 %v5183, 0.01
        %v5200 = vmul.f32 %v5184, 0.01
        %v5201 = vmul.f32 %v5185, 0.01
        %v5202 = vmul.f32 %v5186, 0.01
        %v5203 = vmul.f32 %v5187, 0.01
        %v5204 = vmul.f32 %v5188, 0.01
        %v5205 = vmul.f32 %v5189, 0.01
        %v5206 = vmax.f32 %v5174, %v5190
        %v5207 = vmax.f32 %v5175, %v5191
        %v5208 = vmax.f32 %v5176, %v5192
        %v5209 = vmax.f32 %v5177, %v5193
        %v5210 = vmax.f32 %v5178, %v5194
        %v5211 = vmax.f32 %v5179, %v5195
        %v5212 = vmax.f32 %v5180, %v5196
        %v5213 = vmax.f32 %v5181, %v5197
        %v5214 = vmax.f32 %v5182, %v5198
        %v5215 = vmax.f32 %v5183, %v5199
        %v5216 = vmax.f32 %v5184, %v5200
        %v5217 = vmax.f32 %v5185, %v5201
        %v5218 = vmax.f32 %v5186, %v5202
        %v5219 = vmax.f32 %v5187, %v5203
        %v5220 = vmax.f32 %v5188, %v5204
        %v5221 = vmax.f32 %v5189, %v5205
        %v5222 = vmul.f32 %v5206, %v2615
        %v5223 = vmul.f32 %v5207, %v2619
        %v5224 = vmul.f32 %v5208, %v2623
        %v5225 = vmul.f32 %v5209, %v2627
        %v5226 = vmul.f32 %v5210, %v2631
        %v5227 = vmul.f32 %v5211, %v2635
        %v5228 = vmul.f32 %v5212, %v2639
        %v5229 = vmul.f32 %v5213, %v2643
        %v5230 = vmul.f32 %v5214, %v2615
        %v5231 = vmul.f32 %v5215, %v2619
        %v5232 = vmul.f32 %v5216, %v2623
        %v5233 = vmul.f32 %v5217, %v2627
        %v5234 = vmul.f32 %v5218, %v2631
        %v5235 = vmul.f32 %v5219, %v2635
        %v5236 = vmul.f32 %v5220, %v2639
        %v5237 = vmul.f32 %v5221, %v2643
        %v5238 = vpack.c.bf16 %v5230, %v5222
        %v5239 = vpack.c.bf16 %v5231, %v5223
        %v5240 = vpack.c.bf16 %v5232, %v5224
        %v5241 = vpack.c.bf16 %v5233, %v5225
        %v5242 = vpack.c.bf16 %v5234, %v5226
        %v5243 = vpack.c.bf16 %v5235, %v5227
        %v5244 = vpack.c.bf16 %v5236, %v5228
        %v5245 = vpack.c.bf16 %v5237, %v5229
        %v5254 = vunpack.c.l.b16 %v5238
        %v5255 = vunpack.c.l.b16 %v5239
        %v5256 = vunpack.c.l.b16 %v5240
        %v5257 = vunpack.c.l.b16 %v5241
        %v5258 = vunpack.c.l.b16 %v5242
        %v5259 = vunpack.c.l.b16 %v5243
        %v5260 = vunpack.c.l.b16 %v5244
        %v5261 = vunpack.c.l.b16 %v5245
        %v5262 = vunpack.c.h.b16 %v5238
        %v5263 = vunpack.c.h.b16 %v5239
        %v5264 = vunpack.c.h.b16 %v5240
        %v5265 = vunpack.c.h.b16 %v5241
        %v5266 = vunpack.c.h.b16 %v5242
        %v5267 = vunpack.c.h.b16 %v5243
        %v5268 = vunpack.c.h.b16 %v5244
        %v5269 = vunpack.c.h.b16 %v5245
        %v5270 = vpack.c.b16 %v5255, %v5254
        %v5271 = vpack.c.b16 %v5257, %v5256
        %v5272 = vpack.c.b16 %v5259, %v5258
        %v5273 = vpack.c.b16 %v5261, %v5260
        %v5274 = vpack.c.b16 %v5263, %v5262
        %v5275 = vpack.c.b16 %v5265, %v5264
        %v5276 = vpack.c.b16 %v5267, %v5266
        %v5277 = vpack.c.b16 %v5269, %v5268
        %5286 = vst [vmem:[%s257] sm:$0xff] %v5270
        %5287 = vst [vmem:[%s257 + $0x8] sm:$0xff] %v5271
        %5288 = vst [vmem:[%s257 + $0x10] sm:$0xff] %v5272
        %5289 = vst [vmem:[%s257 + $0x18] sm:$0xff] %v5273
        %5290 = vst [vmem:[%s257 + $0x20] sm:$0xff] %v5274
        %5291 = vst [vmem:[%s257 + $0x28] sm:$0xff] %v5275
        %5292 = vst [vmem:[%s257 + $0x30] sm:$0xff] %v5276
        %5293 = vst [vmem:[%s257 + $0x38] sm:$0xff] %v5277
        %s5294 = sand.u32 %s120, 1
        %s5295 = scalar_lea.sflag [#allocation6], %s5294
        %s5296 = sand.u32 %s120, 1
        %s5297 = smul.addr %s5296, 64
        %s5298 = scalar_lea.vmem [#allocation12], %s5297
        // Predicated region
        $region53: #{up_forward.3} parent=35 // pred_check
          %p5299 = pneg %p130
        $region54: #{up_forward.3} parent=35 // pred_check_branch
          %5301 = sbr.rel (%p5299) target = $region56
        $region55: #{up_forward.3} parent=35 // pred_region
          %s5303 = ssub.s32 1024, 1024
          %5304 = vsyncadd %s5295, %s5303
          %s5305 = smul.addr %s23, 16
          %s5306 = smul.addr %s5305, 64
          %s5307 = scalar_lea.hbm %s4, %s5306
          %s5308 = sshll.u32 %s5298, 4
          %s5309 = int_to_ptr.vmem [resolvable:$true] %s5308
          %5314 = dma.vmem_to_hbm [thread:$0]  %s5309, 1024, %s5307, %s5295, 512, 512, 32
        $region56: #{up_forward.3} parent=35 // pred_fallthru
          _
      $region36: #{up_forward.3} parent=5 // pred_fallthru
        _
      %p5315 = scmp.le.s32.totalorder 2, %s18
      // Predicated region
      $region57: #{up_forward.3} parent=5 // pred_check
        %p5316 = pneg %p5315
      $region58: #{up_forward.3} parent=5 // pred_check_branch
        %5318 = sbr.rel (%p5316) target = $region60
      $region59: #{up_forward.3} parent=5 // pred_region
        %s5319 = ssub.s32 %s18, 2
        // Predicated region
        $region61: #{up_forward.3} parent=59 // pred_check
          %p5320 = pneg %p136
        $region62: #{up_forward.3} parent=59 // pred_check_branch
          %5322 = sbr.rel (%p5320) target = $region64
        $region63: #{up_forward.3} parent=59 // pred_region
          %s5323 = sand.u32 %s121, 1
          %s5324 = scalar_lea.sflag [#allocation6], %s5323
          %s5325 = sand.u32 %s121, 1
          %s5326 = smul.addr %s5325, 64
          %s5327 = scalar_lea.vmem [#allocation12], %s5326
          %5328 = dma.done %s5324, 1024
        $region64: #{up_forward.3} parent=59 // pred_fallthru
          _
      $region60: #{up_forward.3} parent=5 // pred_fallthru
        _
    $region6: #{up_forward.3} parent=1 // loop_footer
      %s22 = sadd.s32 1, %s18
    $region7: #{up_forward.3} parent=1 // loop_footer_branch
      %17 = sbr.rel target = $region3
    $region8: #{up_forward.3} parent=1 // loop_exit
      _
    %5329 = vsyncpa [#allocation5], 1
    %s5330 = scalar_lea.sflag [#allocation5], 1
    %5331 = vsyncpa %s5330, 1
    %5332 = vsyncpa [#allocation8], 1
    %5333 = vsyncpa [#allocation11], 1
    %5334 = vsyncpa [#allocation6], 1
    %s5335 = scalar_lea.sflag [#allocation6], 1
    %5336 = vsyncpa %s5335, 1

</llo_original>
